<compile_context>
chip_gen: v6e
topology: v6e:2x2x1
jax: 0.10.0
libtpu: 0.0.40
codegen_flags: <defaults>
</compile_context>

<pallas_src>
import numpy as np
import jax
import jax.numpy as jnp
from jax import lax
from jax.experimental import pallas as pl
from jax.experimental.pallas import tpu as pltpu


# ------------------------------ hyper parameters (small demo) ------------------------------
class HP:
    encoder_size = 8            # Encoder.Size
    style_size = 8              # Style.Size
    base_size = 16              # Semantic_F0_Predictor.Upsample.Base_Size
    prenet_kernel = 7           # Prenet.Kernel_Size
    upsample_rates = (2, 2)     # Upsample.Rate
    upsample_kernels = (4, 4)   # Upsample.Kernel_Size
    residual_kernels = (3, 5)   # Residual_Block.Kernel_Size
    residual_dilations = ((1, 3), (1, 3))  # Residual_Block.Dilation_Size
    postnet_kernel = 7          # Postnet.Kernel_Size
    leaky_negative_slope = 0.1  # defined by the module but unused in its forward


_EPS = 1e-9
_DOT_DTYPE = jnp.bfloat16       # MXU operand dtype (bf16-native on v5e/v6e/v7x)
_SUB = 8                        # sublane granularity: keep channel blocks 8-row aligned


def _store_rows(c):
    """Stored channel rows (padded up to a sublane multiple, >= 8)."""
    return max(_SUB, ((c + _SUB - 1) // _SUB) * _SUB)


# ------------------------------- in-kernel building blocks --------------------------------
# Storage order of the time axis after the upsample stack: applying upsample rates
# R1, R2, ... maps the true time t = (((q*R1)+r1)*R2+r2)... to the stored lane index
# s = r_n*T_{n-1} + ... + r_1*T0 + q  (newest phase digit is the outermost lane block).
# `_shift_true(x, d, rates)` returns, in that same storage order, x_true[. + d]
# (zero padded), built purely from static lane slices of the phase blocks.

def _shift_true(x, delta, rates):
    """x: [C, T_stored] (one sample).  Stored-order view of x_true shifted by `delta`."""
    if delta == 0:
        return x
    C, T = x.shape
    if not rates:
        assert abs(delta) <= T
        z = jnp.zeros((C, abs(delta)), x.dtype)
        if delta > 0:
            return jnp.concatenate([x[:, delta:], z], axis=1)
        return jnp.concatenate([z, x[:, :T + delta]], axis=1)
    R = rates[-1]
    blk = T // R
    parts = []
    for r in range(R):
        src = (r + delta) % R
        carry = (r + delta) // R
        parts.append(_shift_true(x[:, src * blk:(src + 1) * blk], carry, rates[:-1]))
    return jnp.concatenate(parts, axis=1)


def _segments(x, B):
    T = x.shape[1] // B
    return [x[:, b * T:(b + 1) * T] for b in range(B)]


def _conv1d(x, B, w_fold, bias, kernel, dilation, rates):
    """Stride-1 'same' Conv1d on a batch-packed, phase-permuted activation.
    x: [C_in_store, B*T]; w_fold: [C_out_store, kernel*C_in_store] (bf16);
    bias: [C_out_store, 1] f32 or None.  ONE MXU matmul for the whole batch."""
    pad = (kernel * dilation - dilation) // 2
    cols = []
    for xs in _segments(x, B):
        taps = [_shift_true(xs, k * dilation - pad, rates) for k in range(kernel)]
        cols.append(jnp.concatenate(taps, axis=0))
    rhs = jnp.concatenate(cols, axis=1) if B > 1 else cols[0]
    out = jnp.dot(w_fold, rhs.astype(_DOT_DTYPE), preferred_element_type=jnp.float32)
    if bias is not None:
        out = out + bias
    return out


def _conv_transpose(x, B, w_phases, bias, kernel, rate, rates_in):
    """Polyphase ConvTranspose1d (stride=rate, padding=(kernel-rate)//2).
    x: [C_in_store, B*T_in]; w_phases[r]: [C_out_store, n_taps_r*C_in_store] (bf16);
    bias: [C_out_store, 1].  Returns [C_out_store, B*rate*T_in] in the EXTENDED
    phase-permuted storage order (rates_in + [rate]).  `rate` matmuls total."""
    pad = (kernel - rate) // 2
    segs = _segments(x, B)
    T_in = segs[0].shape[1]
    phase = []
    for r in range(rate):
        k0 = (r + pad) % rate
        s0 = (r + pad) // rate
        n_taps = len(range(k0, kernel, rate))
        assert n_taps > 0
        cols = []
        for xs in segs:
            taps = [_shift_true(xs, s0 - j, rates_in) for j in range(n_taps)]
            cols.append(jnp.concatenate(taps, axis=0))
        rhs = jnp.concatenate(cols, axis=1) if B > 1 else cols[0]
        y = jnp.dot(w_phases[r], rhs.astype(_DOT_DTYPE),
                    preferred_element_type=jnp.float32) + bias
        phase.append(y)                                   # [C_out_store, B*T_in]
    # re-pack per sample: lane-concat the `rate` phase blocks (new storage order).
    pieces = []
    for b in range(B):
        pieces.extend(p[:, b * T_in:(b + 1) * T_in] for p in phase)
    return jnp.concatenate(pieces, axis=1)


def _snake(x, alpha, inv_beta):
    """SnakeBeta (log-scale); alpha / 1/(beta+eps) precomputed in the wrapper: [C, 1]."""
    s = jnp.sin(alpha * x)
    return x + inv_beta * (s * s)


def _make_kernel(B, T0, widx, vidx):
    """Builds the fused Semantic_F0_Predictor forward kernel."""

    def wget(ref, name):
        r, off, w = widx[name]
        return ref[pl.ds(0, r), pl.ds(off, w)]

    def vget(ref, name):
        r, off, _ = vidx[name]
        return ref[pl.ds(0, r), pl.ds(off, 1)]

    def kernel(len_ref, enc_ref, sty_ref, w_ref, v_ref, enc_out_ref, pred_ref):
        lengths = [len_ref[b] for b in range(B)]          # SMEM scalars

        # masks: one hoisted int32 iota of true positions, refined per level
        pos = lax.broadcasted_iota(jnp.int32, (1, T0), 1)

        def make_mask(pos_vec, factor):
            return jnp.concatenate(
                [(pos_vec < lengths[b] * factor).astype(jnp.float32) for b in range(B)],
                axis=1)

        mask = make_mask(pos, 1)

        # ---- prenet + (wrapper-precomputed) style projection, masked ----
        x = _conv1d(enc_ref[...], B, wget(w_ref, 'prenet_w'),
                    vget(v_ref, 'prenet_b'), HP.prenet_kernel, 1, [])
        sty = sty_ref[...]                                # [base_size, B]
        sty_packed = jnp.concatenate(
            [jnp.broadcast_to(sty[:, b:b + 1], (sty.shape[0], T0)) for b in range(B)],
            axis=1)
        x = (x + sty_packed) * mask

        rates = []
        factor = 1
        for L, (rate, kup) in enumerate(zip(HP.upsample_rates, HP.upsample_kernels)):
            # ---- upsample (ConvTranspose1d); output stays in phase-permuted order ----
            w_ph = [wget(w_ref, f'up{L}_w_p{r}') for r in range(rate)]
            x = _conv_transpose(x, B, w_ph, vget(v_ref, f'up{L}_b'), kup, rate, rates)
            rates = rates + [rate]
            factor *= rate
            pos = jnp.concatenate([rate * pos + r for r in range(rate)], axis=1)
            mask = make_mask(pos, factor)

            # ---- residual blocks, averaged ----
            acc = None
            for bi, (rk, dils) in enumerate(zip(HP.residual_kernels,
                                                HP.residual_dilations)):
                h = x
                for li, d in enumerate(dils):
                    tag = f'l{L}_b{bi}_{li}'
                    res = h
                    h = _snake(h, vget(v_ref, f'{tag}_in_alpha'),
                               vget(v_ref, f'{tag}_in_invb')) * mask
                    h = _conv1d(h, B, wget(w_ref, f'{tag}_in_w'),
                                vget(v_ref, f'{tag}_in_b'), rk, d, rates) * mask
                    h = _snake(h, vget(v_ref, f'{tag}_out_alpha'),
                               vget(v_ref, f'{tag}_out_invb')) * mask
                    h = _conv1d(h, B, wget(w_ref, f'{tag}_out_w'),
                                vget(v_ref, f'{tag}_out_b'), rk, 1, rates) * mask
                    h = h + res
                h = h * mask
                acc = h if acc is None else acc + h
            x = acc * (1.0 / float(len(HP.residual_kernels)))

        # ---- head: final SnakeBeta + bias-free postnet conv to 1 channel ----
        enc = _snake(x, vget(v_ref, 'final_alpha'), vget(v_ref, 'final_invb'))
        c_final = enc_out_ref.shape[0]
        enc_out_ref[...] = enc[:c_final, :]
        pred_ref[...] = _conv1d(enc, B, wget(w_ref, 'postnet_w'), None,
                                HP.postnet_kernel, 1, rates)

    return kernel


# --------------------------- wrapper-side parameter packing (plain JAX) --------------------
class _Packer:
    """Packs many small 2-D blocks into one [rows, sum(widths)] array -> one DMA."""

    def __init__(self, rows, dtype):
        self.rows, self.dtype = rows, dtype
        self.blocks, self.index, self.off = [], {}, 0

    def add(self, name, mat):
        r, w = mat.shape
        blk = jnp.zeros((self.rows, w), jnp.float32).at[:r, :].set(
            mat.astype(jnp.float32))
        self.blocks.append(blk.astype(self.dtype))
        self.index[name] = (r, self.off, w)
        self.off += w

    def pack(self):
        return jnp.concatenate(self.blocks, axis=1)


def _fold_conv(w, c_out_store, c_in_store):
    """torch Conv1d weight [C_out, C_in, K] -> folded [c_out_store, K*c_in_store]."""
    c_out, c_in, K = w.shape
    wf = jnp.zeros((c_out_store, K, c_in_store), jnp.float32)
    wf = wf.at[:c_out, :, :c_in].set(jnp.transpose(w, (0, 2, 1)))
    return wf.reshape(c_out_store, K * c_in_store)


def _fold_convt_phase(w, rate, padding, r, c_out_store, c_in_store):
    """torch ConvTranspose1d weight [C_in, C_out, K] -> folded phase-r weight."""
    c_in, c_out, K = w.shape
    taps = list(range((r + padding) % rate, K, rate))
    wf = jnp.zeros((c_out_store, len(taps), c_in_store), jnp.float32)
    for j, k in enumerate(taps):
        wf = wf.at[:c_out, j, :c_in].set(w[:, :, k].T)
    return wf.reshape(c_out_store, len(taps) * c_in_store)


def _col(v, rows):
    out = jnp.zeros((rows, 1), jnp.float32)
    return out.at[:v.shape[0], 0].set(v)


def _pack_params(params):
    wp = _Packer(HP.base_size, _DOT_DTYPE)      # folded matmul weights (bf16)
    vp = _Packer(HP.base_size, jnp.float32)     # bias / snake-alpha / inv-beta columns

    enc_store = _store_rows(HP.encoder_size)
    base_store = _store_rows(HP.base_size)
    wp.add('prenet_w', _fold_conv(params['prenet']['w'], base_store, enc_store))
    vp.add('prenet_b', _col(params['prenet']['b'], base_store))

    prev_store = base_store
    for L, (rate, kup) in enumerate(zip(HP.upsample_rates, HP.upsample_kernels)):
        cur_ch = HP.base_size // 2 ** (L + 1)
        cur_store = _store_rows(cur_ch)
        lvl = params['levels'][L]
        pad = (kup - rate) // 2
        for r in range(rate):
            wp.add(f'up{L}_w_p{r}',
                   _fold_convt_phase(lvl['up_w'], rate, pad, r, cur_store, prev_store))
        vp.add(f'up{L}_b', _col(lvl['up_b'], cur_store))
        for bi, (rk, dils) in enumerate(zip(HP.residual_kernels, HP.residual_dilations)):
            blk = lvl['blocks'][bi]
            for li, _d in enumerate(dils):
                tag = f'l{L}_b{bi}_{li}'
                wp.add(f'{tag}_in_w', _fold_conv(blk['in_w'][li], cur_store, cur_store))
                vp.add(f'{tag}_in_b', _col(blk['in_b'][li], cur_store))
                vp.add(f'{tag}_in_alpha',
                       _col(jnp.exp(blk['in_log_alpha'][li]), cur_store))
                vp.add(f'{tag}_in_invb',
                       _col(1.0 / (jnp.exp(blk['in_log_beta'][li]) + _EPS), cur_store))
                wp.add(f'{tag}_out_w', _fold_conv(blk['out_w'][li], cur_store, cur_store))
                vp.add(f'{tag}_out_b', _col(blk['out_b'][li], cur_store))
                vp.add(f'{tag}_out_alpha',
                       _col(jnp.exp(blk['out_log_alpha'][li]), cur_store))
                vp.add(f'{tag}_out_invb',
                       _col(1.0 / (jnp.exp(blk['out_log_beta'][li]) + _EPS), cur_store))
        prev_store = cur_store

    vp.add('final_alpha', _col(jnp.exp(params['final_log_alpha']), prev_store))
    vp.add('final_invb', _col(1.0 / (jnp.exp(params['final_log_beta']) + _EPS), prev_store))
    wp.add('postnet_w', _fold_conv(params['postnet_w'], 1, prev_store))
    return wp.pack(), wp.index, vp.pack(), vp.index


# ----------------------------------- public forward wrapper --------------------------------
def semantic_f0_predictor_forward(params, encodings, styles, lengths=None):
    """encodings: [B, Encoder.Size, T]; styles: [B, Style.Size]; lengths: [B] or None.
    Returns (semantic_f0_encodings [B, C_final, T*prod(rates)], predictions [B, T*prod(rates)])."""
    B, E, T0 = encodings.shape
    n_levels = len(HP.upsample_rates)
    c_final = HP.base_size // 2 ** n_levels
    T_final = T0 * int(np.prod(HP.upsample_rates))
    for rate, kup in zip(HP.upsample_rates, HP.upsample_kernels):
        assert (kup - rate) % 2 == 0 and kup >= rate, \
            "polyphase upsample requires (kernel - rate) even and kernel >= rate"

    if lengths is None:
        lengths = jnp.full((B,), T0, dtype=jnp.int32)
    lengths = lengths.astype(jnp.int32)

    # ---- wrapper-side (plain XLA) glue: parameter packing + style 1x1 projection ----
    w_pack, widx, v_pack, vidx = _pack_params(params)

    enc_store = _store_rows(E)
    enc_packed = jnp.zeros((enc_store, B * T0), jnp.float32)
    enc_packed = enc_packed.at[:E, :].set(
        jnp.transpose(encodings.astype(jnp.float32), (1, 0, 2)).reshape(E, B * T0))

    style_proj = (jnp.einsum('os,bs->ob', params['style']['w'][:, :, 0],
                             styles.astype(jnp.float32))
                  + params['style']['b'][:, None])                 # [base_size, B]

    kernel = _make_kernel(B, T0, widx, vidx)
    enc_out_p, pred_p = pl.pallas_call(
        kernel,
        in_specs=[
            pl.BlockSpec(memory_space=pltpu.MemorySpace.SMEM),     # lengths (scalars)
            pl.BlockSpec(memory_space=pltpu.MemorySpace.VMEM),     # packed encodings
            pl.BlockSpec(memory_space=pltpu.MemorySpace.VMEM),     # style projection
            pl.BlockSpec(memory_space=pltpu.MemorySpace.VMEM),     # packed weights (bf16)
            pl.BlockSpec(memory_space=pltpu.MemorySpace.VMEM),     # packed vectors (f32)
        ],
        out_specs=(pl.BlockSpec(memory_space=pltpu.MemorySpace.VMEM),
                   pl.BlockSpec(memory_space=pltpu.MemorySpace.VMEM)),
        out_shape=(jax.ShapeDtypeStruct((c_final, B * T_final), jnp.float32),
                   jax.ShapeDtypeStruct((1, B * T_final), jnp.float32)),
    )(lengths, enc_packed, style_proj, w_pack, v_pack)

    # ---- un-pack batch and undo the phase-block time permutation (plain XLA) ----
    rates_rev = tuple(HP.upsample_rates[::-1])

    def unpack(y):                       # [C, B*T_final] -> [B, C, T_final] true order
        C = y.shape[0]
        y = jnp.transpose(y.reshape(C, B, T_final), (1, 0, 2))
        y = y.reshape(B, C, *rates_rev, T0)
        axes = (0, 1) + tuple(range(y.ndim - 1, 1, -1))
        return jnp.transpose(y, axes).reshape(B, C, T_final)

    enc_out = unpack(enc_out_p)
    pred = unpack(pred_p)[:, 0]
    return enc_out, pred


# ------------------------------------ parameter construction -------------------------------
def init_params(key):
    keys = iter(jax.random.split(key, 128))

    def nrm(shape, std=0.1):
        return std * jax.random.normal(next(keys), shape, dtype=jnp.float32)

    p = {
        'prenet': {'w': nrm((HP.base_size, HP.encoder_size, HP.prenet_kernel)),
                   'b': nrm((HP.base_size,), 0.05)},
        'style': {'w': nrm((HP.base_size, HP.style_size, 1)),
                  'b': nrm((HP.base_size,), 0.05)},
        'levels': [],
    }
    prev = HP.base_size
    for i, (rate, kup) in enumerate(zip(HP.upsample_rates, HP.upsample_kernels)):
        cur = HP.base_size // 2 ** (i + 1)
        lvl = {'up_w': nrm((prev, cur, kup), 0.05),      # ConvTranspose1d: [in, out, K]
               'up_b': nrm((cur,), 0.02),
               'blocks': []}
        for rk, rds in zip(HP.residual_kernels, HP.residual_dilations):
            L = len(rds)
            lvl['blocks'].append({
                'in_log_alpha': nrm((L, cur)), 'in_log_beta': nrm((L, cur)),
                'in_w': nrm((L, cur, cur, rk), 0.05), 'in_b': nrm((L, cur), 0.02),
                'out_log_alpha': nrm((L, cur)), 'out_log_beta': nrm((L, cur)),
                'out_w': nrm((L, cur, cur, rk), 0.05), 'out_b': nrm((L, cur), 0.02),
            })
        p['levels'].append(lvl)
        prev = cur
    p['final_log_alpha'] = nrm((prev,))
    p['final_log_beta'] = nrm((prev,))
    p['postnet_w'] = nrm((1, prev, HP.postnet_kernel), 0.05)   # bias=False
    return p


# ------------------------- pure-JAX (XLA) reference implementation -------------------------
def _ref_snake(x, log_alpha, log_beta):
    a = jnp.exp(log_alpha)[None, :, None]
    inv_b = 1.0 / (jnp.exp(log_beta)[None, :, None] + _EPS)
    return x + inv_b * jnp.sin(a * x) ** 2


def _ref_conv1d(x, w, b=None, dilation=1, padding=0):
    y = lax.conv_general_dilated(
        x, w, window_strides=(1,), padding=[(padding, padding)],
        rhs_dilation=(dilation,), dimension_numbers=('NCH', 'OIH', 'NCH'),
        precision=lax.Precision.HIGHEST)
    if b is not None:
        y = y + b[None, :, None]
    return y


def _ref_conv_transpose1d(x, w_t, b, stride, padding):
    K = w_t.shape[2]
    w_eq = jnp.transpose(jnp.flip(w_t, axis=2), (1, 0, 2))
    y = lax.conv_general_dilated(
        x, w_eq, window_strides=(1,), padding=[(K - 1 - padding, K - 1 - padding)],
        lhs_dilation=(stride,), dimension_numbers=('NCH', 'OIH', 'NCH'),
        precision=lax.Precision.HIGHEST)
    return y + b[None, :, None]


def reference_forward(params, encodings, styles, lengths=None):
    B, _, T = encodings.shape
    cur_len = jnp.full((B,), T, jnp.int32) if lengths is None else lengths
    fmask = (jnp.arange(T)[None, :] < cur_len[:, None]).astype(jnp.float32)[:, None]
    x = _ref_conv1d(encodings, params['prenet']['w'], params['prenet']['b'],
                    padding=(HP.prenet_kernel - 1) // 2)
    x = (x + _ref_conv1d(styles[:, :, None], params['style']['w'],
                         params['style']['b'])) * fmask
    for lvl, rate, kup in zip(params['levels'], HP.upsample_rates, HP.upsample_kernels):
        x = _ref_conv_transpose1d(x, lvl['up_w'], lvl['up_b'], rate, (kup - rate) // 2)
        cur_len = cur_len * rate
        T = x.shape[2]
        fmask = (jnp.arange(T)[None, :] < cur_len[:, None]).astype(jnp.float32)[:, None]
        outs = []
        for blk, rk, rds in zip(lvl['blocks'], HP.residual_kernels, HP.residual_dilations):
            h = x
            for li, d in enumerate(rds):
                res = h
                h = _ref_snake(h, blk['in_log_alpha'][li], blk['in_log_beta'][li]) * fmask
                h = _ref_conv1d(h, blk['in_w'][li], blk['in_b'][li],
                                dilation=d, padding=(rk * d - d) // 2) * fmask
                h = _ref_snake(h, blk['out_log_alpha'][li], blk['out_log_beta'][li]) * fmask
                h = _ref_conv1d(h, blk['out_w'][li], blk['out_b'][li],
                                dilation=1, padding=(rk - 1) // 2) * fmask
                h = h + res
            outs.append(h * fmask)
        x = jnp.stack(outs, axis=1).mean(axis=1)
    enc_out = _ref_snake(x, params['final_log_alpha'], params['final_log_beta'])
    pred = _ref_conv1d(enc_out, params['postnet_w'], None,
                       padding=(HP.postnet_kernel - 1) // 2)[:, 0]
    return enc_out, pred


# ------------------------------------------- main ------------------------------------------
if __name__ == "__main__":
    key = jax.random.PRNGKey(0)
    pkey, ekey, skey = jax.random.split(key, 3)
    params = init_params(pkey)

    B, T0 = 2, 32
    T_final = T0 * int(np.prod(HP.upsample_rates))                 # 128 (lane-dense)
    C_final = HP.base_size // 2 ** len(HP.upsample_rates)

    encodings = jax.random.normal(ekey, (B, HP.encoder_size, T0), dtype=jnp.float32)
    styles = jax.random.normal(skey, (B, HP.style_size), dtype=jnp.float32)
    lengths = jnp.array([32, 24], dtype=jnp.int32)

    fwd = jax.jit(semantic_f0_predictor_forward)
    enc_out, f0_pred = fwd(params, encodings, styles, lengths)
    jax.block_until_ready((enc_out, f0_pred))

    assert enc_out.shape == (B, C_final, T_final)
    assert f0_pred.shape == (B, T_final)
    assert bool(jnp.all(jnp.isfinite(enc_out))) and bool(jnp.all(jnp.isfinite(f0_pred)))

    # Correctness check against a pure-JAX / XLA reference of the same module.
    # The kernel deliberately feeds the MXU bf16 operands (per perf review), so the
    # comparison uses a bf16-level tolerance; set _DOT_DTYPE = jnp.float32 for <5e-3.
    ref_enc, ref_pred = jax.jit(reference_forward)(params, encodings, styles, lengths)
    np.testing.assert_allclose(np.asarray(enc_out), np.asarray(ref_enc),
                               rtol=2e-2, atol=2e-2)
    np.testing.assert_allclose(np.asarray(f0_pred), np.asarray(ref_pred),
                               rtol=2e-2, atol=2e-2)

    print("KERNEL_OK")
</pallas_src>

<mosaic_0001>
module attributes {stable_mosaic.version = 11 : i64} {
  func.func @kernel(%arg0: memref<2xi32, #tpu.memory_space<smem>>, %arg1: memref<8x64xf32, #tpu.memory_space<vmem>>, %arg2: memref<16x2xf32, #tpu.memory_space<vmem>>, %arg3: memref<16x720xbf16, #tpu.memory_space<vmem>>, %arg4: memref<16x53xf32, #tpu.memory_space<vmem>>, %arg5: memref<4x256xf32, #tpu.memory_space<vmem>>, %arg6: memref<1x256xf32, #tpu.memory_space<vmem>>) attributes {dimension_semantics = [], scalar_prefetch = 0 : i64, scratch_operands = 0 : i64, tpu.core_type = #tpu.core_type<tc>} {
    %c0 = arith.constant 0 : index
    %0 = memref.load %arg0[%c0] : memref<2xi32, #tpu.memory_space<smem>>
    %c1 = arith.constant 1 : index
    %1 = memref.load %arg0[%c1] : memref<2xi32, #tpu.memory_space<smem>>
    %2 = tpu.iota {dimensions = array<i32: 1>} : vector<1x32xi32>
    %c1_i32 = arith.constant 1 : i32
    %3 = arith.muli %0, %c1_i32 : i32
    %4 = vector.broadcast %3 : i32 to vector<1x32xi32>
    %5 = arith.cmpi slt, %2, %4 : vector<1x32xi32>
    %6 = arith.extui %5 : vector<1x32xi1> to vector<1x32xi32>
    %7 = arith.sitofp %6 : vector<1x32xi32> to vector<1x32xf32>
    %c1_i32_0 = arith.constant 1 : i32
    %8 = arith.muli %1, %c1_i32_0 : i32
    %9 = vector.broadcast %8 : i32 to vector<1x32xi32>
    %10 = arith.cmpi slt, %2, %9 : vector<1x32xi32>
    %11 = arith.extui %10 : vector<1x32xi1> to vector<1x32xi32>
    %12 = arith.sitofp %11 : vector<1x32xi32> to vector<1x32xf32>
    %13 = tpu.concatenate %7, %12 in 1 : vector<1x32xf32>, vector<1x32xf32> -> vector<1x64xf32>
    %c0_1 = arith.constant 0 : index
    %c0_2 = arith.constant 0 : index
    %14 = vector.load %arg1[%c0_1, %c0_2] : memref<8x64xf32, #tpu.memory_space<vmem>>, vector<8x64xf32>
    %c0_3 = arith.constant 0 : index
    %c0_4 = arith.constant 0 : index
    %15 = vector.load %arg3[%c0_3, %c0_4] : memref<16x720xbf16, #tpu.memory_space<vmem>>, vector<16x56xbf16>
    %c0_5 = arith.constant 0 : index
    %c0_6 = arith.constant 0 : index
    %16 = vector.load %arg4[%c0_5, %c0_6] : memref<16x53xf32, #tpu.memory_space<vmem>>, vector<16x1xf32>
    %17 = vector.extract_strided_slice %14 {offsets = [0, 0], sizes = [8, 32], strides = [1, 1]} : vector<8x64xf32> to vector<8x32xf32>
    %18 = vector.extract_strided_slice %14 {offsets = [0, 32], sizes = [8, 32], strides = [1, 1]} : vector<8x64xf32> to vector<8x32xf32>
    %cst = arith.constant 0.000000e+00 : f32
    %19 = vector.broadcast %cst : f32 to vector<8x3xf32>
    %20 = vector.extract_strided_slice %17 {offsets = [0, 0], sizes = [8, 29], strides = [1, 1]} : vector<8x32xf32> to vector<8x29xf32>
    %21 = tpu.concatenate %19, %20 in 1 : vector<8x3xf32>, vector<8x29xf32> -> vector<8x32xf32>
    %cst_7 = arith.constant 0.000000e+00 : f32
    %22 = vector.broadcast %cst_7 : f32 to vector<8x2xf32>
    %23 = vector.extract_strided_slice %17 {offsets = [0, 0], sizes = [8, 30], strides = [1, 1]} : vector<8x32xf32> to vector<8x30xf32>
    %24 = tpu.concatenate %22, %23 in 1 : vector<8x2xf32>, vector<8x30xf32> -> vector<8x32xf32>
    %cst_8 = arith.constant 0.000000e+00 : f32
    %25 = vector.broadcast %cst_8 : f32 to vector<8x1xf32>
    %26 = vector.extract_strided_slice %17 {offsets = [0, 0], sizes = [8, 31], strides = [1, 1]} : vector<8x32xf32> to vector<8x31xf32>
    %27 = tpu.concatenate %25, %26 in 1 : vector<8x1xf32>, vector<8x31xf32> -> vector<8x32xf32>
    %cst_9 = arith.constant 0.000000e+00 : f32
    %28 = vector.broadcast %cst_9 : f32 to vector<8x1xf32>
    %29 = vector.extract_strided_slice %17 {offsets = [0, 1], sizes = [8, 31], strides = [1, 1]} : vector<8x32xf32> to vector<8x31xf32>
    %30 = tpu.concatenate %29, %28 in 1 : vector<8x31xf32>, vector<8x1xf32> -> vector<8x32xf32>
    %cst_10 = arith.constant 0.000000e+00 : f32
    %31 = vector.broadcast %cst_10 : f32 to vector<8x2xf32>
    %32 = vector.extract_strided_slice %17 {offsets = [0, 2], sizes = [8, 30], strides = [1, 1]} : vector<8x32xf32> to vector<8x30xf32>
    %33 = tpu.concatenate %32, %31 in 1 : vector<8x30xf32>, vector<8x2xf32> -> vector<8x32xf32>
    %cst_11 = arith.constant 0.000000e+00 : f32
    %34 = vector.broadcast %cst_11 : f32 to vector<8x3xf32>
    %35 = vector.extract_strided_slice %17 {offsets = [0, 3], sizes = [8, 29], strides = [1, 1]} : vector<8x32xf32> to vector<8x29xf32>
    %36 = tpu.concatenate %35, %34 in 1 : vector<8x29xf32>, vector<8x3xf32> -> vector<8x32xf32>
    %37 = tpu.concatenate %21, %24, %27, %17, %30, %33, %36 in 0 : vector<8x32xf32>, vector<8x32xf32>, vector<8x32xf32>, vector<8x32xf32>, vector<8x32xf32>, vector<8x32xf32>, vector<8x32xf32> -> vector<56x32xf32>
    %cst_12 = arith.constant 0.000000e+00 : f32
    %38 = vector.broadcast %cst_12 : f32 to vector<8x3xf32>
    %39 = vector.extract_strided_slice %18 {offsets = [0, 0], sizes = [8, 29], strides = [1, 1]} : vector<8x32xf32> to vector<8x29xf32>
    %40 = tpu.concatenate %38, %39 in 1 : vector<8x3xf32>, vector<8x29xf32> -> vector<8x32xf32>
    %cst_13 = arith.constant 0.000000e+00 : f32
    %41 = vector.broadcast %cst_13 : f32 to vector<8x2xf32>
    %42 = vector.extract_strided_slice %18 {offsets = [0, 0], sizes = [8, 30], strides = [1, 1]} : vector<8x32xf32> to vector<8x30xf32>
    %43 = tpu.concatenate %41, %42 in 1 : vector<8x2xf32>, vector<8x30xf32> -> vector<8x32xf32>
    %cst_14 = arith.constant 0.000000e+00 : f32
    %44 = vector.broadcast %cst_14 : f32 to vector<8x1xf32>
    %45 = vector.extract_strided_slice %18 {offsets = [0, 0], sizes = [8, 31], strides = [1, 1]} : vector<8x32xf32> to vector<8x31xf32>
    %46 = tpu.concatenate %44, %45 in 1 : vector<8x1xf32>, vector<8x31xf32> -> vector<8x32xf32>
    %cst_15 = arith.constant 0.000000e+00 : f32
    %47 = vector.broadcast %cst_15 : f32 to vector<8x1xf32>
    %48 = vector.extract_strided_slice %18 {offsets = [0, 1], sizes = [8, 31], strides = [1, 1]} : vector<8x32xf32> to vector<8x31xf32>
    %49 = tpu.concatenate %48, %47 in 1 : vector<8x31xf32>, vector<8x1xf32> -> vector<8x32xf32>
    %cst_16 = arith.constant 0.000000e+00 : f32
    %50 = vector.broadcast %cst_16 : f32 to vector<8x2xf32>
    %51 = vector.extract_strided_slice %18 {offsets = [0, 2], sizes = [8, 30], strides = [1, 1]} : vector<8x32xf32> to vector<8x30xf32>
    %52 = tpu.concatenate %51, %50 in 1 : vector<8x30xf32>, vector<8x2xf32> -> vector<8x32xf32>
    %cst_17 = arith.constant 0.000000e+00 : f32
    %53 = vector.broadcast %cst_17 : f32 to vector<8x3xf32>
    %54 = vector.extract_strided_slice %18 {offsets = [0, 3], sizes = [8, 29], strides = [1, 1]} : vector<8x32xf32> to vector<8x29xf32>
    %55 = tpu.concatenate %54, %53 in 1 : vector<8x29xf32>, vector<8x3xf32> -> vector<8x32xf32>
    %56 = tpu.concatenate %40, %43, %46, %18, %49, %52, %55 in 0 : vector<8x32xf32>, vector<8x32xf32>, vector<8x32xf32>, vector<8x32xf32>, vector<8x32xf32>, vector<8x32xf32>, vector<8x32xf32> -> vector<56x32xf32>
    %57 = tpu.concatenate %37, %56 in 1 : vector<56x32xf32>, vector<56x32xf32> -> vector<56x64xf32>
    %58 = arith.truncf %57 : vector<56x64xf32> to vector<56x64xbf16>
    %cst_18 = arith.constant dense<0.000000e+00> : vector<16x64xf32>
    %59 = tpu.matmul %15, %58, %cst_18 {dimension_numbers = #tpu.dot_dimension_numbers<[1], [0], [0], [1], [0, 0, 1, 1], [], []>} : vector<16x56xbf16>, vector<56x64xbf16>, vector<16x64xf32> -> vector<16x64xf32>
    %60 = vector.broadcast %16 : vector<16x1xf32> to vector<16x64xf32>
    %61 = arith.addf %59, %60 : vector<16x64xf32>
    %c0_19 = arith.constant 0 : index
    %c0_20 = arith.constant 0 : index
    %62 = vector.load %arg2[%c0_19, %c0_20] : memref<16x2xf32, #tpu.memory_space<vmem>>, vector<16x2xf32>
    %63 = vector.extract_strided_slice %62 {offsets = [0, 0], sizes = [16, 1], strides = [1, 1]} : vector<16x2xf32> to vector<16x1xf32>
    %64 = vector.shape_cast %63 : vector<16x1xf32> to vector<16x1xf32>
    %65 = vector.broadcast %64 : vector<16x1xf32> to vector<16x32xf32>
    %66 = vector.extract_strided_slice %62 {offsets = [0, 1], sizes = [16, 1], strides = [1, 1]} : vector<16x2xf32> to vector<16x1xf32>
    %67 = vector.shape_cast %66 : vector<16x1xf32> to vector<16x1xf32>
    %68 = vector.broadcast %67 : vector<16x1xf32> to vector<16x32xf32>
    %69 = tpu.concatenate %65, %68 in 1 : vector<16x32xf32>, vector<16x32xf32> -> vector<16x64xf32>
    %70 = arith.addf %61, %69 : vector<16x64xf32>
    %71 = vector.broadcast %13 : vector<1x64xf32> to vector<16x64xf32>
    %72 = arith.mulf %70, %71 : vector<16x64xf32>
    %c0_21 = arith.constant 0 : index
    %c56 = arith.constant 56 : index
    %73 = vector.load %arg3[%c0_21, %c56] : memref<16x720xbf16, #tpu.memory_space<vmem>>, vector<8x32xbf16>
    %c0_22 = arith.constant 0 : index
    %c88 = arith.constant 88 : index
    %74 = vector.load %arg3[%c0_22, %c88] : memref<16x720xbf16, #tpu.memory_space<vmem>>, vector<8x32xbf16>
    %c0_23 = arith.constant 0 : index
    %c1_24 = arith.constant 1 : index
    %75 = vector.load %arg4[%c0_23, %c1_24] : memref<16x53xf32, #tpu.memory_space<vmem>>, vector<8x1xf32>
    %76 = vector.extract_strided_slice %72 {offsets = [0, 0], sizes = [16, 32], strides = [1, 1]} : vector<16x64xf32> to vector<16x32xf32>
    %77 = vector.extract_strided_slice %72 {offsets = [0, 32], sizes = [16, 32], strides = [1, 1]} : vector<16x64xf32> to vector<16x32xf32>
    %cst_25 = arith.constant 0.000000e+00 : f32
    %78 = vector.broadcast %cst_25 : f32 to vector<16x1xf32>
    %79 = vector.extract_strided_slice %76 {offsets = [0, 0], sizes = [16, 31], strides = [1, 1]} : vector<16x32xf32> to vector<16x31xf32>
    %80 = tpu.concatenate %78, %79 in 1 : vector<16x1xf32>, vector<16x31xf32> -> vector<16x32xf32>
    %81 = tpu.concatenate %76, %80 in 0 : vector<16x32xf32>, vector<16x32xf32> -> vector<32x32xf32>
    %cst_26 = arith.constant 0.000000e+00 : f32
    %82 = vector.broadcast %cst_26 : f32 to vector<16x1xf32>
    %83 = vector.extract_strided_slice %77 {offsets = [0, 0], sizes = [16, 31], strides = [1, 1]} : vector<16x32xf32> to vector<16x31xf32>
    %84 = tpu.concatenate %82, %83 in 1 : vector<16x1xf32>, vector<16x31xf32> -> vector<16x32xf32>
    %85 = tpu.concatenate %77, %84 in 0 : vector<16x32xf32>, vector<16x32xf32> -> vector<32x32xf32>
    %86 = tpu.concatenate %81, %85 in 1 : vector<32x32xf32>, vector<32x32xf32> -> vector<32x64xf32>
    %87 = arith.truncf %86 : vector<32x64xf32> to vector<32x64xbf16>
    %cst_27 = arith.constant dense<0.000000e+00> : vector<8x64xf32>
    %88 = tpu.matmul %73, %87, %cst_27 {dimension_numbers = #tpu.dot_dimension_numbers<[1], [0], [0], [1], [0, 0, 1, 1], [], []>} : vector<8x32xbf16>, vector<32x64xbf16>, vector<8x64xf32> -> vector<8x64xf32>
    %89 = vector.broadcast %75 : vector<8x1xf32> to vector<8x64xf32>
    %90 = arith.addf %88, %89 : vector<8x64xf32>
    %cst_28 = arith.constant 0.000000e+00 : f32
    %91 = vector.broadcast %cst_28 : f32 to vector<16x1xf32>
    %92 = vector.extract_strided_slice %76 {offsets = [0, 1], sizes = [16, 31], strides = [1, 1]} : vector<16x32xf32> to vector<16x31xf32>
    %93 = tpu.concatenate %92, %91 in 1 : vector<16x31xf32>, vector<16x1xf32> -> vector<16x32xf32>
    %94 = tpu.concatenate %93, %76 in 0 : vector<16x32xf32>, vector<16x32xf32> -> vector<32x32xf32>
    %cst_29 = arith.constant 0.000000e+00 : f32
    %95 = vector.broadcast %cst_29 : f32 to vector<16x1xf32>
    %96 = vector.extract_strided_slice %77 {offsets = [0, 1], sizes = [16, 31], strides = [1, 1]} : vector<16x32xf32> to vector<16x31xf32>
    %97 = tpu.concatenate %96, %95 in 1 : vector<16x31xf32>, vector<16x1xf32> -> vector<16x32xf32>
    %98 = tpu.concatenate %97, %77 in 0 : vector<16x32xf32>, vector<16x32xf32> -> vector<32x32xf32>
    %99 = tpu.concatenate %94, %98 in 1 : vector<32x32xf32>, vector<32x32xf32> -> vector<32x64xf32>
    %100 = arith.truncf %99 : vector<32x64xf32> to vector<32x64xbf16>
    %cst_30 = arith.constant dense<0.000000e+00> : vector<8x64xf32>
    %101 = tpu.matmul %74, %100, %cst_30 {dimension_numbers = #tpu.dot_dimension_numbers<[1], [0], [0], [1], [0, 0, 1, 1], [], []>} : vector<8x32xbf16>, vector<32x64xbf16>, vector<8x64xf32> -> vector<8x64xf32>
    %102 = vector.broadcast %75 : vector<8x1xf32> to vector<8x64xf32>
    %103 = arith.addf %101, %102 : vector<8x64xf32>
    %104 = vector.extract_strided_slice %90 {offsets = [0, 0], sizes = [8, 32], strides = [1, 1]} : vector<8x64xf32> to vector<8x32xf32>
    %105 = vector.extract_strided_slice %103 {offsets = [0, 0], sizes = [8, 32], strides = [1, 1]} : vector<8x64xf32> to vector<8x32xf32>
    %106 = vector.extract_strided_slice %90 {offsets = [0, 32], sizes = [8, 32], strides = [1, 1]} : vector<8x64xf32> to vector<8x32xf32>
    %107 = vector.extract_strided_slice %103 {offsets = [0, 32], sizes = [8, 32], strides = [1, 1]} : vector<8x64xf32> to vector<8x32xf32>
    %108 = tpu.concatenate %104, %105, %106, %107 in 1 : vector<8x32xf32>, vector<8x32xf32>, vector<8x32xf32>, vector<8x32xf32> -> vector<8x128xf32>
    %c2_i32 = arith.constant 2 : i32
    %109 = vector.broadcast %c2_i32 : i32 to vector<1x32xi32>
    %110 = arith.muli %109, %2 : vector<1x32xi32>
    %c0_i32 = arith.constant 0 : i32
    %111 = vector.broadcast %c0_i32 : i32 to vector<1x32xi32>
    %112 = arith.addi %110, %111 : vector<1x32xi32>
    %c2_i32_31 = arith.constant 2 : i32
    %113 = vector.broadcast %c2_i32_31 : i32 to vector<1x32xi32>
    %114 = arith.muli %113, %2 : vector<1x32xi32>
    %c1_i32_32 = arith.constant 1 : i32
    %115 = vector.broadcast %c1_i32_32 : i32 to vector<1x32xi32>
    %116 = arith.addi %114, %115 : vector<1x32xi32>
    %117 = tpu.concatenate %112, %116 in 1 : vector<1x32xi32>, vector<1x32xi32> -> vector<1x64xi32>
    %c2_i32_33 = arith.constant 2 : i32
    %118 = arith.muli %0, %c2_i32_33 : i32
    %119 = vector.broadcast %118 : i32 to vector<1x64xi32>
    %120 = arith.cmpi slt, %117, %119 : vector<1x64xi32>
    %121 = arith.extui %120 : vector<1x64xi1> to vector<1x64xi32>
    %122 = arith.sitofp %121 : vector<1x64xi32> to vector<1x64xf32>
    %c2_i32_34 = arith.constant 2 : i32
    %123 = arith.muli %1, %c2_i32_34 : i32
    %124 = vector.broadcast %123 : i32 to vector<1x64xi32>
    %125 = arith.cmpi slt, %117, %124 : vector<1x64xi32>
    %126 = arith.extui %125 : vector<1x64xi1> to vector<1x64xi32>
    %127 = arith.sitofp %126 : vector<1x64xi32> to vector<1x64xf32>
    %128 = tpu.concatenate %122, %127 in 1 : vector<1x64xf32>, vector<1x64xf32> -> vector<1x128xf32>
    %c0_35 = arith.constant 0 : index
    %c3 = arith.constant 3 : index
    %129 = vector.load %arg4[%c0_35, %c3] : memref<16x53xf32, #tpu.memory_space<vmem>>, vector<8x1xf32>
    %c0_36 = arith.constant 0 : index
    %c4 = arith.constant 4 : index
    %130 = vector.load %arg4[%c0_36, %c4] : memref<16x53xf32, #tpu.memory_space<vmem>>, vector<8x1xf32>
    %131 = vector.broadcast %129 : vector<8x1xf32> to vector<8x128xf32>
    %132 = arith.mulf %131, %108 : vector<8x128xf32>
    %133 = math.sin %132 : vector<8x128xf32>
    %134 = arith.mulf %133, %133 : vector<8x128xf32>
    %135 = vector.broadcast %130 : vector<8x1xf32> to vector<8x128xf32>
    %136 = arith.mulf %135, %134 : vector<8x128xf32>
    %137 = arith.addf %108, %136 : vector<8x128xf32>
    %138 = vector.broadcast %128 : vector<1x128xf32> to vector<8x128xf32>
    %139 = arith.mulf %137, %138 : vector<8x128xf32>
    %c0_37 = arith.constant 0 : index
    %c120 = arith.constant 120 : index
    %140 = vector.load %arg3[%c0_37, %c120] : memref<16x720xbf16, #tpu.memory_space<vmem>>, vector<8x24xbf16>
    %c0_38 = arith.constant 0 : index
    %c2 = arith.constant 2 : index
    %141 = vector.load %arg4[%c0_38, %c2] : memref<16x53xf32, #tpu.memory_space<vmem>>, vector<8x1xf32>
    %142 = vector.extract_strided_slice %139 {offsets = [0, 0], sizes = [8, 64], strides = [1, 1]} : vector<8x128xf32> to vector<8x64xf32>
    %143 = vector.extract_strided_slice %139 {offsets = [0, 64], sizes = [8, 64], strides = [1, 1]} : vector<8x128xf32> to vector<8x64xf32>
    %144 = vector.extract_strided_slice %142 {offsets = [0, 32], sizes = [8, 32], strides = [1, 1]} : vector<8x64xf32> to vector<8x32xf32>
    %cst_39 = arith.constant 0.000000e+00 : f32
    %145 = vector.broadcast %cst_39 : f32 to vector<8x1xf32>
    %146 = vector.extract_strided_slice %144 {offsets = [0, 0], sizes = [8, 31], strides = [1, 1]} : vector<8x32xf32> to vector<8x31xf32>
    %147 = tpu.concatenate %145, %146 in 1 : vector<8x1xf32>, vector<8x31xf32> -> vector<8x32xf32>
    %148 = vector.extract_strided_slice %142 {offsets = [0, 0], sizes = [8, 32], strides = [1, 1]} : vector<8x64xf32> to vector<8x32xf32>
    %149 = tpu.concatenate %147, %148 in 1 : vector<8x32xf32>, vector<8x32xf32> -> vector<8x64xf32>
    %150 = vector.extract_strided_slice %142 {offsets = [0, 32], sizes = [8, 32], strides = [1, 1]} : vector<8x64xf32> to vector<8x32xf32>
    %151 = vector.extract_strided_slice %142 {offsets = [0, 0], sizes = [8, 32], strides = [1, 1]} : vector<8x64xf32> to vector<8x32xf32>
    %cst_40 = arith.constant 0.000000e+00 : f32
    %152 = vector.broadcast %cst_40 : f32 to vector<8x1xf32>
    %153 = vector.extract_strided_slice %151 {offsets = [0, 1], sizes = [8, 31], strides = [1, 1]} : vector<8x32xf32> to vector<8x31xf32>
    %154 = tpu.concatenate %153, %152 in 1 : vector<8x31xf32>, vector<8x1xf32> -> vector<8x32xf32>
    %155 = tpu.concatenate %150, %154 in 1 : vector<8x32xf32>, vector<8x32xf32> -> vector<8x64xf32>
    %156 = tpu.concatenate %149, %142, %155 in 0 : vector<8x64xf32>, vector<8x64xf32>, vector<8x64xf32> -> vector<24x64xf32>
    %157 = vector.extract_strided_slice %143 {offsets = [0, 32], sizes = [8, 32], strides = [1, 1]} : vector<8x64xf32> to vector<8x32xf32>
    %cst_41 = arith.constant 0.000000e+00 : f32
    %158 = vector.broadcast %cst_41 : f32 to vector<8x1xf32>
    %159 = vector.extract_strided_slice %157 {offsets = [0, 0], sizes = [8, 31], strides = [1, 1]} : vector<8x32xf32> to vector<8x31xf32>
    %160 = tpu.concatenate %158, %159 in 1 : vector<8x1xf32>, vector<8x31xf32> -> vector<8x32xf32>
    %161 = vector.extract_strided_slice %143 {offsets = [0, 0], sizes = [8, 32], strides = [1, 1]} : vector<8x64xf32> to vector<8x32xf32>
    %162 = tpu.concatenate %160, %161 in 1 : vector<8x32xf32>, vector<8x32xf32> -> vector<8x64xf32>
    %163 = vector.extract_strided_slice %143 {offsets = [0, 32], sizes = [8, 32], strides = [1, 1]} : vector<8x64xf32> to vector<8x32xf32>
    %164 = vector.extract_strided_slice %143 {offsets = [0, 0], sizes = [8, 32], strides = [1, 1]} : vector<8x64xf32> to vector<8x32xf32>
    %cst_42 = arith.constant 0.000000e+00 : f32
    %165 = vector.broadcast %cst_42 : f32 to vector<8x1xf32>
    %166 = vector.extract_strided_slice %164 {offsets = [0, 1], sizes = [8, 31], strides = [1, 1]} : vector<8x32xf32> to vector<8x31xf32>
    %167 = tpu.concatenate %166, %165 in 1 : vector<8x31xf32>, vector<8x1xf32> -> vector<8x32xf32>
    %168 = tpu.concatenate %163, %167 in 1 : vector<8x32xf32>, vector<8x32xf32> -> vector<8x64xf32>
    %169 = tpu.concatenate %162, %143, %168 in 0 : vector<8x64xf32>, vector<8x64xf32>, vector<8x64xf32> -> vector<24x64xf32>
    %170 = tpu.concatenate %156, %169 in 1 : vector<24x64xf32>, vector<24x64xf32> -> vector<24x128xf32>
    %171 = arith.truncf %170 : vector<24x128xf32> to vector<24x128xbf16>
    %cst_43 = arith.constant dense<0.000000e+00> : vector<8x128xf32>
    %172 = tpu.matmul %140, %171, %cst_43 {dimension_numbers = #tpu.dot_dimension_numbers<[1], [0], [0], [1], [0, 0, 1, 1], [], []>} : vector<8x24xbf16>, vector<24x128xbf16>, vector<8x128xf32> -> vector<8x128xf32>
    %173 = vector.broadcast %141 : vector<8x1xf32> to vector<8x128xf32>
    %174 = arith.addf %172, %173 : vector<8x128xf32>
    %175 = vector.broadcast %128 : vector<1x128xf32> to vector<8x128xf32>
    %176 = arith.mulf %174, %175 : vector<8x128xf32>
    %c0_44 = arith.constant 0 : index
    %c6 = arith.constant 6 : index
    %177 = vector.load %arg4[%c0_44, %c6] : memref<16x53xf32, #tpu.memory_space<vmem>>, vector<8x1xf32>
    %c0_45 = arith.constant 0 : index
    %c7 = arith.constant 7 : index
    %178 = vector.load %arg4[%c0_45, %c7] : memref<16x53xf32, #tpu.memory_space<vmem>>, vector<8x1xf32>
    %179 = vector.broadcast %177 : vector<8x1xf32> to vector<8x128xf32>
    %180 = arith.mulf %179, %176 : vector<8x128xf32>
    %181 = math.sin %180 : vector<8x128xf32>
    %182 = arith.mulf %181, %181 : vector<8x128xf32>
    %183 = vector.broadcast %178 : vector<8x1xf32> to vector<8x128xf32>
    %184 = arith.mulf %183, %182 : vector<8x128xf32>
    %185 = arith.addf %176, %184 : vector<8x128xf32>
    %186 = vector.broadcast %128 : vector<1x128xf32> to vector<8x128xf32>
    %187 = arith.mulf %185, %186 : vector<8x128xf32>
    %c0_46 = arith.constant 0 : index
    %c144 = arith.constant 144 : index
    %188 = vector.load %arg3[%c0_46, %c144] : memref<16x720xbf16, #tpu.memory_space<vmem>>, vector<8x24xbf16>
    %c0_47 = arith.constant 0 : index
    %c5 = arith.constant 5 : index
    %189 = vector.load %arg4[%c0_47, %c5] : memref<16x53xf32, #tpu.memory_space<vmem>>, vector<8x1xf32>
    %190 = vector.extract_strided_slice %187 {offsets = [0, 0], sizes = [8, 64], strides = [1, 1]} : vector<8x128xf32> to vector<8x64xf32>
    %191 = vector.extract_strided_slice %187 {offsets = [0, 64], sizes = [8, 64], strides = [1, 1]} : vector<8x128xf32> to vector<8x64xf32>
    %192 = vector.extract_strided_slice %190 {offsets = [0, 32], sizes = [8, 32], strides = [1, 1]} : vector<8x64xf32> to vector<8x32xf32>
    %cst_48 = arith.constant 0.000000e+00 : f32
    %193 = vector.broadcast %cst_48 : f32 to vector<8x1xf32>
    %194 = vector.extract_strided_slice %192 {offsets = [0, 0], sizes = [8, 31], strides = [1, 1]} : vector<8x32xf32> to vector<8x31xf32>
    %195 = tpu.concatenate %193, %194 in 1 : vector<8x1xf32>, vector<8x31xf32> -> vector<8x32xf32>
    %196 = vector.extract_strided_slice %190 {offsets = [0, 0], sizes = [8, 32], strides = [1, 1]} : vector<8x64xf32> to vector<8x32xf32>
    %197 = tpu.concatenate %195, %196 in 1 : vector<8x32xf32>, vector<8x32xf32> -> vector<8x64xf32>
    %198 = vector.extract_strided_slice %190 {offsets = [0, 32], sizes = [8, 32], strides = [1, 1]} : vector<8x64xf32> to vector<8x32xf32>
    %199 = vector.extract_strided_slice %190 {offsets = [0, 0], sizes = [8, 32], strides = [1, 1]} : vector<8x64xf32> to vector<8x32xf32>
    %cst_49 = arith.constant 0.000000e+00 : f32
    %200 = vector.broadcast %cst_49 : f32 to vector<8x1xf32>
    %201 = vector.extract_strided_slice %199 {offsets = [0, 1], sizes = [8, 31], strides = [1, 1]} : vector<8x32xf32> to vector<8x31xf32>
    %202 = tpu.concatenate %201, %200 in 1 : vector<8x31xf32>, vector<8x1xf32> -> vector<8x32xf32>
    %203 = tpu.concatenate %198, %202 in 1 : vector<8x32xf32>, vector<8x32xf32> -> vector<8x64xf32>
    %204 = tpu.concatenate %197, %190, %203 in 0 : vector<8x64xf32>, vector<8x64xf32>, vector<8x64xf32> -> vector<24x64xf32>
    %205 = vector.extract_strided_slice %191 {offsets = [0, 32], sizes = [8, 32], strides = [1, 1]} : vector<8x64xf32> to vector<8x32xf32>
    %cst_50 = arith.constant 0.000000e+00 : f32
    %206 = vector.broadcast %cst_50 : f32 to vector<8x1xf32>
    %207 = vector.extract_strided_slice %205 {offsets = [0, 0], sizes = [8, 31], strides = [1, 1]} : vector<8x32xf32> to vector<8x31xf32>
    %208 = tpu.concatenate %206, %207 in 1 : vector<8x1xf32>, vector<8x31xf32> -> vector<8x32xf32>
    %209 = vector.extract_strided_slice %191 {offsets = [0, 0], sizes = [8, 32], strides = [1, 1]} : vector<8x64xf32> to vector<8x32xf32>
    %210 = tpu.concatenate %208, %209 in 1 : vector<8x32xf32>, vector<8x32xf32> -> vector<8x64xf32>
    %211 = vector.extract_strided_slice %191 {offsets = [0, 32], sizes = [8, 32], strides = [1, 1]} : vector<8x64xf32> to vector<8x32xf32>
    %212 = vector.extract_strided_slice %191 {offsets = [0, 0], sizes = [8, 32], strides = [1, 1]} : vector<8x64xf32> to vector<8x32xf32>
    %cst_51 = arith.constant 0.000000e+00 : f32
    %213 = vector.broadcast %cst_51 : f32 to vector<8x1xf32>
    %214 = vector.extract_strided_slice %212 {offsets = [0, 1], sizes = [8, 31], strides = [1, 1]} : vector<8x32xf32> to vector<8x31xf32>
    %215 = tpu.concatenate %214, %213 in 1 : vector<8x31xf32>, vector<8x1xf32> -> vector<8x32xf32>
    %216 = tpu.concatenate %211, %215 in 1 : vector<8x32xf32>, vector<8x32xf32> -> vector<8x64xf32>
    %217 = tpu.concatenate %210, %191, %216 in 0 : vector<8x64xf32>, vector<8x64xf32>, vector<8x64xf32> -> vector<24x64xf32>
    %218 = tpu.concatenate %204, %217 in 1 : vector<24x64xf32>, vector<24x64xf32> -> vector<24x128xf32>
    %219 = arith.truncf %218 : vector<24x128xf32> to vector<24x128xbf16>
    %cst_52 = arith.constant dense<0.000000e+00> : vector<8x128xf32>
    %220 = tpu.matmul %188, %219, %cst_52 {dimension_numbers = #tpu.dot_dimension_numbers<[1], [0], [0], [1], [0, 0, 1, 1], [], []>} : vector<8x24xbf16>, vector<24x128xbf16>, vector<8x128xf32> -> vector<8x128xf32>
    %221 = vector.broadcast %189 : vector<8x1xf32> to vector<8x128xf32>
    %222 = arith.addf %220, %221 : vector<8x128xf32>
    %223 = vector.broadcast %128 : vector<1x128xf32> to vector<8x128xf32>
    %224 = arith.mulf %222, %223 : vector<8x128xf32>
    %225 = arith.addf %224, %108 : vector<8x128xf32>
    %c0_53 = arith.constant 0 : index
    %c9 = arith.constant 9 : index
    %226 = vector.load %arg4[%c0_53, %c9] : memref<16x53xf32, #tpu.memory_space<vmem>>, vector<8x1xf32>
    %c0_54 = arith.constant 0 : index
    %c10 = arith.constant 10 : index
    %227 = vector.load %arg4[%c0_54, %c10] : memref<16x53xf32, #tpu.memory_space<vmem>>, vector<8x1xf32>
    %228 = vector.broadcast %226 : vector<8x1xf32> to vector<8x128xf32>
    %229 = arith.mulf %228, %225 : vector<8x128xf32>
    %230 = math.sin %229 : vector<8x128xf32>
    %231 = arith.mulf %230, %230 : vector<8x128xf32>
    %232 = vector.broadcast %227 : vector<8x1xf32> to vector<8x128xf32>
    %233 = arith.mulf %232, %231 : vector<8x128xf32>
    %234 = arith.addf %225, %233 : vector<8x128xf32>
    %235 = vector.broadcast %128 : vector<1x128xf32> to vector<8x128xf32>
    %236 = arith.mulf %234, %235 : vector<8x128xf32>
    %c0_55 = arith.constant 0 : index
    %c168 = arith.constant 168 : index
    %237 = vector.load %arg3[%c0_55, %c168] : memref<16x720xbf16, #tpu.memory_space<vmem>>, vector<8x24xbf16>
    %c0_56 = arith.constant 0 : index
    %c8 = arith.constant 8 : index
    %238 = vector.load %arg4[%c0_56, %c8] : memref<16x53xf32, #tpu.memory_space<vmem>>, vector<8x1xf32>
    %239 = vector.extract_strided_slice %236 {offsets = [0, 0], sizes = [8, 64], strides = [1, 1]} : vector<8x128xf32> to vector<8x64xf32>
    %240 = vector.extract_strided_slice %236 {offsets = [0, 64], sizes = [8, 64], strides = [1, 1]} : vector<8x128xf32> to vector<8x64xf32>
    %241 = vector.extract_strided_slice %239 {offsets = [0, 32], sizes = [8, 32], strides = [1, 1]} : vector<8x64xf32> to vector<8x32xf32>
    %cst_57 = arith.constant 0.000000e+00 : f32
    %242 = vector.broadcast %cst_57 : f32 to vector<8x2xf32>
    %243 = vector.extract_strided_slice %241 {offsets = [0, 0], sizes = [8, 30], strides = [1, 1]} : vector<8x32xf32> to vector<8x30xf32>
    %244 = tpu.concatenate %242, %243 in 1 : vector<8x2xf32>, vector<8x30xf32> -> vector<8x32xf32>
    %245 = vector.extract_strided_slice %239 {offsets = [0, 0], sizes = [8, 32], strides = [1, 1]} : vector<8x64xf32> to vector<8x32xf32>
    %cst_58 = arith.constant 0.000000e+00 : f32
    %246 = vector.broadcast %cst_58 : f32 to vector<8x1xf32>
    %247 = vector.extract_strided_slice %245 {offsets = [0, 0], sizes = [8, 31], strides = [1, 1]} : vector<8x32xf32> to vector<8x31xf32>
    %248 = tpu.concatenate %246, %247 in 1 : vector<8x1xf32>, vector<8x31xf32> -> vector<8x32xf32>
    %249 = tpu.concatenate %244, %248 in 1 : vector<8x32xf32>, vector<8x32xf32> -> vector<8x64xf32>
    %250 = vector.extract_strided_slice %239 {offsets = [0, 32], sizes = [8, 32], strides = [1, 1]} : vector<8x64xf32> to vector<8x32xf32>
    %cst_59 = arith.constant 0.000000e+00 : f32
    %251 = vector.broadcast %cst_59 : f32 to vector<8x1xf32>
    %252 = vector.extract_strided_slice %250 {offsets = [0, 1], sizes = [8, 31], strides = [1, 1]} : vector<8x32xf32> to vector<8x31xf32>
    %253 = tpu.concatenate %252, %251 in 1 : vector<8x31xf32>, vector<8x1xf32> -> vector<8x32xf32>
    %254 = vector.extract_strided_slice %239 {offsets = [0, 0], sizes = [8, 32], strides = [1, 1]} : vector<8x64xf32> to vector<8x32xf32>
    %cst_60 = arith.constant 0.000000e+00 : f32
    %255 = vector.broadcast %cst_60 : f32 to vector<8x2xf32>
    %256 = vector.extract_strided_slice %254 {offsets = [0, 2], sizes = [8, 30], strides = [1, 1]} : vector<8x32xf32> to vector<8x30xf32>
    %257 = tpu.concatenate %256, %255 in 1 : vector<8x30xf32>, vector<8x2xf32> -> vector<8x32xf32>
    %258 = tpu.concatenate %253, %257 in 1 : vector<8x32xf32>, vector<8x32xf32> -> vector<8x64xf32>
    %259 = tpu.concatenate %249, %239, %258 in 0 : vector<8x64xf32>, vector<8x64xf32>, vector<8x64xf32> -> vector<24x64xf32>
    %260 = vector.extract_strided_slice %240 {offsets = [0, 32], sizes = [8, 32], strides = [1, 1]} : vector<8x64xf32> to vector<8x32xf32>
    %cst_61 = arith.constant 0.000000e+00 : f32
    %261 = vector.broadcast %cst_61 : f32 to vector<8x2xf32>
    %262 = vector.extract_strided_slice %260 {offsets = [0, 0], sizes = [8, 30], strides = [1, 1]} : vector<8x32xf32> to vector<8x30xf32>
    %263 = tpu.concatenate %261, %262 in 1 : vector<8x2xf32>, vector<8x30xf32> -> vector<8x32xf32>
    %264 = vector.extract_strided_slice %240 {offsets = [0, 0], sizes = [8, 32], strides = [1, 1]} : vector<8x64xf32> to vector<8x32xf32>
    %cst_62 = arith.constant 0.000000e+00 : f32
    %265 = vector.broadcast %cst_62 : f32 to vector<8x1xf32>
    %266 = vector.extract_strided_slice %264 {offsets = [0, 0], sizes = [8, 31], strides = [1, 1]} : vector<8x32xf32> to vector<8x31xf32>
    %267 = tpu.concatenate %265, %266 in 1 : vector<8x1xf32>, vector<8x31xf32> -> vector<8x32xf32>
    %268 = tpu.concatenate %263, %267 in 1 : vector<8x32xf32>, vector<8x32xf32> -> vector<8x64xf32>
    %269 = vector.extract_strided_slice %240 {offsets = [0, 32], sizes = [8, 32], strides = [1, 1]} : vector<8x64xf32> to vector<8x32xf32>
    %cst_63 = arith.constant 0.000000e+00 : f32
    %270 = vector.broadcast %cst_63 : f32 to vector<8x1xf32>
    %271 = vector.extract_strided_slice %269 {offsets = [0, 1], sizes = [8, 31], strides = [1, 1]} : vector<8x32xf32> to vector<8x31xf32>
    %272 = tpu.concatenate %271, %270 in 1 : vector<8x31xf32>, vector<8x1xf32> -> vector<8x32xf32>
    %273 = vector.extract_strided_slice %240 {offsets = [0, 0], sizes = [8, 32], strides = [1, 1]} : vector<8x64xf32> to vector<8x32xf32>
    %cst_64 = arith.constant 0.000000e+00 : f32
    %274 = vector.broadcast %cst_64 : f32 to vector<8x2xf32>
    %275 = vector.extract_strided_slice %273 {offsets = [0, 2], sizes = [8, 30], strides = [1, 1]} : vector<8x32xf32> to vector<8x30xf32>
    %276 = tpu.concatenate %275, %274 in 1 : vector<8x30xf32>, vector<8x2xf32> -> vector<8x32xf32>
    %277 = tpu.concatenate %272, %276 in 1 : vector<8x32xf32>, vector<8x32xf32> -> vector<8x64xf32>
    %278 = tpu.concatenate %268, %240, %277 in 0 : vector<8x64xf32>, vector<8x64xf32>, vector<8x64xf32> -> vector<24x64xf32>
    %279 = tpu.concatenate %259, %278 in 1 : vector<24x64xf32>, vector<24x64xf32> -> vector<24x128xf32>
    %280 = arith.truncf %279 : vector<24x128xf32> to vector<24x128xbf16>
    %cst_65 = arith.constant dense<0.000000e+00> : vector<8x128xf32>
    %281 = tpu.matmul %237, %280, %cst_65 {dimension_numbers = #tpu.dot_dimension_numbers<[1], [0], [0], [1], [0, 0, 1, 1], [], []>} : vector<8x24xbf16>, vector<24x128xbf16>, vector<8x128xf32> -> vector<8x128xf32>
    %282 = vector.broadcast %238 : vector<8x1xf32> to vector<8x128xf32>
    %283 = arith.addf %281, %282 : vector<8x128xf32>
    %284 = vector.broadcast %128 : vector<1x128xf32> to vector<8x128xf32>
    %285 = arith.mulf %283, %284 : vector<8x128xf32>
    %c0_66 = arith.constant 0 : index
    %c12 = arith.constant 12 : index
    %286 = vector.load %arg4[%c0_66, %c12] : memref<16x53xf32, #tpu.memory_space<vmem>>, vector<8x1xf32>
    %c0_67 = arith.constant 0 : index
    %c13 = arith.constant 13 : index
    %287 = vector.load %arg4[%c0_67, %c13] : memref<16x53xf32, #tpu.memory_space<vmem>>, vector<8x1xf32>
    %288 = vector.broadcast %286 : vector<8x1xf32> to vector<8x128xf32>
    %289 = arith.mulf %288, %285 : vector<8x128xf32>
    %290 = math.sin %289 : vector<8x128xf32>
    %291 = arith.mulf %290, %290 : vector<8x128xf32>
    %292 = vector.broadcast %287 : vector<8x1xf32> to vector<8x128xf32>
    %293 = arith.mulf %292, %291 : vector<8x128xf32>
    %294 = arith.addf %285, %293 : vector<8x128xf32>
    %295 = vector.broadcast %128 : vector<1x128xf32> to vector<8x128xf32>
    %296 = arith.mulf %294, %295 : vector<8x128xf32>
    %c0_68 = arith.constant 0 : index
    %c192 = arith.constant 192 : index
    %297 = vector.load %arg3[%c0_68, %c192] : memref<16x720xbf16, #tpu.memory_space<vmem>>, vector<8x24xbf16>
    %c0_69 = arith.constant 0 : index
    %c11 = arith.constant 11 : index
    %298 = vector.load %arg4[%c0_69, %c11] : memref<16x53xf32, #tpu.memory_space<vmem>>, vector<8x1xf32>
    %299 = vector.extract_strided_slice %296 {offsets = [0, 0], sizes = [8, 64], strides = [1, 1]} : vector<8x128xf32> to vector<8x64xf32>
    %300 = vector.extract_strided_slice %296 {offsets = [0, 64], sizes = [8, 64], strides = [1, 1]} : vector<8x128xf32> to vector<8x64xf32>
    %301 = vector.extract_strided_slice %299 {offsets = [0, 32], sizes = [8, 32], strides = [1, 1]} : vector<8x64xf32> to vector<8x32xf32>
    %cst_70 = arith.constant 0.000000e+00 : f32
    %302 = vector.broadcast %cst_70 : f32 to vector<8x1xf32>
    %303 = vector.extract_strided_slice %301 {offsets = [0, 0], sizes = [8, 31], strides = [1, 1]} : vector<8x32xf32> to vector<8x31xf32>
    %304 = tpu.concatenate %302, %303 in 1 : vector<8x1xf32>, vector<8x31xf32> -> vector<8x32xf32>
    %305 = vector.extract_strided_slice %299 {offsets = [0, 0], sizes = [8, 32], strides = [1, 1]} : vector<8x64xf32> to vector<8x32xf32>
    %306 = tpu.concatenate %304, %305 in 1 : vector<8x32xf32>, vector<8x32xf32> -> vector<8x64xf32>
    %307 = vector.extract_strided_slice %299 {offsets = [0, 32], sizes = [8, 32], strides = [1, 1]} : vector<8x64xf32> to vector<8x32xf32>
    %308 = vector.extract_strided_slice %299 {offsets = [0, 0], sizes = [8, 32], strides = [1, 1]} : vector<8x64xf32> to vector<8x32xf32>
    %cst_71 = arith.constant 0.000000e+00 : f32
    %309 = vector.broadcast %cst_71 : f32 to vector<8x1xf32>
    %310 = vector.extract_strided_slice %308 {offsets = [0, 1], sizes = [8, 31], strides = [1, 1]} : vector<8x32xf32> to vector<8x31xf32>
    %311 = tpu.concatenate %310, %309 in 1 : vector<8x31xf32>, vector<8x1xf32> -> vector<8x32xf32>
    %312 = tpu.concatenate %307, %311 in 1 : vector<8x32xf32>, vector<8x32xf32> -> vector<8x64xf32>
    %313 = tpu.concatenate %306, %299, %312 in 0 : vector<8x64xf32>, vector<8x64xf32>, vector<8x64xf32> -> vector<24x64xf32>
    %314 = vector.extract_strided_slice %300 {offsets = [0, 32], sizes = [8, 32], strides = [1, 1]} : vector<8x64xf32> to vector<8x32xf32>
    %cst_72 = arith.constant 0.000000e+00 : f32
    %315 = vector.broadcast %cst_72 : f32 to vector<8x1xf32>
    %316 = vector.extract_strided_slice %314 {offsets = [0, 0], sizes = [8, 31], strides = [1, 1]} : vector<8x32xf32> to vector<8x31xf32>
    %317 = tpu.concatenate %315, %316 in 1 : vector<8x1xf32>, vector<8x31xf32> -> vector<8x32xf32>
    %318 = vector.extract_strided_slice %300 {offsets = [0, 0], sizes = [8, 32], strides = [1, 1]} : vector<8x64xf32> to vector<8x32xf32>
    %319 = tpu.concatenate %317, %318 in 1 : vector<8x32xf32>, vector<8x32xf32> -> vector<8x64xf32>
    %320 = vector.extract_strided_slice %300 {offsets = [0, 32], sizes = [8, 32], strides = [1, 1]} : vector<8x64xf32> to vector<8x32xf32>
    %321 = vector.extract_strided_slice %300 {offsets = [0, 0], sizes = [8, 32], strides = [1, 1]} : vector<8x64xf32> to vector<8x32xf32>
    %cst_73 = arith.constant 0.000000e+00 : f32
    %322 = vector.broadcast %cst_73 : f32 to vector<8x1xf32>
    %323 = vector.extract_strided_slice %321 {offsets = [0, 1], sizes = [8, 31], strides = [1, 1]} : vector<8x32xf32> to vector<8x31xf32>
    %324 = tpu.concatenate %323, %322 in 1 : vector<8x31xf32>, vector<8x1xf32> -> vector<8x32xf32>
    %325 = tpu.concatenate %320, %324 in 1 : vector<8x32xf32>, vector<8x32xf32> -> vector<8x64xf32>
    %326 = tpu.concatenate %319, %300, %325 in 0 : vector<8x64xf32>, vector<8x64xf32>, vector<8x64xf32> -> vector<24x64xf32>
    %327 = tpu.concatenate %313, %326 in 1 : vector<24x64xf32>, vector<24x64xf32> -> vector<24x128xf32>
    %328 = arith.truncf %327 : vector<24x128xf32> to vector<24x128xbf16>
    %cst_74 = arith.constant dense<0.000000e+00> : vector<8x128xf32>
    %329 = tpu.matmul %297, %328, %cst_74 {dimension_numbers = #tpu.dot_dimension_numbers<[1], [0], [0], [1], [0, 0, 1, 1], [], []>} : vector<8x24xbf16>, vector<24x128xbf16>, vector<8x128xf32> -> vector<8x128xf32>
    %330 = vector.broadcast %298 : vector<8x1xf32> to vector<8x128xf32>
    %331 = arith.addf %329, %330 : vector<8x128xf32>
    %332 = vector.broadcast %128 : vector<1x128xf32> to vector<8x128xf32>
    %333 = arith.mulf %331, %332 : vector<8x128xf32>
    %334 = arith.addf %333, %225 : vector<8x128xf32>
    %335 = vector.broadcast %128 : vector<1x128xf32> to vector<8x128xf32>
    %336 = arith.mulf %334, %335 : vector<8x128xf32>
    %c0_75 = arith.constant 0 : index
    %c15 = arith.constant 15 : index
    %337 = vector.load %arg4[%c0_75, %c15] : memref<16x53xf32, #tpu.memory_space<vmem>>, vector<8x1xf32>
    %c0_76 = arith.constant 0 : index
    %c16 = arith.constant 16 : index
    %338 = vector.load %arg4[%c0_76, %c16] : memref<16x53xf32, #tpu.memory_space<vmem>>, vector<8x1xf32>
    %339 = vector.broadcast %337 : vector<8x1xf32> to vector<8x128xf32>
    %340 = arith.mulf %339, %108 : vector<8x128xf32>
    %341 = math.sin %340 : vector<8x128xf32>
    %342 = arith.mulf %341, %341 : vector<8x128xf32>
    %343 = vector.broadcast %338 : vector<8x1xf32> to vector<8x128xf32>
    %344 = arith.mulf %343, %342 : vector<8x128xf32>
    %345 = arith.addf %108, %344 : vector<8x128xf32>
    %346 = vector.broadcast %128 : vector<1x128xf32> to vector<8x128xf32>
    %347 = arith.mulf %345, %346 : vector<8x128xf32>
    %c0_77 = arith.constant 0 : index
    %c216 = arith.constant 216 : index
    %348 = vector.load %arg3[%c0_77, %c216] : memref<16x720xbf16, #tpu.memory_space<vmem>>, vector<8x40xbf16>
    %c0_78 = arith.constant 0 : index
    %c14 = arith.constant 14 : index
    %349 = vector.load %arg4[%c0_78, %c14] : memref<16x53xf32, #tpu.memory_space<vmem>>, vector<8x1xf32>
    %350 = vector.extract_strided_slice %347 {offsets = [0, 0], sizes = [8, 64], strides = [1, 1]} : vector<8x128xf32> to vector<8x64xf32>
    %351 = vector.extract_strided_slice %347 {offsets = [0, 64], sizes = [8, 64], strides = [1, 1]} : vector<8x128xf32> to vector<8x64xf32>
    %352 = vector.extract_strided_slice %350 {offsets = [0, 0], sizes = [8, 32], strides = [1, 1]} : vector<8x64xf32> to vector<8x32xf32>
    %cst_79 = arith.constant 0.000000e+00 : f32
    %353 = vector.broadcast %cst_79 : f32 to vector<8x1xf32>
    %354 = vector.extract_strided_slice %352 {offsets = [0, 0], sizes = [8, 31], strides = [1, 1]} : vector<8x32xf32> to vector<8x31xf32>
    %355 = tpu.concatenate %353, %354 in 1 : vector<8x1xf32>, vector<8x31xf32> -> vector<8x32xf32>
    %356 = vector.extract_strided_slice %350 {offsets = [0, 32], sizes = [8, 32], strides = [1, 1]} : vector<8x64xf32> to vector<8x32xf32>
    %cst_80 = arith.constant 0.000000e+00 : f32
    %357 = vector.broadcast %cst_80 : f32 to vector<8x1xf32>
    %358 = vector.extract_strided_slice %356 {offsets = [0, 0], sizes = [8, 31], strides = [1, 1]} : vector<8x32xf32> to vector<8x31xf32>
    %359 = tpu.concatenate %357, %358 in 1 : vector<8x1xf32>, vector<8x31xf32> -> vector<8x32xf32>
    %360 = tpu.concatenate %355, %359 in 1 : vector<8x32xf32>, vector<8x32xf32> -> vector<8x64xf32>
    %361 = vector.extract_strided_slice %350 {offsets = [0, 32], sizes = [8, 32], strides = [1, 1]} : vector<8x64xf32> to vector<8x32xf32>
    %cst_81 = arith.constant 0.000000e+00 : f32
    %362 = vector.broadcast %cst_81 : f32 to vector<8x1xf32>
    %363 = vector.extract_strided_slice %361 {offsets = [0, 0], sizes = [8, 31], strides = [1, 1]} : vector<8x32xf32> to vector<8x31xf32>
    %364 = tpu.concatenate %362, %363 in 1 : vector<8x1xf32>, vector<8x31xf32> -> vector<8x32xf32>
    %365 = vector.extract_strided_slice %350 {offsets = [0, 0], sizes = [8, 32], strides = [1, 1]} : vector<8x64xf32> to vector<8x32xf32>
    %366 = tpu.concatenate %364, %365 in 1 : vector<8x32xf32>, vector<8x32xf32> -> vector<8x64xf32>
    %367 = vector.extract_strided_slice %350 {offsets = [0, 32], sizes = [8, 32], strides = [1, 1]} : vector<8x64xf32> to vector<8x32xf32>
    %368 = vector.extract_strided_slice %350 {offsets = [0, 0], sizes = [8, 32], strides = [1, 1]} : vector<8x64xf32> to vector<8x32xf32>
    %cst_82 = arith.constant 0.000000e+00 : f32
    %369 = vector.broadcast %cst_82 : f32 to vector<8x1xf32>
    %370 = vector.extract_strided_slice %368 {offsets = [0, 1], sizes = [8, 31], strides = [1, 1]} : vector<8x32xf32> to vector<8x31xf32>
    %371 = tpu.concatenate %370, %369 in 1 : vector<8x31xf32>, vector<8x1xf32> -> vector<8x32xf32>
    %372 = tpu.concatenate %367, %371 in 1 : vector<8x32xf32>, vector<8x32xf32> -> vector<8x64xf32>
    %373 = vector.extract_strided_slice %350 {offsets = [0, 0], sizes = [8, 32], strides = [1, 1]} : vector<8x64xf32> to vector<8x32xf32>
    %cst_83 = arith.constant 0.000000e+00 : f32
    %374 = vector.broadcast %cst_83 : f32 to vector<8x1xf32>
    %375 = vector.extract_strided_slice %373 {offsets = [0, 1], sizes = [8, 31], strides = [1, 1]} : vector<8x32xf32> to vector<8x31xf32>
    %376 = tpu.concatenate %375, %374 in 1 : vector<8x31xf32>, vector<8x1xf32> -> vector<8x32xf32>
    %377 = vector.extract_strided_slice %350 {offsets = [0, 32], sizes = [8, 32], strides = [1, 1]} : vector<8x64xf32> to vector<8x32xf32>
    %cst_84 = arith.constant 0.000000e+00 : f32
    %378 = vector.broadcast %cst_84 : f32 to vector<8x1xf32>
    %379 = vector.extract_strided_slice %377 {offsets = [0, 1], sizes = [8, 31], strides = [1, 1]} : vector<8x32xf32> to vector<8x31xf32>
    %380 = tpu.concatenate %379, %378 in 1 : vector<8x31xf32>, vector<8x1xf32> -> vector<8x32xf32>
    %381 = tpu.concatenate %376, %380 in 1 : vector<8x32xf32>, vector<8x32xf32> -> vector<8x64xf32>
    %382 = tpu.concatenate %360, %366, %350, %372, %381 in 0 : vector<8x64xf32>, vector<8x64xf32>, vector<8x64xf32>, vector<8x64xf32>, vector<8x64xf32> -> vector<40x64xf32>
    %383 = vector.extract_strided_slice %351 {offsets = [0, 0], sizes = [8, 32], strides = [1, 1]} : vector<8x64xf32> to vector<8x32xf32>
    %cst_85 = arith.constant 0.000000e+00 : f32
    %384 = vector.broadcast %cst_85 : f32 to vector<8x1xf32>
    %385 = vector.extract_strided_slice %383 {offsets = [0, 0], sizes = [8, 31], strides = [1, 1]} : vector<8x32xf32> to vector<8x31xf32>
    %386 = tpu.concatenate %384, %385 in 1 : vector<8x1xf32>, vector<8x31xf32> -> vector<8x32xf32>
    %387 = vector.extract_strided_slice %351 {offsets = [0, 32], sizes = [8, 32], strides = [1, 1]} : vector<8x64xf32> to vector<8x32xf32>
    %cst_86 = arith.constant 0.000000e+00 : f32
    %388 = vector.broadcast %cst_86 : f32 to vector<8x1xf32>
    %389 = vector.extract_strided_slice %387 {offsets = [0, 0], sizes = [8, 31], strides = [1, 1]} : vector<8x32xf32> to vector<8x31xf32>
    %390 = tpu.concatenate %388, %389 in 1 : vector<8x1xf32>, vector<8x31xf32> -> vector<8x32xf32>
    %391 = tpu.concatenate %386, %390 in 1 : vector<8x32xf32>, vector<8x32xf32> -> vector<8x64xf32>
    %392 = vector.extract_strided_slice %351 {offsets = [0, 32], sizes = [8, 32], strides = [1, 1]} : vector<8x64xf32> to vector<8x32xf32>
    %cst_87 = arith.constant 0.000000e+00 : f32
    %393 = vector.broadcast %cst_87 : f32 to vector<8x1xf32>
    %394 = vector.extract_strided_slice %392 {offsets = [0, 0], sizes = [8, 31], strides = [1, 1]} : vector<8x32xf32> to vector<8x31xf32>
    %395 = tpu.concatenate %393, %394 in 1 : vector<8x1xf32>, vector<8x31xf32> -> vector<8x32xf32>
    %396 = vector.extract_strided_slice %351 {offsets = [0, 0], sizes = [8, 32], strides = [1, 1]} : vector<8x64xf32> to vector<8x32xf32>
    %397 = tpu.concatenate %395, %396 in 1 : vector<8x32xf32>, vector<8x32xf32> -> vector<8x64xf32>
    %398 = vector.extract_strided_slice %351 {offsets = [0, 32], sizes = [8, 32], strides = [1, 1]} : vector<8x64xf32> to vector<8x32xf32>
    %399 = vector.extract_strided_slice %351 {offsets = [0, 0], sizes = [8, 32], strides = [1, 1]} : vector<8x64xf32> to vector<8x32xf32>
    %cst_88 = arith.constant 0.000000e+00 : f32
    %400 = vector.broadcast %cst_88 : f32 to vector<8x1xf32>
    %401 = vector.extract_strided_slice %399 {offsets = [0, 1], sizes = [8, 31], strides = [1, 1]} : vector<8x32xf32> to vector<8x31xf32>
    %402 = tpu.concatenate %401, %400 in 1 : vector<8x31xf32>, vector<8x1xf32> -> vector<8x32xf32>
    %403 = tpu.concatenate %398, %402 in 1 : vector<8x32xf32>, vector<8x32xf32> -> vector<8x64xf32>
    %404 = vector.extract_strided_slice %351 {offsets = [0, 0], sizes = [8, 32], strides = [1, 1]} : vector<8x64xf32> to vector<8x32xf32>
    %cst_89 = arith.constant 0.000000e+00 : f32
    %405 = vector.broadcast %cst_89 : f32 to vector<8x1xf32>
    %406 = vector.extract_strided_slice %404 {offsets = [0, 1], sizes = [8, 31], strides = [1, 1]} : vector<8x32xf32> to vector<8x31xf32>
    %407 = tpu.concatenate %406, %405 in 1 : vector<8x31xf32>, vector<8x1xf32> -> vector<8x32xf32>
    %408 = vector.extract_strided_slice %351 {offsets = [0, 32], sizes = [8, 32], strides = [1, 1]} : vector<8x64xf32> to vector<8x32xf32>
    %cst_90 = arith.constant 0.000000e+00 : f32
    %409 = vector.broadcast %cst_90 : f32 to vector<8x1xf32>
    %410 = vector.extract_strided_slice %408 {offsets = [0, 1], sizes = [8, 31], strides = [1, 1]} : vector<8x32xf32> to vector<8x31xf32>
    %411 = tpu.concatenate %410, %409 in 1 : vector<8x31xf32>, vector<8x1xf32> -> vector<8x32xf32>
    %412 = tpu.concatenate %407, %411 in 1 : vector<8x32xf32>, vector<8x32xf32> -> vector<8x64xf32>
    %413 = tpu.concatenate %391, %397, %351, %403, %412 in 0 : vector<8x64xf32>, vector<8x64xf32>, vector<8x64xf32>, vector<8x64xf32>, vector<8x64xf32> -> vector<40x64xf32>
    %414 = tpu.concatenate %382, %413 in 1 : vector<40x64xf32>, vector<40x64xf32> -> vector<40x128xf32>
    %415 = arith.truncf %414 : vector<40x128xf32> to vector<40x128xbf16>
    %cst_91 = arith.constant dense<0.000000e+00> : vector<8x128xf32>
    %416 = tpu.matmul %348, %415, %cst_91 {dimension_numbers = #tpu.dot_dimension_numbers<[1], [0], [0], [1], [0, 0, 1, 1], [], []>} : vector<8x40xbf16>, vector<40x128xbf16>, vector<8x128xf32> -> vector<8x128xf32>
    %417 = vector.broadcast %349 : vector<8x1xf32> to vector<8x128xf32>
    %418 = arith.addf %416, %417 : vector<8x128xf32>
    %419 = vector.broadcast %128 : vector<1x128xf32> to vector<8x128xf32>
    %420 = arith.mulf %418, %419 : vector<8x128xf32>
    %c0_92 = arith.constant 0 : index
    %c18 = arith.constant 18 : index
    %421 = vector.load %arg4[%c0_92, %c18] : memref<16x53xf32, #tpu.memory_space<vmem>>, vector<8x1xf32>
    %c0_93 = arith.constant 0 : index
    %c19 = arith.constant 19 : index
    %422 = vector.load %arg4[%c0_93, %c19] : memref<16x53xf32, #tpu.memory_space<vmem>>, vector<8x1xf32>
    %423 = vector.broadcast %421 : vector<8x1xf32> to vector<8x128xf32>
    %424 = arith.mulf %423, %420 : vector<8x128xf32>
    %425 = math.sin %424 : vector<8x128xf32>
    %426 = arith.mulf %425, %425 : vector<8x128xf32>
    %427 = vector.broadcast %422 : vector<8x1xf32> to vector<8x128xf32>
    %428 = arith.mulf %427, %426 : vector<8x128xf32>
    %429 = arith.addf %420, %428 : vector<8x128xf32>
    %430 = vector.broadcast %128 : vector<1x128xf32> to vector<8x128xf32>
    %431 = arith.mulf %429, %430 : vector<8x128xf32>
    %c0_94 = arith.constant 0 : index
    %c256 = arith.constant 256 : index
    %432 = vector.load %arg3[%c0_94, %c256] : memref<16x720xbf16, #tpu.memory_space<vmem>>, vector<8x40xbf16>
    %c0_95 = arith.constant 0 : index
    %c17 = arith.constant 17 : index
    %433 = vector.load %arg4[%c0_95, %c17] : memref<16x53xf32, #tpu.memory_space<vmem>>, vector<8x1xf32>
    %434 = vector.extract_strided_slice %431 {offsets = [0, 0], sizes = [8, 64], strides = [1, 1]} : vector<8x128xf32> to vector<8x64xf32>
    %435 = vector.extract_strided_slice %431 {offsets = [0, 64], sizes = [8, 64], strides = [1, 1]} : vector<8x128xf32> to vector<8x64xf32>
    %436 = vector.extract_strided_slice %434 {offsets = [0, 0], sizes = [8, 32], strides = [1, 1]} : vector<8x64xf32> to vector<8x32xf32>
    %cst_96 = arith.constant 0.000000e+00 : f32
    %437 = vector.broadcast %cst_96 : f32 to vector<8x1xf32>
    %438 = vector.extract_strided_slice %436 {offsets = [0, 0], sizes = [8, 31], strides = [1, 1]} : vector<8x32xf32> to vector<8x31xf32>
    %439 = tpu.concatenate %437, %438 in 1 : vector<8x1xf32>, vector<8x31xf32> -> vector<8x32xf32>
    %440 = vector.extract_strided_slice %434 {offsets = [0, 32], sizes = [8, 32], strides = [1, 1]} : vector<8x64xf32> to vector<8x32xf32>
    %cst_97 = arith.constant 0.000000e+00 : f32
    %441 = vector.broadcast %cst_97 : f32 to vector<8x1xf32>
    %442 = vector.extract_strided_slice %440 {offsets = [0, 0], sizes = [8, 31], strides = [1, 1]} : vector<8x32xf32> to vector<8x31xf32>
    %443 = tpu.concatenate %441, %442 in 1 : vector<8x1xf32>, vector<8x31xf32> -> vector<8x32xf32>
    %444 = tpu.concatenate %439, %443 in 1 : vector<8x32xf32>, vector<8x32xf32> -> vector<8x64xf32>
    %445 = vector.extract_strided_slice %434 {offsets = [0, 32], sizes = [8, 32], strides = [1, 1]} : vector<8x64xf32> to vector<8x32xf32>
    %cst_98 = arith.constant 0.000000e+00 : f32
    %446 = vector.broadcast %cst_98 : f32 to vector<8x1xf32>
    %447 = vector.extract_strided_slice %445 {offsets = [0, 0], sizes = [8, 31], strides = [1, 1]} : vector<8x32xf32> to vector<8x31xf32>
    %448 = tpu.concatenate %446, %447 in 1 : vector<8x1xf32>, vector<8x31xf32> -> vector<8x32xf32>
    %449 = vector.extract_strided_slice %434 {offsets = [0, 0], sizes = [8, 32], strides = [1, 1]} : vector<8x64xf32> to vector<8x32xf32>
    %450 = tpu.concatenate %448, %449 in 1 : vector<8x32xf32>, vector<8x32xf32> -> vector<8x64xf32>
    %451 = vector.extract_strided_slice %434 {offsets = [0, 32], sizes = [8, 32], strides = [1, 1]} : vector<8x64xf32> to vector<8x32xf32>
    %452 = vector.extract_strided_slice %434 {offsets = [0, 0], sizes = [8, 32], strides = [1, 1]} : vector<8x64xf32> to vector<8x32xf32>
    %cst_99 = arith.constant 0.000000e+00 : f32
    %453 = vector.broadcast %cst_99 : f32 to vector<8x1xf32>
    %454 = vector.extract_strided_slice %452 {offsets = [0, 1], sizes = [8, 31], strides = [1, 1]} : vector<8x32xf32> to vector<8x31xf32>
    %455 = tpu.concatenate %454, %453 in 1 : vector<8x31xf32>, vector<8x1xf32> -> vector<8x32xf32>
    %456 = tpu.concatenate %451, %455 in 1 : vector<8x32xf32>, vector<8x32xf32> -> vector<8x64xf32>
    %457 = vector.extract_strided_slice %434 {offsets = [0, 0], sizes = [8, 32], strides = [1, 1]} : vector<8x64xf32> to vector<8x32xf32>
    %cst_100 = arith.constant 0.000000e+00 : f32
    %458 = vector.broadcast %cst_100 : f32 to vector<8x1xf32>
    %459 = vector.extract_strided_slice %457 {offsets = [0, 1], sizes = [8, 31], strides = [1, 1]} : vector<8x32xf32> to vector<8x31xf32>
    %460 = tpu.concatenate %459, %458 in 1 : vector<8x31xf32>, vector<8x1xf32> -> vector<8x32xf32>
    %461 = vector.extract_strided_slice %434 {offsets = [0, 32], sizes = [8, 32], strides = [1, 1]} : vector<8x64xf32> to vector<8x32xf32>
    %cst_101 = arith.constant 0.000000e+00 : f32
    %462 = vector.broadcast %cst_101 : f32 to vector<8x1xf32>
    %463 = vector.extract_strided_slice %461 {offsets = [0, 1], sizes = [8, 31], strides = [1, 1]} : vector<8x32xf32> to vector<8x31xf32>
    %464 = tpu.concatenate %463, %462 in 1 : vector<8x31xf32>, vector<8x1xf32> -> vector<8x32xf32>
    %465 = tpu.concatenate %460, %464 in 1 : vector<8x32xf32>, vector<8x32xf32> -> vector<8x64xf32>
    %466 = tpu.concatenate %444, %450, %434, %456, %465 in 0 : vector<8x64xf32>, vector<8x64xf32>, vector<8x64xf32>, vector<8x64xf32>, vector<8x64xf32> -> vector<40x64xf32>
    %467 = vector.extract_strided_slice %435 {offsets = [0, 0], sizes = [8, 32], strides = [1, 1]} : vector<8x64xf32> to vector<8x32xf32>
    %cst_102 = arith.constant 0.000000e+00 : f32
    %468 = vector.broadcast %cst_102 : f32 to vector<8x1xf32>
    %469 = vector.extract_strided_slice %467 {offsets = [0, 0], sizes = [8, 31], strides = [1, 1]} : vector<8x32xf32> to vector<8x31xf32>
    %470 = tpu.concatenate %468, %469 in 1 : vector<8x1xf32>, vector<8x31xf32> -> vector<8x32xf32>
    %471 = vector.extract_strided_slice %435 {offsets = [0, 32], sizes = [8, 32], strides = [1, 1]} : vector<8x64xf32> to vector<8x32xf32>
    %cst_103 = arith.constant 0.000000e+00 : f32
    %472 = vector.broadcast %cst_103 : f32 to vector<8x1xf32>
    %473 = vector.extract_strided_slice %471 {offsets = [0, 0], sizes = [8, 31], strides = [1, 1]} : vector<8x32xf32> to vector<8x31xf32>
    %474 = tpu.concatenate %472, %473 in 1 : vector<8x1xf32>, vector<8x31xf32> -> vector<8x32xf32>
    %475 = tpu.concatenate %470, %474 in 1 : vector<8x32xf32>, vector<8x32xf32> -> vector<8x64xf32>
    %476 = vector.extract_strided_slice %435 {offsets = [0, 32], sizes = [8, 32], strides = [1, 1]} : vector<8x64xf32> to vector<8x32xf32>
    %cst_104 = arith.constant 0.000000e+00 : f32
    %477 = vector.broadcast %cst_104 : f32 to vector<8x1xf32>
    %478 = vector.extract_strided_slice %476 {offsets = [0, 0], sizes = [8, 31], strides = [1, 1]} : vector<8x32xf32> to vector<8x31xf32>
    %479 = tpu.concatenate %477, %478 in 1 : vector<8x1xf32>, vector<8x31xf32> -> vector<8x32xf32>
    %480 = vector.extract_strided_slice %435 {offsets = [0, 0], sizes = [8, 32], strides = [1, 1]} : vector<8x64xf32> to vector<8x32xf32>
    %481 = tpu.concatenate %479, %480 in 1 : vector<8x32xf32>, vector<8x32xf32> -> vector<8x64xf32>
    %482 = vector.extract_strided_slice %435 {offsets = [0, 32], sizes = [8, 32], strides = [1, 1]} : vector<8x64xf32> to vector<8x32xf32>
    %483 = vector.extract_strided_slice %435 {offsets = [0, 0], sizes = [8, 32], strides = [1, 1]} : vector<8x64xf32> to vector<8x32xf32>
    %cst_105 = arith.constant 0.000000e+00 : f32
    %484 = vector.broadcast %cst_105 : f32 to vector<8x1xf32>
    %485 = vector.extract_strided_slice %483 {offsets = [0, 1], sizes = [8, 31], strides = [1, 1]} : vector<8x32xf32> to vector<8x31xf32>
    %486 = tpu.concatenate %485, %484 in 1 : vector<8x31xf32>, vector<8x1xf32> -> vector<8x32xf32>
    %487 = tpu.concatenate %482, %486 in 1 : vector<8x32xf32>, vector<8x32xf32> -> vector<8x64xf32>
    %488 = vector.extract_strided_slice %435 {offsets = [0, 0], sizes = [8, 32], strides = [1, 1]} : vector<8x64xf32> to vector<8x32xf32>
    %cst_106 = arith.constant 0.000000e+00 : f32
    %489 = vector.broadcast %cst_106 : f32 to vector<8x1xf32>
    %490 = vector.extract_strided_slice %488 {offsets = [0, 1], sizes = [8, 31], strides = [1, 1]} : vector<8x32xf32> to vector<8x31xf32>
    %491 = tpu.concatenate %490, %489 in 1 : vector<8x31xf32>, vector<8x1xf32> -> vector<8x32xf32>
    %492 = vector.extract_strided_slice %435 {offsets = [0, 32], sizes = [8, 32], strides = [1, 1]} : vector<8x64xf32> to vector<8x32xf32>
    %cst_107 = arith.constant 0.000000e+00 : f32
    %493 = vector.broadcast %cst_107 : f32 to vector<8x1xf32>
    %494 = vector.extract_strided_slice %492 {offsets = [0, 1], sizes = [8, 31], strides = [1, 1]} : vector<8x32xf32> to vector<8x31xf32>
    %495 = tpu.concatenate %494, %493 in 1 : vector<8x31xf32>, vector<8x1xf32> -> vector<8x32xf32>
    %496 = tpu.concatenate %491, %495 in 1 : vector<8x32xf32>, vector<8x32xf32> -> vector<8x64xf32>
    %497 = tpu.concatenate %475, %481, %435, %487, %496 in 0 : vector<8x64xf32>, vector<8x64xf32>, vector<8x64xf32>, vector<8x64xf32>, vector<8x64xf32> -> vector<40x64xf32>
    %498 = tpu.concatenate %466, %497 in 1 : vector<40x64xf32>, vector<40x64xf32> -> vector<40x128xf32>
    %499 = arith.truncf %498 : vector<40x128xf32> to vector<40x128xbf16>
    %cst_108 = arith.constant dense<0.000000e+00> : vector<8x128xf32>
    %500 = tpu.matmul %432, %499, %cst_108 {dimension_numbers = #tpu.dot_dimension_numbers<[1], [0], [0], [1], [0, 0, 1, 1], [], []>} : vector<8x40xbf16>, vector<40x128xbf16>, vector<8x128xf32> -> vector<8x128xf32>
    %501 = vector.broadcast %433 : vector<8x1xf32> to vector<8x128xf32>
    %502 = arith.addf %500, %501 : vector<8x128xf32>
    %503 = vector.broadcast %128 : vector<1x128xf32> to vector<8x128xf32>
    %504 = arith.mulf %502, %503 : vector<8x128xf32>
    %505 = arith.addf %504, %108 : vector<8x128xf32>
    %c0_109 = arith.constant 0 : index
    %c21 = arith.constant 21 : index
    %506 = vector.load %arg4[%c0_109, %c21] : memref<16x53xf32, #tpu.memory_space<vmem>>, vector<8x1xf32>
    %c0_110 = arith.constant 0 : index
    %c22 = arith.constant 22 : index
    %507 = vector.load %arg4[%c0_110, %c22] : memref<16x53xf32, #tpu.memory_space<vmem>>, vector<8x1xf32>
    %508 = vector.broadcast %506 : vector<8x1xf32> to vector<8x128xf32>
    %509 = arith.mulf %508, %505 : vector<8x128xf32>
    %510 = math.sin %509 : vector<8x128xf32>
    %511 = arith.mulf %510, %510 : vector<8x128xf32>
    %512 = vector.broadcast %507 : vector<8x1xf32> to vector<8x128xf32>
    %513 = arith.mulf %512, %511 : vector<8x128xf32>
    %514 = arith.addf %505, %513 : vector<8x128xf32>
    %515 = vector.broadcast %128 : vector<1x128xf32> to vector<8x128xf32>
    %516 = arith.mulf %514, %515 : vector<8x128xf32>
    %c0_111 = arith.constant 0 : index
    %c296 = arith.constant 296 : index
    %517 = vector.load %arg3[%c0_111, %c296] : memref<16x720xbf16, #tpu.memory_space<vmem>>, vector<8x40xbf16>
    %c0_112 = arith.constant 0 : index
    %c20 = arith.constant 20 : index
    %518 = vector.load %arg4[%c0_112, %c20] : memref<16x53xf32, #tpu.memory_space<vmem>>, vector<8x1xf32>
    %519 = vector.extract_strided_slice %516 {offsets = [0, 0], sizes = [8, 64], strides = [1, 1]} : vector<8x128xf32> to vector<8x64xf32>
    %520 = vector.extract_strided_slice %516 {offsets = [0, 64], sizes = [8, 64], strides = [1, 1]} : vector<8x128xf32> to vector<8x64xf32>
    %521 = vector.extract_strided_slice %519 {offsets = [0, 0], sizes = [8, 32], strides = [1, 1]} : vector<8x64xf32> to vector<8x32xf32>
    %cst_113 = arith.constant 0.000000e+00 : f32
    %522 = vector.broadcast %cst_113 : f32 to vector<8x3xf32>
    %523 = vector.extract_strided_slice %521 {offsets = [0, 0], sizes = [8, 29], strides = [1, 1]} : vector<8x32xf32> to vector<8x29xf32>
    %524 = tpu.concatenate %522, %523 in 1 : vector<8x3xf32>, vector<8x29xf32> -> vector<8x32xf32>
    %525 = vector.extract_strided_slice %519 {offsets = [0, 32], sizes = [8, 32], strides = [1, 1]} : vector<8x64xf32> to vector<8x32xf32>
    %cst_114 = arith.constant 0.000000e+00 : f32
    %526 = vector.broadcast %cst_114 : f32 to vector<8x3xf32>
    %527 = vector.extract_strided_slice %525 {offsets = [0, 0], sizes = [8, 29], strides = [1, 1]} : vector<8x32xf32> to vector<8x29xf32>
    %528 = tpu.concatenate %526, %527 in 1 : vector<8x3xf32>, vector<8x29xf32> -> vector<8x32xf32>
    %529 = tpu.concatenate %524, %528 in 1 : vector<8x32xf32>, vector<8x32xf32> -> vector<8x64xf32>
    %530 = vector.extract_strided_slice %519 {offsets = [0, 32], sizes = [8, 32], strides = [1, 1]} : vector<8x64xf32> to vector<8x32xf32>
    %cst_115 = arith.constant 0.000000e+00 : f32
    %531 = vector.broadcast %cst_115 : f32 to vector<8x2xf32>
    %532 = vector.extract_strided_slice %530 {offsets = [0, 0], sizes = [8, 30], strides = [1, 1]} : vector<8x32xf32> to vector<8x30xf32>
    %533 = tpu.concatenate %531, %532 in 1 : vector<8x2xf32>, vector<8x30xf32> -> vector<8x32xf32>
    %534 = vector.extract_strided_slice %519 {offsets = [0, 0], sizes = [8, 32], strides = [1, 1]} : vector<8x64xf32> to vector<8x32xf32>
    %cst_116 = arith.constant 0.000000e+00 : f32
    %535 = vector.broadcast %cst_116 : f32 to vector<8x1xf32>
    %536 = vector.extract_strided_slice %534 {offsets = [0, 0], sizes = [8, 31], strides = [1, 1]} : vector<8x32xf32> to vector<8x31xf32>
    %537 = tpu.concatenate %535, %536 in 1 : vector<8x1xf32>, vector<8x31xf32> -> vector<8x32xf32>
    %538 = tpu.concatenate %533, %537 in 1 : vector<8x32xf32>, vector<8x32xf32> -> vector<8x64xf32>
    %539 = vector.extract_strided_slice %519 {offsets = [0, 32], sizes = [8, 32], strides = [1, 1]} : vector<8x64xf32> to vector<8x32xf32>
    %cst_117 = arith.constant 0.000000e+00 : f32
    %540 = vector.broadcast %cst_117 : f32 to vector<8x1xf32>
    %541 = vector.extract_strided_slice %539 {offsets = [0, 1], sizes = [8, 31], strides = [1, 1]} : vector<8x32xf32> to vector<8x31xf32>
    %542 = tpu.concatenate %541, %540 in 1 : vector<8x31xf32>, vector<8x1xf32> -> vector<8x32xf32>
    %543 = vector.extract_strided_slice %519 {offsets = [0, 0], sizes = [8, 32], strides = [1, 1]} : vector<8x64xf32> to vector<8x32xf32>
    %cst_118 = arith.constant 0.000000e+00 : f32
    %544 = vector.broadcast %cst_118 : f32 to vector<8x2xf32>
    %545 = vector.extract_strided_slice %543 {offsets = [0, 2], sizes = [8, 30], strides = [1, 1]} : vector<8x32xf32> to vector<8x30xf32>
    %546 = tpu.concatenate %545, %544 in 1 : vector<8x30xf32>, vector<8x2xf32> -> vector<8x32xf32>
    %547 = tpu.concatenate %542, %546 in 1 : vector<8x32xf32>, vector<8x32xf32> -> vector<8x64xf32>
    %548 = vector.extract_strided_slice %519 {offsets = [0, 0], sizes = [8, 32], strides = [1, 1]} : vector<8x64xf32> to vector<8x32xf32>
    %cst_119 = arith.constant 0.000000e+00 : f32
    %549 = vector.broadcast %cst_119 : f32 to vector<8x3xf32>
    %550 = vector.extract_strided_slice %548 {offsets = [0, 3], sizes = [8, 29], strides = [1, 1]} : vector<8x32xf32> to vector<8x29xf32>
    %551 = tpu.concatenate %550, %549 in 1 : vector<8x29xf32>, vector<8x3xf32> -> vector<8x32xf32>
    %552 = vector.extract_strided_slice %519 {offsets = [0, 32], sizes = [8, 32], strides = [1, 1]} : vector<8x64xf32> to vector<8x32xf32>
    %cst_120 = arith.constant 0.000000e+00 : f32
    %553 = vector.broadcast %cst_120 : f32 to vector<8x3xf32>
    %554 = vector.extract_strided_slice %552 {offsets = [0, 3], sizes = [8, 29], strides = [1, 1]} : vector<8x32xf32> to vector<8x29xf32>
    %555 = tpu.concatenate %554, %553 in 1 : vector<8x29xf32>, vector<8x3xf32> -> vector<8x32xf32>
    %556 = tpu.concatenate %551, %555 in 1 : vector<8x32xf32>, vector<8x32xf32> -> vector<8x64xf32>
    %557 = tpu.concatenate %529, %538, %519, %547, %556 in 0 : vector<8x64xf32>, vector<8x64xf32>, vector<8x64xf32>, vector<8x64xf32>, vector<8x64xf32> -> vector<40x64xf32>
    %558 = vector.extract_strided_slice %520 {offsets = [0, 0], sizes = [8, 32], strides = [1, 1]} : vector<8x64xf32> to vector<8x32xf32>
    %cst_121 = arith.constant 0.000000e+00 : f32
    %559 = vector.broadcast %cst_121 : f32 to vector<8x3xf32>
    %560 = vector.extract_strided_slice %558 {offsets = [0, 0], sizes = [8, 29], strides = [1, 1]} : vector<8x32xf32> to vector<8x29xf32>
    %561 = tpu.concatenate %559, %560 in 1 : vector<8x3xf32>, vector<8x29xf32> -> vector<8x32xf32>
    %562 = vector.extract_strided_slice %520 {offsets = [0, 32], sizes = [8, 32], strides = [1, 1]} : vector<8x64xf32> to vector<8x32xf32>
    %cst_122 = arith.constant 0.000000e+00 : f32
    %563 = vector.broadcast %cst_122 : f32 to vector<8x3xf32>
    %564 = vector.extract_strided_slice %562 {offsets = [0, 0], sizes = [8, 29], strides = [1, 1]} : vector<8x32xf32> to vector<8x29xf32>
    %565 = tpu.concatenate %563, %564 in 1 : vector<8x3xf32>, vector<8x29xf32> -> vector<8x32xf32>
    %566 = tpu.concatenate %561, %565 in 1 : vector<8x32xf32>, vector<8x32xf32> -> vector<8x64xf32>
    %567 = vector.extract_strided_slice %520 {offsets = [0, 32], sizes = [8, 32], strides = [1, 1]} : vector<8x64xf32> to vector<8x32xf32>
    %cst_123 = arith.constant 0.000000e+00 : f32
    %568 = vector.broadcast %cst_123 : f32 to vector<8x2xf32>
    %569 = vector.extract_strided_slice %567 {offsets = [0, 0], sizes = [8, 30], strides = [1, 1]} : vector<8x32xf32> to vector<8x30xf32>
    %570 = tpu.concatenate %568, %569 in 1 : vector<8x2xf32>, vector<8x30xf32> -> vector<8x32xf32>
    %571 = vector.extract_strided_slice %520 {offsets = [0, 0], sizes = [8, 32], strides = [1, 1]} : vector<8x64xf32> to vector<8x32xf32>
    %cst_124 = arith.constant 0.000000e+00 : f32
    %572 = vector.broadcast %cst_124 : f32 to vector<8x1xf32>
    %573 = vector.extract_strided_slice %571 {offsets = [0, 0], sizes = [8, 31], strides = [1, 1]} : vector<8x32xf32> to vector<8x31xf32>
    %574 = tpu.concatenate %572, %573 in 1 : vector<8x1xf32>, vector<8x31xf32> -> vector<8x32xf32>
    %575 = tpu.concatenate %570, %574 in 1 : vector<8x32xf32>, vector<8x32xf32> -> vector<8x64xf32>
    %576 = vector.extract_strided_slice %520 {offsets = [0, 32], sizes = [8, 32], strides = [1, 1]} : vector<8x64xf32> to vector<8x32xf32>
    %cst_125 = arith.constant 0.000000e+00 : f32
    %577 = vector.broadcast %cst_125 : f32 to vector<8x1xf32>
    %578 = vector.extract_strided_slice %576 {offsets = [0, 1], sizes = [8, 31], strides = [1, 1]} : vector<8x32xf32> to vector<8x31xf32>
    %579 = tpu.concatenate %578, %577 in 1 : vector<8x31xf32>, vector<8x1xf32> -> vector<8x32xf32>
    %580 = vector.extract_strided_slice %520 {offsets = [0, 0], sizes = [8, 32], strides = [1, 1]} : vector<8x64xf32> to vector<8x32xf32>
    %cst_126 = arith.constant 0.000000e+00 : f32
    %581 = vector.broadcast %cst_126 : f32 to vector<8x2xf32>
    %582 = vector.extract_strided_slice %580 {offsets = [0, 2], sizes = [8, 30], strides = [1, 1]} : vector<8x32xf32> to vector<8x30xf32>
    %583 = tpu.concatenate %582, %581 in 1 : vector<8x30xf32>, vector<8x2xf32> -> vector<8x32xf32>
    %584 = tpu.concatenate %579, %583 in 1 : vector<8x32xf32>, vector<8x32xf32> -> vector<8x64xf32>
    %585 = vector.extract_strided_slice %520 {offsets = [0, 0], sizes = [8, 32], strides = [1, 1]} : vector<8x64xf32> to vector<8x32xf32>
    %cst_127 = arith.constant 0.000000e+00 : f32
    %586 = vector.broadcast %cst_127 : f32 to vector<8x3xf32>
    %587 = vector.extract_strided_slice %585 {offsets = [0, 3], sizes = [8, 29], strides = [1, 1]} : vector<8x32xf32> to vector<8x29xf32>
    %588 = tpu.concatenate %587, %586 in 1 : vector<8x29xf32>, vector<8x3xf32> -> vector<8x32xf32>
    %589 = vector.extract_strided_slice %520 {offsets = [0, 32], sizes = [8, 32], strides = [1, 1]} : vector<8x64xf32> to vector<8x32xf32>
    %cst_128 = arith.constant 0.000000e+00 : f32
    %590 = vector.broadcast %cst_128 : f32 to vector<8x3xf32>
    %591 = vector.extract_strided_slice %589 {offsets = [0, 3], sizes = [8, 29], strides = [1, 1]} : vector<8x32xf32> to vector<8x29xf32>
    %592 = tpu.concatenate %591, %590 in 1 : vector<8x29xf32>, vector<8x3xf32> -> vector<8x32xf32>
    %593 = tpu.concatenate %588, %592 in 1 : vector<8x32xf32>, vector<8x32xf32> -> vector<8x64xf32>
    %594 = tpu.concatenate %566, %575, %520, %584, %593 in 0 : vector<8x64xf32>, vector<8x64xf32>, vector<8x64xf32>, vector<8x64xf32>, vector<8x64xf32> -> vector<40x64xf32>
    %595 = tpu.concatenate %557, %594 in 1 : vector<40x64xf32>, vector<40x64xf32> -> vector<40x128xf32>
    %596 = arith.truncf %595 : vector<40x128xf32> to vector<40x128xbf16>
    %cst_129 = arith.constant dense<0.000000e+00> : vector<8x128xf32>
    %597 = tpu.matmul %517, %596, %cst_129 {dimension_numbers = #tpu.dot_dimension_numbers<[1], [0], [0], [1], [0, 0, 1, 1], [], []>} : vector<8x40xbf16>, vector<40x128xbf16>, vector<8x128xf32> -> vector<8x128xf32>
    %598 = vector.broadcast %518 : vector<8x1xf32> to vector<8x128xf32>
    %599 = arith.addf %597, %598 : vector<8x128xf32>
    %600 = vector.broadcast %128 : vector<1x128xf32> to vector<8x128xf32>
    %601 = arith.mulf %599, %600 : vector<8x128xf32>
    %c0_130 = arith.constant 0 : index
    %c24 = arith.constant 24 : index
    %602 = vector.load %arg4[%c0_130, %c24] : memref<16x53xf32, #tpu.memory_space<vmem>>, vector<8x1xf32>
    %c0_131 = arith.constant 0 : index
    %c25 = arith.constant 25 : index
    %603 = vector.load %arg4[%c0_131, %c25] : memref<16x53xf32, #tpu.memory_space<vmem>>, vector<8x1xf32>
    %604 = vector.broadcast %602 : vector<8x1xf32> to vector<8x128xf32>
    %605 = arith.mulf %604, %601 : vector<8x128xf32>
    %606 = math.sin %605 : vector<8x128xf32>
    %607 = arith.mulf %606, %606 : vector<8x128xf32>
    %608 = vector.broadcast %603 : vector<8x1xf32> to vector<8x128xf32>
    %609 = arith.mulf %608, %607 : vector<8x128xf32>
    %610 = arith.addf %601, %609 : vector<8x128xf32>
    %611 = vector.broadcast %128 : vector<1x128xf32> to vector<8x128xf32>
    %612 = arith.mulf %610, %611 : vector<8x128xf32>
    %c0_132 = arith.constant 0 : index
    %c336 = arith.constant 336 : index
    %613 = vector.load %arg3[%c0_132, %c336] : memref<16x720xbf16, #tpu.memory_space<vmem>>, vector<8x40xbf16>
    %c0_133 = arith.constant 0 : index
    %c23 = arith.constant 23 : index
    %614 = vector.load %arg4[%c0_133, %c23] : memref<16x53xf32, #tpu.memory_space<vmem>>, vector<8x1xf32>
    %615 = vector.extract_strided_slice %612 {offsets = [0, 0], sizes = [8, 64], strides = [1, 1]} : vector<8x128xf32> to vector<8x64xf32>
    %616 = vector.extract_strided_slice %612 {offsets = [0, 64], sizes = [8, 64], strides = [1, 1]} : vector<8x128xf32> to vector<8x64xf32>
    %617 = vector.extract_strided_slice %615 {offsets = [0, 0], sizes = [8, 32], strides = [1, 1]} : vector<8x64xf32> to vector<8x32xf32>
    %cst_134 = arith.constant 0.000000e+00 : f32
    %618 = vector.broadcast %cst_134 : f32 to vector<8x1xf32>
    %619 = vector.extract_strided_slice %617 {offsets = [0, 0], sizes = [8, 31], strides = [1, 1]} : vector<8x32xf32> to vector<8x31xf32>
    %620 = tpu.concatenate %618, %619 in 1 : vector<8x1xf32>, vector<8x31xf32> -> vector<8x32xf32>
    %621 = vector.extract_strided_slice %615 {offsets = [0, 32], sizes = [8, 32], strides = [1, 1]} : vector<8x64xf32> to vector<8x32xf32>
    %cst_135 = arith.constant 0.000000e+00 : f32
    %622 = vector.broadcast %cst_135 : f32 to vector<8x1xf32>
    %623 = vector.extract_strided_slice %621 {offsets = [0, 0], sizes = [8, 31], strides = [1, 1]} : vector<8x32xf32> to vector<8x31xf32>
    %624 = tpu.concatenate %622, %623 in 1 : vector<8x1xf32>, vector<8x31xf32> -> vector<8x32xf32>
    %625 = tpu.concatenate %620, %624 in 1 : vector<8x32xf32>, vector<8x32xf32> -> vector<8x64xf32>
    %626 = vector.extract_strided_slice %615 {offsets = [0, 32], sizes = [8, 32], strides = [1, 1]} : vector<8x64xf32> to vector<8x32xf32>
    %cst_136 = arith.constant 0.000000e+00 : f32
    %627 = vector.broadcast %cst_136 : f32 to vector<8x1xf32>
    %628 = vector.extract_strided_slice %626 {offsets = [0, 0], sizes = [8, 31], strides = [1, 1]} : vector<8x32xf32> to vector<8x31xf32>
    %629 = tpu.concatenate %627, %628 in 1 : vector<8x1xf32>, vector<8x31xf32> -> vector<8x32xf32>
    %630 = vector.extract_strided_slice %615 {offsets = [0, 0], sizes = [8, 32], strides = [1, 1]} : vector<8x64xf32> to vector<8x32xf32>
    %631 = tpu.concatenate %629, %630 in 1 : vector<8x32xf32>, vector<8x32xf32> -> vector<8x64xf32>
    %632 = vector.extract_strided_slice %615 {offsets = [0, 32], sizes = [8, 32], strides = [1, 1]} : vector<8x64xf32> to vector<8x32xf32>
    %633 = vector.extract_strided_slice %615 {offsets = [0, 0], sizes = [8, 32], strides = [1, 1]} : vector<8x64xf32> to vector<8x32xf32>
    %cst_137 = arith.constant 0.000000e+00 : f32
    %634 = vector.broadcast %cst_137 : f32 to vector<8x1xf32>
    %635 = vector.extract_strided_slice %633 {offsets = [0, 1], sizes = [8, 31], strides = [1, 1]} : vector<8x32xf32> to vector<8x31xf32>
    %636 = tpu.concatenate %635, %634 in 1 : vector<8x31xf32>, vector<8x1xf32> -> vector<8x32xf32>
    %637 = tpu.concatenate %632, %636 in 1 : vector<8x32xf32>, vector<8x32xf32> -> vector<8x64xf32>
    %638 = vector.extract_strided_slice %615 {offsets = [0, 0], sizes = [8, 32], strides = [1, 1]} : vector<8x64xf32> to vector<8x32xf32>
    %cst_138 = arith.constant 0.000000e+00 : f32
    %639 = vector.broadcast %cst_138 : f32 to vector<8x1xf32>
    %640 = vector.extract_strided_slice %638 {offsets = [0, 1], sizes = [8, 31], strides = [1, 1]} : vector<8x32xf32> to vector<8x31xf32>
    %641 = tpu.concatenate %640, %639 in 1 : vector<8x31xf32>, vector<8x1xf32> -> vector<8x32xf32>
    %642 = vector.extract_strided_slice %615 {offsets = [0, 32], sizes = [8, 32], strides = [1, 1]} : vector<8x64xf32> to vector<8x32xf32>
    %cst_139 = arith.constant 0.000000e+00 : f32
    %643 = vector.broadcast %cst_139 : f32 to vector<8x1xf32>
    %644 = vector.extract_strided_slice %642 {offsets = [0, 1], sizes = [8, 31], strides = [1, 1]} : vector<8x32xf32> to vector<8x31xf32>
    %645 = tpu.concatenate %644, %643 in 1 : vector<8x31xf32>, vector<8x1xf32> -> vector<8x32xf32>
    %646 = tpu.concatenate %641, %645 in 1 : vector<8x32xf32>, vector<8x32xf32> -> vector<8x64xf32>
    %647 = tpu.concatenate %625, %631, %615, %637, %646 in 0 : vector<8x64xf32>, vector<8x64xf32>, vector<8x64xf32>, vector<8x64xf32>, vector<8x64xf32> -> vector<40x64xf32>
    %648 = vector.extract_strided_slice %616 {offsets = [0, 0], sizes = [8, 32], strides = [1, 1]} : vector<8x64xf32> to vector<8x32xf32>
    %cst_140 = arith.constant 0.000000e+00 : f32
    %649 = vector.broadcast %cst_140 : f32 to vector<8x1xf32>
    %650 = vector.extract_strided_slice %648 {offsets = [0, 0], sizes = [8, 31], strides = [1, 1]} : vector<8x32xf32> to vector<8x31xf32>
    %651 = tpu.concatenate %649, %650 in 1 : vector<8x1xf32>, vector<8x31xf32> -> vector<8x32xf32>
    %652 = vector.extract_strided_slice %616 {offsets = [0, 32], sizes = [8, 32], strides = [1, 1]} : vector<8x64xf32> to vector<8x32xf32>
    %cst_141 = arith.constant 0.000000e+00 : f32
    %653 = vector.broadcast %cst_141 : f32 to vector<8x1xf32>
    %654 = vector.extract_strided_slice %652 {offsets = [0, 0], sizes = [8, 31], strides = [1, 1]} : vector<8x32xf32> to vector<8x31xf32>
    %655 = tpu.concatenate %653, %654 in 1 : vector<8x1xf32>, vector<8x31xf32> -> vector<8x32xf32>
    %656 = tpu.concatenate %651, %655 in 1 : vector<8x32xf32>, vector<8x32xf32> -> vector<8x64xf32>
    %657 = vector.extract_strided_slice %616 {offsets = [0, 32], sizes = [8, 32], strides = [1, 1]} : vector<8x64xf32> to vector<8x32xf32>
    %cst_142 = arith.constant 0.000000e+00 : f32
    %658 = vector.broadcast %cst_142 : f32 to vector<8x1xf32>
    %659 = vector.extract_strided_slice %657 {offsets = [0, 0], sizes = [8, 31], strides = [1, 1]} : vector<8x32xf32> to vector<8x31xf32>
    %660 = tpu.concatenate %658, %659 in 1 : vector<8x1xf32>, vector<8x31xf32> -> vector<8x32xf32>
    %661 = vector.extract_strided_slice %616 {offsets = [0, 0], sizes = [8, 32], strides = [1, 1]} : vector<8x64xf32> to vector<8x32xf32>
    %662 = tpu.concatenate %660, %661 in 1 : vector<8x32xf32>, vector<8x32xf32> -> vector<8x64xf32>
    %663 = vector.extract_strided_slice %616 {offsets = [0, 32], sizes = [8, 32], strides = [1, 1]} : vector<8x64xf32> to vector<8x32xf32>
    %664 = vector.extract_strided_slice %616 {offsets = [0, 0], sizes = [8, 32], strides = [1, 1]} : vector<8x64xf32> to vector<8x32xf32>
    %cst_143 = arith.constant 0.000000e+00 : f32
    %665 = vector.broadcast %cst_143 : f32 to vector<8x1xf32>
    %666 = vector.extract_strided_slice %664 {offsets = [0, 1], sizes = [8, 31], strides = [1, 1]} : vector<8x32xf32> to vector<8x31xf32>
    %667 = tpu.concatenate %666, %665 in 1 : vector<8x31xf32>, vector<8x1xf32> -> vector<8x32xf32>
    %668 = tpu.concatenate %663, %667 in 1 : vector<8x32xf32>, vector<8x32xf32> -> vector<8x64xf32>
    %669 = vector.extract_strided_slice %616 {offsets = [0, 0], sizes = [8, 32], strides = [1, 1]} : vector<8x64xf32> to vector<8x32xf32>
    %cst_144 = arith.constant 0.000000e+00 : f32
    %670 = vector.broadcast %cst_144 : f32 to vector<8x1xf32>
    %671 = vector.extract_strided_slice %669 {offsets = [0, 1], sizes = [8, 31], strides = [1, 1]} : vector<8x32xf32> to vector<8x31xf32>
    %672 = tpu.concatenate %671, %670 in 1 : vector<8x31xf32>, vector<8x1xf32> -> vector<8x32xf32>
    %673 = vector.extract_strided_slice %616 {offsets = [0, 32], sizes = [8, 32], strides = [1, 1]} : vector<8x64xf32> to vector<8x32xf32>
    %cst_145 = arith.constant 0.000000e+00 : f32
    %674 = vector.broadcast %cst_145 : f32 to vector<8x1xf32>
    %675 = vector.extract_strided_slice %673 {offsets = [0, 1], sizes = [8, 31], strides = [1, 1]} : vector<8x32xf32> to vector<8x31xf32>
    %676 = tpu.concatenate %675, %674 in 1 : vector<8x31xf32>, vector<8x1xf32> -> vector<8x32xf32>
    %677 = tpu.concatenate %672, %676 in 1 : vector<8x32xf32>, vector<8x32xf32> -> vector<8x64xf32>
    %678 = tpu.concatenate %656, %662, %616, %668, %677 in 0 : vector<8x64xf32>, vector<8x64xf32>, vector<8x64xf32>, vector<8x64xf32>, vector<8x64xf32> -> vector<40x64xf32>
    %679 = tpu.concatenate %647, %678 in 1 : vector<40x64xf32>, vector<40x64xf32> -> vector<40x128xf32>
    %680 = arith.truncf %679 : vector<40x128xf32> to vector<40x128xbf16>
    %cst_146 = arith.constant dense<0.000000e+00> : vector<8x128xf32>
    %681 = tpu.matmul %613, %680, %cst_146 {dimension_numbers = #tpu.dot_dimension_numbers<[1], [0], [0], [1], [0, 0, 1, 1], [], []>} : vector<8x40xbf16>, vector<40x128xbf16>, vector<8x128xf32> -> vector<8x128xf32>
    %682 = vector.broadcast %614 : vector<8x1xf32> to vector<8x128xf32>
    %683 = arith.addf %681, %682 : vector<8x128xf32>
    %684 = vector.broadcast %128 : vector<1x128xf32> to vector<8x128xf32>
    %685 = arith.mulf %683, %684 : vector<8x128xf32>
    %686 = arith.addf %685, %505 : vector<8x128xf32>
    %687 = vector.broadcast %128 : vector<1x128xf32> to vector<8x128xf32>
    %688 = arith.mulf %686, %687 : vector<8x128xf32>
    %689 = arith.addf %336, %688 : vector<8x128xf32>
    %cst_147 = arith.constant 5.000000e-01 : f32
    %690 = vector.broadcast %cst_147 : f32 to vector<8x128xf32>
    %691 = arith.mulf %689, %690 : vector<8x128xf32>
    %c0_148 = arith.constant 0 : index
    %c376 = arith.constant 376 : index
    %692 = vector.load %arg3[%c0_148, %c376] : memref<16x720xbf16, #tpu.memory_space<vmem>>, vector<8x16xbf16>
    %c0_149 = arith.constant 0 : index
    %c392 = arith.constant 392 : index
    %693 = vector.load %arg3[%c0_149, %c392] : memref<16x720xbf16, #tpu.memory_space<vmem>>, vector<8x16xbf16>
    %c0_150 = arith.constant 0 : index
    %c26 = arith.constant 26 : index
    %694 = vector.load %arg4[%c0_150, %c26] : memref<16x53xf32, #tpu.memory_space<vmem>>, vector<8x1xf32>
    %695 = vector.extract_strided_slice %691 {offsets = [0, 0], sizes = [8, 64], strides = [1, 1]} : vector<8x128xf32> to vector<8x64xf32>
    %696 = vector.extract_strided_slice %691 {offsets = [0, 64], sizes = [8, 64], strides = [1, 1]} : vector<8x128xf32> to vector<8x64xf32>
    %697 = vector.extract_strided_slice %695 {offsets = [0, 32], sizes = [8, 32], strides = [1, 1]} : vector<8x64xf32> to vector<8x32xf32>
    %cst_151 = arith.constant 0.000000e+00 : f32
    %698 = vector.broadcast %cst_151 : f32 to vector<8x1xf32>
    %699 = vector.extract_strided_slice %697 {offsets = [0, 0], sizes = [8, 31], strides = [1, 1]} : vector<8x32xf32> to vector<8x31xf32>
    %700 = tpu.concatenate %698, %699 in 1 : vector<8x1xf32>, vector<8x31xf32> -> vector<8x32xf32>
    %701 = vector.extract_strided_slice %695 {offsets = [0, 0], sizes = [8, 32], strides = [1, 1]} : vector<8x64xf32> to vector<8x32xf32>
    %702 = tpu.concatenate %700, %701 in 1 : vector<8x32xf32>, vector<8x32xf32> -> vector<8x64xf32>
    %703 = tpu.concatenate %695, %702 in 0 : vector<8x64xf32>, vector<8x64xf32> -> vector<16x64xf32>
    %704 = vector.extract_strided_slice %696 {offsets = [0, 32], sizes = [8, 32], strides = [1, 1]} : vector<8x64xf32> to vector<8x32xf32>
    %cst_152 = arith.constant 0.000000e+00 : f32
    %705 = vector.broadcast %cst_152 : f32 to vector<8x1xf32>
    %706 = vector.extract_strided_slice %704 {offsets = [0, 0], sizes = [8, 31], strides = [1, 1]} : vector<8x32xf32> to vector<8x31xf32>
    %707 = tpu.concatenate %705, %706 in 1 : vector<8x1xf32>, vector<8x31xf32> -> vector<8x32xf32>
    %708 = vector.extract_strided_slice %696 {offsets = [0, 0], sizes = [8, 32], strides = [1, 1]} : vector<8x64xf32> to vector<8x32xf32>
    %709 = tpu.concatenate %707, %708 in 1 : vector<8x32xf32>, vector<8x32xf32> -> vector<8x64xf32>
    %710 = tpu.concatenate %696, %709 in 0 : vector<8x64xf32>, vector<8x64xf32> -> vector<16x64xf32>
    %711 = tpu.concatenate %703, %710 in 1 : vector<16x64xf32>, vector<16x64xf32> -> vector<16x128xf32>
    %712 = arith.truncf %711 : vector<16x128xf32> to vector<16x128xbf16>
    %cst_153 = arith.constant dense<0.000000e+00> : vector<8x128xf32>
    %713 = tpu.matmul %692, %712, %cst_153 {dimension_numbers = #tpu.dot_dimension_numbers<[1], [0], [0], [1], [0, 0, 1, 1], [], []>} : vector<8x16xbf16>, vector<16x128xbf16>, vector<8x128xf32> -> vector<8x128xf32>
    %714 = vector.broadcast %694 : vector<8x1xf32> to vector<8x128xf32>
    %715 = arith.addf %713, %714 : vector<8x128xf32>
    %716 = vector.extract_strided_slice %695 {offsets = [0, 32], sizes = [8, 32], strides = [1, 1]} : vector<8x64xf32> to vector<8x32xf32>
    %717 = vector.extract_strided_slice %695 {offsets = [0, 0], sizes = [8, 32], strides = [1, 1]} : vector<8x64xf32> to vector<8x32xf32>
    %cst_154 = arith.constant 0.000000e+00 : f32
    %718 = vector.broadcast %cst_154 : f32 to vector<8x1xf32>
    %719 = vector.extract_strided_slice %717 {offsets = [0, 1], sizes = [8, 31], strides = [1, 1]} : vector<8x32xf32> to vector<8x31xf32>
    %720 = tpu.concatenate %719, %718 in 1 : vector<8x31xf32>, vector<8x1xf32> -> vector<8x32xf32>
    %721 = tpu.concatenate %716, %720 in 1 : vector<8x32xf32>, vector<8x32xf32> -> vector<8x64xf32>
    %722 = tpu.concatenate %721, %695 in 0 : vector<8x64xf32>, vector<8x64xf32> -> vector<16x64xf32>
    %723 = vector.extract_strided_slice %696 {offsets = [0, 32], sizes = [8, 32], strides = [1, 1]} : vector<8x64xf32> to vector<8x32xf32>
    %724 = vector.extract_strided_slice %696 {offsets = [0, 0], sizes = [8, 32], strides = [1, 1]} : vector<8x64xf32> to vector<8x32xf32>
    %cst_155 = arith.constant 0.000000e+00 : f32
    %725 = vector.broadcast %cst_155 : f32 to vector<8x1xf32>
    %726 = vector.extract_strided_slice %724 {offsets = [0, 1], sizes = [8, 31], strides = [1, 1]} : vector<8x32xf32> to vector<8x31xf32>
    %727 = tpu.concatenate %726, %725 in 1 : vector<8x31xf32>, vector<8x1xf32> -> vector<8x32xf32>
    %728 = tpu.concatenate %723, %727 in 1 : vector<8x32xf32>, vector<8x32xf32> -> vector<8x64xf32>
    %729 = tpu.concatenate %728, %696 in 0 : vector<8x64xf32>, vector<8x64xf32> -> vector<16x64xf32>
    %730 = tpu.concatenate %722, %729 in 1 : vector<16x64xf32>, vector<16x64xf32> -> vector<16x128xf32>
    %731 = arith.truncf %730 : vector<16x128xf32> to vector<16x128xbf16>
    %cst_156 = arith.constant dense<0.000000e+00> : vector<8x128xf32>
    %732 = tpu.matmul %693, %731, %cst_156 {dimension_numbers = #tpu.dot_dimension_numbers<[1], [0], [0], [1], [0, 0, 1, 1], [], []>} : vector<8x16xbf16>, vector<16x128xbf16>, vector<8x128xf32> -> vector<8x128xf32>
    %733 = vector.broadcast %694 : vector<8x1xf32> to vector<8x128xf32>
    %734 = arith.addf %732, %733 : vector<8x128xf32>
    %735 = vector.extract_strided_slice %715 {offsets = [0, 0], sizes = [8, 64], strides = [1, 1]} : vector<8x128xf32> to vector<8x64xf32>
    %736 = vector.extract_strided_slice %734 {offsets = [0, 0], sizes = [8, 64], strides = [1, 1]} : vector<8x128xf32> to vector<8x64xf32>
    %737 = vector.extract_strided_slice %715 {offsets = [0, 64], sizes = [8, 64], strides = [1, 1]} : vector<8x128xf32> to vector<8x64xf32>
    %738 = vector.extract_strided_slice %734 {offsets = [0, 64], sizes = [8, 64], strides = [1, 1]} : vector<8x128xf32> to vector<8x64xf32>
    %739 = tpu.concatenate %735, %736, %737, %738 in 1 : vector<8x64xf32>, vector<8x64xf32>, vector<8x64xf32>, vector<8x64xf32> -> vector<8x256xf32>
    %c2_i32_157 = arith.constant 2 : i32
    %740 = vector.broadcast %c2_i32_157 : i32 to vector<1x64xi32>
    %741 = arith.muli %740, %117 : vector<1x64xi32>
    %c0_i32_158 = arith.constant 0 : i32
    %742 = vector.broadcast %c0_i32_158 : i32 to vector<1x64xi32>
    %743 = arith.addi %741, %742 : vector<1x64xi32>
    %c2_i32_159 = arith.constant 2 : i32
    %744 = vector.broadcast %c2_i32_159 : i32 to vector<1x64xi32>
    %745 = arith.muli %744, %117 : vector<1x64xi32>
    %c1_i32_160 = arith.constant 1 : i32
    %746 = vector.broadcast %c1_i32_160 : i32 to vector<1x64xi32>
    %747 = arith.addi %745, %746 : vector<1x64xi32>
    %748 = tpu.concatenate %743, %747 in 1 : vector<1x64xi32>, vector<1x64xi32> -> vector<1x128xi32>
    %c4_i32 = arith.constant 4 : i32
    %749 = arith.muli %0, %c4_i32 : i32
    %750 = vector.broadcast %749 : i32 to vector<1x128xi32>
    %751 = arith.cmpi slt, %748, %750 : vector<1x128xi32>
    %752 = arith.extui %751 : vector<1x128xi1> to vector<1x128xi32>
    %753 = arith.sitofp %752 : vector<1x128xi32> to vector<1x128xf32>
    %c4_i32_161 = arith.constant 4 : i32
    %754 = arith.muli %1, %c4_i32_161 : i32
    %755 = vector.broadcast %754 : i32 to vector<1x128xi32>
    %756 = arith.cmpi slt, %748, %755 : vector<1x128xi32>
    %757 = arith.extui %756 : vector<1x128xi1> to vector<1x128xi32>
    %758 = arith.sitofp %757 : vector<1x128xi32> to vector<1x128xf32>
    %759 = tpu.concatenate %753, %758 in 1 : vector<1x128xf32>, vector<1x128xf32> -> vector<1x256xf32>
    %c0_162 = arith.constant 0 : index
    %c28 = arith.constant 28 : index
    %760 = vector.load %arg4[%c0_162, %c28] : memref<16x53xf32, #tpu.memory_space<vmem>>, vector<8x1xf32>
    %c0_163 = arith.constant 0 : index
    %c29 = arith.constant 29 : index
    %761 = vector.load %arg4[%c0_163, %c29] : memref<16x53xf32, #tpu.memory_space<vmem>>, vector<8x1xf32>
    %762 = vector.broadcast %760 : vector<8x1xf32> to vector<8x256xf32>
    %763 = arith.mulf %762, %739 : vector<8x256xf32>
    %764 = math.sin %763 : vector<8x256xf32>
    %765 = arith.mulf %764, %764 : vector<8x256xf32>
    %766 = vector.broadcast %761 : vector<8x1xf32> to vector<8x256xf32>
    %767 = arith.mulf %766, %765 : vector<8x256xf32>
    %768 = arith.addf %739, %767 : vector<8x256xf32>
    %769 = vector.broadcast %759 : vector<1x256xf32> to vector<8x256xf32>
    %770 = arith.mulf %768, %769 : vector<8x256xf32>
    %c0_164 = arith.constant 0 : index
    %c408 = arith.constant 408 : index
    %771 = vector.load %arg3[%c0_164, %c408] : memref<16x720xbf16, #tpu.memory_space<vmem>>, vector<8x24xbf16>
    %c0_165 = arith.constant 0 : index
    %c27 = arith.constant 27 : index
    %772 = vector.load %arg4[%c0_165, %c27] : memref<16x53xf32, #tpu.memory_space<vmem>>, vector<8x1xf32>
    %773 = vector.extract_strided_slice %770 {offsets = [0, 0], sizes = [8, 128], strides = [1, 1]} : vector<8x256xf32> to vector<8x128xf32>
    %774 = vector.extract_strided_slice %770 {offsets = [0, 128], sizes = [8, 128], strides = [1, 1]} : vector<8x256xf32> to vector<8x128xf32>
    %775 = vector.extract_strided_slice %773 {offsets = [0, 64], sizes = [8, 64], strides = [1, 1]} : vector<8x128xf32> to vector<8x64xf32>
    %776 = vector.extract_strided_slice %775 {offsets = [0, 32], sizes = [8, 32], strides = [1, 1]} : vector<8x64xf32> to vector<8x32xf32>
    %cst_166 = arith.constant 0.000000e+00 : f32
    %777 = vector.broadcast %cst_166 : f32 to vector<8x1xf32>
    %778 = vector.extract_strided_slice %776 {offsets = [0, 0], sizes = [8, 31], strides = [1, 1]} : vector<8x32xf32> to vector<8x31xf32>
    %779 = tpu.concatenate %777, %778 in 1 : vector<8x1xf32>, vector<8x31xf32> -> vector<8x32xf32>
    %780 = vector.extract_strided_slice %775 {offsets = [0, 0], sizes = [8, 32], strides = [1, 1]} : vector<8x64xf32> to vector<8x32xf32>
    %781 = tpu.concatenate %779, %780 in 1 : vector<8x32xf32>, vector<8x32xf32> -> vector<8x64xf32>
    %782 = vector.extract_strided_slice %773 {offsets = [0, 0], sizes = [8, 64], strides = [1, 1]} : vector<8x128xf32> to vector<8x64xf32>
    %783 = tpu.concatenate %781, %782 in 1 : vector<8x64xf32>, vector<8x64xf32> -> vector<8x128xf32>
    %784 = vector.extract_strided_slice %773 {offsets = [0, 64], sizes = [8, 64], strides = [1, 1]} : vector<8x128xf32> to vector<8x64xf32>
    %785 = vector.extract_strided_slice %773 {offsets = [0, 0], sizes = [8, 64], strides = [1, 1]} : vector<8x128xf32> to vector<8x64xf32>
    %786 = vector.extract_strided_slice %785 {offsets = [0, 32], sizes = [8, 32], strides = [1, 1]} : vector<8x64xf32> to vector<8x32xf32>
    %787 = vector.extract_strided_slice %785 {offsets = [0, 0], sizes = [8, 32], strides = [1, 1]} : vector<8x64xf32> to vector<8x32xf32>
    %cst_167 = arith.constant 0.000000e+00 : f32
    %788 = vector.broadcast %cst_167 : f32 to vector<8x1xf32>
    %789 = vector.extract_strided_slice %787 {offsets = [0, 1], sizes = [8, 31], strides = [1, 1]} : vector<8x32xf32> to vector<8x31xf32>
    %790 = tpu.concatenate %789, %788 in 1 : vector<8x31xf32>, vector<8x1xf32> -> vector<8x32xf32>
    %791 = tpu.concatenate %786, %790 in 1 : vector<8x32xf32>, vector<8x32xf32> -> vector<8x64xf32>
    %792 = tpu.concatenate %784, %791 in 1 : vector<8x64xf32>, vector<8x64xf32> -> vector<8x128xf32>
    %793 = tpu.concatenate %783, %773, %792 in 0 : vector<8x128xf32>, vector<8x128xf32>, vector<8x128xf32> -> vector<24x128xf32>
    %794 = vector.extract_strided_slice %774 {offsets = [0, 64], sizes = [8, 64], strides = [1, 1]} : vector<8x128xf32> to vector<8x64xf32>
    %795 = vector.extract_strided_slice %794 {offsets = [0, 32], sizes = [8, 32], strides = [1, 1]} : vector<8x64xf32> to vector<8x32xf32>
    %cst_168 = arith.constant 0.000000e+00 : f32
    %796 = vector.broadcast %cst_168 : f32 to vector<8x1xf32>
    %797 = vector.extract_strided_slice %795 {offsets = [0, 0], sizes = [8, 31], strides = [1, 1]} : vector<8x32xf32> to vector<8x31xf32>
    %798 = tpu.concatenate %796, %797 in 1 : vector<8x1xf32>, vector<8x31xf32> -> vector<8x32xf32>
    %799 = vector.extract_strided_slice %794 {offsets = [0, 0], sizes = [8, 32], strides = [1, 1]} : vector<8x64xf32> to vector<8x32xf32>
    %800 = tpu.concatenate %798, %799 in 1 : vector<8x32xf32>, vector<8x32xf32> -> vector<8x64xf32>
    %801 = vector.extract_strided_slice %774 {offsets = [0, 0], sizes = [8, 64], strides = [1, 1]} : vector<8x128xf32> to vector<8x64xf32>
    %802 = tpu.concatenate %800, %801 in 1 : vector<8x64xf32>, vector<8x64xf32> -> vector<8x128xf32>
    %803 = vector.extract_strided_slice %774 {offsets = [0, 64], sizes = [8, 64], strides = [1, 1]} : vector<8x128xf32> to vector<8x64xf32>
    %804 = vector.extract_strided_slice %774 {offsets = [0, 0], sizes = [8, 64], strides = [1, 1]} : vector<8x128xf32> to vector<8x64xf32>
    %805 = vector.extract_strided_slice %804 {offsets = [0, 32], sizes = [8, 32], strides = [1, 1]} : vector<8x64xf32> to vector<8x32xf32>
    %806 = vector.extract_strided_slice %804 {offsets = [0, 0], sizes = [8, 32], strides = [1, 1]} : vector<8x64xf32> to vector<8x32xf32>
    %cst_169 = arith.constant 0.000000e+00 : f32
    %807 = vector.broadcast %cst_169 : f32 to vector<8x1xf32>
    %808 = vector.extract_strided_slice %806 {offsets = [0, 1], sizes = [8, 31], strides = [1, 1]} : vector<8x32xf32> to vector<8x31xf32>
    %809 = tpu.concatenate %808, %807 in 1 : vector<8x31xf32>, vector<8x1xf32> -> vector<8x32xf32>
    %810 = tpu.concatenate %805, %809 in 1 : vector<8x32xf32>, vector<8x32xf32> -> vector<8x64xf32>
    %811 = tpu.concatenate %803, %810 in 1 : vector<8x64xf32>, vector<8x64xf32> -> vector<8x128xf32>
    %812 = tpu.concatenate %802, %774, %811 in 0 : vector<8x128xf32>, vector<8x128xf32>, vector<8x128xf32> -> vector<24x128xf32>
    %813 = tpu.concatenate %793, %812 in 1 : vector<24x128xf32>, vector<24x128xf32> -> vector<24x256xf32>
    %814 = arith.truncf %813 : vector<24x256xf32> to vector<24x256xbf16>
    %cst_170 = arith.constant dense<0.000000e+00> : vector<8x256xf32>
    %815 = tpu.matmul %771, %814, %cst_170 {dimension_numbers = #tpu.dot_dimension_numbers<[1], [0], [0], [1], [0, 0, 1, 1], [], []>} : vector<8x24xbf16>, vector<24x256xbf16>, vector<8x256xf32> -> vector<8x256xf32>
    %816 = vector.broadcast %772 : vector<8x1xf32> to vector<8x256xf32>
    %817 = arith.addf %815, %816 : vector<8x256xf32>
    %818 = vector.broadcast %759 : vector<1x256xf32> to vector<8x256xf32>
    %819 = arith.mulf %817, %818 : vector<8x256xf32>
    %c0_171 = arith.constant 0 : index
    %c31 = arith.constant 31 : index
    %820 = vector.load %arg4[%c0_171, %c31] : memref<16x53xf32, #tpu.memory_space<vmem>>, vector<8x1xf32>
    %c0_172 = arith.constant 0 : index
    %c32 = arith.constant 32 : index
    %821 = vector.load %arg4[%c0_172, %c32] : memref<16x53xf32, #tpu.memory_space<vmem>>, vector<8x1xf32>
    %822 = vector.broadcast %820 : vector<8x1xf32> to vector<8x256xf32>
    %823 = arith.mulf %822, %819 : vector<8x256xf32>
    %824 = math.sin %823 : vector<8x256xf32>
    %825 = arith.mulf %824, %824 : vector<8x256xf32>
    %826 = vector.broadcast %821 : vector<8x1xf32> to vector<8x256xf32>
    %827 = arith.mulf %826, %825 : vector<8x256xf32>
    %828 = arith.addf %819, %827 : vector<8x256xf32>
    %829 = vector.broadcast %759 : vector<1x256xf32> to vector<8x256xf32>
    %830 = arith.mulf %828, %829 : vector<8x256xf32>
    %c0_173 = arith.constant 0 : index
    %c432 = arith.constant 432 : index
    %831 = vector.load %arg3[%c0_173, %c432] : memref<16x720xbf16, #tpu.memory_space<vmem>>, vector<8x24xbf16>
    %c0_174 = arith.constant 0 : index
    %c30 = arith.constant 30 : index
    %832 = vector.load %arg4[%c0_174, %c30] : memref<16x53xf32, #tpu.memory_space<vmem>>, vector<8x1xf32>
    %833 = vector.extract_strided_slice %830 {offsets = [0, 0], sizes = [8, 128], strides = [1, 1]} : vector<8x256xf32> to vector<8x128xf32>
    %834 = vector.extract_strided_slice %830 {offsets = [0, 128], sizes = [8, 128], strides = [1, 1]} : vector<8x256xf32> to vector<8x128xf32>
    %835 = vector.extract_strided_slice %833 {offsets = [0, 64], sizes = [8, 64], strides = [1, 1]} : vector<8x128xf32> to vector<8x64xf32>
    %836 = vector.extract_strided_slice %835 {offsets = [0, 32], sizes = [8, 32], strides = [1, 1]} : vector<8x64xf32> to vector<8x32xf32>
    %cst_175 = arith.constant 0.000000e+00 : f32
    %837 = vector.broadcast %cst_175 : f32 to vector<8x1xf32>
    %838 = vector.extract_strided_slice %836 {offsets = [0, 0], sizes = [8, 31], strides = [1, 1]} : vector<8x32xf32> to vector<8x31xf32>
    %839 = tpu.concatenate %837, %838 in 1 : vector<8x1xf32>, vector<8x31xf32> -> vector<8x32xf32>
    %840 = vector.extract_strided_slice %835 {offsets = [0, 0], sizes = [8, 32], strides = [1, 1]} : vector<8x64xf32> to vector<8x32xf32>
    %841 = tpu.concatenate %839, %840 in 1 : vector<8x32xf32>, vector<8x32xf32> -> vector<8x64xf32>
    %842 = vector.extract_strided_slice %833 {offsets = [0, 0], sizes = [8, 64], strides = [1, 1]} : vector<8x128xf32> to vector<8x64xf32>
    %843 = tpu.concatenate %841, %842 in 1 : vector<8x64xf32>, vector<8x64xf32> -> vector<8x128xf32>
    %844 = vector.extract_strided_slice %833 {offsets = [0, 64], sizes = [8, 64], strides = [1, 1]} : vector<8x128xf32> to vector<8x64xf32>
    %845 = vector.extract_strided_slice %833 {offsets = [0, 0], sizes = [8, 64], strides = [1, 1]} : vector<8x128xf32> to vector<8x64xf32>
    %846 = vector.extract_strided_slice %845 {offsets = [0, 32], sizes = [8, 32], strides = [1, 1]} : vector<8x64xf32> to vector<8x32xf32>
    %847 = vector.extract_strided_slice %845 {offsets = [0, 0], sizes = [8, 32], strides = [1, 1]} : vector<8x64xf32> to vector<8x32xf32>
    %cst_176 = arith.constant 0.000000e+00 : f32
    %848 = vector.broadcast %cst_176 : f32 to vector<8x1xf32>
    %849 = vector.extract_strided_slice %847 {offsets = [0, 1], sizes = [8, 31], strides = [1, 1]} : vector<8x32xf32> to vector<8x31xf32>
    %850 = tpu.concatenate %849, %848 in 1 : vector<8x31xf32>, vector<8x1xf32> -> vector<8x32xf32>
    %851 = tpu.concatenate %846, %850 in 1 : vector<8x32xf32>, vector<8x32xf32> -> vector<8x64xf32>
    %852 = tpu.concatenate %844, %851 in 1 : vector<8x64xf32>, vector<8x64xf32> -> vector<8x128xf32>
    %853 = tpu.concatenate %843, %833, %852 in 0 : vector<8x128xf32>, vector<8x128xf32>, vector<8x128xf32> -> vector<24x128xf32>
    %854 = vector.extract_strided_slice %834 {offsets = [0, 64], sizes = [8, 64], strides = [1, 1]} : vector<8x128xf32> to vector<8x64xf32>
    %855 = vector.extract_strided_slice %854 {offsets = [0, 32], sizes = [8, 32], strides = [1, 1]} : vector<8x64xf32> to vector<8x32xf32>
    %cst_177 = arith.constant 0.000000e+00 : f32
    %856 = vector.broadcast %cst_177 : f32 to vector<8x1xf32>
    %857 = vector.extract_strided_slice %855 {offsets = [0, 0], sizes = [8, 31], strides = [1, 1]} : vector<8x32xf32> to vector<8x31xf32>
    %858 = tpu.concatenate %856, %857 in 1 : vector<8x1xf32>, vector<8x31xf32> -> vector<8x32xf32>
    %859 = vector.extract_strided_slice %854 {offsets = [0, 0], sizes = [8, 32], strides = [1, 1]} : vector<8x64xf32> to vector<8x32xf32>
    %860 = tpu.concatenate %858, %859 in 1 : vector<8x32xf32>, vector<8x32xf32> -> vector<8x64xf32>
    %861 = vector.extract_strided_slice %834 {offsets = [0, 0], sizes = [8, 64], strides = [1, 1]} : vector<8x128xf32> to vector<8x64xf32>
    %862 = tpu.concatenate %860, %861 in 1 : vector<8x64xf32>, vector<8x64xf32> -> vector<8x128xf32>
    %863 = vector.extract_strided_slice %834 {offsets = [0, 64], sizes = [8, 64], strides = [1, 1]} : vector<8x128xf32> to vector<8x64xf32>
    %864 = vector.extract_strided_slice %834 {offsets = [0, 0], sizes = [8, 64], strides = [1, 1]} : vector<8x128xf32> to vector<8x64xf32>
    %865 = vector.extract_strided_slice %864 {offsets = [0, 32], sizes = [8, 32], strides = [1, 1]} : vector<8x64xf32> to vector<8x32xf32>
    %866 = vector.extract_strided_slice %864 {offsets = [0, 0], sizes = [8, 32], strides = [1, 1]} : vector<8x64xf32> to vector<8x32xf32>
    %cst_178 = arith.constant 0.000000e+00 : f32
    %867 = vector.broadcast %cst_178 : f32 to vector<8x1xf32>
    %868 = vector.extract_strided_slice %866 {offsets = [0, 1], sizes = [8, 31], strides = [1, 1]} : vector<8x32xf32> to vector<8x31xf32>
    %869 = tpu.concatenate %868, %867 in 1 : vector<8x31xf32>, vector<8x1xf32> -> vector<8x32xf32>
    %870 = tpu.concatenate %865, %869 in 1 : vector<8x32xf32>, vector<8x32xf32> -> vector<8x64xf32>
    %871 = tpu.concatenate %863, %870 in 1 : vector<8x64xf32>, vector<8x64xf32> -> vector<8x128xf32>
    %872 = tpu.concatenate %862, %834, %871 in 0 : vector<8x128xf32>, vector<8x128xf32>, vector<8x128xf32> -> vector<24x128xf32>
    %873 = tpu.concatenate %853, %872 in 1 : vector<24x128xf32>, vector<24x128xf32> -> vector<24x256xf32>
    %874 = arith.truncf %873 : vector<24x256xf32> to vector<24x256xbf16>
    %cst_179 = arith.constant dense<0.000000e+00> : vector<8x256xf32>
    %875 = tpu.matmul %831, %874, %cst_179 {dimension_numbers = #tpu.dot_dimension_numbers<[1], [0], [0], [1], [0, 0, 1, 1], [], []>} : vector<8x24xbf16>, vector<24x256xbf16>, vector<8x256xf32> -> vector<8x256xf32>
    %876 = vector.broadcast %832 : vector<8x1xf32> to vector<8x256xf32>
    %877 = arith.addf %875, %876 : vector<8x256xf32>
    %878 = vector.broadcast %759 : vector<1x256xf32> to vector<8x256xf32>
    %879 = arith.mulf %877, %878 : vector<8x256xf32>
    %880 = arith.addf %879, %739 : vector<8x256xf32>
    %c0_180 = arith.constant 0 : index
    %c34 = arith.constant 34 : index
    %881 = vector.load %arg4[%c0_180, %c34] : memref<16x53xf32, #tpu.memory_space<vmem>>, vector<8x1xf32>
    %c0_181 = arith.constant 0 : index
    %c35 = arith.constant 35 : index
    %882 = vector.load %arg4[%c0_181, %c35] : memref<16x53xf32, #tpu.memory_space<vmem>>, vector<8x1xf32>
    %883 = vector.broadcast %881 : vector<8x1xf32> to vector<8x256xf32>
    %884 = arith.mulf %883, %880 : vector<8x256xf32>
    %885 = math.sin %884 : vector<8x256xf32>
    %886 = arith.mulf %885, %885 : vector<8x256xf32>
    %887 = vector.broadcast %882 : vector<8x1xf32> to vector<8x256xf32>
    %888 = arith.mulf %887, %886 : vector<8x256xf32>
    %889 = arith.addf %880, %888 : vector<8x256xf32>
    %890 = vector.broadcast %759 : vector<1x256xf32> to vector<8x256xf32>
    %891 = arith.mulf %889, %890 : vector<8x256xf32>
    %c0_182 = arith.constant 0 : index
    %c456 = arith.constant 456 : index
    %892 = vector.load %arg3[%c0_182, %c456] : memref<16x720xbf16, #tpu.memory_space<vmem>>, vector<8x24xbf16>
    %c0_183 = arith.constant 0 : index
    %c33 = arith.constant 33 : index
    %893 = vector.load %arg4[%c0_183, %c33] : memref<16x53xf32, #tpu.memory_space<vmem>>, vector<8x1xf32>
    %894 = vector.extract_strided_slice %891 {offsets = [0, 0], sizes = [8, 128], strides = [1, 1]} : vector<8x256xf32> to vector<8x128xf32>
    %895 = vector.extract_strided_slice %891 {offsets = [0, 128], sizes = [8, 128], strides = [1, 1]} : vector<8x256xf32> to vector<8x128xf32>
    %896 = vector.extract_strided_slice %894 {offsets = [0, 64], sizes = [8, 64], strides = [1, 1]} : vector<8x128xf32> to vector<8x64xf32>
    %897 = vector.extract_strided_slice %896 {offsets = [0, 0], sizes = [8, 32], strides = [1, 1]} : vector<8x64xf32> to vector<8x32xf32>
    %cst_184 = arith.constant 0.000000e+00 : f32
    %898 = vector.broadcast %cst_184 : f32 to vector<8x1xf32>
    %899 = vector.extract_strided_slice %897 {offsets = [0, 0], sizes = [8, 31], strides = [1, 1]} : vector<8x32xf32> to vector<8x31xf32>
    %900 = tpu.concatenate %898, %899 in 1 : vector<8x1xf32>, vector<8x31xf32> -> vector<8x32xf32>
    %901 = vector.extract_strided_slice %896 {offsets = [0, 32], sizes = [8, 32], strides = [1, 1]} : vector<8x64xf32> to vector<8x32xf32>
    %cst_185 = arith.constant 0.000000e+00 : f32
    %902 = vector.broadcast %cst_185 : f32 to vector<8x1xf32>
    %903 = vector.extract_strided_slice %901 {offsets = [0, 0], sizes = [8, 31], strides = [1, 1]} : vector<8x32xf32> to vector<8x31xf32>
    %904 = tpu.concatenate %902, %903 in 1 : vector<8x1xf32>, vector<8x31xf32> -> vector<8x32xf32>
    %905 = tpu.concatenate %900, %904 in 1 : vector<8x32xf32>, vector<8x32xf32> -> vector<8x64xf32>
    %906 = vector.extract_strided_slice %894 {offsets = [0, 0], sizes = [8, 64], strides = [1, 1]} : vector<8x128xf32> to vector<8x64xf32>
    %907 = vector.extract_strided_slice %906 {offsets = [0, 32], sizes = [8, 32], strides = [1, 1]} : vector<8x64xf32> to vector<8x32xf32>
    %cst_186 = arith.constant 0.000000e+00 : f32
    %908 = vector.broadcast %cst_186 : f32 to vector<8x1xf32>
    %909 = vector.extract_strided_slice %907 {offsets = [0, 0], sizes = [8, 31], strides = [1, 1]} : vector<8x32xf32> to vector<8x31xf32>
    %910 = tpu.concatenate %908, %909 in 1 : vector<8x1xf32>, vector<8x31xf32> -> vector<8x32xf32>
    %911 = vector.extract_strided_slice %906 {offsets = [0, 0], sizes = [8, 32], strides = [1, 1]} : vector<8x64xf32> to vector<8x32xf32>
    %912 = tpu.concatenate %910, %911 in 1 : vector<8x32xf32>, vector<8x32xf32> -> vector<8x64xf32>
    %913 = tpu.concatenate %905, %912 in 1 : vector<8x64xf32>, vector<8x64xf32> -> vector<8x128xf32>
    %914 = vector.extract_strided_slice %894 {offsets = [0, 64], sizes = [8, 64], strides = [1, 1]} : vector<8x128xf32> to vector<8x64xf32>
    %915 = vector.extract_strided_slice %914 {offsets = [0, 32], sizes = [8, 32], strides = [1, 1]} : vector<8x64xf32> to vector<8x32xf32>
    %916 = vector.extract_strided_slice %914 {offsets = [0, 0], sizes = [8, 32], strides = [1, 1]} : vector<8x64xf32> to vector<8x32xf32>
    %cst_187 = arith.constant 0.000000e+00 : f32
    %917 = vector.broadcast %cst_187 : f32 to vector<8x1xf32>
    %918 = vector.extract_strided_slice %916 {offsets = [0, 1], sizes = [8, 31], strides = [1, 1]} : vector<8x32xf32> to vector<8x31xf32>
    %919 = tpu.concatenate %918, %917 in 1 : vector<8x31xf32>, vector<8x1xf32> -> vector<8x32xf32>
    %920 = tpu.concatenate %915, %919 in 1 : vector<8x32xf32>, vector<8x32xf32> -> vector<8x64xf32>
    %921 = vector.extract_strided_slice %894 {offsets = [0, 0], sizes = [8, 64], strides = [1, 1]} : vector<8x128xf32> to vector<8x64xf32>
    %922 = vector.extract_strided_slice %921 {offsets = [0, 0], sizes = [8, 32], strides = [1, 1]} : vector<8x64xf32> to vector<8x32xf32>
    %cst_188 = arith.constant 0.000000e+00 : f32
    %923 = vector.broadcast %cst_188 : f32 to vector<8x1xf32>
    %924 = vector.extract_strided_slice %922 {offsets = [0, 1], sizes = [8, 31], strides = [1, 1]} : vector<8x32xf32> to vector<8x31xf32>
    %925 = tpu.concatenate %924, %923 in 1 : vector<8x31xf32>, vector<8x1xf32> -> vector<8x32xf32>
    %926 = vector.extract_strided_slice %921 {offsets = [0, 32], sizes = [8, 32], strides = [1, 1]} : vector<8x64xf32> to vector<8x32xf32>
    %cst_189 = arith.constant 0.000000e+00 : f32
    %927 = vector.broadcast %cst_189 : f32 to vector<8x1xf32>
    %928 = vector.extract_strided_slice %926 {offsets = [0, 1], sizes = [8, 31], strides = [1, 1]} : vector<8x32xf32> to vector<8x31xf32>
    %929 = tpu.concatenate %928, %927 in 1 : vector<8x31xf32>, vector<8x1xf32> -> vector<8x32xf32>
    %930 = tpu.concatenate %925, %929 in 1 : vector<8x32xf32>, vector<8x32xf32> -> vector<8x64xf32>
    %931 = tpu.concatenate %920, %930 in 1 : vector<8x64xf32>, vector<8x64xf32> -> vector<8x128xf32>
    %932 = tpu.concatenate %913, %894, %931 in 0 : vector<8x128xf32>, vector<8x128xf32>, vector<8x128xf32> -> vector<24x128xf32>
    %933 = vector.extract_strided_slice %895 {offsets = [0, 64], sizes = [8, 64], strides = [1, 1]} : vector<8x128xf32> to vector<8x64xf32>
    %934 = vector.extract_strided_slice %933 {offsets = [0, 0], sizes = [8, 32], strides = [1, 1]} : vector<8x64xf32> to vector<8x32xf32>
    %cst_190 = arith.constant 0.000000e+00 : f32
    %935 = vector.broadcast %cst_190 : f32 to vector<8x1xf32>
    %936 = vector.extract_strided_slice %934 {offsets = [0, 0], sizes = [8, 31], strides = [1, 1]} : vector<8x32xf32> to vector<8x31xf32>
    %937 = tpu.concatenate %935, %936 in 1 : vector<8x1xf32>, vector<8x31xf32> -> vector<8x32xf32>
    %938 = vector.extract_strided_slice %933 {offsets = [0, 32], sizes = [8, 32], strides = [1, 1]} : vector<8x64xf32> to vector<8x32xf32>
    %cst_191 = arith.constant 0.000000e+00 : f32
    %939 = vector.broadcast %cst_191 : f32 to vector<8x1xf32>
    %940 = vector.extract_strided_slice %938 {offsets = [0, 0], sizes = [8, 31], strides = [1, 1]} : vector<8x32xf32> to vector<8x31xf32>
    %941 = tpu.concatenate %939, %940 in 1 : vector<8x1xf32>, vector<8x31xf32> -> vector<8x32xf32>
    %942 = tpu.concatenate %937, %941 in 1 : vector<8x32xf32>, vector<8x32xf32> -> vector<8x64xf32>
    %943 = vector.extract_strided_slice %895 {offsets = [0, 0], sizes = [8, 64], strides = [1, 1]} : vector<8x128xf32> to vector<8x64xf32>
    %944 = vector.extract_strided_slice %943 {offsets = [0, 32], sizes = [8, 32], strides = [1, 1]} : vector<8x64xf32> to vector<8x32xf32>
    %cst_192 = arith.constant 0.000000e+00 : f32
    %945 = vector.broadcast %cst_192 : f32 to vector<8x1xf32>
    %946 = vector.extract_strided_slice %944 {offsets = [0, 0], sizes = [8, 31], strides = [1, 1]} : vector<8x32xf32> to vector<8x31xf32>
    %947 = tpu.concatenate %945, %946 in 1 : vector<8x1xf32>, vector<8x31xf32> -> vector<8x32xf32>
    %948 = vector.extract_strided_slice %943 {offsets = [0, 0], sizes = [8, 32], strides = [1, 1]} : vector<8x64xf32> to vector<8x32xf32>
    %949 = tpu.concatenate %947, %948 in 1 : vector<8x32xf32>, vector<8x32xf32> -> vector<8x64xf32>
    %950 = tpu.concatenate %942, %949 in 1 : vector<8x64xf32>, vector<8x64xf32> -> vector<8x128xf32>
    %951 = vector.extract_strided_slice %895 {offsets = [0, 64], sizes = [8, 64], strides = [1, 1]} : vector<8x128xf32> to vector<8x64xf32>
    %952 = vector.extract_strided_slice %951 {offsets = [0, 32], sizes = [8, 32], strides = [1, 1]} : vector<8x64xf32> to vector<8x32xf32>
    %953 = vector.extract_strided_slice %951 {offsets = [0, 0], sizes = [8, 32], strides = [1, 1]} : vector<8x64xf32> to vector<8x32xf32>
    %cst_193 = arith.constant 0.000000e+00 : f32
    %954 = vector.broadcast %cst_193 : f32 to vector<8x1xf32>
    %955 = vector.extract_strided_slice %953 {offsets = [0, 1], sizes = [8, 31], strides = [1, 1]} : vector<8x32xf32> to vector<8x31xf32>
    %956 = tpu.concatenate %955, %954 in 1 : vector<8x31xf32>, vector<8x1xf32> -> vector<8x32xf32>
    %957 = tpu.concatenate %952, %956 in 1 : vector<8x32xf32>, vector<8x32xf32> -> vector<8x64xf32>
    %958 = vector.extract_strided_slice %895 {offsets = [0, 0], sizes = [8, 64], strides = [1, 1]} : vector<8x128xf32> to vector<8x64xf32>
    %959 = vector.extract_strided_slice %958 {offsets = [0, 0], sizes = [8, 32], strides = [1, 1]} : vector<8x64xf32> to vector<8x32xf32>
    %cst_194 = arith.constant 0.000000e+00 : f32
    %960 = vector.broadcast %cst_194 : f32 to vector<8x1xf32>
    %961 = vector.extract_strided_slice %959 {offsets = [0, 1], sizes = [8, 31], strides = [1, 1]} : vector<8x32xf32> to vector<8x31xf32>
    %962 = tpu.concatenate %961, %960 in 1 : vector<8x31xf32>, vector<8x1xf32> -> vector<8x32xf32>
    %963 = vector.extract_strided_slice %958 {offsets = [0, 32], sizes = [8, 32], strides = [1, 1]} : vector<8x64xf32> to vector<8x32xf32>
    %cst_195 = arith.constant 0.000000e+00 : f32
    %964 = vector.broadcast %cst_195 : f32 to vector<8x1xf32>
    %965 = vector.extract_strided_slice %963 {offsets = [0, 1], sizes = [8, 31], strides = [1, 1]} : vector<8x32xf32> to vector<8x31xf32>
    %966 = tpu.concatenate %965, %964 in 1 : vector<8x31xf32>, vector<8x1xf32> -> vector<8x32xf32>
    %967 = tpu.concatenate %962, %966 in 1 : vector<8x32xf32>, vector<8x32xf32> -> vector<8x64xf32>
    %968 = tpu.concatenate %957, %967 in 1 : vector<8x64xf32>, vector<8x64xf32> -> vector<8x128xf32>
    %969 = tpu.concatenate %950, %895, %968 in 0 : vector<8x128xf32>, vector<8x128xf32>, vector<8x128xf32> -> vector<24x128xf32>
    %970 = tpu.concatenate %932, %969 in 1 : vector<24x128xf32>, vector<24x128xf32> -> vector<24x256xf32>
    %971 = arith.truncf %970 : vector<24x256xf32> to vector<24x256xbf16>
    %cst_196 = arith.constant dense<0.000000e+00> : vector<8x256xf32>
    %972 = tpu.matmul %892, %971, %cst_196 {dimension_numbers = #tpu.dot_dimension_numbers<[1], [0], [0], [1], [0, 0, 1, 1], [], []>} : vector<8x24xbf16>, vector<24x256xbf16>, vector<8x256xf32> -> vector<8x256xf32>
    %973 = vector.broadcast %893 : vector<8x1xf32> to vector<8x256xf32>
    %974 = arith.addf %972, %973 : vector<8x256xf32>
    %975 = vector.broadcast %759 : vector<1x256xf32> to vector<8x256xf32>
    %976 = arith.mulf %974, %975 : vector<8x256xf32>
    %c0_197 = arith.constant 0 : index
    %c37 = arith.constant 37 : index
    %977 = vector.load %arg4[%c0_197, %c37] : memref<16x53xf32, #tpu.memory_space<vmem>>, vector<8x1xf32>
    %c0_198 = arith.constant 0 : index
    %c38 = arith.constant 38 : index
    %978 = vector.load %arg4[%c0_198, %c38] : memref<16x53xf32, #tpu.memory_space<vmem>>, vector<8x1xf32>
    %979 = vector.broadcast %977 : vector<8x1xf32> to vector<8x256xf32>
    %980 = arith.mulf %979, %976 : vector<8x256xf32>
    %981 = math.sin %980 : vector<8x256xf32>
    %982 = arith.mulf %981, %981 : vector<8x256xf32>
    %983 = vector.broadcast %978 : vector<8x1xf32> to vector<8x256xf32>
    %984 = arith.mulf %983, %982 : vector<8x256xf32>
    %985 = arith.addf %976, %984 : vector<8x256xf32>
    %986 = vector.broadcast %759 : vector<1x256xf32> to vector<8x256xf32>
    %987 = arith.mulf %985, %986 : vector<8x256xf32>
    %c0_199 = arith.constant 0 : index
    %c480 = arith.constant 480 : index
    %988 = vector.load %arg3[%c0_199, %c480] : memref<16x720xbf16, #tpu.memory_space<vmem>>, vector<8x24xbf16>
    %c0_200 = arith.constant 0 : index
    %c36 = arith.constant 36 : index
    %989 = vector.load %arg4[%c0_200, %c36] : memref<16x53xf32, #tpu.memory_space<vmem>>, vector<8x1xf32>
    %990 = vector.extract_strided_slice %987 {offsets = [0, 0], sizes = [8, 128], strides = [1, 1]} : vector<8x256xf32> to vector<8x128xf32>
    %991 = vector.extract_strided_slice %987 {offsets = [0, 128], sizes = [8, 128], strides = [1, 1]} : vector<8x256xf32> to vector<8x128xf32>
    %992 = vector.extract_strided_slice %990 {offsets = [0, 64], sizes = [8, 64], strides = [1, 1]} : vector<8x128xf32> to vector<8x64xf32>
    %993 = vector.extract_strided_slice %992 {offsets = [0, 32], sizes = [8, 32], strides = [1, 1]} : vector<8x64xf32> to vector<8x32xf32>
    %cst_201 = arith.constant 0.000000e+00 : f32
    %994 = vector.broadcast %cst_201 : f32 to vector<8x1xf32>
    %995 = vector.extract_strided_slice %993 {offsets = [0, 0], sizes = [8, 31], strides = [1, 1]} : vector<8x32xf32> to vector<8x31xf32>
    %996 = tpu.concatenate %994, %995 in 1 : vector<8x1xf32>, vector<8x31xf32> -> vector<8x32xf32>
    %997 = vector.extract_strided_slice %992 {offsets = [0, 0], sizes = [8, 32], strides = [1, 1]} : vector<8x64xf32> to vector<8x32xf32>
    %998 = tpu.concatenate %996, %997 in 1 : vector<8x32xf32>, vector<8x32xf32> -> vector<8x64xf32>
    %999 = vector.extract_strided_slice %990 {offsets = [0, 0], sizes = [8, 64], strides = [1, 1]} : vector<8x128xf32> to vector<8x64xf32>
    %1000 = tpu.concatenate %998, %999 in 1 : vector<8x64xf32>, vector<8x64xf32> -> vector<8x128xf32>
    %1001 = vector.extract_strided_slice %990 {offsets = [0, 64], sizes = [8, 64], strides = [1, 1]} : vector<8x128xf32> to vector<8x64xf32>
    %1002 = vector.extract_strided_slice %990 {offsets = [0, 0], sizes = [8, 64], strides = [1, 1]} : vector<8x128xf32> to vector<8x64xf32>
    %1003 = vector.extract_strided_slice %1002 {offsets = [0, 32], sizes = [8, 32], strides = [1, 1]} : vector<8x64xf32> to vector<8x32xf32>
    %1004 = vector.extract_strided_slice %1002 {offsets = [0, 0], sizes = [8, 32], strides = [1, 1]} : vector<8x64xf32> to vector<8x32xf32>
    %cst_202 = arith.constant 0.000000e+00 : f32
    %1005 = vector.broadcast %cst_202 : f32 to vector<8x1xf32>
    %1006 = vector.extract_strided_slice %1004 {offsets = [0, 1], sizes = [8, 31], strides = [1, 1]} : vector<8x32xf32> to vector<8x31xf32>
    %1007 = tpu.concatenate %1006, %1005 in 1 : vector<8x31xf32>, vector<8x1xf32> -> vector<8x32xf32>
    %1008 = tpu.concatenate %1003, %1007 in 1 : vector<8x32xf32>, vector<8x32xf32> -> vector<8x64xf32>
    %1009 = tpu.concatenate %1001, %1008 in 1 : vector<8x64xf32>, vector<8x64xf32> -> vector<8x128xf32>
    %1010 = tpu.concatenate %1000, %990, %1009 in 0 : vector<8x128xf32>, vector<8x128xf32>, vector<8x128xf32> -> vector<24x128xf32>
    %1011 = vector.extract_strided_slice %991 {offsets = [0, 64], sizes = [8, 64], strides = [1, 1]} : vector<8x128xf32> to vector<8x64xf32>
    %1012 = vector.extract_strided_slice %1011 {offsets = [0, 32], sizes = [8, 32], strides = [1, 1]} : vector<8x64xf32> to vector<8x32xf32>
    %cst_203 = arith.constant 0.000000e+00 : f32
    %1013 = vector.broadcast %cst_203 : f32 to vector<8x1xf32>
    %1014 = vector.extract_strided_slice %1012 {offsets = [0, 0], sizes = [8, 31], strides = [1, 1]} : vector<8x32xf32> to vector<8x31xf32>
    %1015 = tpu.concatenate %1013, %1014 in 1 : vector<8x1xf32>, vector<8x31xf32> -> vector<8x32xf32>
    %1016 = vector.extract_strided_slice %1011 {offsets = [0, 0], sizes = [8, 32], strides = [1, 1]} : vector<8x64xf32> to vector<8x32xf32>
    %1017 = tpu.concatenate %1015, %1016 in 1 : vector<8x32xf32>, vector<8x32xf32> -> vector<8x64xf32>
    %1018 = vector.extract_strided_slice %991 {offsets = [0, 0], sizes = [8, 64], strides = [1, 1]} : vector<8x128xf32> to vector<8x64xf32>
    %1019 = tpu.concatenate %1017, %1018 in 1 : vector<8x64xf32>, vector<8x64xf32> -> vector<8x128xf32>
    %1020 = vector.extract_strided_slice %991 {offsets = [0, 64], sizes = [8, 64], strides = [1, 1]} : vector<8x128xf32> to vector<8x64xf32>
    %1021 = vector.extract_strided_slice %991 {offsets = [0, 0], sizes = [8, 64], strides = [1, 1]} : vector<8x128xf32> to vector<8x64xf32>
    %1022 = vector.extract_strided_slice %1021 {offsets = [0, 32], sizes = [8, 32], strides = [1, 1]} : vector<8x64xf32> to vector<8x32xf32>
    %1023 = vector.extract_strided_slice %1021 {offsets = [0, 0], sizes = [8, 32], strides = [1, 1]} : vector<8x64xf32> to vector<8x32xf32>
    %cst_204 = arith.constant 0.000000e+00 : f32
    %1024 = vector.broadcast %cst_204 : f32 to vector<8x1xf32>
    %1025 = vector.extract_strided_slice %1023 {offsets = [0, 1], sizes = [8, 31], strides = [1, 1]} : vector<8x32xf32> to vector<8x31xf32>
    %1026 = tpu.concatenate %1025, %1024 in 1 : vector<8x31xf32>, vector<8x1xf32> -> vector<8x32xf32>
    %1027 = tpu.concatenate %1022, %1026 in 1 : vector<8x32xf32>, vector<8x32xf32> -> vector<8x64xf32>
    %1028 = tpu.concatenate %1020, %1027 in 1 : vector<8x64xf32>, vector<8x64xf32> -> vector<8x128xf32>
    %1029 = tpu.concatenate %1019, %991, %1028 in 0 : vector<8x128xf32>, vector<8x128xf32>, vector<8x128xf32> -> vector<24x128xf32>
    %1030 = tpu.concatenate %1010, %1029 in 1 : vector<24x128xf32>, vector<24x128xf32> -> vector<24x256xf32>
    %1031 = arith.truncf %1030 : vector<24x256xf32> to vector<24x256xbf16>
    %cst_205 = arith.constant dense<0.000000e+00> : vector<8x256xf32>
    %1032 = tpu.matmul %988, %1031, %cst_205 {dimension_numbers = #tpu.dot_dimension_numbers<[1], [0], [0], [1], [0, 0, 1, 1], [], []>} : vector<8x24xbf16>, vector<24x256xbf16>, vector<8x256xf32> -> vector<8x256xf32>
    %1033 = vector.broadcast %989 : vector<8x1xf32> to vector<8x256xf32>
    %1034 = arith.addf %1032, %1033 : vector<8x256xf32>
    %1035 = vector.broadcast %759 : vector<1x256xf32> to vector<8x256xf32>
    %1036 = arith.mulf %1034, %1035 : vector<8x256xf32>
    %1037 = arith.addf %1036, %880 : vector<8x256xf32>
    %1038 = vector.broadcast %759 : vector<1x256xf32> to vector<8x256xf32>
    %1039 = arith.mulf %1037, %1038 : vector<8x256xf32>
    %c0_206 = arith.constant 0 : index
    %c40 = arith.constant 40 : index
    %1040 = vector.load %arg4[%c0_206, %c40] : memref<16x53xf32, #tpu.memory_space<vmem>>, vector<8x1xf32>
    %c0_207 = arith.constant 0 : index
    %c41 = arith.constant 41 : index
    %1041 = vector.load %arg4[%c0_207, %c41] : memref<16x53xf32, #tpu.memory_space<vmem>>, vector<8x1xf32>
    %1042 = vector.broadcast %1040 : vector<8x1xf32> to vector<8x256xf32>
    %1043 = arith.mulf %1042, %739 : vector<8x256xf32>
    %1044 = math.sin %1043 : vector<8x256xf32>
    %1045 = arith.mulf %1044, %1044 : vector<8x256xf32>
    %1046 = vector.broadcast %1041 : vector<8x1xf32> to vector<8x256xf32>
    %1047 = arith.mulf %1046, %1045 : vector<8x256xf32>
    %1048 = arith.addf %739, %1047 : vector<8x256xf32>
    %1049 = vector.broadcast %759 : vector<1x256xf32> to vector<8x256xf32>
    %1050 = arith.mulf %1048, %1049 : vector<8x256xf32>
    %c0_208 = arith.constant 0 : index
    %c504 = arith.constant 504 : index
    %1051 = vector.load %arg3[%c0_208, %c504] : memref<16x720xbf16, #tpu.memory_space<vmem>>, vector<8x40xbf16>
    %c0_209 = arith.constant 0 : index
    %c39 = arith.constant 39 : index
    %1052 = vector.load %arg4[%c0_209, %c39] : memref<16x53xf32, #tpu.memory_space<vmem>>, vector<8x1xf32>
    %1053 = vector.extract_strided_slice %1050 {offsets = [0, 0], sizes = [8, 128], strides = [1, 1]} : vector<8x256xf32> to vector<8x128xf32>
    %1054 = vector.extract_strided_slice %1050 {offsets = [0, 128], sizes = [8, 128], strides = [1, 1]} : vector<8x256xf32> to vector<8x128xf32>
    %1055 = vector.extract_strided_slice %1053 {offsets = [0, 0], sizes = [8, 64], strides = [1, 1]} : vector<8x128xf32> to vector<8x64xf32>
    %1056 = vector.extract_strided_slice %1055 {offsets = [0, 32], sizes = [8, 32], strides = [1, 1]} : vector<8x64xf32> to vector<8x32xf32>
    %cst_210 = arith.constant 0.000000e+00 : f32
    %1057 = vector.broadcast %cst_210 : f32 to vector<8x1xf32>
    %1058 = vector.extract_strided_slice %1056 {offsets = [0, 0], sizes = [8, 31], strides = [1, 1]} : vector<8x32xf32> to vector<8x31xf32>
    %1059 = tpu.concatenate %1057, %1058 in 1 : vector<8x1xf32>, vector<8x31xf32> -> vector<8x32xf32>
    %1060 = vector.extract_strided_slice %1055 {offsets = [0, 0], sizes = [8, 32], strides = [1, 1]} : vector<8x64xf32> to vector<8x32xf32>
    %1061 = tpu.concatenate %1059, %1060 in 1 : vector<8x32xf32>, vector<8x32xf32> -> vector<8x64xf32>
    %1062 = vector.extract_strided_slice %1053 {offsets = [0, 64], sizes = [8, 64], strides = [1, 1]} : vector<8x128xf32> to vector<8x64xf32>
    %1063 = vector.extract_strided_slice %1062 {offsets = [0, 32], sizes = [8, 32], strides = [1, 1]} : vector<8x64xf32> to vector<8x32xf32>
    %cst_211 = arith.constant 0.000000e+00 : f32
    %1064 = vector.broadcast %cst_211 : f32 to vector<8x1xf32>
    %1065 = vector.extract_strided_slice %1063 {offsets = [0, 0], sizes = [8, 31], strides = [1, 1]} : vector<8x32xf32> to vector<8x31xf32>
    %1066 = tpu.concatenate %1064, %1065 in 1 : vector<8x1xf32>, vector<8x31xf32> -> vector<8x32xf32>
    %1067 = vector.extract_strided_slice %1062 {offsets = [0, 0], sizes = [8, 32], strides = [1, 1]} : vector<8x64xf32> to vector<8x32xf32>
    %1068 = tpu.concatenate %1066, %1067 in 1 : vector<8x32xf32>, vector<8x32xf32> -> vector<8x64xf32>
    %1069 = tpu.concatenate %1061, %1068 in 1 : vector<8x64xf32>, vector<8x64xf32> -> vector<8x128xf32>
    %1070 = vector.extract_strided_slice %1053 {offsets = [0, 64], sizes = [8, 64], strides = [1, 1]} : vector<8x128xf32> to vector<8x64xf32>
    %1071 = vector.extract_strided_slice %1070 {offsets = [0, 32], sizes = [8, 32], strides = [1, 1]} : vector<8x64xf32> to vector<8x32xf32>
    %cst_212 = arith.constant 0.000000e+00 : f32
    %1072 = vector.broadcast %cst_212 : f32 to vector<8x1xf32>
    %1073 = vector.extract_strided_slice %1071 {offsets = [0, 0], sizes = [8, 31], strides = [1, 1]} : vector<8x32xf32> to vector<8x31xf32>
    %1074 = tpu.concatenate %1072, %1073 in 1 : vector<8x1xf32>, vector<8x31xf32> -> vector<8x32xf32>
    %1075 = vector.extract_strided_slice %1070 {offsets = [0, 0], sizes = [8, 32], strides = [1, 1]} : vector<8x64xf32> to vector<8x32xf32>
    %1076 = tpu.concatenate %1074, %1075 in 1 : vector<8x32xf32>, vector<8x32xf32> -> vector<8x64xf32>
    %1077 = vector.extract_strided_slice %1053 {offsets = [0, 0], sizes = [8, 64], strides = [1, 1]} : vector<8x128xf32> to vector<8x64xf32>
    %1078 = tpu.concatenate %1076, %1077 in 1 : vector<8x64xf32>, vector<8x64xf32> -> vector<8x128xf32>
    %1079 = vector.extract_strided_slice %1053 {offsets = [0, 64], sizes = [8, 64], strides = [1, 1]} : vector<8x128xf32> to vector<8x64xf32>
    %1080 = vector.extract_strided_slice %1053 {offsets = [0, 0], sizes = [8, 64], strides = [1, 1]} : vector<8x128xf32> to vector<8x64xf32>
    %1081 = vector.extract_strided_slice %1080 {offsets = [0, 32], sizes = [8, 32], strides = [1, 1]} : vector<8x64xf32> to vector<8x32xf32>
    %1082 = vector.extract_strided_slice %1080 {offsets = [0, 0], sizes = [8, 32], strides = [1, 1]} : vector<8x64xf32> to vector<8x32xf32>
    %cst_213 = arith.constant 0.000000e+00 : f32
    %1083 = vector.broadcast %cst_213 : f32 to vector<8x1xf32>
    %1084 = vector.extract_strided_slice %1082 {offsets = [0, 1], sizes = [8, 31], strides = [1, 1]} : vector<8x32xf32> to vector<8x31xf32>
    %1085 = tpu.concatenate %1084, %1083 in 1 : vector<8x31xf32>, vector<8x1xf32> -> vector<8x32xf32>
    %1086 = tpu.concatenate %1081, %1085 in 1 : vector<8x32xf32>, vector<8x32xf32> -> vector<8x64xf32>
    %1087 = tpu.concatenate %1079, %1086 in 1 : vector<8x64xf32>, vector<8x64xf32> -> vector<8x128xf32>
    %1088 = vector.extract_strided_slice %1053 {offsets = [0, 0], sizes = [8, 64], strides = [1, 1]} : vector<8x128xf32> to vector<8x64xf32>
    %1089 = vector.extract_strided_slice %1088 {offsets = [0, 32], sizes = [8, 32], strides = [1, 1]} : vector<8x64xf32> to vector<8x32xf32>
    %1090 = vector.extract_strided_slice %1088 {offsets = [0, 0], sizes = [8, 32], strides = [1, 1]} : vector<8x64xf32> to vector<8x32xf32>
    %cst_214 = arith.constant 0.000000e+00 : f32
    %1091 = vector.broadcast %cst_214 : f32 to vector<8x1xf32>
    %1092 = vector.extract_strided_slice %1090 {offsets = [0, 1], sizes = [8, 31], strides = [1, 1]} : vector<8x32xf32> to vector<8x31xf32>
    %1093 = tpu.concatenate %1092, %1091 in 1 : vector<8x31xf32>, vector<8x1xf32> -> vector<8x32xf32>
    %1094 = tpu.concatenate %1089, %1093 in 1 : vector<8x32xf32>, vector<8x32xf32> -> vector<8x64xf32>
    %1095 = vector.extract_strided_slice %1053 {offsets = [0, 64], sizes = [8, 64], strides = [1, 1]} : vector<8x128xf32> to vector<8x64xf32>
    %1096 = vector.extract_strided_slice %1095 {offsets = [0, 32], sizes = [8, 32], strides = [1, 1]} : vector<8x64xf32> to vector<8x32xf32>
    %1097 = vector.extract_strided_slice %1095 {offsets = [0, 0], sizes = [8, 32], strides = [1, 1]} : vector<8x64xf32> to vector<8x32xf32>
    %cst_215 = arith.constant 0.000000e+00 : f32
    %1098 = vector.broadcast %cst_215 : f32 to vector<8x1xf32>
    %1099 = vector.extract_strided_slice %1097 {offsets = [0, 1], sizes = [8, 31], strides = [1, 1]} : vector<8x32xf32> to vector<8x31xf32>
    %1100 = tpu.concatenate %1099, %1098 in 1 : vector<8x31xf32>, vector<8x1xf32> -> vector<8x32xf32>
    %1101 = tpu.concatenate %1096, %1100 in 1 : vector<8x32xf32>, vector<8x32xf32> -> vector<8x64xf32>
    %1102 = tpu.concatenate %1094, %1101 in 1 : vector<8x64xf32>, vector<8x64xf32> -> vector<8x128xf32>
    %1103 = tpu.concatenate %1069, %1078, %1053, %1087, %1102 in 0 : vector<8x128xf32>, vector<8x128xf32>, vector<8x128xf32>, vector<8x128xf32>, vector<8x128xf32> -> vector<40x128xf32>
    %1104 = vector.extract_strided_slice %1054 {offsets = [0, 0], sizes = [8, 64], strides = [1, 1]} : vector<8x128xf32> to vector<8x64xf32>
    %1105 = vector.extract_strided_slice %1104 {offsets = [0, 32], sizes = [8, 32], strides = [1, 1]} : vector<8x64xf32> to vector<8x32xf32>
    %cst_216 = arith.constant 0.000000e+00 : f32
    %1106 = vector.broadcast %cst_216 : f32 to vector<8x1xf32>
    %1107 = vector.extract_strided_slice %1105 {offsets = [0, 0], sizes = [8, 31], strides = [1, 1]} : vector<8x32xf32> to vector<8x31xf32>
    %1108 = tpu.concatenate %1106, %1107 in 1 : vector<8x1xf32>, vector<8x31xf32> -> vector<8x32xf32>
    %1109 = vector.extract_strided_slice %1104 {offsets = [0, 0], sizes = [8, 32], strides = [1, 1]} : vector<8x64xf32> to vector<8x32xf32>
    %1110 = tpu.concatenate %1108, %1109 in 1 : vector<8x32xf32>, vector<8x32xf32> -> vector<8x64xf32>
    %1111 = vector.extract_strided_slice %1054 {offsets = [0, 64], sizes = [8, 64], strides = [1, 1]} : vector<8x128xf32> to vector<8x64xf32>
    %1112 = vector.extract_strided_slice %1111 {offsets = [0, 32], sizes = [8, 32], strides = [1, 1]} : vector<8x64xf32> to vector<8x32xf32>
    %cst_217 = arith.constant 0.000000e+00 : f32
    %1113 = vector.broadcast %cst_217 : f32 to vector<8x1xf32>
    %1114 = vector.extract_strided_slice %1112 {offsets = [0, 0], sizes = [8, 31], strides = [1, 1]} : vector<8x32xf32> to vector<8x31xf32>
    %1115 = tpu.concatenate %1113, %1114 in 1 : vector<8x1xf32>, vector<8x31xf32> -> vector<8x32xf32>
    %1116 = vector.extract_strided_slice %1111 {offsets = [0, 0], sizes = [8, 32], strides = [1, 1]} : vector<8x64xf32> to vector<8x32xf32>
    %1117 = tpu.concatenate %1115, %1116 in 1 : vector<8x32xf32>, vector<8x32xf32> -> vector<8x64xf32>
    %1118 = tpu.concatenate %1110, %1117 in 1 : vector<8x64xf32>, vector<8x64xf32> -> vector<8x128xf32>
    %1119 = vector.extract_strided_slice %1054 {offsets = [0, 64], sizes = [8, 64], strides = [1, 1]} : vector<8x128xf32> to vector<8x64xf32>
    %1120 = vector.extract_strided_slice %1119 {offsets = [0, 32], sizes = [8, 32], strides = [1, 1]} : vector<8x64xf32> to vector<8x32xf32>
    %cst_218 = arith.constant 0.000000e+00 : f32
    %1121 = vector.broadcast %cst_218 : f32 to vector<8x1xf32>
    %1122 = vector.extract_strided_slice %1120 {offsets = [0, 0], sizes = [8, 31], strides = [1, 1]} : vector<8x32xf32> to vector<8x31xf32>
    %1123 = tpu.concatenate %1121, %1122 in 1 : vector<8x1xf32>, vector<8x31xf32> -> vector<8x32xf32>
    %1124 = vector.extract_strided_slice %1119 {offsets = [0, 0], sizes = [8, 32], strides = [1, 1]} : vector<8x64xf32> to vector<8x32xf32>
    %1125 = tpu.concatenate %1123, %1124 in 1 : vector<8x32xf32>, vector<8x32xf32> -> vector<8x64xf32>
    %1126 = vector.extract_strided_slice %1054 {offsets = [0, 0], sizes = [8, 64], strides = [1, 1]} : vector<8x128xf32> to vector<8x64xf32>
    %1127 = tpu.concatenate %1125, %1126 in 1 : vector<8x64xf32>, vector<8x64xf32> -> vector<8x128xf32>
    %1128 = vector.extract_strided_slice %1054 {offsets = [0, 64], sizes = [8, 64], strides = [1, 1]} : vector<8x128xf32> to vector<8x64xf32>
    %1129 = vector.extract_strided_slice %1054 {offsets = [0, 0], sizes = [8, 64], strides = [1, 1]} : vector<8x128xf32> to vector<8x64xf32>
    %1130 = vector.extract_strided_slice %1129 {offsets = [0, 32], sizes = [8, 32], strides = [1, 1]} : vector<8x64xf32> to vector<8x32xf32>
    %1131 = vector.extract_strided_slice %1129 {offsets = [0, 0], sizes = [8, 32], strides = [1, 1]} : vector<8x64xf32> to vector<8x32xf32>
    %cst_219 = arith.constant 0.000000e+00 : f32
    %1132 = vector.broadcast %cst_219 : f32 to vector<8x1xf32>
    %1133 = vector.extract_strided_slice %1131 {offsets = [0, 1], sizes = [8, 31], strides = [1, 1]} : vector<8x32xf32> to vector<8x31xf32>
    %1134 = tpu.concatenate %1133, %1132 in 1 : vector<8x31xf32>, vector<8x1xf32> -> vector<8x32xf32>
    %1135 = tpu.concatenate %1130, %1134 in 1 : vector<8x32xf32>, vector<8x32xf32> -> vector<8x64xf32>
    %1136 = tpu.concatenate %1128, %1135 in 1 : vector<8x64xf32>, vector<8x64xf32> -> vector<8x128xf32>
    %1137 = vector.extract_strided_slice %1054 {offsets = [0, 0], sizes = [8, 64], strides = [1, 1]} : vector<8x128xf32> to vector<8x64xf32>
    %1138 = vector.extract_strided_slice %1137 {offsets = [0, 32], sizes = [8, 32], strides = [1, 1]} : vector<8x64xf32> to vector<8x32xf32>
    %1139 = vector.extract_strided_slice %1137 {offsets = [0, 0], sizes = [8, 32], strides = [1, 1]} : vector<8x64xf32> to vector<8x32xf32>
    %cst_220 = arith.constant 0.000000e+00 : f32
    %1140 = vector.broadcast %cst_220 : f32 to vector<8x1xf32>
    %1141 = vector.extract_strided_slice %1139 {offsets = [0, 1], sizes = [8, 31], strides = [1, 1]} : vector<8x32xf32> to vector<8x31xf32>
    %1142 = tpu.concatenate %1141, %1140 in 1 : vector<8x31xf32>, vector<8x1xf32> -> vector<8x32xf32>
    %1143 = tpu.concatenate %1138, %1142 in 1 : vector<8x32xf32>, vector<8x32xf32> -> vector<8x64xf32>
    %1144 = vector.extract_strided_slice %1054 {offsets = [0, 64], sizes = [8, 64], strides = [1, 1]} : vector<8x128xf32> to vector<8x64xf32>
    %1145 = vector.extract_strided_slice %1144 {offsets = [0, 32], sizes = [8, 32], strides = [1, 1]} : vector<8x64xf32> to vector<8x32xf32>
    %1146 = vector.extract_strided_slice %1144 {offsets = [0, 0], sizes = [8, 32], strides = [1, 1]} : vector<8x64xf32> to vector<8x32xf32>
    %cst_221 = arith.constant 0.000000e+00 : f32
    %1147 = vector.broadcast %cst_221 : f32 to vector<8x1xf32>
    %1148 = vector.extract_strided_slice %1146 {offsets = [0, 1], sizes = [8, 31], strides = [1, 1]} : vector<8x32xf32> to vector<8x31xf32>
    %1149 = tpu.concatenate %1148, %1147 in 1 : vector<8x31xf32>, vector<8x1xf32> -> vector<8x32xf32>
    %1150 = tpu.concatenate %1145, %1149 in 1 : vector<8x32xf32>, vector<8x32xf32> -> vector<8x64xf32>
    %1151 = tpu.concatenate %1143, %1150 in 1 : vector<8x64xf32>, vector<8x64xf32> -> vector<8x128xf32>
    %1152 = tpu.concatenate %1118, %1127, %1054, %1136, %1151 in 0 : vector<8x128xf32>, vector<8x128xf32>, vector<8x128xf32>, vector<8x128xf32>, vector<8x128xf32> -> vector<40x128xf32>
    %1153 = tpu.concatenate %1103, %1152 in 1 : vector<40x128xf32>, vector<40x128xf32> -> vector<40x256xf32>
    %1154 = arith.truncf %1153 : vector<40x256xf32> to vector<40x256xbf16>
    %cst_222 = arith.constant dense<0.000000e+00> : vector<8x256xf32>
    %1155 = tpu.matmul %1051, %1154, %cst_222 {dimension_numbers = #tpu.dot_dimension_numbers<[1], [0], [0], [1], [0, 0, 1, 1], [], []>} : vector<8x40xbf16>, vector<40x256xbf16>, vector<8x256xf32> -> vector<8x256xf32>
    %1156 = vector.broadcast %1052 : vector<8x1xf32> to vector<8x256xf32>
    %1157 = arith.addf %1155, %1156 : vector<8x256xf32>
    %1158 = vector.broadcast %759 : vector<1x256xf32> to vector<8x256xf32>
    %1159 = arith.mulf %1157, %1158 : vector<8x256xf32>
    %c0_223 = arith.constant 0 : index
    %c43 = arith.constant 43 : index
    %1160 = vector.load %arg4[%c0_223, %c43] : memref<16x53xf32, #tpu.memory_space<vmem>>, vector<8x1xf32>
    %c0_224 = arith.constant 0 : index
    %c44 = arith.constant 44 : index
    %1161 = vector.load %arg4[%c0_224, %c44] : memref<16x53xf32, #tpu.memory_space<vmem>>, vector<8x1xf32>
    %1162 = vector.broadcast %1160 : vector<8x1xf32> to vector<8x256xf32>
    %1163 = arith.mulf %1162, %1159 : vector<8x256xf32>
    %1164 = math.sin %1163 : vector<8x256xf32>
    %1165 = arith.mulf %1164, %1164 : vector<8x256xf32>
    %1166 = vector.broadcast %1161 : vector<8x1xf32> to vector<8x256xf32>
    %1167 = arith.mulf %1166, %1165 : vector<8x256xf32>
    %1168 = arith.addf %1159, %1167 : vector<8x256xf32>
    %1169 = vector.broadcast %759 : vector<1x256xf32> to vector<8x256xf32>
    %1170 = arith.mulf %1168, %1169 : vector<8x256xf32>
    %c0_225 = arith.constant 0 : index
    %c544 = arith.constant 544 : index
    %1171 = vector.load %arg3[%c0_225, %c544] : memref<16x720xbf16, #tpu.memory_space<vmem>>, vector<8x40xbf16>
    %c0_226 = arith.constant 0 : index
    %c42 = arith.constant 42 : index
    %1172 = vector.load %arg4[%c0_226, %c42] : memref<16x53xf32, #tpu.memory_space<vmem>>, vector<8x1xf32>
    %1173 = vector.extract_strided_slice %1170 {offsets = [0, 0], sizes = [8, 128], strides = [1, 1]} : vector<8x256xf32> to vector<8x128xf32>
    %1174 = vector.extract_strided_slice %1170 {offsets = [0, 128], sizes = [8, 128], strides = [1, 1]} : vector<8x256xf32> to vector<8x128xf32>
    %1175 = vector.extract_strided_slice %1173 {offsets = [0, 0], sizes = [8, 64], strides = [1, 1]} : vector<8x128xf32> to vector<8x64xf32>
    %1176 = vector.extract_strided_slice %1175 {offsets = [0, 32], sizes = [8, 32], strides = [1, 1]} : vector<8x64xf32> to vector<8x32xf32>
    %cst_227 = arith.constant 0.000000e+00 : f32
    %1177 = vector.broadcast %cst_227 : f32 to vector<8x1xf32>
    %1178 = vector.extract_strided_slice %1176 {offsets = [0, 0], sizes = [8, 31], strides = [1, 1]} : vector<8x32xf32> to vector<8x31xf32>
    %1179 = tpu.concatenate %1177, %1178 in 1 : vector<8x1xf32>, vector<8x31xf32> -> vector<8x32xf32>
    %1180 = vector.extract_strided_slice %1175 {offsets = [0, 0], sizes = [8, 32], strides = [1, 1]} : vector<8x64xf32> to vector<8x32xf32>
    %1181 = tpu.concatenate %1179, %1180 in 1 : vector<8x32xf32>, vector<8x32xf32> -> vector<8x64xf32>
    %1182 = vector.extract_strided_slice %1173 {offsets = [0, 64], sizes = [8, 64], strides = [1, 1]} : vector<8x128xf32> to vector<8x64xf32>
    %1183 = vector.extract_strided_slice %1182 {offsets = [0, 32], sizes = [8, 32], strides = [1, 1]} : vector<8x64xf32> to vector<8x32xf32>
    %cst_228 = arith.constant 0.000000e+00 : f32
    %1184 = vector.broadcast %cst_228 : f32 to vector<8x1xf32>
    %1185 = vector.extract_strided_slice %1183 {offsets = [0, 0], sizes = [8, 31], strides = [1, 1]} : vector<8x32xf32> to vector<8x31xf32>
    %1186 = tpu.concatenate %1184, %1185 in 1 : vector<8x1xf32>, vector<8x31xf32> -> vector<8x32xf32>
    %1187 = vector.extract_strided_slice %1182 {offsets = [0, 0], sizes = [8, 32], strides = [1, 1]} : vector<8x64xf32> to vector<8x32xf32>
    %1188 = tpu.concatenate %1186, %1187 in 1 : vector<8x32xf32>, vector<8x32xf32> -> vector<8x64xf32>
    %1189 = tpu.concatenate %1181, %1188 in 1 : vector<8x64xf32>, vector<8x64xf32> -> vector<8x128xf32>
    %1190 = vector.extract_strided_slice %1173 {offsets = [0, 64], sizes = [8, 64], strides = [1, 1]} : vector<8x128xf32> to vector<8x64xf32>
    %1191 = vector.extract_strided_slice %1190 {offsets = [0, 32], sizes = [8, 32], strides = [1, 1]} : vector<8x64xf32> to vector<8x32xf32>
    %cst_229 = arith.constant 0.000000e+00 : f32
    %1192 = vector.broadcast %cst_229 : f32 to vector<8x1xf32>
    %1193 = vector.extract_strided_slice %1191 {offsets = [0, 0], sizes = [8, 31], strides = [1, 1]} : vector<8x32xf32> to vector<8x31xf32>
    %1194 = tpu.concatenate %1192, %1193 in 1 : vector<8x1xf32>, vector<8x31xf32> -> vector<8x32xf32>
    %1195 = vector.extract_strided_slice %1190 {offsets = [0, 0], sizes = [8, 32], strides = [1, 1]} : vector<8x64xf32> to vector<8x32xf32>
    %1196 = tpu.concatenate %1194, %1195 in 1 : vector<8x32xf32>, vector<8x32xf32> -> vector<8x64xf32>
    %1197 = vector.extract_strided_slice %1173 {offsets = [0, 0], sizes = [8, 64], strides = [1, 1]} : vector<8x128xf32> to vector<8x64xf32>
    %1198 = tpu.concatenate %1196, %1197 in 1 : vector<8x64xf32>, vector<8x64xf32> -> vector<8x128xf32>
    %1199 = vector.extract_strided_slice %1173 {offsets = [0, 64], sizes = [8, 64], strides = [1, 1]} : vector<8x128xf32> to vector<8x64xf32>
    %1200 = vector.extract_strided_slice %1173 {offsets = [0, 0], sizes = [8, 64], strides = [1, 1]} : vector<8x128xf32> to vector<8x64xf32>
    %1201 = vector.extract_strided_slice %1200 {offsets = [0, 32], sizes = [8, 32], strides = [1, 1]} : vector<8x64xf32> to vector<8x32xf32>
    %1202 = vector.extract_strided_slice %1200 {offsets = [0, 0], sizes = [8, 32], strides = [1, 1]} : vector<8x64xf32> to vector<8x32xf32>
    %cst_230 = arith.constant 0.000000e+00 : f32
    %1203 = vector.broadcast %cst_230 : f32 to vector<8x1xf32>
    %1204 = vector.extract_strided_slice %1202 {offsets = [0, 1], sizes = [8, 31], strides = [1, 1]} : vector<8x32xf32> to vector<8x31xf32>
    %1205 = tpu.concatenate %1204, %1203 in 1 : vector<8x31xf32>, vector<8x1xf32> -> vector<8x32xf32>
    %1206 = tpu.concatenate %1201, %1205 in 1 : vector<8x32xf32>, vector<8x32xf32> -> vector<8x64xf32>
    %1207 = tpu.concatenate %1199, %1206 in 1 : vector<8x64xf32>, vector<8x64xf32> -> vector<8x128xf32>
    %1208 = vector.extract_strided_slice %1173 {offsets = [0, 0], sizes = [8, 64], strides = [1, 1]} : vector<8x128xf32> to vector<8x64xf32>
    %1209 = vector.extract_strided_slice %1208 {offsets = [0, 32], sizes = [8, 32], strides = [1, 1]} : vector<8x64xf32> to vector<8x32xf32>
    %1210 = vector.extract_strided_slice %1208 {offsets = [0, 0], sizes = [8, 32], strides = [1, 1]} : vector<8x64xf32> to vector<8x32xf32>
    %cst_231 = arith.constant 0.000000e+00 : f32
    %1211 = vector.broadcast %cst_231 : f32 to vector<8x1xf32>
    %1212 = vector.extract_strided_slice %1210 {offsets = [0, 1], sizes = [8, 31], strides = [1, 1]} : vector<8x32xf32> to vector<8x31xf32>
    %1213 = tpu.concatenate %1212, %1211 in 1 : vector<8x31xf32>, vector<8x1xf32> -> vector<8x32xf32>
    %1214 = tpu.concatenate %1209, %1213 in 1 : vector<8x32xf32>, vector<8x32xf32> -> vector<8x64xf32>
    %1215 = vector.extract_strided_slice %1173 {offsets = [0, 64], sizes = [8, 64], strides = [1, 1]} : vector<8x128xf32> to vector<8x64xf32>
    %1216 = vector.extract_strided_slice %1215 {offsets = [0, 32], sizes = [8, 32], strides = [1, 1]} : vector<8x64xf32> to vector<8x32xf32>
    %1217 = vector.extract_strided_slice %1215 {offsets = [0, 0], sizes = [8, 32], strides = [1, 1]} : vector<8x64xf32> to vector<8x32xf32>
    %cst_232 = arith.constant 0.000000e+00 : f32
    %1218 = vector.broadcast %cst_232 : f32 to vector<8x1xf32>
    %1219 = vector.extract_strided_slice %1217 {offsets = [0, 1], sizes = [8, 31], strides = [1, 1]} : vector<8x32xf32> to vector<8x31xf32>
    %1220 = tpu.concatenate %1219, %1218 in 1 : vector<8x31xf32>, vector<8x1xf32> -> vector<8x32xf32>
    %1221 = tpu.concatenate %1216, %1220 in 1 : vector<8x32xf32>, vector<8x32xf32> -> vector<8x64xf32>
    %1222 = tpu.concatenate %1214, %1221 in 1 : vector<8x64xf32>, vector<8x64xf32> -> vector<8x128xf32>
    %1223 = tpu.concatenate %1189, %1198, %1173, %1207, %1222 in 0 : vector<8x128xf32>, vector<8x128xf32>, vector<8x128xf32>, vector<8x128xf32>, vector<8x128xf32> -> vector<40x128xf32>
    %1224 = vector.extract_strided_slice %1174 {offsets = [0, 0], sizes = [8, 64], strides = [1, 1]} : vector<8x128xf32> to vector<8x64xf32>
    %1225 = vector.extract_strided_slice %1224 {offsets = [0, 32], sizes = [8, 32], strides = [1, 1]} : vector<8x64xf32> to vector<8x32xf32>
    %cst_233 = arith.constant 0.000000e+00 : f32
    %1226 = vector.broadcast %cst_233 : f32 to vector<8x1xf32>
    %1227 = vector.extract_strided_slice %1225 {offsets = [0, 0], sizes = [8, 31], strides = [1, 1]} : vector<8x32xf32> to vector<8x31xf32>
    %1228 = tpu.concatenate %1226, %1227 in 1 : vector<8x1xf32>, vector<8x31xf32> -> vector<8x32xf32>
    %1229 = vector.extract_strided_slice %1224 {offsets = [0, 0], sizes = [8, 32], strides = [1, 1]} : vector<8x64xf32> to vector<8x32xf32>
    %1230 = tpu.concatenate %1228, %1229 in 1 : vector<8x32xf32>, vector<8x32xf32> -> vector<8x64xf32>
    %1231 = vector.extract_strided_slice %1174 {offsets = [0, 64], sizes = [8, 64], strides = [1, 1]} : vector<8x128xf32> to vector<8x64xf32>
    %1232 = vector.extract_strided_slice %1231 {offsets = [0, 32], sizes = [8, 32], strides = [1, 1]} : vector<8x64xf32> to vector<8x32xf32>
    %cst_234 = arith.constant 0.000000e+00 : f32
    %1233 = vector.broadcast %cst_234 : f32 to vector<8x1xf32>
    %1234 = vector.extract_strided_slice %1232 {offsets = [0, 0], sizes = [8, 31], strides = [1, 1]} : vector<8x32xf32> to vector<8x31xf32>
    %1235 = tpu.concatenate %1233, %1234 in 1 : vector<8x1xf32>, vector<8x31xf32> -> vector<8x32xf32>
    %1236 = vector.extract_strided_slice %1231 {offsets = [0, 0], sizes = [8, 32], strides = [1, 1]} : vector<8x64xf32> to vector<8x32xf32>
    %1237 = tpu.concatenate %1235, %1236 in 1 : vector<8x32xf32>, vector<8x32xf32> -> vector<8x64xf32>
    %1238 = tpu.concatenate %1230, %1237 in 1 : vector<8x64xf32>, vector<8x64xf32> -> vector<8x128xf32>
    %1239 = vector.extract_strided_slice %1174 {offsets = [0, 64], sizes = [8, 64], strides = [1, 1]} : vector<8x128xf32> to vector<8x64xf32>
    %1240 = vector.extract_strided_slice %1239 {offsets = [0, 32], sizes = [8, 32], strides = [1, 1]} : vector<8x64xf32> to vector<8x32xf32>
    %cst_235 = arith.constant 0.000000e+00 : f32
    %1241 = vector.broadcast %cst_235 : f32 to vector<8x1xf32>
    %1242 = vector.extract_strided_slice %1240 {offsets = [0, 0], sizes = [8, 31], strides = [1, 1]} : vector<8x32xf32> to vector<8x31xf32>
    %1243 = tpu.concatenate %1241, %1242 in 1 : vector<8x1xf32>, vector<8x31xf32> -> vector<8x32xf32>
    %1244 = vector.extract_strided_slice %1239 {offsets = [0, 0], sizes = [8, 32], strides = [1, 1]} : vector<8x64xf32> to vector<8x32xf32>
    %1245 = tpu.concatenate %1243, %1244 in 1 : vector<8x32xf32>, vector<8x32xf32> -> vector<8x64xf32>
    %1246 = vector.extract_strided_slice %1174 {offsets = [0, 0], sizes = [8, 64], strides = [1, 1]} : vector<8x128xf32> to vector<8x64xf32>
    %1247 = tpu.concatenate %1245, %1246 in 1 : vector<8x64xf32>, vector<8x64xf32> -> vector<8x128xf32>
    %1248 = vector.extract_strided_slice %1174 {offsets = [0, 64], sizes = [8, 64], strides = [1, 1]} : vector<8x128xf32> to vector<8x64xf32>
    %1249 = vector.extract_strided_slice %1174 {offsets = [0, 0], sizes = [8, 64], strides = [1, 1]} : vector<8x128xf32> to vector<8x64xf32>
    %1250 = vector.extract_strided_slice %1249 {offsets = [0, 32], sizes = [8, 32], strides = [1, 1]} : vector<8x64xf32> to vector<8x32xf32>
    %1251 = vector.extract_strided_slice %1249 {offsets = [0, 0], sizes = [8, 32], strides = [1, 1]} : vector<8x64xf32> to vector<8x32xf32>
    %cst_236 = arith.constant 0.000000e+00 : f32
    %1252 = vector.broadcast %cst_236 : f32 to vector<8x1xf32>
    %1253 = vector.extract_strided_slice %1251 {offsets = [0, 1], sizes = [8, 31], strides = [1, 1]} : vector<8x32xf32> to vector<8x31xf32>
    %1254 = tpu.concatenate %1253, %1252 in 1 : vector<8x31xf32>, vector<8x1xf32> -> vector<8x32xf32>
    %1255 = tpu.concatenate %1250, %1254 in 1 : vector<8x32xf32>, vector<8x32xf32> -> vector<8x64xf32>
    %1256 = tpu.concatenate %1248, %1255 in 1 : vector<8x64xf32>, vector<8x64xf32> -> vector<8x128xf32>
    %1257 = vector.extract_strided_slice %1174 {offsets = [0, 0], sizes = [8, 64], strides = [1, 1]} : vector<8x128xf32> to vector<8x64xf32>
    %1258 = vector.extract_strided_slice %1257 {offsets = [0, 32], sizes = [8, 32], strides = [1, 1]} : vector<8x64xf32> to vector<8x32xf32>
    %1259 = vector.extract_strided_slice %1257 {offsets = [0, 0], sizes = [8, 32], strides = [1, 1]} : vector<8x64xf32> to vector<8x32xf32>
    %cst_237 = arith.constant 0.000000e+00 : f32
    %1260 = vector.broadcast %cst_237 : f32 to vector<8x1xf32>
    %1261 = vector.extract_strided_slice %1259 {offsets = [0, 1], sizes = [8, 31], strides = [1, 1]} : vector<8x32xf32> to vector<8x31xf32>
    %1262 = tpu.concatenate %1261, %1260 in 1 : vector<8x31xf32>, vector<8x1xf32> -> vector<8x32xf32>
    %1263 = tpu.concatenate %1258, %1262 in 1 : vector<8x32xf32>, vector<8x32xf32> -> vector<8x64xf32>
    %1264 = vector.extract_strided_slice %1174 {offsets = [0, 64], sizes = [8, 64], strides = [1, 1]} : vector<8x128xf32> to vector<8x64xf32>
    %1265 = vector.extract_strided_slice %1264 {offsets = [0, 32], sizes = [8, 32], strides = [1, 1]} : vector<8x64xf32> to vector<8x32xf32>
    %1266 = vector.extract_strided_slice %1264 {offsets = [0, 0], sizes = [8, 32], strides = [1, 1]} : vector<8x64xf32> to vector<8x32xf32>
    %cst_238 = arith.constant 0.000000e+00 : f32
    %1267 = vector.broadcast %cst_238 : f32 to vector<8x1xf32>
    %1268 = vector.extract_strided_slice %1266 {offsets = [0, 1], sizes = [8, 31], strides = [1, 1]} : vector<8x32xf32> to vector<8x31xf32>
    %1269 = tpu.concatenate %1268, %1267 in 1 : vector<8x31xf32>, vector<8x1xf32> -> vector<8x32xf32>
    %1270 = tpu.concatenate %1265, %1269 in 1 : vector<8x32xf32>, vector<8x32xf32> -> vector<8x64xf32>
    %1271 = tpu.concatenate %1263, %1270 in 1 : vector<8x64xf32>, vector<8x64xf32> -> vector<8x128xf32>
    %1272 = tpu.concatenate %1238, %1247, %1174, %1256, %1271 in 0 : vector<8x128xf32>, vector<8x128xf32>, vector<8x128xf32>, vector<8x128xf32>, vector<8x128xf32> -> vector<40x128xf32>
    %1273 = tpu.concatenate %1223, %1272 in 1 : vector<40x128xf32>, vector<40x128xf32> -> vector<40x256xf32>
    %1274 = arith.truncf %1273 : vector<40x256xf32> to vector<40x256xbf16>
    %cst_239 = arith.constant dense<0.000000e+00> : vector<8x256xf32>
    %1275 = tpu.matmul %1171, %1274, %cst_239 {dimension_numbers = #tpu.dot_dimension_numbers<[1], [0], [0], [1], [0, 0, 1, 1], [], []>} : vector<8x40xbf16>, vector<40x256xbf16>, vector<8x256xf32> -> vector<8x256xf32>
    %1276 = vector.broadcast %1172 : vector<8x1xf32> to vector<8x256xf32>
    %1277 = arith.addf %1275, %1276 : vector<8x256xf32>
    %1278 = vector.broadcast %759 : vector<1x256xf32> to vector<8x256xf32>
    %1279 = arith.mulf %1277, %1278 : vector<8x256xf32>
    %1280 = arith.addf %1279, %739 : vector<8x256xf32>
    %c0_240 = arith.constant 0 : index
    %c46 = arith.constant 46 : index
    %1281 = vector.load %arg4[%c0_240, %c46] : memref<16x53xf32, #tpu.memory_space<vmem>>, vector<8x1xf32>
    %c0_241 = arith.constant 0 : index
    %c47 = arith.constant 47 : index
    %1282 = vector.load %arg4[%c0_241, %c47] : memref<16x53xf32, #tpu.memory_space<vmem>>, vector<8x1xf32>
    %1283 = vector.broadcast %1281 : vector<8x1xf32> to vector<8x256xf32>
    %1284 = arith.mulf %1283, %1280 : vector<8x256xf32>
    %1285 = math.sin %1284 : vector<8x256xf32>
    %1286 = arith.mulf %1285, %1285 : vector<8x256xf32>
    %1287 = vector.broadcast %1282 : vector<8x1xf32> to vector<8x256xf32>
    %1288 = arith.mulf %1287, %1286 : vector<8x256xf32>
    %1289 = arith.addf %1280, %1288 : vector<8x256xf32>
    %1290 = vector.broadcast %759 : vector<1x256xf32> to vector<8x256xf32>
    %1291 = arith.mulf %1289, %1290 : vector<8x256xf32>
    %c0_242 = arith.constant 0 : index
    %c584 = arith.constant 584 : index
    %1292 = vector.load %arg3[%c0_242, %c584] : memref<16x720xbf16, #tpu.memory_space<vmem>>, vector<8x40xbf16>
    %c0_243 = arith.constant 0 : index
    %c45 = arith.constant 45 : index
    %1293 = vector.load %arg4[%c0_243, %c45] : memref<16x53xf32, #tpu.memory_space<vmem>>, vector<8x1xf32>
    %1294 = vector.extract_strided_slice %1291 {offsets = [0, 0], sizes = [8, 128], strides = [1, 1]} : vector<8x256xf32> to vector<8x128xf32>
    %1295 = vector.extract_strided_slice %1291 {offsets = [0, 128], sizes = [8, 128], strides = [1, 1]} : vector<8x256xf32> to vector<8x128xf32>
    %1296 = vector.extract_strided_slice %1294 {offsets = [0, 0], sizes = [8, 64], strides = [1, 1]} : vector<8x128xf32> to vector<8x64xf32>
    %1297 = vector.extract_strided_slice %1296 {offsets = [0, 32], sizes = [8, 32], strides = [1, 1]} : vector<8x64xf32> to vector<8x32xf32>
    %cst_244 = arith.constant 0.000000e+00 : f32
    %1298 = vector.broadcast %cst_244 : f32 to vector<8x2xf32>
    %1299 = vector.extract_strided_slice %1297 {offsets = [0, 0], sizes = [8, 30], strides = [1, 1]} : vector<8x32xf32> to vector<8x30xf32>
    %1300 = tpu.concatenate %1298, %1299 in 1 : vector<8x2xf32>, vector<8x30xf32> -> vector<8x32xf32>
    %1301 = vector.extract_strided_slice %1296 {offsets = [0, 0], sizes = [8, 32], strides = [1, 1]} : vector<8x64xf32> to vector<8x32xf32>
    %cst_245 = arith.constant 0.000000e+00 : f32
    %1302 = vector.broadcast %cst_245 : f32 to vector<8x1xf32>
    %1303 = vector.extract_strided_slice %1301 {offsets = [0, 0], sizes = [8, 31], strides = [1, 1]} : vector<8x32xf32> to vector<8x31xf32>
    %1304 = tpu.concatenate %1302, %1303 in 1 : vector<8x1xf32>, vector<8x31xf32> -> vector<8x32xf32>
    %1305 = tpu.concatenate %1300, %1304 in 1 : vector<8x32xf32>, vector<8x32xf32> -> vector<8x64xf32>
    %1306 = vector.extract_strided_slice %1294 {offsets = [0, 64], sizes = [8, 64], strides = [1, 1]} : vector<8x128xf32> to vector<8x64xf32>
    %1307 = vector.extract_strided_slice %1306 {offsets = [0, 32], sizes = [8, 32], strides = [1, 1]} : vector<8x64xf32> to vector<8x32xf32>
    %cst_246 = arith.constant 0.000000e+00 : f32
    %1308 = vector.broadcast %cst_246 : f32 to vector<8x2xf32>
    %1309 = vector.extract_strided_slice %1307 {offsets = [0, 0], sizes = [8, 30], strides = [1, 1]} : vector<8x32xf32> to vector<8x30xf32>
    %1310 = tpu.concatenate %1308, %1309 in 1 : vector<8x2xf32>, vector<8x30xf32> -> vector<8x32xf32>
    %1311 = vector.extract_strided_slice %1306 {offsets = [0, 0], sizes = [8, 32], strides = [1, 1]} : vector<8x64xf32> to vector<8x32xf32>
    %cst_247 = arith.constant 0.000000e+00 : f32
    %1312 = vector.broadcast %cst_247 : f32 to vector<8x1xf32>
    %1313 = vector.extract_strided_slice %1311 {offsets = [0, 0], sizes = [8, 31], strides = [1, 1]} : vector<8x32xf32> to vector<8x31xf32>
    %1314 = tpu.concatenate %1312, %1313 in 1 : vector<8x1xf32>, vector<8x31xf32> -> vector<8x32xf32>
    %1315 = tpu.concatenate %1310, %1314 in 1 : vector<8x32xf32>, vector<8x32xf32> -> vector<8x64xf32>
    %1316 = tpu.concatenate %1305, %1315 in 1 : vector<8x64xf32>, vector<8x64xf32> -> vector<8x128xf32>
    %1317 = vector.extract_strided_slice %1294 {offsets = [0, 64], sizes = [8, 64], strides = [1, 1]} : vector<8x128xf32> to vector<8x64xf32>
    %1318 = vector.extract_strided_slice %1317 {offsets = [0, 0], sizes = [8, 32], strides = [1, 1]} : vector<8x64xf32> to vector<8x32xf32>
    %cst_248 = arith.constant 0.000000e+00 : f32
    %1319 = vector.broadcast %cst_248 : f32 to vector<8x1xf32>
    %1320 = vector.extract_strided_slice %1318 {offsets = [0, 0], sizes = [8, 31], strides = [1, 1]} : vector<8x32xf32> to vector<8x31xf32>
    %1321 = tpu.concatenate %1319, %1320 in 1 : vector<8x1xf32>, vector<8x31xf32> -> vector<8x32xf32>
    %1322 = vector.extract_strided_slice %1317 {offsets = [0, 32], sizes = [8, 32], strides = [1, 1]} : vector<8x64xf32> to vector<8x32xf32>
    %cst_249 = arith.constant 0.000000e+00 : f32
    %1323 = vector.broadcast %cst_249 : f32 to vector<8x1xf32>
    %1324 = vector.extract_strided_slice %1322 {offsets = [0, 0], sizes = [8, 31], strides = [1, 1]} : vector<8x32xf32> to vector<8x31xf32>
    %1325 = tpu.concatenate %1323, %1324 in 1 : vector<8x1xf32>, vector<8x31xf32> -> vector<8x32xf32>
    %1326 = tpu.concatenate %1321, %1325 in 1 : vector<8x32xf32>, vector<8x32xf32> -> vector<8x64xf32>
    %1327 = vector.extract_strided_slice %1294 {offsets = [0, 0], sizes = [8, 64], strides = [1, 1]} : vector<8x128xf32> to vector<8x64xf32>
    %1328 = vector.extract_strided_slice %1327 {offsets = [0, 32], sizes = [8, 32], strides = [1, 1]} : vector<8x64xf32> to vector<8x32xf32>
    %cst_250 = arith.constant 0.000000e+00 : f32
    %1329 = vector.broadcast %cst_250 : f32 to vector<8x1xf32>
    %1330 = vector.extract_strided_slice %1328 {offsets = [0, 0], sizes = [8, 31], strides = [1, 1]} : vector<8x32xf32> to vector<8x31xf32>
    %1331 = tpu.concatenate %1329, %1330 in 1 : vector<8x1xf32>, vector<8x31xf32> -> vector<8x32xf32>
    %1332 = vector.extract_strided_slice %1327 {offsets = [0, 0], sizes = [8, 32], strides = [1, 1]} : vector<8x64xf32> to vector<8x32xf32>
    %1333 = tpu.concatenate %1331, %1332 in 1 : vector<8x32xf32>, vector<8x32xf32> -> vector<8x64xf32>
    %1334 = tpu.concatenate %1326, %1333 in 1 : vector<8x64xf32>, vector<8x64xf32> -> vector<8x128xf32>
    %1335 = vector.extract_strided_slice %1294 {offsets = [0, 64], sizes = [8, 64], strides = [1, 1]} : vector<8x128xf32> to vector<8x64xf32>
    %1336 = vector.extract_strided_slice %1335 {offsets = [0, 32], sizes = [8, 32], strides = [1, 1]} : vector<8x64xf32> to vector<8x32xf32>
    %1337 = vector.extract_strided_slice %1335 {offsets = [0, 0], sizes = [8, 32], strides = [1, 1]} : vector<8x64xf32> to vector<8x32xf32>
    %cst_251 = arith.constant 0.000000e+00 : f32
    %1338 = vector.broadcast %cst_251 : f32 to vector<8x1xf32>
    %1339 = vector.extract_strided_slice %1337 {offsets = [0, 1], sizes = [8, 31], strides = [1, 1]} : vector<8x32xf32> to vector<8x31xf32>
    %1340 = tpu.concatenate %1339, %1338 in 1 : vector<8x31xf32>, vector<8x1xf32> -> vector<8x32xf32>
    %1341 = tpu.concatenate %1336, %1340 in 1 : vector<8x32xf32>, vector<8x32xf32> -> vector<8x64xf32>
    %1342 = vector.extract_strided_slice %1294 {offsets = [0, 0], sizes = [8, 64], strides = [1, 1]} : vector<8x128xf32> to vector<8x64xf32>
    %1343 = vector.extract_strided_slice %1342 {offsets = [0, 0], sizes = [8, 32], strides = [1, 1]} : vector<8x64xf32> to vector<8x32xf32>
    %cst_252 = arith.constant 0.000000e+00 : f32
    %1344 = vector.broadcast %cst_252 : f32 to vector<8x1xf32>
    %1345 = vector.extract_strided_slice %1343 {offsets = [0, 1], sizes = [8, 31], strides = [1, 1]} : vector<8x32xf32> to vector<8x31xf32>
    %1346 = tpu.concatenate %1345, %1344 in 1 : vector<8x31xf32>, vector<8x1xf32> -> vector<8x32xf32>
    %1347 = vector.extract_strided_slice %1342 {offsets = [0, 32], sizes = [8, 32], strides = [1, 1]} : vector<8x64xf32> to vector<8x32xf32>
    %cst_253 = arith.constant 0.000000e+00 : f32
    %1348 = vector.broadcast %cst_253 : f32 to vector<8x1xf32>
    %1349 = vector.extract_strided_slice %1347 {offsets = [0, 1], sizes = [8, 31], strides = [1, 1]} : vector<8x32xf32> to vector<8x31xf32>
    %1350 = tpu.concatenate %1349, %1348 in 1 : vector<8x31xf32>, vector<8x1xf32> -> vector<8x32xf32>
    %1351 = tpu.concatenate %1346, %1350 in 1 : vector<8x32xf32>, vector<8x32xf32> -> vector<8x64xf32>
    %1352 = tpu.concatenate %1341, %1351 in 1 : vector<8x64xf32>, vector<8x64xf32> -> vector<8x128xf32>
    %1353 = vector.extract_strided_slice %1294 {offsets = [0, 0], sizes = [8, 64], strides = [1, 1]} : vector<8x128xf32> to vector<8x64xf32>
    %1354 = vector.extract_strided_slice %1353 {offsets = [0, 32], sizes = [8, 32], strides = [1, 1]} : vector<8x64xf32> to vector<8x32xf32>
    %cst_254 = arith.constant 0.000000e+00 : f32
    %1355 = vector.broadcast %cst_254 : f32 to vector<8x1xf32>
    %1356 = vector.extract_strided_slice %1354 {offsets = [0, 1], sizes = [8, 31], strides = [1, 1]} : vector<8x32xf32> to vector<8x31xf32>
    %1357 = tpu.concatenate %1356, %1355 in 1 : vector<8x31xf32>, vector<8x1xf32> -> vector<8x32xf32>
    %1358 = vector.extract_strided_slice %1353 {offsets = [0, 0], sizes = [8, 32], strides = [1, 1]} : vector<8x64xf32> to vector<8x32xf32>
    %cst_255 = arith.constant 0.000000e+00 : f32
    %1359 = vector.broadcast %cst_255 : f32 to vector<8x2xf32>
    %1360 = vector.extract_strided_slice %1358 {offsets = [0, 2], sizes = [8, 30], strides = [1, 1]} : vector<8x32xf32> to vector<8x30xf32>
    %1361 = tpu.concatenate %1360, %1359 in 1 : vector<8x30xf32>, vector<8x2xf32> -> vector<8x32xf32>
    %1362 = tpu.concatenate %1357, %1361 in 1 : vector<8x32xf32>, vector<8x32xf32> -> vector<8x64xf32>
    %1363 = vector.extract_strided_slice %1294 {offsets = [0, 64], sizes = [8, 64], strides = [1, 1]} : vector<8x128xf32> to vector<8x64xf32>
    %1364 = vector.extract_strided_slice %1363 {offsets = [0, 32], sizes = [8, 32], strides = [1, 1]} : vector<8x64xf32> to vector<8x32xf32>
    %cst_256 = arith.constant 0.000000e+00 : f32
    %1365 = vector.broadcast %cst_256 : f32 to vector<8x1xf32>
    %1366 = vector.extract_strided_slice %1364 {offsets = [0, 1], sizes = [8, 31], strides = [1, 1]} : vector<8x32xf32> to vector<8x31xf32>
    %1367 = tpu.concatenate %1366, %1365 in 1 : vector<8x31xf32>, vector<8x1xf32> -> vector<8x32xf32>
    %1368 = vector.extract_strided_slice %1363 {offsets = [0, 0], sizes = [8, 32], strides = [1, 1]} : vector<8x64xf32> to vector<8x32xf32>
    %cst_257 = arith.constant 0.000000e+00 : f32
    %1369 = vector.broadcast %cst_257 : f32 to vector<8x2xf32>
    %1370 = vector.extract_strided_slice %1368 {offsets = [0, 2], sizes = [8, 30], strides = [1, 1]} : vector<8x32xf32> to vector<8x30xf32>
    %1371 = tpu.concatenate %1370, %1369 in 1 : vector<8x30xf32>, vector<8x2xf32> -> vector<8x32xf32>
    %1372 = tpu.concatenate %1367, %1371 in 1 : vector<8x32xf32>, vector<8x32xf32> -> vector<8x64xf32>
    %1373 = tpu.concatenate %1362, %1372 in 1 : vector<8x64xf32>, vector<8x64xf32> -> vector<8x128xf32>
    %1374 = tpu.concatenate %1316, %1334, %1294, %1352, %1373 in 0 : vector<8x128xf32>, vector<8x128xf32>, vector<8x128xf32>, vector<8x128xf32>, vector<8x128xf32> -> vector<40x128xf32>
    %1375 = vector.extract_strided_slice %1295 {offsets = [0, 0], sizes = [8, 64], strides = [1, 1]} : vector<8x128xf32> to vector<8x64xf32>
    %1376 = vector.extract_strided_slice %1375 {offsets = [0, 32], sizes = [8, 32], strides = [1, 1]} : vector<8x64xf32> to vector<8x32xf32>
    %cst_258 = arith.constant 0.000000e+00 : f32
    %1377 = vector.broadcast %cst_258 : f32 to vector<8x2xf32>
    %1378 = vector.extract_strided_slice %1376 {offsets = [0, 0], sizes = [8, 30], strides = [1, 1]} : vector<8x32xf32> to vector<8x30xf32>
    %1379 = tpu.concatenate %1377, %1378 in 1 : vector<8x2xf32>, vector<8x30xf32> -> vector<8x32xf32>
    %1380 = vector.extract_strided_slice %1375 {offsets = [0, 0], sizes = [8, 32], strides = [1, 1]} : vector<8x64xf32> to vector<8x32xf32>
    %cst_259 = arith.constant 0.000000e+00 : f32
    %1381 = vector.broadcast %cst_259 : f32 to vector<8x1xf32>
    %1382 = vector.extract_strided_slice %1380 {offsets = [0, 0], sizes = [8, 31], strides = [1, 1]} : vector<8x32xf32> to vector<8x31xf32>
    %1383 = tpu.concatenate %1381, %1382 in 1 : vector<8x1xf32>, vector<8x31xf32> -> vector<8x32xf32>
    %1384 = tpu.concatenate %1379, %1383 in 1 : vector<8x32xf32>, vector<8x32xf32> -> vector<8x64xf32>
    %1385 = vector.extract_strided_slice %1295 {offsets = [0, 64], sizes = [8, 64], strides = [1, 1]} : vector<8x128xf32> to vector<8x64xf32>
    %1386 = vector.extract_strided_slice %1385 {offsets = [0, 32], sizes = [8, 32], strides = [1, 1]} : vector<8x64xf32> to vector<8x32xf32>
    %cst_260 = arith.constant 0.000000e+00 : f32
    %1387 = vector.broadcast %cst_260 : f32 to vector<8x2xf32>
    %1388 = vector.extract_strided_slice %1386 {offsets = [0, 0], sizes = [8, 30], strides = [1, 1]} : vector<8x32xf32> to vector<8x30xf32>
    %1389 = tpu.concatenate %1387, %1388 in 1 : vector<8x2xf32>, vector<8x30xf32> -> vector<8x32xf32>
    %1390 = vector.extract_strided_slice %1385 {offsets = [0, 0], sizes = [8, 32], strides = [1, 1]} : vector<8x64xf32> to vector<8x32xf32>
    %cst_261 = arith.constant 0.000000e+00 : f32
    %1391 = vector.broadcast %cst_261 : f32 to vector<8x1xf32>
    %1392 = vector.extract_strided_slice %1390 {offsets = [0, 0], sizes = [8, 31], strides = [1, 1]} : vector<8x32xf32> to vector<8x31xf32>
    %1393 = tpu.concatenate %1391, %1392 in 1 : vector<8x1xf32>, vector<8x31xf32> -> vector<8x32xf32>
    %1394 = tpu.concatenate %1389, %1393 in 1 : vector<8x32xf32>, vector<8x32xf32> -> vector<8x64xf32>
    %1395 = tpu.concatenate %1384, %1394 in 1 : vector<8x64xf32>, vector<8x64xf32> -> vector<8x128xf32>
    %1396 = vector.extract_strided_slice %1295 {offsets = [0, 64], sizes = [8, 64], strides = [1, 1]} : vector<8x128xf32> to vector<8x64xf32>
    %1397 = vector.extract_strided_slice %1396 {offsets = [0, 0], sizes = [8, 32], strides = [1, 1]} : vector<8x64xf32> to vector<8x32xf32>
    %cst_262 = arith.constant 0.000000e+00 : f32
    %1398 = vector.broadcast %cst_262 : f32 to vector<8x1xf32>
    %1399 = vector.extract_strided_slice %1397 {offsets = [0, 0], sizes = [8, 31], strides = [1, 1]} : vector<8x32xf32> to vector<8x31xf32>
    %1400 = tpu.concatenate %1398, %1399 in 1 : vector<8x1xf32>, vector<8x31xf32> -> vector<8x32xf32>
    %1401 = vector.extract_strided_slice %1396 {offsets = [0, 32], sizes = [8, 32], strides = [1, 1]} : vector<8x64xf32> to vector<8x32xf32>
    %cst_263 = arith.constant 0.000000e+00 : f32
    %1402 = vector.broadcast %cst_263 : f32 to vector<8x1xf32>
    %1403 = vector.extract_strided_slice %1401 {offsets = [0, 0], sizes = [8, 31], strides = [1, 1]} : vector<8x32xf32> to vector<8x31xf32>
    %1404 = tpu.concatenate %1402, %1403 in 1 : vector<8x1xf32>, vector<8x31xf32> -> vector<8x32xf32>
    %1405 = tpu.concatenate %1400, %1404 in 1 : vector<8x32xf32>, vector<8x32xf32> -> vector<8x64xf32>
    %1406 = vector.extract_strided_slice %1295 {offsets = [0, 0], sizes = [8, 64], strides = [1, 1]} : vector<8x128xf32> to vector<8x64xf32>
    %1407 = vector.extract_strided_slice %1406 {offsets = [0, 32], sizes = [8, 32], strides = [1, 1]} : vector<8x64xf32> to vector<8x32xf32>
    %cst_264 = arith.constant 0.000000e+00 : f32
    %1408 = vector.broadcast %cst_264 : f32 to vector<8x1xf32>
    %1409 = vector.extract_strided_slice %1407 {offsets = [0, 0], sizes = [8, 31], strides = [1, 1]} : vector<8x32xf32> to vector<8x31xf32>
    %1410 = tpu.concatenate %1408, %1409 in 1 : vector<8x1xf32>, vector<8x31xf32> -> vector<8x32xf32>
    %1411 = vector.extract_strided_slice %1406 {offsets = [0, 0], sizes = [8, 32], strides = [1, 1]} : vector<8x64xf32> to vector<8x32xf32>
    %1412 = tpu.concatenate %1410, %1411 in 1 : vector<8x32xf32>, vector<8x32xf32> -> vector<8x64xf32>
    %1413 = tpu.concatenate %1405, %1412 in 1 : vector<8x64xf32>, vector<8x64xf32> -> vector<8x128xf32>
    %1414 = vector.extract_strided_slice %1295 {offsets = [0, 64], sizes = [8, 64], strides = [1, 1]} : vector<8x128xf32> to vector<8x64xf32>
    %1415 = vector.extract_strided_slice %1414 {offsets = [0, 32], sizes = [8, 32], strides = [1, 1]} : vector<8x64xf32> to vector<8x32xf32>
    %1416 = vector.extract_strided_slice %1414 {offsets = [0, 0], sizes = [8, 32], strides = [1, 1]} : vector<8x64xf32> to vector<8x32xf32>
    %cst_265 = arith.constant 0.000000e+00 : f32
    %1417 = vector.broadcast %cst_265 : f32 to vector<8x1xf32>
    %1418 = vector.extract_strided_slice %1416 {offsets = [0, 1], sizes = [8, 31], strides = [1, 1]} : vector<8x32xf32> to vector<8x31xf32>
    %1419 = tpu.concatenate %1418, %1417 in 1 : vector<8x31xf32>, vector<8x1xf32> -> vector<8x32xf32>
    %1420 = tpu.concatenate %1415, %1419 in 1 : vector<8x32xf32>, vector<8x32xf32> -> vector<8x64xf32>
    %1421 = vector.extract_strided_slice %1295 {offsets = [0, 0], sizes = [8, 64], strides = [1, 1]} : vector<8x128xf32> to vector<8x64xf32>
    %1422 = vector.extract_strided_slice %1421 {offsets = [0, 0], sizes = [8, 32], strides = [1, 1]} : vector<8x64xf32> to vector<8x32xf32>
    %cst_266 = arith.constant 0.000000e+00 : f32
    %1423 = vector.broadcast %cst_266 : f32 to vector<8x1xf32>
    %1424 = vector.extract_strided_slice %1422 {offsets = [0, 1], sizes = [8, 31], strides = [1, 1]} : vector<8x32xf32> to vector<8x31xf32>
    %1425 = tpu.concatenate %1424, %1423 in 1 : vector<8x31xf32>, vector<8x1xf32> -> vector<8x32xf32>
    %1426 = vector.extract_strided_slice %1421 {offsets = [0, 32], sizes = [8, 32], strides = [1, 1]} : vector<8x64xf32> to vector<8x32xf32>
    %cst_267 = arith.constant 0.000000e+00 : f32
    %1427 = vector.broadcast %cst_267 : f32 to vector<8x1xf32>
    %1428 = vector.extract_strided_slice %1426 {offsets = [0, 1], sizes = [8, 31], strides = [1, 1]} : vector<8x32xf32> to vector<8x31xf32>
    %1429 = tpu.concatenate %1428, %1427 in 1 : vector<8x31xf32>, vector<8x1xf32> -> vector<8x32xf32>
    %1430 = tpu.concatenate %1425, %1429 in 1 : vector<8x32xf32>, vector<8x32xf32> -> vector<8x64xf32>
    %1431 = tpu.concatenate %1420, %1430 in 1 : vector<8x64xf32>, vector<8x64xf32> -> vector<8x128xf32>
    %1432 = vector.extract_strided_slice %1295 {offsets = [0, 0], sizes = [8, 64], strides = [1, 1]} : vector<8x128xf32> to vector<8x64xf32>
    %1433 = vector.extract_strided_slice %1432 {offsets = [0, 32], sizes = [8, 32], strides = [1, 1]} : vector<8x64xf32> to vector<8x32xf32>
    %cst_268 = arith.constant 0.000000e+00 : f32
    %1434 = vector.broadcast %cst_268 : f32 to vector<8x1xf32>
    %1435 = vector.extract_strided_slice %1433 {offsets = [0, 1], sizes = [8, 31], strides = [1, 1]} : vector<8x32xf32> to vector<8x31xf32>
    %1436 = tpu.concatenate %1435, %1434 in 1 : vector<8x31xf32>, vector<8x1xf32> -> vector<8x32xf32>
    %1437 = vector.extract_strided_slice %1432 {offsets = [0, 0], sizes = [8, 32], strides = [1, 1]} : vector<8x64xf32> to vector<8x32xf32>
    %cst_269 = arith.constant 0.000000e+00 : f32
    %1438 = vector.broadcast %cst_269 : f32 to vector<8x2xf32>
    %1439 = vector.extract_strided_slice %1437 {offsets = [0, 2], sizes = [8, 30], strides = [1, 1]} : vector<8x32xf32> to vector<8x30xf32>
    %1440 = tpu.concatenate %1439, %1438 in 1 : vector<8x30xf32>, vector<8x2xf32> -> vector<8x32xf32>
    %1441 = tpu.concatenate %1436, %1440 in 1 : vector<8x32xf32>, vector<8x32xf32> -> vector<8x64xf32>
    %1442 = vector.extract_strided_slice %1295 {offsets = [0, 64], sizes = [8, 64], strides = [1, 1]} : vector<8x128xf32> to vector<8x64xf32>
    %1443 = vector.extract_strided_slice %1442 {offsets = [0, 32], sizes = [8, 32], strides = [1, 1]} : vector<8x64xf32> to vector<8x32xf32>
    %cst_270 = arith.constant 0.000000e+00 : f32
    %1444 = vector.broadcast %cst_270 : f32 to vector<8x1xf32>
    %1445 = vector.extract_strided_slice %1443 {offsets = [0, 1], sizes = [8, 31], strides = [1, 1]} : vector<8x32xf32> to vector<8x31xf32>
    %1446 = tpu.concatenate %1445, %1444 in 1 : vector<8x31xf32>, vector<8x1xf32> -> vector<8x32xf32>
    %1447 = vector.extract_strided_slice %1442 {offsets = [0, 0], sizes = [8, 32], strides = [1, 1]} : vector<8x64xf32> to vector<8x32xf32>
    %cst_271 = arith.constant 0.000000e+00 : f32
    %1448 = vector.broadcast %cst_271 : f32 to vector<8x2xf32>
    %1449 = vector.extract_strided_slice %1447 {offsets = [0, 2], sizes = [8, 30], strides = [1, 1]} : vector<8x32xf32> to vector<8x30xf32>
    %1450 = tpu.concatenate %1449, %1448 in 1 : vector<8x30xf32>, vector<8x2xf32> -> vector<8x32xf32>
    %1451 = tpu.concatenate %1446, %1450 in 1 : vector<8x32xf32>, vector<8x32xf32> -> vector<8x64xf32>
    %1452 = tpu.concatenate %1441, %1451 in 1 : vector<8x64xf32>, vector<8x64xf32> -> vector<8x128xf32>
    %1453 = tpu.concatenate %1395, %1413, %1295, %1431, %1452 in 0 : vector<8x128xf32>, vector<8x128xf32>, vector<8x128xf32>, vector<8x128xf32>, vector<8x128xf32> -> vector<40x128xf32>
    %1454 = tpu.concatenate %1374, %1453 in 1 : vector<40x128xf32>, vector<40x128xf32> -> vector<40x256xf32>
    %1455 = arith.truncf %1454 : vector<40x256xf32> to vector<40x256xbf16>
    %cst_272 = arith.constant dense<0.000000e+00> : vector<8x256xf32>
    %1456 = tpu.matmul %1292, %1455, %cst_272 {dimension_numbers = #tpu.dot_dimension_numbers<[1], [0], [0], [1], [0, 0, 1, 1], [], []>} : vector<8x40xbf16>, vector<40x256xbf16>, vector<8x256xf32> -> vector<8x256xf32>
    %1457 = vector.broadcast %1293 : vector<8x1xf32> to vector<8x256xf32>
    %1458 = arith.addf %1456, %1457 : vector<8x256xf32>
    %1459 = vector.broadcast %759 : vector<1x256xf32> to vector<8x256xf32>
    %1460 = arith.mulf %1458, %1459 : vector<8x256xf32>
    %c0_273 = arith.constant 0 : index
    %c49 = arith.constant 49 : index
    %1461 = vector.load %arg4[%c0_273, %c49] : memref<16x53xf32, #tpu.memory_space<vmem>>, vector<8x1xf32>
    %c0_274 = arith.constant 0 : index
    %c50 = arith.constant 50 : index
    %1462 = vector.load %arg4[%c0_274, %c50] : memref<16x53xf32, #tpu.memory_space<vmem>>, vector<8x1xf32>
    %1463 = vector.broadcast %1461 : vector<8x1xf32> to vector<8x256xf32>
    %1464 = arith.mulf %1463, %1460 : vector<8x256xf32>
    %1465 = math.sin %1464 : vector<8x256xf32>
    %1466 = arith.mulf %1465, %1465 : vector<8x256xf32>
    %1467 = vector.broadcast %1462 : vector<8x1xf32> to vector<8x256xf32>
    %1468 = arith.mulf %1467, %1466 : vector<8x256xf32>
    %1469 = arith.addf %1460, %1468 : vector<8x256xf32>
    %1470 = vector.broadcast %759 : vector<1x256xf32> to vector<8x256xf32>
    %1471 = arith.mulf %1469, %1470 : vector<8x256xf32>
    %c0_275 = arith.constant 0 : index
    %c624 = arith.constant 624 : index
    %1472 = vector.load %arg3[%c0_275, %c624] : memref<16x720xbf16, #tpu.memory_space<vmem>>, vector<8x40xbf16>
    %c0_276 = arith.constant 0 : index
    %c48 = arith.constant 48 : index
    %1473 = vector.load %arg4[%c0_276, %c48] : memref<16x53xf32, #tpu.memory_space<vmem>>, vector<8x1xf32>
    %1474 = vector.extract_strided_slice %1471 {offsets = [0, 0], sizes = [8, 128], strides = [1, 1]} : vector<8x256xf32> to vector<8x128xf32>
    %1475 = vector.extract_strided_slice %1471 {offsets = [0, 128], sizes = [8, 128], strides = [1, 1]} : vector<8x256xf32> to vector<8x128xf32>
    %1476 = vector.extract_strided_slice %1474 {offsets = [0, 0], sizes = [8, 64], strides = [1, 1]} : vector<8x128xf32> to vector<8x64xf32>
    %1477 = vector.extract_strided_slice %1476 {offsets = [0, 32], sizes = [8, 32], strides = [1, 1]} : vector<8x64xf32> to vector<8x32xf32>
    %cst_277 = arith.constant 0.000000e+00 : f32
    %1478 = vector.broadcast %cst_277 : f32 to vector<8x1xf32>
    %1479 = vector.extract_strided_slice %1477 {offsets = [0, 0], sizes = [8, 31], strides = [1, 1]} : vector<8x32xf32> to vector<8x31xf32>
    %1480 = tpu.concatenate %1478, %1479 in 1 : vector<8x1xf32>, vector<8x31xf32> -> vector<8x32xf32>
    %1481 = vector.extract_strided_slice %1476 {offsets = [0, 0], sizes = [8, 32], strides = [1, 1]} : vector<8x64xf32> to vector<8x32xf32>
    %1482 = tpu.concatenate %1480, %1481 in 1 : vector<8x32xf32>, vector<8x32xf32> -> vector<8x64xf32>
    %1483 = vector.extract_strided_slice %1474 {offsets = [0, 64], sizes = [8, 64], strides = [1, 1]} : vector<8x128xf32> to vector<8x64xf32>
    %1484 = vector.extract_strided_slice %1483 {offsets = [0, 32], sizes = [8, 32], strides = [1, 1]} : vector<8x64xf32> to vector<8x32xf32>
    %cst_278 = arith.constant 0.000000e+00 : f32
    %1485 = vector.broadcast %cst_278 : f32 to vector<8x1xf32>
    %1486 = vector.extract_strided_slice %1484 {offsets = [0, 0], sizes = [8, 31], strides = [1, 1]} : vector<8x32xf32> to vector<8x31xf32>
    %1487 = tpu.concatenate %1485, %1486 in 1 : vector<8x1xf32>, vector<8x31xf32> -> vector<8x32xf32>
    %1488 = vector.extract_strided_slice %1483 {offsets = [0, 0], sizes = [8, 32], strides = [1, 1]} : vector<8x64xf32> to vector<8x32xf32>
    %1489 = tpu.concatenate %1487, %1488 in 1 : vector<8x32xf32>, vector<8x32xf32> -> vector<8x64xf32>
    %1490 = tpu.concatenate %1482, %1489 in 1 : vector<8x64xf32>, vector<8x64xf32> -> vector<8x128xf32>
    %1491 = vector.extract_strided_slice %1474 {offsets = [0, 64], sizes = [8, 64], strides = [1, 1]} : vector<8x128xf32> to vector<8x64xf32>
    %1492 = vector.extract_strided_slice %1491 {offsets = [0, 32], sizes = [8, 32], strides = [1, 1]} : vector<8x64xf32> to vector<8x32xf32>
    %cst_279 = arith.constant 0.000000e+00 : f32
    %1493 = vector.broadcast %cst_279 : f32 to vector<8x1xf32>
    %1494 = vector.extract_strided_slice %1492 {offsets = [0, 0], sizes = [8, 31], strides = [1, 1]} : vector<8x32xf32> to vector<8x31xf32>
    %1495 = tpu.concatenate %1493, %1494 in 1 : vector<8x1xf32>, vector<8x31xf32> -> vector<8x32xf32>
    %1496 = vector.extract_strided_slice %1491 {offsets = [0, 0], sizes = [8, 32], strides = [1, 1]} : vector<8x64xf32> to vector<8x32xf32>
    %1497 = tpu.concatenate %1495, %1496 in 1 : vector<8x32xf32>, vector<8x32xf32> -> vector<8x64xf32>
    %1498 = vector.extract_strided_slice %1474 {offsets = [0, 0], sizes = [8, 64], strides = [1, 1]} : vector<8x128xf32> to vector<8x64xf32>
    %1499 = tpu.concatenate %1497, %1498 in 1 : vector<8x64xf32>, vector<8x64xf32> -> vector<8x128xf32>
    %1500 = vector.extract_strided_slice %1474 {offsets = [0, 64], sizes = [8, 64], strides = [1, 1]} : vector<8x128xf32> to vector<8x64xf32>
    %1501 = vector.extract_strided_slice %1474 {offsets = [0, 0], sizes = [8, 64], strides = [1, 1]} : vector<8x128xf32> to vector<8x64xf32>
    %1502 = vector.extract_strided_slice %1501 {offsets = [0, 32], sizes = [8, 32], strides = [1, 1]} : vector<8x64xf32> to vector<8x32xf32>
    %1503 = vector.extract_strided_slice %1501 {offsets = [0, 0], sizes = [8, 32], strides = [1, 1]} : vector<8x64xf32> to vector<8x32xf32>
    %cst_280 = arith.constant 0.000000e+00 : f32
    %1504 = vector.broadcast %cst_280 : f32 to vector<8x1xf32>
    %1505 = vector.extract_strided_slice %1503 {offsets = [0, 1], sizes = [8, 31], strides = [1, 1]} : vector<8x32xf32> to vector<8x31xf32>
    %1506 = tpu.concatenate %1505, %1504 in 1 : vector<8x31xf32>, vector<8x1xf32> -> vector<8x32xf32>
    %1507 = tpu.concatenate %1502, %1506 in 1 : vector<8x32xf32>, vector<8x32xf32> -> vector<8x64xf32>
    %1508 = tpu.concatenate %1500, %1507 in 1 : vector<8x64xf32>, vector<8x64xf32> -> vector<8x128xf32>
    %1509 = vector.extract_strided_slice %1474 {offsets = [0, 0], sizes = [8, 64], strides = [1, 1]} : vector<8x128xf32> to vector<8x64xf32>
    %1510 = vector.extract_strided_slice %1509 {offsets = [0, 32], sizes = [8, 32], strides = [1, 1]} : vector<8x64xf32> to vector<8x32xf32>
    %1511 = vector.extract_strided_slice %1509 {offsets = [0, 0], sizes = [8, 32], strides = [1, 1]} : vector<8x64xf32> to vector<8x32xf32>
    %cst_281 = arith.constant 0.000000e+00 : f32
    %1512 = vector.broadcast %cst_281 : f32 to vector<8x1xf32>
    %1513 = vector.extract_strided_slice %1511 {offsets = [0, 1], sizes = [8, 31], strides = [1, 1]} : vector<8x32xf32> to vector<8x31xf32>
    %1514 = tpu.concatenate %1513, %1512 in 1 : vector<8x31xf32>, vector<8x1xf32> -> vector<8x32xf32>
    %1515 = tpu.concatenate %1510, %1514 in 1 : vector<8x32xf32>, vector<8x32xf32> -> vector<8x64xf32>
    %1516 = vector.extract_strided_slice %1474 {offsets = [0, 64], sizes = [8, 64], strides = [1, 1]} : vector<8x128xf32> to vector<8x64xf32>
    %1517 = vector.extract_strided_slice %1516 {offsets = [0, 32], sizes = [8, 32], strides = [1, 1]} : vector<8x64xf32> to vector<8x32xf32>
    %1518 = vector.extract_strided_slice %1516 {offsets = [0, 0], sizes = [8, 32], strides = [1, 1]} : vector<8x64xf32> to vector<8x32xf32>
    %cst_282 = arith.constant 0.000000e+00 : f32
    %1519 = vector.broadcast %cst_282 : f32 to vector<8x1xf32>
    %1520 = vector.extract_strided_slice %1518 {offsets = [0, 1], sizes = [8, 31], strides = [1, 1]} : vector<8x32xf32> to vector<8x31xf32>
    %1521 = tpu.concatenate %1520, %1519 in 1 : vector<8x31xf32>, vector<8x1xf32> -> vector<8x32xf32>
    %1522 = tpu.concatenate %1517, %1521 in 1 : vector<8x32xf32>, vector<8x32xf32> -> vector<8x64xf32>
    %1523 = tpu.concatenate %1515, %1522 in 1 : vector<8x64xf32>, vector<8x64xf32> -> vector<8x128xf32>
    %1524 = tpu.concatenate %1490, %1499, %1474, %1508, %1523 in 0 : vector<8x128xf32>, vector<8x128xf32>, vector<8x128xf32>, vector<8x128xf32>, vector<8x128xf32> -> vector<40x128xf32>
    %1525 = vector.extract_strided_slice %1475 {offsets = [0, 0], sizes = [8, 64], strides = [1, 1]} : vector<8x128xf32> to vector<8x64xf32>
    %1526 = vector.extract_strided_slice %1525 {offsets = [0, 32], sizes = [8, 32], strides = [1, 1]} : vector<8x64xf32> to vector<8x32xf32>
    %cst_283 = arith.constant 0.000000e+00 : f32
    %1527 = vector.broadcast %cst_283 : f32 to vector<8x1xf32>
    %1528 = vector.extract_strided_slice %1526 {offsets = [0, 0], sizes = [8, 31], strides = [1, 1]} : vector<8x32xf32> to vector<8x31xf32>
    %1529 = tpu.concatenate %1527, %1528 in 1 : vector<8x1xf32>, vector<8x31xf32> -> vector<8x32xf32>
    %1530 = vector.extract_strided_slice %1525 {offsets = [0, 0], sizes = [8, 32], strides = [1, 1]} : vector<8x64xf32> to vector<8x32xf32>
    %1531 = tpu.concatenate %1529, %1530 in 1 : vector<8x32xf32>, vector<8x32xf32> -> vector<8x64xf32>
    %1532 = vector.extract_strided_slice %1475 {offsets = [0, 64], sizes = [8, 64], strides = [1, 1]} : vector<8x128xf32> to vector<8x64xf32>
    %1533 = vector.extract_strided_slice %1532 {offsets = [0, 32], sizes = [8, 32], strides = [1, 1]} : vector<8x64xf32> to vector<8x32xf32>
    %cst_284 = arith.constant 0.000000e+00 : f32
    %1534 = vector.broadcast %cst_284 : f32 to vector<8x1xf32>
    %1535 = vector.extract_strided_slice %1533 {offsets = [0, 0], sizes = [8, 31], strides = [1, 1]} : vector<8x32xf32> to vector<8x31xf32>
    %1536 = tpu.concatenate %1534, %1535 in 1 : vector<8x1xf32>, vector<8x31xf32> -> vector<8x32xf32>
    %1537 = vector.extract_strided_slice %1532 {offsets = [0, 0], sizes = [8, 32], strides = [1, 1]} : vector<8x64xf32> to vector<8x32xf32>
    %1538 = tpu.concatenate %1536, %1537 in 1 : vector<8x32xf32>, vector<8x32xf32> -> vector<8x64xf32>
    %1539 = tpu.concatenate %1531, %1538 in 1 : vector<8x64xf32>, vector<8x64xf32> -> vector<8x128xf32>
    %1540 = vector.extract_strided_slice %1475 {offsets = [0, 64], sizes = [8, 64], strides = [1, 1]} : vector<8x128xf32> to vector<8x64xf32>
    %1541 = vector.extract_strided_slice %1540 {offsets = [0, 32], sizes = [8, 32], strides = [1, 1]} : vector<8x64xf32> to vector<8x32xf32>
    %cst_285 = arith.constant 0.000000e+00 : f32
    %1542 = vector.broadcast %cst_285 : f32 to vector<8x1xf32>
    %1543 = vector.extract_strided_slice %1541 {offsets = [0, 0], sizes = [8, 31], strides = [1, 1]} : vector<8x32xf32> to vector<8x31xf32>
    %1544 = tpu.concatenate %1542, %1543 in 1 : vector<8x1xf32>, vector<8x31xf32> -> vector<8x32xf32>
    %1545 = vector.extract_strided_slice %1540 {offsets = [0, 0], sizes = [8, 32], strides = [1, 1]} : vector<8x64xf32> to vector<8x32xf32>
    %1546 = tpu.concatenate %1544, %1545 in 1 : vector<8x32xf32>, vector<8x32xf32> -> vector<8x64xf32>
    %1547 = vector.extract_strided_slice %1475 {offsets = [0, 0], sizes = [8, 64], strides = [1, 1]} : vector<8x128xf32> to vector<8x64xf32>
    %1548 = tpu.concatenate %1546, %1547 in 1 : vector<8x64xf32>, vector<8x64xf32> -> vector<8x128xf32>
    %1549 = vector.extract_strided_slice %1475 {offsets = [0, 64], sizes = [8, 64], strides = [1, 1]} : vector<8x128xf32> to vector<8x64xf32>
    %1550 = vector.extract_strided_slice %1475 {offsets = [0, 0], sizes = [8, 64], strides = [1, 1]} : vector<8x128xf32> to vector<8x64xf32>
    %1551 = vector.extract_strided_slice %1550 {offsets = [0, 32], sizes = [8, 32], strides = [1, 1]} : vector<8x64xf32> to vector<8x32xf32>
    %1552 = vector.extract_strided_slice %1550 {offsets = [0, 0], sizes = [8, 32], strides = [1, 1]} : vector<8x64xf32> to vector<8x32xf32>
    %cst_286 = arith.constant 0.000000e+00 : f32
    %1553 = vector.broadcast %cst_286 : f32 to vector<8x1xf32>
    %1554 = vector.extract_strided_slice %1552 {offsets = [0, 1], sizes = [8, 31], strides = [1, 1]} : vector<8x32xf32> to vector<8x31xf32>
    %1555 = tpu.concatenate %1554, %1553 in 1 : vector<8x31xf32>, vector<8x1xf32> -> vector<8x32xf32>
    %1556 = tpu.concatenate %1551, %1555 in 1 : vector<8x32xf32>, vector<8x32xf32> -> vector<8x64xf32>
    %1557 = tpu.concatenate %1549, %1556 in 1 : vector<8x64xf32>, vector<8x64xf32> -> vector<8x128xf32>
    %1558 = vector.extract_strided_slice %1475 {offsets = [0, 0], sizes = [8, 64], strides = [1, 1]} : vector<8x128xf32> to vector<8x64xf32>
    %1559 = vector.extract_strided_slice %1558 {offsets = [0, 32], sizes = [8, 32], strides = [1, 1]} : vector<8x64xf32> to vector<8x32xf32>
    %1560 = vector.extract_strided_slice %1558 {offsets = [0, 0], sizes = [8, 32], strides = [1, 1]} : vector<8x64xf32> to vector<8x32xf32>
    %cst_287 = arith.constant 0.000000e+00 : f32
    %1561 = vector.broadcast %cst_287 : f32 to vector<8x1xf32>
    %1562 = vector.extract_strided_slice %1560 {offsets = [0, 1], sizes = [8, 31], strides = [1, 1]} : vector<8x32xf32> to vector<8x31xf32>
    %1563 = tpu.concatenate %1562, %1561 in 1 : vector<8x31xf32>, vector<8x1xf32> -> vector<8x32xf32>
    %1564 = tpu.concatenate %1559, %1563 in 1 : vector<8x32xf32>, vector<8x32xf32> -> vector<8x64xf32>
    %1565 = vector.extract_strided_slice %1475 {offsets = [0, 64], sizes = [8, 64], strides = [1, 1]} : vector<8x128xf32> to vector<8x64xf32>
    %1566 = vector.extract_strided_slice %1565 {offsets = [0, 32], sizes = [8, 32], strides = [1, 1]} : vector<8x64xf32> to vector<8x32xf32>
    %1567 = vector.extract_strided_slice %1565 {offsets = [0, 0], sizes = [8, 32], strides = [1, 1]} : vector<8x64xf32> to vector<8x32xf32>
    %cst_288 = arith.constant 0.000000e+00 : f32
    %1568 = vector.broadcast %cst_288 : f32 to vector<8x1xf32>
    %1569 = vector.extract_strided_slice %1567 {offsets = [0, 1], sizes = [8, 31], strides = [1, 1]} : vector<8x32xf32> to vector<8x31xf32>
    %1570 = tpu.concatenate %1569, %1568 in 1 : vector<8x31xf32>, vector<8x1xf32> -> vector<8x32xf32>
    %1571 = tpu.concatenate %1566, %1570 in 1 : vector<8x32xf32>, vector<8x32xf32> -> vector<8x64xf32>
    %1572 = tpu.concatenate %1564, %1571 in 1 : vector<8x64xf32>, vector<8x64xf32> -> vector<8x128xf32>
    %1573 = tpu.concatenate %1539, %1548, %1475, %1557, %1572 in 0 : vector<8x128xf32>, vector<8x128xf32>, vector<8x128xf32>, vector<8x128xf32>, vector<8x128xf32> -> vector<40x128xf32>
    %1574 = tpu.concatenate %1524, %1573 in 1 : vector<40x128xf32>, vector<40x128xf32> -> vector<40x256xf32>
    %1575 = arith.truncf %1574 : vector<40x256xf32> to vector<40x256xbf16>
    %cst_289 = arith.constant dense<0.000000e+00> : vector<8x256xf32>
    %1576 = tpu.matmul %1472, %1575, %cst_289 {dimension_numbers = #tpu.dot_dimension_numbers<[1], [0], [0], [1], [0, 0, 1, 1], [], []>} : vector<8x40xbf16>, vector<40x256xbf16>, vector<8x256xf32> -> vector<8x256xf32>
    %1577 = vector.broadcast %1473 : vector<8x1xf32> to vector<8x256xf32>
    %1578 = arith.addf %1576, %1577 : vector<8x256xf32>
    %1579 = vector.broadcast %759 : vector<1x256xf32> to vector<8x256xf32>
    %1580 = arith.mulf %1578, %1579 : vector<8x256xf32>
    %1581 = arith.addf %1580, %1280 : vector<8x256xf32>
    %1582 = vector.broadcast %759 : vector<1x256xf32> to vector<8x256xf32>
    %1583 = arith.mulf %1581, %1582 : vector<8x256xf32>
    %1584 = arith.addf %1039, %1583 : vector<8x256xf32>
    %cst_290 = arith.constant 5.000000e-01 : f32
    %1585 = vector.broadcast %cst_290 : f32 to vector<8x256xf32>
    %1586 = arith.mulf %1584, %1585 : vector<8x256xf32>
    %c0_291 = arith.constant 0 : index
    %c51 = arith.constant 51 : index
    %1587 = vector.load %arg4[%c0_291, %c51] : memref<16x53xf32, #tpu.memory_space<vmem>>, vector<8x1xf32>
    %c0_292 = arith.constant 0 : index
    %c52 = arith.constant 52 : index
    %1588 = vector.load %arg4[%c0_292, %c52] : memref<16x53xf32, #tpu.memory_space<vmem>>, vector<8x1xf32>
    %1589 = vector.broadcast %1587 : vector<8x1xf32> to vector<8x256xf32>
    %1590 = arith.mulf %1589, %1586 : vector<8x256xf32>
    %1591 = math.sin %1590 : vector<8x256xf32>
    %1592 = arith.mulf %1591, %1591 : vector<8x256xf32>
    %1593 = vector.broadcast %1588 : vector<8x1xf32> to vector<8x256xf32>
    %1594 = arith.mulf %1593, %1592 : vector<8x256xf32>
    %1595 = arith.addf %1586, %1594 : vector<8x256xf32>
    %1596 = vector.extract_strided_slice %1595 {offsets = [0, 0], sizes = [4, 256], strides = [1, 1]} : vector<8x256xf32> to vector<4x256xf32>
    %c0_293 = arith.constant 0 : index
    %c0_294 = arith.constant 0 : index
    %1597 = vector.load %arg5[%c0_293, %c0_294] : memref<4x256xf32, #tpu.memory_space<vmem>>, vector<4x256xf32>
    tpu.vector_store %arg5[%c0_293, %c0_294], %1596 {strides = array<i32>} : memref<4x256xf32, #tpu.memory_space<vmem>>, vector<4x256xf32>,
    %c0_295 = arith.constant 0 : index
    %c664 = arith.constant 664 : index
    %1598 = vector.load %arg3[%c0_295, %c664] : memref<16x720xbf16, #tpu.memory_space<vmem>>, vector<1x56xbf16>
    %1599 = vector.extract_strided_slice %1595 {offsets = [0, 0], sizes = [8, 128], strides = [1, 1]} : vector<8x256xf32> to vector<8x128xf32>
    %1600 = vector.extract_strided_slice %1595 {offsets = [0, 128], sizes = [8, 128], strides = [1, 1]} : vector<8x256xf32> to vector<8x128xf32>
    %1601 = vector.extract_strided_slice %1599 {offsets = [0, 64], sizes = [8, 64], strides = [1, 1]} : vector<8x128xf32> to vector<8x64xf32>
    %1602 = vector.extract_strided_slice %1601 {offsets = [0, 0], sizes = [8, 32], strides = [1, 1]} : vector<8x64xf32> to vector<8x32xf32>
    %cst_296 = arith.constant 0.000000e+00 : f32
    %1603 = vector.broadcast %cst_296 : f32 to vector<8x1xf32>
    %1604 = vector.extract_strided_slice %1602 {offsets = [0, 0], sizes = [8, 31], strides = [1, 1]} : vector<8x32xf32> to vector<8x31xf32>
    %1605 = tpu.concatenate %1603, %1604 in 1 : vector<8x1xf32>, vector<8x31xf32> -> vector<8x32xf32>
    %1606 = vector.extract_strided_slice %1601 {offsets = [0, 32], sizes = [8, 32], strides = [1, 1]} : vector<8x64xf32> to vector<8x32xf32>
    %cst_297 = arith.constant 0.000000e+00 : f32
    %1607 = vector.broadcast %cst_297 : f32 to vector<8x1xf32>
    %1608 = vector.extract_strided_slice %1606 {offsets = [0, 0], sizes = [8, 31], strides = [1, 1]} : vector<8x32xf32> to vector<8x31xf32>
    %1609 = tpu.concatenate %1607, %1608 in 1 : vector<8x1xf32>, vector<8x31xf32> -> vector<8x32xf32>
    %1610 = tpu.concatenate %1605, %1609 in 1 : vector<8x32xf32>, vector<8x32xf32> -> vector<8x64xf32>
    %1611 = vector.extract_strided_slice %1599 {offsets = [0, 0], sizes = [8, 64], strides = [1, 1]} : vector<8x128xf32> to vector<8x64xf32>
    %1612 = vector.extract_strided_slice %1611 {offsets = [0, 32], sizes = [8, 32], strides = [1, 1]} : vector<8x64xf32> to vector<8x32xf32>
    %cst_298 = arith.constant 0.000000e+00 : f32
    %1613 = vector.broadcast %cst_298 : f32 to vector<8x1xf32>
    %1614 = vector.extract_strided_slice %1612 {offsets = [0, 0], sizes = [8, 31], strides = [1, 1]} : vector<8x32xf32> to vector<8x31xf32>
    %1615 = tpu.concatenate %1613, %1614 in 1 : vector<8x1xf32>, vector<8x31xf32> -> vector<8x32xf32>
    %1616 = vector.extract_strided_slice %1611 {offsets = [0, 0], sizes = [8, 32], strides = [1, 1]} : vector<8x64xf32> to vector<8x32xf32>
    %1617 = tpu.concatenate %1615, %1616 in 1 : vector<8x32xf32>, vector<8x32xf32> -> vector<8x64xf32>
    %1618 = tpu.concatenate %1610, %1617 in 1 : vector<8x64xf32>, vector<8x64xf32> -> vector<8x128xf32>
    %1619 = vector.extract_strided_slice %1599 {offsets = [0, 0], sizes = [8, 64], strides = [1, 1]} : vector<8x128xf32> to vector<8x64xf32>
    %1620 = vector.extract_strided_slice %1619 {offsets = [0, 32], sizes = [8, 32], strides = [1, 1]} : vector<8x64xf32> to vector<8x32xf32>
    %cst_299 = arith.constant 0.000000e+00 : f32
    %1621 = vector.broadcast %cst_299 : f32 to vector<8x1xf32>
    %1622 = vector.extract_strided_slice %1620 {offsets = [0, 0], sizes = [8, 31], strides = [1, 1]} : vector<8x32xf32> to vector<8x31xf32>
    %1623 = tpu.concatenate %1621, %1622 in 1 : vector<8x1xf32>, vector<8x31xf32> -> vector<8x32xf32>
    %1624 = vector.extract_strided_slice %1619 {offsets = [0, 0], sizes = [8, 32], strides = [1, 1]} : vector<8x64xf32> to vector<8x32xf32>
    %1625 = tpu.concatenate %1623, %1624 in 1 : vector<8x32xf32>, vector<8x32xf32> -> vector<8x64xf32>
    %1626 = vector.extract_strided_slice %1599 {offsets = [0, 64], sizes = [8, 64], strides = [1, 1]} : vector<8x128xf32> to vector<8x64xf32>
    %1627 = vector.extract_strided_slice %1626 {offsets = [0, 32], sizes = [8, 32], strides = [1, 1]} : vector<8x64xf32> to vector<8x32xf32>
    %cst_300 = arith.constant 0.000000e+00 : f32
    %1628 = vector.broadcast %cst_300 : f32 to vector<8x1xf32>
    %1629 = vector.extract_strided_slice %1627 {offsets = [0, 0], sizes = [8, 31], strides = [1, 1]} : vector<8x32xf32> to vector<8x31xf32>
    %1630 = tpu.concatenate %1628, %1629 in 1 : vector<8x1xf32>, vector<8x31xf32> -> vector<8x32xf32>
    %1631 = vector.extract_strided_slice %1626 {offsets = [0, 0], sizes = [8, 32], strides = [1, 1]} : vector<8x64xf32> to vector<8x32xf32>
    %1632 = tpu.concatenate %1630, %1631 in 1 : vector<8x32xf32>, vector<8x32xf32> -> vector<8x64xf32>
    %1633 = tpu.concatenate %1625, %1632 in 1 : vector<8x64xf32>, vector<8x64xf32> -> vector<8x128xf32>
    %1634 = vector.extract_strided_slice %1599 {offsets = [0, 64], sizes = [8, 64], strides = [1, 1]} : vector<8x128xf32> to vector<8x64xf32>
    %1635 = vector.extract_strided_slice %1634 {offsets = [0, 32], sizes = [8, 32], strides = [1, 1]} : vector<8x64xf32> to vector<8x32xf32>
    %cst_301 = arith.constant 0.000000e+00 : f32
    %1636 = vector.broadcast %cst_301 : f32 to vector<8x1xf32>
    %1637 = vector.extract_strided_slice %1635 {offsets = [0, 0], sizes = [8, 31], strides = [1, 1]} : vector<8x32xf32> to vector<8x31xf32>
    %1638 = tpu.concatenate %1636, %1637 in 1 : vector<8x1xf32>, vector<8x31xf32> -> vector<8x32xf32>
    %1639 = vector.extract_strided_slice %1634 {offsets = [0, 0], sizes = [8, 32], strides = [1, 1]} : vector<8x64xf32> to vector<8x32xf32>
    %1640 = tpu.concatenate %1638, %1639 in 1 : vector<8x32xf32>, vector<8x32xf32> -> vector<8x64xf32>
    %1641 = vector.extract_strided_slice %1599 {offsets = [0, 0], sizes = [8, 64], strides = [1, 1]} : vector<8x128xf32> to vector<8x64xf32>
    %1642 = tpu.concatenate %1640, %1641 in 1 : vector<8x64xf32>, vector<8x64xf32> -> vector<8x128xf32>
    %1643 = vector.extract_strided_slice %1599 {offsets = [0, 64], sizes = [8, 64], strides = [1, 1]} : vector<8x128xf32> to vector<8x64xf32>
    %1644 = vector.extract_strided_slice %1599 {offsets = [0, 0], sizes = [8, 64], strides = [1, 1]} : vector<8x128xf32> to vector<8x64xf32>
    %1645 = vector.extract_strided_slice %1644 {offsets = [0, 32], sizes = [8, 32], strides = [1, 1]} : vector<8x64xf32> to vector<8x32xf32>
    %1646 = vector.extract_strided_slice %1644 {offsets = [0, 0], sizes = [8, 32], strides = [1, 1]} : vector<8x64xf32> to vector<8x32xf32>
    %cst_302 = arith.constant 0.000000e+00 : f32
    %1647 = vector.broadcast %cst_302 : f32 to vector<8x1xf32>
    %1648 = vector.extract_strided_slice %1646 {offsets = [0, 1], sizes = [8, 31], strides = [1, 1]} : vector<8x32xf32> to vector<8x31xf32>
    %1649 = tpu.concatenate %1648, %1647 in 1 : vector<8x31xf32>, vector<8x1xf32> -> vector<8x32xf32>
    %1650 = tpu.concatenate %1645, %1649 in 1 : vector<8x32xf32>, vector<8x32xf32> -> vector<8x64xf32>
    %1651 = tpu.concatenate %1643, %1650 in 1 : vector<8x64xf32>, vector<8x64xf32> -> vector<8x128xf32>
    %1652 = vector.extract_strided_slice %1599 {offsets = [0, 0], sizes = [8, 64], strides = [1, 1]} : vector<8x128xf32> to vector<8x64xf32>
    %1653 = vector.extract_strided_slice %1652 {offsets = [0, 32], sizes = [8, 32], strides = [1, 1]} : vector<8x64xf32> to vector<8x32xf32>
    %1654 = vector.extract_strided_slice %1652 {offsets = [0, 0], sizes = [8, 32], strides = [1, 1]} : vector<8x64xf32> to vector<8x32xf32>
    %cst_303 = arith.constant 0.000000e+00 : f32
    %1655 = vector.broadcast %cst_303 : f32 to vector<8x1xf32>
    %1656 = vector.extract_strided_slice %1654 {offsets = [0, 1], sizes = [8, 31], strides = [1, 1]} : vector<8x32xf32> to vector<8x31xf32>
    %1657 = tpu.concatenate %1656, %1655 in 1 : vector<8x31xf32>, vector<8x1xf32> -> vector<8x32xf32>
    %1658 = tpu.concatenate %1653, %1657 in 1 : vector<8x32xf32>, vector<8x32xf32> -> vector<8x64xf32>
    %1659 = vector.extract_strided_slice %1599 {offsets = [0, 64], sizes = [8, 64], strides = [1, 1]} : vector<8x128xf32> to vector<8x64xf32>
    %1660 = vector.extract_strided_slice %1659 {offsets = [0, 32], sizes = [8, 32], strides = [1, 1]} : vector<8x64xf32> to vector<8x32xf32>
    %1661 = vector.extract_strided_slice %1659 {offsets = [0, 0], sizes = [8, 32], strides = [1, 1]} : vector<8x64xf32> to vector<8x32xf32>
    %cst_304 = arith.constant 0.000000e+00 : f32
    %1662 = vector.broadcast %cst_304 : f32 to vector<8x1xf32>
    %1663 = vector.extract_strided_slice %1661 {offsets = [0, 1], sizes = [8, 31], strides = [1, 1]} : vector<8x32xf32> to vector<8x31xf32>
    %1664 = tpu.concatenate %1663, %1662 in 1 : vector<8x31xf32>, vector<8x1xf32> -> vector<8x32xf32>
    %1665 = tpu.concatenate %1660, %1664 in 1 : vector<8x32xf32>, vector<8x32xf32> -> vector<8x64xf32>
    %1666 = tpu.concatenate %1658, %1665 in 1 : vector<8x64xf32>, vector<8x64xf32> -> vector<8x128xf32>
    %1667 = vector.extract_strided_slice %1599 {offsets = [0, 64], sizes = [8, 64], strides = [1, 1]} : vector<8x128xf32> to vector<8x64xf32>
    %1668 = vector.extract_strided_slice %1667 {offsets = [0, 32], sizes = [8, 32], strides = [1, 1]} : vector<8x64xf32> to vector<8x32xf32>
    %1669 = vector.extract_strided_slice %1667 {offsets = [0, 0], sizes = [8, 32], strides = [1, 1]} : vector<8x64xf32> to vector<8x32xf32>
    %cst_305 = arith.constant 0.000000e+00 : f32
    %1670 = vector.broadcast %cst_305 : f32 to vector<8x1xf32>
    %1671 = vector.extract_strided_slice %1669 {offsets = [0, 1], sizes = [8, 31], strides = [1, 1]} : vector<8x32xf32> to vector<8x31xf32>
    %1672 = tpu.concatenate %1671, %1670 in 1 : vector<8x31xf32>, vector<8x1xf32> -> vector<8x32xf32>
    %1673 = tpu.concatenate %1668, %1672 in 1 : vector<8x32xf32>, vector<8x32xf32> -> vector<8x64xf32>
    %1674 = vector.extract_strided_slice %1599 {offsets = [0, 0], sizes = [8, 64], strides = [1, 1]} : vector<8x128xf32> to vector<8x64xf32>
    %1675 = vector.extract_strided_slice %1674 {offsets = [0, 0], sizes = [8, 32], strides = [1, 1]} : vector<8x64xf32> to vector<8x32xf32>
    %cst_306 = arith.constant 0.000000e+00 : f32
    %1676 = vector.broadcast %cst_306 : f32 to vector<8x1xf32>
    %1677 = vector.extract_strided_slice %1675 {offsets = [0, 1], sizes = [8, 31], strides = [1, 1]} : vector<8x32xf32> to vector<8x31xf32>
    %1678 = tpu.concatenate %1677, %1676 in 1 : vector<8x31xf32>, vector<8x1xf32> -> vector<8x32xf32>
    %1679 = vector.extract_strided_slice %1674 {offsets = [0, 32], sizes = [8, 32], strides = [1, 1]} : vector<8x64xf32> to vector<8x32xf32>
    %cst_307 = arith.constant 0.000000e+00 : f32
    %1680 = vector.broadcast %cst_307 : f32 to vector<8x1xf32>
    %1681 = vector.extract_strided_slice %1679 {offsets = [0, 1], sizes = [8, 31], strides = [1, 1]} : vector<8x32xf32> to vector<8x31xf32>
    %1682 = tpu.concatenate %1681, %1680 in 1 : vector<8x31xf32>, vector<8x1xf32> -> vector<8x32xf32>
    %1683 = tpu.concatenate %1678, %1682 in 1 : vector<8x32xf32>, vector<8x32xf32> -> vector<8x64xf32>
    %1684 = tpu.concatenate %1673, %1683 in 1 : vector<8x64xf32>, vector<8x64xf32> -> vector<8x128xf32>
    %1685 = tpu.concatenate %1618, %1633, %1642, %1599, %1651, %1666, %1684 in 0 : vector<8x128xf32>, vector<8x128xf32>, vector<8x128xf32>, vector<8x128xf32>, vector<8x128xf32>, vector<8x128xf32>, vector<8x128xf32> -> vector<56x128xf32>
    %1686 = vector.extract_strided_slice %1600 {offsets = [0, 64], sizes = [8, 64], strides = [1, 1]} : vector<8x128xf32> to vector<8x64xf32>
    %1687 = vector.extract_strided_slice %1686 {offsets = [0, 0], sizes = [8, 32], strides = [1, 1]} : vector<8x64xf32> to vector<8x32xf32>
    %cst_308 = arith.constant 0.000000e+00 : f32
    %1688 = vector.broadcast %cst_308 : f32 to vector<8x1xf32>
    %1689 = vector.extract_strided_slice %1687 {offsets = [0, 0], sizes = [8, 31], strides = [1, 1]} : vector<8x32xf32> to vector<8x31xf32>
    %1690 = tpu.concatenate %1688, %1689 in 1 : vector<8x1xf32>, vector<8x31xf32> -> vector<8x32xf32>
    %1691 = vector.extract_strided_slice %1686 {offsets = [0, 32], sizes = [8, 32], strides = [1, 1]} : vector<8x64xf32> to vector<8x32xf32>
    %cst_309 = arith.constant 0.000000e+00 : f32
    %1692 = vector.broadcast %cst_309 : f32 to vector<8x1xf32>
    %1693 = vector.extract_strided_slice %1691 {offsets = [0, 0], sizes = [8, 31], strides = [1, 1]} : vector<8x32xf32> to vector<8x31xf32>
    %1694 = tpu.concatenate %1692, %1693 in 1 : vector<8x1xf32>, vector<8x31xf32> -> vector<8x32xf32>
    %1695 = tpu.concatenate %1690, %1694 in 1 : vector<8x32xf32>, vector<8x32xf32> -> vector<8x64xf32>
    %1696 = vector.extract_strided_slice %1600 {offsets = [0, 0], sizes = [8, 64], strides = [1, 1]} : vector<8x128xf32> to vector<8x64xf32>
    %1697 = vector.extract_strided_slice %1696 {offsets = [0, 32], sizes = [8, 32], strides = [1, 1]} : vector<8x64xf32> to vector<8x32xf32>
    %cst_310 = arith.constant 0.000000e+00 : f32
    %1698 = vector.broadcast %cst_310 : f32 to vector<8x1xf32>
    %1699 = vector.extract_strided_slice %1697 {offsets = [0, 0], sizes = [8, 31], strides = [1, 1]} : vector<8x32xf32> to vector<8x31xf32>
    %1700 = tpu.concatenate %1698, %1699 in 1 : vector<8x1xf32>, vector<8x31xf32> -> vector<8x32xf32>
    %1701 = vector.extract_strided_slice %1696 {offsets = [0, 0], sizes = [8, 32], strides = [1, 1]} : vector<8x64xf32> to vector<8x32xf32>
    %1702 = tpu.concatenate %1700, %1701 in 1 : vector<8x32xf32>, vector<8x32xf32> -> vector<8x64xf32>
    %1703 = tpu.concatenate %1695, %1702 in 1 : vector<8x64xf32>, vector<8x64xf32> -> vector<8x128xf32>
    %1704 = vector.extract_strided_slice %1600 {offsets = [0, 0], sizes = [8, 64], strides = [1, 1]} : vector<8x128xf32> to vector<8x64xf32>
    %1705 = vector.extract_strided_slice %1704 {offsets = [0, 32], sizes = [8, 32], strides = [1, 1]} : vector<8x64xf32> to vector<8x32xf32>
    %cst_311 = arith.constant 0.000000e+00 : f32
    %1706 = vector.broadcast %cst_311 : f32 to vector<8x1xf32>
    %1707 = vector.extract_strided_slice %1705 {offsets = [0, 0], sizes = [8, 31], strides = [1, 1]} : vector<8x32xf32> to vector<8x31xf32>
    %1708 = tpu.concatenate %1706, %1707 in 1 : vector<8x1xf32>, vector<8x31xf32> -> vector<8x32xf32>
    %1709 = vector.extract_strided_slice %1704 {offsets = [0, 0], sizes = [8, 32], strides = [1, 1]} : vector<8x64xf32> to vector<8x32xf32>
    %1710 = tpu.concatenate %1708, %1709 in 1 : vector<8x32xf32>, vector<8x32xf32> -> vector<8x64xf32>
    %1711 = vector.extract_strided_slice %1600 {offsets = [0, 64], sizes = [8, 64], strides = [1, 1]} : vector<8x128xf32> to vector<8x64xf32>
    %1712 = vector.extract_strided_slice %1711 {offsets = [0, 32], sizes = [8, 32], strides = [1, 1]} : vector<8x64xf32> to vector<8x32xf32>
    %cst_312 = arith.constant 0.000000e+00 : f32
    %1713 = vector.broadcast %cst_312 : f32 to vector<8x1xf32>
    %1714 = vector.extract_strided_slice %1712 {offsets = [0, 0], sizes = [8, 31], strides = [1, 1]} : vector<8x32xf32> to vector<8x31xf32>
    %1715 = tpu.concatenate %1713, %1714 in 1 : vector<8x1xf32>, vector<8x31xf32> -> vector<8x32xf32>
    %1716 = vector.extract_strided_slice %1711 {offsets = [0, 0], sizes = [8, 32], strides = [1, 1]} : vector<8x64xf32> to vector<8x32xf32>
    %1717 = tpu.concatenate %1715, %1716 in 1 : vector<8x32xf32>, vector<8x32xf32> -> vector<8x64xf32>
    %1718 = tpu.concatenate %1710, %1717 in 1 : vector<8x64xf32>, vector<8x64xf32> -> vector<8x128xf32>
    %1719 = vector.extract_strided_slice %1600 {offsets = [0, 64], sizes = [8, 64], strides = [1, 1]} : vector<8x128xf32> to vector<8x64xf32>
    %1720 = vector.extract_strided_slice %1719 {offsets = [0, 32], sizes = [8, 32], strides = [1, 1]} : vector<8x64xf32> to vector<8x32xf32>
    %cst_313 = arith.constant 0.000000e+00 : f32
    %1721 = vector.broadcast %cst_313 : f32 to vector<8x1xf32>
    %1722 = vector.extract_strided_slice %1720 {offsets = [0, 0], sizes = [8, 31], strides = [1, 1]} : vector<8x32xf32> to vector<8x31xf32>
    %1723 = tpu.concatenate %1721, %1722 in 1 : vector<8x1xf32>, vector<8x31xf32> -> vector<8x32xf32>
    %1724 = vector.extract_strided_slice %1719 {offsets = [0, 0], sizes = [8, 32], strides = [1, 1]} : vector<8x64xf32> to vector<8x32xf32>
    %1725 = tpu.concatenate %1723, %1724 in 1 : vector<8x32xf32>, vector<8x32xf32> -> vector<8x64xf32>
    %1726 = vector.extract_strided_slice %1600 {offsets = [0, 0], sizes = [8, 64], strides = [1, 1]} : vector<8x128xf32> to vector<8x64xf32>
    %1727 = tpu.concatenate %1725, %1726 in 1 : vector<8x64xf32>, vector<8x64xf32> -> vector<8x128xf32>
    %1728 = vector.extract_strided_slice %1600 {offsets = [0, 64], sizes = [8, 64], strides = [1, 1]} : vector<8x128xf32> to vector<8x64xf32>
    %1729 = vector.extract_strided_slice %1600 {offsets = [0, 0], sizes = [8, 64], strides = [1, 1]} : vector<8x128xf32> to vector<8x64xf32>
    %1730 = vector.extract_strided_slice %1729 {offsets = [0, 32], sizes = [8, 32], strides = [1, 1]} : vector<8x64xf32> to vector<8x32xf32>
    %1731 = vector.extract_strided_slice %1729 {offsets = [0, 0], sizes = [8, 32], strides = [1, 1]} : vector<8x64xf32> to vector<8x32xf32>
    %cst_314 = arith.constant 0.000000e+00 : f32
    %1732 = vector.broadcast %cst_314 : f32 to vector<8x1xf32>
    %1733 = vector.extract_strided_slice %1731 {offsets = [0, 1], sizes = [8, 31], strides = [1, 1]} : vector<8x32xf32> to vector<8x31xf32>
    %1734 = tpu.concatenate %1733, %1732 in 1 : vector<8x31xf32>, vector<8x1xf32> -> vector<8x32xf32>
    %1735 = tpu.concatenate %1730, %1734 in 1 : vector<8x32xf32>, vector<8x32xf32> -> vector<8x64xf32>
    %1736 = tpu.concatenate %1728, %1735 in 1 : vector<8x64xf32>, vector<8x64xf32> -> vector<8x128xf32>
    %1737 = vector.extract_strided_slice %1600 {offsets = [0, 0], sizes = [8, 64], strides = [1, 1]} : vector<8x128xf32> to vector<8x64xf32>
    %1738 = vector.extract_strided_slice %1737 {offsets = [0, 32], sizes = [8, 32], strides = [1, 1]} : vector<8x64xf32> to vector<8x32xf32>
    %1739 = vector.extract_strided_slice %1737 {offsets = [0, 0], sizes = [8, 32], strides = [1, 1]} : vector<8x64xf32> to vector<8x32xf32>
    %cst_315 = arith.constant 0.000000e+00 : f32
    %1740 = vector.broadcast %cst_315 : f32 to vector<8x1xf32>
    %1741 = vector.extract_strided_slice %1739 {offsets = [0, 1], sizes = [8, 31], strides = [1, 1]} : vector<8x32xf32> to vector<8x31xf32>
    %1742 = tpu.concatenate %1741, %1740 in 1 : vector<8x31xf32>, vector<8x1xf32> -> vector<8x32xf32>
    %1743 = tpu.concatenate %1738, %1742 in 1 : vector<8x32xf32>, vector<8x32xf32> -> vector<8x64xf32>
    %1744 = vector.extract_strided_slice %1600 {offsets = [0, 64], sizes = [8, 64], strides = [1, 1]} : vector<8x128xf32> to vector<8x64xf32>
    %1745 = vector.extract_strided_slice %1744 {offsets = [0, 32], sizes = [8, 32], strides = [1, 1]} : vector<8x64xf32> to vector<8x32xf32>
    %1746 = vector.extract_strided_slice %1744 {offsets = [0, 0], sizes = [8, 32], strides = [1, 1]} : vector<8x64xf32> to vector<8x32xf32>
    %cst_316 = arith.constant 0.000000e+00 : f32
    %1747 = vector.broadcast %cst_316 : f32 to vector<8x1xf32>
    %1748 = vector.extract_strided_slice %1746 {offsets = [0, 1], sizes = [8, 31], strides = [1, 1]} : vector<8x32xf32> to vector<8x31xf32>
    %1749 = tpu.concatenate %1748, %1747 in 1 : vector<8x31xf32>, vector<8x1xf32> -> vector<8x32xf32>
    %1750 = tpu.concatenate %1745, %1749 in 1 : vector<8x32xf32>, vector<8x32xf32> -> vector<8x64xf32>
    %1751 = tpu.concatenate %1743, %1750 in 1 : vector<8x64xf32>, vector<8x64xf32> -> vector<8x128xf32>
    %1752 = vector.extract_strided_slice %1600 {offsets = [0, 64], sizes = [8, 64], strides = [1, 1]} : vector<8x128xf32> to vector<8x64xf32>
    %1753 = vector.extract_strided_slice %1752 {offsets = [0, 32], sizes = [8, 32], strides = [1, 1]} : vector<8x64xf32> to vector<8x32xf32>
    %1754 = vector.extract_strided_slice %1752 {offsets = [0, 0], sizes = [8, 32], strides = [1, 1]} : vector<8x64xf32> to vector<8x32xf32>
    %cst_317 = arith.constant 0.000000e+00 : f32
    %1755 = vector.broadcast %cst_317 : f32 to vector<8x1xf32>
    %1756 = vector.extract_strided_slice %1754 {offsets = [0, 1], sizes = [8, 31], strides = [1, 1]} : vector<8x32xf32> to vector<8x31xf32>
    %1757 = tpu.concatenate %1756, %1755 in 1 : vector<8x31xf32>, vector<8x1xf32> -> vector<8x32xf32>
    %1758 = tpu.concatenate %1753, %1757 in 1 : vector<8x32xf32>, vector<8x32xf32> -> vector<8x64xf32>
    %1759 = vector.extract_strided_slice %1600 {offsets = [0, 0], sizes = [8, 64], strides = [1, 1]} : vector<8x128xf32> to vector<8x64xf32>
    %1760 = vector.extract_strided_slice %1759 {offsets = [0, 0], sizes = [8, 32], strides = [1, 1]} : vector<8x64xf32> to vector<8x32xf32>
    %cst_318 = arith.constant 0.000000e+00 : f32
    %1761 = vector.broadcast %cst_318 : f32 to vector<8x1xf32>
    %1762 = vector.extract_strided_slice %1760 {offsets = [0, 1], sizes = [8, 31], strides = [1, 1]} : vector<8x32xf32> to vector<8x31xf32>
    %1763 = tpu.concatenate %1762, %1761 in 1 : vector<8x31xf32>, vector<8x1xf32> -> vector<8x32xf32>
    %1764 = vector.extract_strided_slice %1759 {offsets = [0, 32], sizes = [8, 32], strides = [1, 1]} : vector<8x64xf32> to vector<8x32xf32>
    %cst_319 = arith.constant 0.000000e+00 : f32
    %1765 = vector.broadcast %cst_319 : f32 to vector<8x1xf32>
    %1766 = vector.extract_strided_slice %1764 {offsets = [0, 1], sizes = [8, 31], strides = [1, 1]} : vector<8x32xf32> to vector<8x31xf32>
    %1767 = tpu.concatenate %1766, %1765 in 1 : vector<8x31xf32>, vector<8x1xf32> -> vector<8x32xf32>
    %1768 = tpu.concatenate %1763, %1767 in 1 : vector<8x32xf32>, vector<8x32xf32> -> vector<8x64xf32>
    %1769 = tpu.concatenate %1758, %1768 in 1 : vector<8x64xf32>, vector<8x64xf32> -> vector<8x128xf32>
    %1770 = tpu.concatenate %1703, %1718, %1727, %1600, %1736, %1751, %1769 in 0 : vector<8x128xf32>, vector<8x128xf32>, vector<8x128xf32>, vector<8x128xf32>, vector<8x128xf32>, vector<8x128xf32>, vector<8x128xf32> -> vector<56x128xf32>
    %1771 = tpu.concatenate %1685, %1770 in 1 : vector<56x128xf32>, vector<56x128xf32> -> vector<56x256xf32>
    %1772 = arith.truncf %1771 : vector<56x256xf32> to vector<56x256xbf16>
    %cst_320 = arith.constant dense<0.000000e+00> : vector<1x256xf32>
    %1773 = tpu.matmul %1598, %1772, %cst_320 {dimension_numbers = #tpu.dot_dimension_numbers<[1], [0], [0], [1], [0, 0, 1, 1], [], []>} : vector<1x56xbf16>, vector<56x256xbf16>, vector<1x256xf32> -> vector<1x256xf32>
    %c0_321 = arith.constant 0 : index
    %c0_322 = arith.constant 0 : index
    %1774 = vector.load %arg6[%c0_321, %c0_322] : memref<1x256xf32, #tpu.memory_space<vmem>>, vector<1x256xf32>
    tpu.vector_store %arg6[%c0_321, %c0_322], %1773 {strides = array<i32>} : memref<1x256xf32, #tpu.memory_space<vmem>>, vector<1x256xf32>,
    return
  }
}

</mosaic_0001>

<llo_original>
// kernel: semantic_f0_predictor_forward.1
$region0: #{semantic_f0_predictor_forward.1}
  #allocation0 [shape = 'u32[]', space=smem, size = 0x4, offset = 0x4, fixed_abs, tag = 'smem constant byte address 0x4 - core index']
  #allocation1 [shape = 'u32[144,128]{1,0:T(1,128)}', space=vmem, size = 0x12000, scoped, tag = 'internal scratch']
  %s0 = inlined_call_operand.vmem [shape: s32[2], index: 0, kind: input, shape index: {}]
  %s1 = inlined_call_operand.vmem [shape: f32[8,64], index: 1, kind: input, shape index: {}]
  %s2 = inlined_call_operand.vmem [shape: f32[16,2], index: 2, kind: input, shape index: {}]
  %s3 = inlined_call_operand.vmem [shape: bf16[16,720], index: 3, kind: input, shape index: {}]
  %s4 = inlined_call_operand.vmem [shape: f32[16,53], index: 4, kind: input, shape index: {}]
  %s5 = inlined_call_operand.vmem [shape: f32[4,256], index: 5, kind: output, shape index: {0}]
  %s6 = inlined_call_operand.vmem [shape: f32[1,256], index: 6, kind: output, shape index: {1}]
  %7 = xla_tuple %s5, %s6
  %s8 = sld [smem:[#allocation0]]
  $region42: #{semantic_f0_predictor_forward.1} parent=0
    _
  %s10 = ssub.s32 1, %s8
  %s11 = scalar_select 0, %s10, %s8
  $region1: #{semantic_f0_predictor_forward.1} parent=0
    #allocation2 [shape = 'u8[512]{0}', space=smem, size = 0x200, scoped, tag = 'input window, operand 0, single buffered']
    #allocation3 [shape = 's32[1]{0}', space=sflag, size = 0x4, scoped, tag = 'scoped memory for semantic_f0_predictor_forward.1']
    %12 = vsyncpa [#allocation3], 0
    // Predicated region
    $region2: #{semantic_f0_predictor_forward.1} parent=1 // pred_check
      _
    $region3: #{semantic_f0_predictor_forward.1} parent=1 // pred_check_branch
      %14 = sbr.rel (0) target = $region5
    $region4: #{semantic_f0_predictor_forward.1} parent=1 // pred_region
      %s16 = ssub.s32 16, 16
      %17 = vsyncadd [#allocation3], %s16
      %s19 = sshll.u32 %s0, 4
      %s20 = int_to_ptr.vmem [resolvable:$true] %s19
      %22 = dma.vmem_to_smem %s20, 16, [#allocation2], [#allocation3]
    $region5: #{semantic_f0_predictor_forward.1} parent=1 // pred_fallthru
      _
    // Predicated region
    $region6: #{semantic_f0_predictor_forward.1} parent=1 // pred_check
      _
    $region7: #{semantic_f0_predictor_forward.1} parent=1 // pred_check_branch
      %24 = sbr.rel (0) target = $region9
    $region8: #{semantic_f0_predictor_forward.1} parent=1 // pred_region
      _
    $region9: #{semantic_f0_predictor_forward.1} parent=1 // pred_fallthru
      _
    // Predicated region
    $region10: #{semantic_f0_predictor_forward.1} parent=1 // pred_check
      _
    $region11: #{semantic_f0_predictor_forward.1} parent=1 // pred_check_branch
      %26 = sbr.rel (0) target = $region13
    $region12: #{semantic_f0_predictor_forward.1} parent=1 // pred_region
      _
    $region13: #{semantic_f0_predictor_forward.1} parent=1 // pred_fallthru
      _
    // Predicated region
    $region14: #{semantic_f0_predictor_forward.1} parent=1 // pred_check
      _
    $region15: #{semantic_f0_predictor_forward.1} parent=1 // pred_check_branch
      %28 = sbr.rel (0) target = $region17
    $region16: #{semantic_f0_predictor_forward.1} parent=1 // pred_region
      _
    $region17: #{semantic_f0_predictor_forward.1} parent=1 // pred_fallthru
      _
    // Predicated region
    $region18: #{semantic_f0_predictor_forward.1} parent=1 // pred_check
      _
    $region19: #{semantic_f0_predictor_forward.1} parent=1 // pred_check_branch
      %30 = sbr.rel (0) target = $region21
    $region20: #{semantic_f0_predictor_forward.1} parent=1 // pred_region
      _
    $region21: #{semantic_f0_predictor_forward.1} parent=1 // pred_fallthru
      _
    // Predicated region
    $region22: #{semantic_f0_predictor_forward.1} parent=1 // pred_check
      _
    $region23: #{semantic_f0_predictor_forward.1} parent=1 // pred_check_branch
      %32 = sbr.rel (0) target = $region25
    $region24: #{semantic_f0_predictor_forward.1} parent=1 // pred_region
      %33 = dma.done [#allocation3], 16
    $region25: #{semantic_f0_predictor_forward.1} parent=1 // pred_fallthru
      _
    %34 = sfence
    %s36 = sld [smem:[#allocation2]]
    %s37 = sld [smem:[#allocation2 + $0x1]]
    %v38 = vlaneseq
    %v39 = vand.u32 %v38, 127
    %v40 = vstv %s36
    %vm41 = vcmp.lt.s32.totalorder %v39, %v40
    %v42 = vsel %vm41, 1, 0
    %v43 = vcvt.s32.f32 %v42
    %v44 = vstv %s37
    %vm45 = vcmp.lt.s32.totalorder %v39, %v44
    %v46 = vsel %vm45, 1, 0
    %v47 = vcvt.s32.f32 %v46
    %49 = vrot.lane.b32.xlu0 %v47, 32
    %v50 = vpop.permute.xlu0 %49
    %vm52 = vcmask 261120
    %v53 = vsel %vm52, %v43, %v50
    %v54 = vld [vmem:[%s1] sm:$0xff]
    %v55 = vld [vmem:[%s3] sm:$0xf]
    %v56 = vld [vmem:[%s3 + $0x18] sm:$0xf]
    %v57 = vld [vmem:[%s4] sm:$0xff]
    %v58 = vld [vmem:[%s4 + $0x8] sm:$0xff]
    %60 = vrot.lane.b32.xlu0 %v54, 3
    %v61 = vpop.permute.xlu0 %60
    %vm63 = vcmask 23552
    %v64 = vsel %vm63, 0.0, %v61
    %65 = vrot.lane.b32.xlu0 %v54, 2
    %v66 = vpop.permute.xlu0 %65
    %vm68 = vcmask 15360
    %v69 = vsel %vm68, 0.0, %v66
    %70 = vrot.lane.b32.xlu0 %v54, 1
    %v71 = vpop.permute.xlu0 %70
    %vm73 = vcmask 7168
    %v74 = vsel %vm73, 0.0, %v71
    %75 = vrot.lane.b32.xlu0 %v54, 127
    %v76 = vpop.permute.xlu0 %75
    %vm78 = vcmask 252928
    %v79 = vsel %vm78, %v76, 0.0
    %80 = vrot.lane.b32.xlu0 %v54, 126
    %v81 = vpop.permute.xlu0 %80
    %vm83 = vcmask 244736
    %v84 = vsel %vm83, %v81, 0.0
    %85 = vrot.lane.b32.xlu0 %v54, 125
    %v86 = vpop.permute.xlu0 %85
    %vm88 = vcmask 236544
    %v89 = vsel %vm88, %v86, 0.0
    %90 = vrot.lane.b32.xlu0 %v54, 99
    %v91 = vpop.permute.xlu0 %90
    %v93 = vsel %vm63, 0.0, %v91
    %94 = vrot.lane.b32.xlu0 %v54, 98
    %v95 = vpop.permute.xlu0 %94
    %v97 = vsel %vm68, 0.0, %v95
    %98 = vrot.lane.b32.xlu0 %v54, 97
    %v99 = vpop.permute.xlu0 %98
    %v101 = vsel %vm73, 0.0, %v99
    %102 = vrot.lane.b32.xlu0 %v54, 95
    %v103 = vpop.permute.xlu0 %102
    %v105 = vsel %vm78, %v103, 0.0
    %106 = vrot.lane.b32.xlu0 %v54, 94
    %v107 = vpop.permute.xlu0 %106
    %v109 = vsel %vm83, %v107, 0.0
    %110 = vrot.lane.b32.xlu0 %v54, 93
    %v111 = vpop.permute.xlu0 %110
    %v113 = vsel %vm88, %v111, 0.0
    %114 = vrot.lane.b32.xlu0 %v54, 96
    %v115 = vpop.permute.xlu0 %114
    %122 = vrot.lane.b32.xlu0 %v93, 32
    %v123 = vpop.permute.xlu0 %122
    %124 = vrot.lane.b32.xlu0 %v97, 32
    %v125 = vpop.permute.xlu0 %124
    %126 = vrot.lane.b32.xlu0 %v101, 32
    %v127 = vpop.permute.xlu0 %126
    %128 = vrot.lane.b32.xlu0 %v115, 32
    %v129 = vpop.permute.xlu0 %128
    %130 = vrot.lane.b32.xlu0 %v105, 32
    %v131 = vpop.permute.xlu0 %130
    %132 = vrot.lane.b32.xlu0 %v109, 32
    %v133 = vpop.permute.xlu0 %132
    %134 = vrot.lane.b32.xlu0 %v113, 32
    %v135 = vpop.permute.xlu0 %134
    %v143 = vsel %vm52, %v64, %v123
    %v144 = vsel %vm52, %v69, %v125
    %v145 = vsel %vm52, %v74, %v127
    %v146 = vsel %vm52, %v54, %v129
    %v147 = vsel %vm52, %v79, %v131
    %v148 = vsel %vm52, %v84, %v133
    %v149 = vsel %vm52, %v89, %v135
    %v150 = vpack.c.bf16 %v144, %v143
    %v151 = vpack.c.bf16 %v146, %v145
    %v152 = vpack.c.bf16 %v148, %v147
    %v153 = vpack.c.bf16 %v149, %v149
    %155 = vset.pattern.permute.xlu0 0
    %156 = vperm.xlu0 %155, %v57
    %v157 = vpop.permute.xlu0 %156
    %160 = vset.pattern.permute.xlu0 0
    %161 = vperm.xlu0 %160, %v58
    %v162 = vpop.permute.xlu0 %161
    %v166 = vunpack.c.l.b16 %v55
    %v167 = vunpack.c.l.b16 %v56
    %v168 = vpack.c.b16 %v167, %v166
    %vm169 = vcmask 457728
    %v171 = vsel %vm169, %v168, 0
    %vm173 = vcmask 1043456
    %v175 = vsel %vm173, %v153, 0
    %177 = vmatprep.subr.bf16.mxu0 0
    %178 = vmatpush1.bf16.msra.mxu0 0
    %179 = vmatprep.subr.bf16.mxu0 0
    %180 = vmatpush1.bf16.msra.mxu0 0
    %181 = vmatprep.subr.bf16.mxu0 0
    %182 = vmatpush1.bf16.msra.mxu0 0
    %183 = vmatprep.subr.bf16.mxu0 0
    %184 = vmatpush1.bf16.msra.mxu0 0
    %185 = vmatprep.subr.bf16.mxu0 0
    %186 = vmatpush1.bf16.msra.mxu0 %v175
    %187 = vmatprep.subr.bf16.mxu0 0
    %188 = vmatpush1.bf16.msra.mxu0 %v152
    %189 = vmatprep.subr.bf16.mxu0 0
    %190 = vmatpush1.bf16.msra.mxu0 %v151
    %191 = vmatprep.subr.bf16.mxu0 0
    %192 = vmatpush1.bf16.msra.mxu0 %v150
    %193 = vmatprep.subr.bf16.mxu0 0
    %194 = vmatpush2.bf16.msra.mxu0 0
    %195 = vmatprep.subr.bf16.mxu0 0
    %196 = vmatpush2.bf16.msra.mxu0 0
    %197 = vmatprep.subr.bf16.mxu0 0
    %198 = vmatpush2.bf16.msra.mxu0 0
    %199 = vmatprep.subr.bf16.mxu0 0
    %200 = vmatpush2.bf16.msra.mxu0 0
    %201 = vmatprep.subr.bf16.mxu0 0
    %202 = vmatpush2.bf16.msra.mxu0 0
    %203 = vmatprep.subr.bf16.mxu0 0
    %204 = vmatpush2.bf16.msra.mxu0 0
    %205 = vmatprep.subr.bf16.mxu0 0
    %206 = vmatpush2.bf16.msra.mxu0 0
    %207 = vmatprep.subr.bf16.mxu0 0
    %208 = vmatpush2.bf16.msra.mxu0 0
    %209 = vmatprep.mubr.bf16.mxu0 0
    %210 = vmatmul.mubr.bf16.gmra.mxu0 %v171
    %v211 = vpop.f32.mrf.mxu0
    %v212 = vadd.f32 %v157, %v211
    %v213 = vpop.f32.mrf.mxu0
    %v214 = vpop.f32.mrf.mxu0
    %v215 = vadd.f32 %v162, %v214
    %v216 = vpop.f32.mrf.mxu0
    %217 = vdwg.mxu0
    %v218 = vld [vmem:[%s2] sm:$0xff]
    %v219 = vld [vmem:[%s2 + $0x8] sm:$0xff]
    %221 = vset.pattern.permute.xlu0 0
    %222 = vperm.xlu0 %221, %v218
    %v223 = vpop.permute.xlu0 %222
    %226 = vset.pattern.permute.xlu0 0
    %227 = vperm.xlu0 %226, %v219
    %v228 = vpop.permute.xlu0 %227
    %230 = vset.pattern.permute.xlu0 1
    %231 = vperm.xlu0 %230, %v218
    %v232 = vpop.permute.xlu0 %231
    %234 = vset.pattern.permute.xlu0 1
    %235 = vperm.xlu0 %234, %v219
    %v236 = vpop.permute.xlu0 %235
    %v238 = vsel %vm52, %v223, %v232
    %v239 = vsel %vm52, %v228, %v236
    %v240 = vadd.f32 %v212, %v238
    %v241 = vadd.f32 %v215, %v239
    %v242 = vlaneseq
    %v243 = vshrl.u32 %v242, 7
    %v244 = vsub.s32 0, %v243
    %v245 = vrot.slane %v53, %v244
    %v246 = vmul.f32 %v240, %v245
    %v247 = vmul.f32 %v241, %v245
    %v248 = vld [vmem:[%s3] sm:$0xf]
    %v249 = vld [vmem:[%s4] sm:$0xff]
    %252 = vrot.lane.b32.xlu0 %v246, 1
    %v253 = vpop.permute.xlu0 %252
    %254 = vrot.lane.b32.xlu0 %v247, 1
    %v255 = vpop.permute.xlu0 %254
    %v258 = vsel %vm73, 0.0, %v253
    %v259 = vsel %vm73, 0.0, %v255
    %260 = vrot.lane.b32.xlu0 %v246, 97
    %v261 = vpop.permute.xlu0 %260
    %262 = vrot.lane.b32.xlu0 %v247, 97
    %v263 = vpop.permute.xlu0 %262
    %v266 = vsel %vm73, 0.0, %v261
    %v267 = vsel %vm73, 0.0, %v263
    %270 = vrot.lane.b32.xlu0 %v266, 32
    %v271 = vpop.permute.xlu0 %270
    %272 = vrot.lane.b32.xlu0 %v267, 32
    %v273 = vpop.permute.xlu0 %272
    %v276 = vsel %vm52, %v258, %v271
    %v277 = vsel %vm52, %v259, %v273
    %v278 = vpack.c.bf16 %v247, %v246
    %v279 = vpack.c.bf16 %v277, %v276
    %281 = vset.pattern.permute.xlu0 1
    %282 = vperm.xlu0 %281, %v249
    %v283 = vpop.permute.xlu0 %282
    %v286 = vunpack.c.l.b16 %v248
    %v287 = vpack.c.b16 %v286, %v286
    %288 = vrot.lane.b32.xlu0 %v287, 72
    %v289 = vpop.permute.xlu0 %288
    %v291 = vsel %vm52, %v289, 0
    %293 = vmatprep.subr.bf16.mxu0 0
    %294 = vmatpush1.bf16.msra.mxu0 0
    %295 = vmatprep.subr.bf16.mxu0 0
    %296 = vmatpush1.bf16.msra.mxu0 0
    %297 = vmatprep.subr.bf16.mxu0 0
    %298 = vmatpush1.bf16.msra.mxu0 0
    %299 = vmatprep.subr.bf16.mxu0 0
    %300 = vmatpush1.bf16.msra.mxu0 0
    %301 = vmatprep.subr.bf16.mxu0 0
    %302 = vmatpush1.bf16.msra.mxu0 0
    %303 = vmatprep.subr.bf16.mxu0 0
    %304 = vmatpush1.bf16.msra.mxu0 0
    %305 = vmatprep.subr.bf16.mxu0 0
    %306 = vmatpush1.bf16.msra.mxu0 %v279
    %307 = vmatprep.subr.bf16.mxu0 0
    %308 = vmatpush1.bf16.msra.mxu0 %v278
    %309 = vmatprep.subr.bf16.mxu0 0
    %310 = vmatpush2.bf16.msra.mxu0 0
    %311 = vmatprep.subr.bf16.mxu0 0
    %312 = vmatpush2.bf16.msra.mxu0 0
    %313 = vmatprep.subr.bf16.mxu0 0
    %314 = vmatpush2.bf16.msra.mxu0 0
    %315 = vmatprep.subr.bf16.mxu0 0
    %316 = vmatpush2.bf16.msra.mxu0 0
    %317 = vmatprep.subr.bf16.mxu0 0
    %318 = vmatpush2.bf16.msra.mxu0 0
    %319 = vmatprep.subr.bf16.mxu0 0
    %320 = vmatpush2.bf16.msra.mxu0 0
    %321 = vmatprep.subr.bf16.mxu0 0
    %322 = vmatpush2.bf16.msra.mxu0 0
    %323 = vmatprep.subr.bf16.mxu0 0
    %324 = vmatpush2.bf16.msra.mxu0 0
    %325 = vmatprep.mubr.bf16.mxu0 0
    %326 = vmatmul.mubr.bf16.gmra.mxu0 %v291
    %v327 = vpop.f32.mrf.mxu0
    %v328 = vadd.f32 %v283, %v327
    %v329 = vpop.f32.mrf.mxu0
    %v330 = vpop.f32.mrf.mxu0
    %v331 = vpop.f32.mrf.mxu0
    %332 = vdwg.mxu0
    %333 = vrot.lane.b32.xlu0 %v246, 127
    %v334 = vpop.permute.xlu0 %333
    %335 = vrot.lane.b32.xlu0 %v247, 127
    %v336 = vpop.permute.xlu0 %335
    %v339 = vsel %vm78, %v334, 0.0
    %v340 = vsel %vm78, %v336, 0.0
    %341 = vrot.lane.b32.xlu0 %v246, 95
    %v342 = vpop.permute.xlu0 %341
    %343 = vrot.lane.b32.xlu0 %v247, 95
    %v344 = vpop.permute.xlu0 %343
    %v347 = vsel %vm78, %v342, 0.0
    %v348 = vsel %vm78, %v344, 0.0
    %349 = vrot.lane.b32.xlu0 %v246, 96
    %v350 = vpop.permute.xlu0 %349
    %351 = vrot.lane.b32.xlu0 %v247, 96
    %v352 = vpop.permute.xlu0 %351
    %355 = vrot.lane.b32.xlu0 %v347, 32
    %v356 = vpop.permute.xlu0 %355
    %357 = vrot.lane.b32.xlu0 %v348, 32
    %v358 = vpop.permute.xlu0 %357
    %359 = vrot.lane.b32.xlu0 %v350, 32
    %v360 = vpop.permute.xlu0 %359
    %361 = vrot.lane.b32.xlu0 %v352, 32
    %v362 = vpop.permute.xlu0 %361
    %v367 = vsel %vm52, %v339, %v356
    %v368 = vsel %vm52, %v340, %v358
    %v369 = vsel %vm52, %v246, %v360
    %v370 = vsel %vm52, %v247, %v362
    %v371 = vpack.c.bf16 %v368, %v367
    %v372 = vpack.c.bf16 %v370, %v369
    %373 = vrot.lane.b32.xlu0 %v287, 40
    %v374 = vpop.permute.xlu0 %373
    %v376 = vsel %vm52, %v374, 0
    %378 = vmatprep.subr.bf16.mxu0 0
    %379 = vmatpush1.bf16.msra.mxu0 0
    %380 = vmatprep.subr.bf16.mxu0 0
    %381 = vmatpush1.bf16.msra.mxu0 0
    %382 = vmatprep.subr.bf16.mxu0 0
    %383 = vmatpush1.bf16.msra.mxu0 0
    %384 = vmatprep.subr.bf16.mxu0 0
    %385 = vmatpush1.bf16.msra.mxu0 0
    %386 = vmatprep.subr.bf16.mxu0 0
    %387 = vmatpush1.bf16.msra.mxu0 0
    %388 = vmatprep.subr.bf16.mxu0 0
    %389 = vmatpush1.bf16.msra.mxu0 0
    %390 = vmatprep.subr.bf16.mxu0 0
    %391 = vmatpush1.bf16.msra.mxu0 %v372
    %392 = vmatprep.subr.bf16.mxu0 0
    %393 = vmatpush1.bf16.msra.mxu0 %v371
    %394 = vmatprep.subr.bf16.mxu0 0
    %395 = vmatpush2.bf16.msra.mxu0 0
    %396 = vmatprep.subr.bf16.mxu0 0
    %397 = vmatpush2.bf16.msra.mxu0 0
    %398 = vmatprep.subr.bf16.mxu0 0
    %399 = vmatpush2.bf16.msra.mxu0 0
    %400 = vmatprep.subr.bf16.mxu0 0
    %401 = vmatpush2.bf16.msra.mxu0 0
    %402 = vmatprep.subr.bf16.mxu0 0
    %403 = vmatpush2.bf16.msra.mxu0 0
    %404 = vmatprep.subr.bf16.mxu0 0
    %405 = vmatpush2.bf16.msra.mxu0 0
    %406 = vmatprep.subr.bf16.mxu0 0
    %407 = vmatpush2.bf16.msra.mxu0 0
    %408 = vmatprep.subr.bf16.mxu0 0
    %409 = vmatpush2.bf16.msra.mxu0 0
    %410 = vmatprep.mubr.bf16.mxu0 0
    %411 = vmatmul.mubr.bf16.gmra.mxu0 %v376
    %v412 = vpop.f32.mrf.mxu0
    %v413 = vadd.f32 %v283, %v412
    %v414 = vpop.f32.mrf.mxu0
    %v415 = vpop.f32.mrf.mxu0
    %v416 = vpop.f32.mrf.mxu0
    %417 = vdwg.mxu0
    %419 = vrot.lane.b32.xlu0 %v413, 32
    %v420 = vpop.permute.xlu0 %419
    %423 = vrot.lane.b32.xlu0 %v328, 32
    %v424 = vpop.permute.xlu0 %423
    %426 = vrot.lane.b32.xlu0 %v413, 64
    %v427 = vpop.permute.xlu0 %426
    %v429 = vsel %vm52, %v328, %v420
    %vm430 = vcmask 523264
    %v431 = vsel %vm430, %v429, %v424
    %vm432 = vcmask 785408
    %v433 = vsel %vm432, %v431, %v427
    %v434 = vmul.u32 %v39, 2
    %v435 = vadd.s32 %v434, 1
    %436 = vrot.lane.b32.xlu0 %v435, 32
    %v437 = vpop.permute.xlu0 %436
    %v438 = vsel %vm52, %v434, %v437
    %s439 = smul.u32 %s36, 2
    %v440 = vstv %s439
    %vm441 = vcmp.lt.s32.totalorder %v438, %v440
    %v442 = vsel %vm441, 1, 0
    %v443 = vcvt.s32.f32 %v442
    %s444 = smul.u32 %s37, 2
    %v445 = vstv %s444
    %vm446 = vcmp.lt.s32.totalorder %v438, %v445
    %v447 = vsel %vm446, 1, 0
    %v448 = vcvt.s32.f32 %v447
    %450 = vrot.lane.b32.xlu0 %v448, 64
    %v451 = vpop.permute.xlu0 %450
    %v453 = vsel %vm430, %v443, %v451
    %454 = vset.pattern.permute.xlu0 3
    %455 = vperm.xlu0 %454, %v249
    %v456 = vpop.permute.xlu0 %455
    %v458 = vmul.f32 %v456, %v433
    %v459 = vand.u32 2147483647, %v458
    %vm460 = vcmp.le.f32.partialorder %v459, 0.7853982
    %vm461 = vcmp.lt.s32.totalorder %v458, 0
    %v462 = vand.u32 %v458, 2139095040
    %v463 = vshrl.u32 %v462, 23
    %v464 = vsub.s32 %v463, 127
    %v465 = vand.u32 2147483647, %v458
    %v466 = vand.u32 %v465, 8388607
    %v467 = vor.u32 %v466, 8388608
    %v468 = vsub.s32 0, %v467
    %v469 = vadd.s32 %v464, 1
    %vm470 = vcmp.gt.s32.totalorder %v469, 0
    %v471 = vsel %vm470, %v469, 0
    %v472 = vshrl.u32 %v471, 5
    %v473 = vand.u32 %v471, 31
    %v474 = vsub.s32 32, %v473
    %v475 = vshrl.u32 683565275, %v474
    %v476 = vshll.u32 683565275, %v473
    %v477 = vshrl.u32 2475754826, %v474
    %v478 = vor.u32 %v476, %v477
    %v479 = vshll.u32 2475754826, %v473
    %v480 = vshrl.u32 2131351028, %v474
    %v481 = vor.u32 %v479, %v480
    %v482 = vshll.u32 2131351028, %v473
    %v483 = vshrl.u32 2102212464, %v474
    %v484 = vor.u32 %v482, %v483
    %v485 = vshll.u32 2102212464, %v473
    %v486 = vshrl.u32 920167782, %v474
    %v487 = vor.u32 %v485, %v486
    %v488 = vshll.u32 920167782, %v473
    %v489 = vshrl.u32 1326507024, %v474
    %v490 = vor.u32 %v488, %v489
    %vm491 = vcmp.lt.s32.totalorder %v472, 1
    %vm492 = vcmp.lt.s32.totalorder %v472, 2
    %vm493 = vcmp.lt.s32.totalorder %v472, 3
    %vm494 = vcmp.lt.s32.totalorder %v472, 4
    %v495 = vsel %vm491, %v475, %v478
    %v496 = vsel %vm494, %v484, 2102212464
    %v497 = vsel %vm493, %v481, %v496
    %v498 = vsel %vm492, %v495, %v497
    %v499 = vsel %vm491, %v478, %v481
    %v500 = vsel %vm494, %v487, 920167782
    %v501 = vsel %vm493, %v484, %v500
    %v502 = vsel %vm492, %v499, %v501
    %v503 = vsel %vm491, %v481, %v484
    %v504 = vsel %vm494, %v490, 1326507024
    %v505 = vsel %vm493, %v487, %v504
    %v506 = vsel %vm492, %v503, %v505
    %v507 = vshll.u32 %v467, 8
    %v508 = vmul.u32.u64.compose %v507, %v506
    %v509 = vextract.low.u32 %v508
    %v510 = vextract.high.u32 %v508
    %v511 = vmul.u32.u64.compose %v507, %v502
    %v512 = vextract.low.u32 %v511
    %v513 = vextract.high.u32 %v511
    %v514 = vmul.u32 %v507, %v498
    %v515 = vadd.s32 %v510, %v512
    %vm516 = vc.u32 %v510, %v512
    %v517 = vadd.s32 %v513, 1
    %v518 = vsel %vm516, %v517, %v513
    %v519 = vadd.s32 %v514, %v518
    %v520 = vadd.s32 %v519, 536870912
    %v521 = vshrl.u32 %v520, 30
    %v522 = vshll.u32 %v521, 30
    %v523 = vsub.s32 %v519, %v522
    %vm524 = vcmp.lt.s32.totalorder %v523, 0
    %v525 = vsub.s32 0, %v523
    %v526 = vsel %vm524, %v525, %v523
    %v527 = vclz %v526
    %v528 = vsub.s32 %v527, 2
    %vm529 = vcmp.gt.s32.totalorder 0, %v528
    %v530 = vsel %vm529, 0, %v528
    %v531 = vsub.s32 32, %v530
    %v532 = vshll.u32 %v523, %v530
    %v533 = vshrl.u32 %v515, %v531
    %v534 = vor.u32 %v532, %v533
    %v535 = vsub.s32 4294967266, %v530
    %v536 = vadd.s32 %v535, 127
    %v537 = vshll.u32 %v536, 23
    %v538 = vor.u32 4788187, %v537
    %v539 = vand.u32 2147483647, %v538
    %v541 = vcvt.s32.f32 %v534
    %v542 = vmul.f32 %v541, %v539
    %v543 = vxor.u32 %v542, 2147483648
    %v544 = vsel %vm461, %v543, %v542
    %v545 = vsub.s32 4, %v521
    %v546 = vsel %vm461, %v545, %v521
    %v547 = vsel %vm460, %v458, %v544
    %v548 = vsel %vm460, 0, %v546
    %v549 = vcosq.f32.pop %v547
    %v550 = vsinq.f32.pop %v547
    %vm551 = vweird.f32 %v458
    %v552 = vadd.s32 %v548, 3
    %v553 = vand.u32 %v552, 3
    %vm554 = vcmp.lt.s32.totalorder %v553, 2
    %vm555 = vcmp.eq.s32.totalorder %v553, 0
    %v556 = vxor.u32 %v550, 2147483648
    %v557 = vsel %vm555, %v549, %v556
    %vm558 = vcmp.eq.s32.totalorder %v553, 2
    %v559 = vxor.u32 %v549, 2147483648
    %v560 = vsel %vm558, %v559, %v550
    %v561 = vsel %vm554, %v557, %v560
    %v562 = vsel %vm551, nan, %v561
    %v563 = vmul.f32 %v562, %v562
    %564 = vset.pattern.permute.xlu0 4
    %565 = vperm.xlu0 %564, %v249
    %v566 = vpop.permute.xlu0 %565
    %v568 = vmul.f32 %v566, %v563
    %v569 = vadd.f32 %v433, %v568
    %v570 = vlaneseq
    %v571 = vshrl.u32 %v570, 7
    %v572 = vsub.s32 0, %v571
    %v573 = vrot.slane %v453, %v572
    %v574 = vmul.f32 %v569, %v573
    %v575 = vld [vmem:[%s3] sm:$0xff]
    %577 = vrot.lane.b32.xlu0 %v574, 97
    %v578 = vpop.permute.xlu0 %577
    %v580 = vsel %vm73, 0.0, %v578
    %581 = vrot.lane.b32.xlu0 %v574, 32
    %v582 = vpop.permute.xlu0 %581
    %v584 = vsel %vm52, %v580, %v582
    %585 = vrot.lane.b32.xlu0 %v574, 127
    %v586 = vpop.permute.xlu0 %585
    %v588 = vsel %vm78, %v586, 0.0
    %589 = vrot.lane.b32.xlu0 %v574, 96
    %v590 = vpop.permute.xlu0 %589
    %593 = vrot.lane.b32.xlu0 %v588, 32
    %v594 = vpop.permute.xlu0 %593
    %v596 = vsel %vm52, %v590, %v594
    %597 = vrot.lane.b32.xlu0 %v574, 33
    %v598 = vpop.permute.xlu0 %597
    %v600 = vsel %vm73, 0.0, %v598
    %v601 = vsel %vm52, %v600, %v590
    %602 = vrot.lane.b32.xlu0 %v574, 63
    %v603 = vpop.permute.xlu0 %602
    %v605 = vsel %vm78, %v603, 0.0
    %607 = vrot.lane.b32.xlu0 %v605, 32
    %v608 = vpop.permute.xlu0 %607
    %v610 = vsel %vm52, %v582, %v608
    %611 = vrot.lane.b32.xlu0 %v574, 64
    %v612 = vpop.permute.xlu0 %611
    %615 = vrot.lane.b32.xlu0 %v601, 64
    %v616 = vpop.permute.xlu0 %615
    %617 = vrot.lane.b32.xlu0 %v612, 64
    %v618 = vpop.permute.xlu0 %617
    %619 = vrot.lane.b32.xlu0 %v610, 64
    %v620 = vpop.permute.xlu0 %619
    %v624 = vsel %vm430, %v584, %v616
    %v625 = vsel %vm430, %v574, %v618
    %v626 = vsel %vm430, %v596, %v620
    %v627 = vpack.c.bf16 %v625, %v624
    %v628 = vpack.c.bf16 %v626, %v626
    %629 = vset.pattern.permute.xlu0 2
    %630 = vperm.xlu0 %629, %v249
    %v631 = vpop.permute.xlu0 %630
    %v634 = vunpack.c.l.b16 %v575
    %v635 = vunpack.c.h.b16 %v575
    %v636 = vpack.c.b16 %v634, %v634
    %v637 = vpack.c.b16 %v635, %v635
    %638 = vrot.lane.b32.xlu0 %v636, 8
    %v639 = vpop.permute.xlu0 %638
    %640 = vrot.lane.b32.xlu0 %v637, 8
    %v641 = vpop.permute.xlu0 %640
    %vm642 = vcmask 64512
    %v643 = vsel %vm642, %v639, %v641
    %vm644 = vcmask 195584
    %v646 = vsel %vm644, %v643, 0
    %v649 = vsel %vm173, %v628, 0
    %651 = vmatprep.subr.bf16.mxu0 0
    %652 = vmatpush1.bf16.msra.mxu0 0
    %653 = vmatprep.subr.bf16.mxu0 0
    %654 = vmatpush1.bf16.msra.mxu0 0
    %655 = vmatprep.subr.bf16.mxu0 0
    %656 = vmatpush1.bf16.msra.mxu0 0
    %657 = vmatprep.subr.bf16.mxu0 0
    %658 = vmatpush1.bf16.msra.mxu0 0
    %659 = vmatprep.subr.bf16.mxu0 0
    %660 = vmatpush1.bf16.msra.mxu0 0
    %661 = vmatprep.subr.bf16.mxu0 0
    %662 = vmatpush1.bf16.msra.mxu0 0
    %663 = vmatprep.subr.bf16.mxu0 0
    %664 = vmatpush1.bf16.msra.mxu0 %v649
    %665 = vmatprep.subr.bf16.mxu0 0
    %666 = vmatpush1.bf16.msra.mxu0 %v627
    %667 = vmatprep.subr.bf16.mxu0 0
    %668 = vmatpush2.bf16.msra.mxu0 0
    %669 = vmatprep.subr.bf16.mxu0 0
    %670 = vmatpush2.bf16.msra.mxu0 0
    %671 = vmatprep.subr.bf16.mxu0 0
    %672 = vmatpush2.bf16.msra.mxu0 0
    %673 = vmatprep.subr.bf16.mxu0 0
    %674 = vmatpush2.bf16.msra.mxu0 0
    %675 = vmatprep.subr.bf16.mxu0 0
    %676 = vmatpush2.bf16.msra.mxu0 0
    %677 = vmatprep.subr.bf16.mxu0 0
    %678 = vmatpush2.bf16.msra.mxu0 0
    %679 = vmatprep.subr.bf16.mxu0 0
    %680 = vmatpush2.bf16.msra.mxu0 0
    %681 = vmatprep.subr.bf16.mxu0 0
    %682 = vmatpush2.bf16.msra.mxu0 0
    %683 = vmatprep.mubr.bf16.mxu0 0
    %684 = vmatmul.mubr.bf16.gmra.mxu0 %v646
    %v685 = vpop.f32.mrf.mxu0
    %v686 = vadd.f32 %v631, %v685
    %v687 = vpop.f32.mrf.mxu0
    %v688 = vpop.f32.mrf.mxu0
    %v689 = vpop.f32.mrf.mxu0
    %690 = vdwg.mxu0
    %v691 = vmul.f32 %v686, %v573
    %692 = vset.pattern.permute.xlu0 6
    %693 = vperm.xlu0 %692, %v249
    %v694 = vpop.permute.xlu0 %693
    %v696 = vmul.f32 %v694, %v691
    %v697 = vand.u32 2147483647, %v696
    %vm698 = vcmp.le.f32.partialorder %v697, 0.7853982
    %vm699 = vcmp.lt.s32.totalorder %v696, 0
    %v700 = vand.u32 %v696, 2139095040
    %v701 = vshrl.u32 %v700, 23
    %v702 = vsub.s32 %v701, 127
    %v703 = vand.u32 2147483647, %v696
    %v704 = vand.u32 %v703, 8388607
    %v705 = vor.u32 %v704, 8388608
    %v706 = vsub.s32 0, %v705
    %v707 = vadd.s32 %v702, 1
    %vm708 = vcmp.gt.s32.totalorder %v707, 0
    %v709 = vsel %vm708, %v707, 0
    %v710 = vshrl.u32 %v709, 5
    %v711 = vand.u32 %v709, 31
    %v712 = vsub.s32 32, %v711
    %v713 = vshrl.u32 683565275, %v712
    %v714 = vshll.u32 683565275, %v711
    %v715 = vshrl.u32 2475754826, %v712
    %v716 = vor.u32 %v714, %v715
    %v717 = vshll.u32 2475754826, %v711
    %v718 = vshrl.u32 2131351028, %v712
    %v719 = vor.u32 %v717, %v718
    %v720 = vshll.u32 2131351028, %v711
    %v721 = vshrl.u32 2102212464, %v712
    %v722 = vor.u32 %v720, %v721
    %v723 = vshll.u32 2102212464, %v711
    %v724 = vshrl.u32 920167782, %v712
    %v725 = vor.u32 %v723, %v724
    %v726 = vshll.u32 920167782, %v711
    %v727 = vshrl.u32 1326507024, %v712
    %v728 = vor.u32 %v726, %v727
    %vm729 = vcmp.lt.s32.totalorder %v710, 1
    %vm730 = vcmp.lt.s32.totalorder %v710, 2
    %vm731 = vcmp.lt.s32.totalorder %v710, 3
    %vm732 = vcmp.lt.s32.totalorder %v710, 4
    %v733 = vsel %vm729, %v713, %v716
    %v734 = vsel %vm732, %v722, 2102212464
    %v735 = vsel %vm731, %v719, %v734
    %v736 = vsel %vm730, %v733, %v735
    %v737 = vsel %vm729, %v716, %v719
    %v738 = vsel %vm732, %v725, 920167782
    %v739 = vsel %vm731, %v722, %v738
    %v740 = vsel %vm730, %v737, %v739
    %v741 = vsel %vm729, %v719, %v722
    %v742 = vsel %vm732, %v728, 1326507024
    %v743 = vsel %vm731, %v725, %v742
    %v744 = vsel %vm730, %v741, %v743
    %v745 = vshll.u32 %v705, 8
    %v746 = vmul.u32.u64.compose %v745, %v744
    %v747 = vextract.low.u32 %v746
    %v748 = vextract.high.u32 %v746
    %v749 = vmul.u32.u64.compose %v745, %v740
    %v750 = vextract.low.u32 %v749
    %v751 = vextract.high.u32 %v749
    %v752 = vmul.u32 %v745, %v736
    %v753 = vadd.s32 %v748, %v750
    %vm754 = vc.u32 %v748, %v750
    %v755 = vadd.s32 %v751, 1
    %v756 = vsel %vm754, %v755, %v751
    %v757 = vadd.s32 %v752, %v756
    %v758 = vadd.s32 %v757, 536870912
    %v759 = vshrl.u32 %v758, 30
    %v760 = vshll.u32 %v759, 30
    %v761 = vsub.s32 %v757, %v760
    %vm762 = vcmp.lt.s32.totalorder %v761, 0
    %v763 = vsub.s32 0, %v761
    %v764 = vsel %vm762, %v763, %v761
    %v765 = vclz %v764
    %v766 = vsub.s32 %v765, 2
    %vm767 = vcmp.gt.s32.totalorder 0, %v766
    %v768 = vsel %vm767, 0, %v766
    %v769 = vsub.s32 32, %v768
    %v770 = vshll.u32 %v761, %v768
    %v771 = vshrl.u32 %v753, %v769
    %v772 = vor.u32 %v770, %v771
    %v773 = vsub.s32 4294967266, %v768
    %v774 = vadd.s32 %v773, 127
    %v775 = vshll.u32 %v774, 23
    %v776 = vor.u32 4788187, %v775
    %v777 = vand.u32 2147483647, %v776
    %v779 = vcvt.s32.f32 %v772
    %v780 = vmul.f32 %v779, %v777
    %v781 = vxor.u32 %v780, 2147483648
    %v782 = vsel %vm699, %v781, %v780
    %v783 = vsub.s32 4, %v759
    %v784 = vsel %vm699, %v783, %v759
    %v785 = vsel %vm698, %v696, %v782
    %v786 = vsel %vm698, 0, %v784
    %v787 = vcosq.f32.pop %v785
    %v788 = vsinq.f32.pop %v785
    %vm789 = vweird.f32 %v696
    %v790 = vadd.s32 %v786, 3
    %v791 = vand.u32 %v790, 3
    %vm792 = vcmp.lt.s32.totalorder %v791, 2
    %vm793 = vcmp.eq.s32.totalorder %v791, 0
    %v794 = vxor.u32 %v788, 2147483648
    %v795 = vsel %vm793, %v787, %v794
    %vm796 = vcmp.eq.s32.totalorder %v791, 2
    %v797 = vxor.u32 %v787, 2147483648
    %v798 = vsel %vm796, %v797, %v788
    %v799 = vsel %vm792, %v795, %v798
    %v800 = vsel %vm789, nan, %v799
    %v801 = vmul.f32 %v800, %v800
    %802 = vset.pattern.permute.xlu0 7
    %803 = vperm.xlu0 %802, %v249
    %v804 = vpop.permute.xlu0 %803
    %v806 = vmul.f32 %v804, %v801
    %v807 = vadd.f32 %v691, %v806
    %v808 = vmul.f32 %v807, %v573
    %v809 = vld [vmem:[%s3 + $0x4] sm:$0xf]
    %811 = vrot.lane.b32.xlu0 %v808, 97
    %v812 = vpop.permute.xlu0 %811
    %v814 = vsel %vm73, 0.0, %v812
    %815 = vrot.lane.b32.xlu0 %v808, 32
    %v816 = vpop.permute.xlu0 %815
    %v818 = vsel %vm52, %v814, %v816
    %819 = vrot.lane.b32.xlu0 %v808, 127
    %v820 = vpop.permute.xlu0 %819
    %v822 = vsel %vm78, %v820, 0.0
    %823 = vrot.lane.b32.xlu0 %v808, 96
    %v824 = vpop.permute.xlu0 %823
    %827 = vrot.lane.b32.xlu0 %v822, 32
    %v828 = vpop.permute.xlu0 %827
    %v830 = vsel %vm52, %v824, %v828
    %831 = vrot.lane.b32.xlu0 %v808, 33
    %v832 = vpop.permute.xlu0 %831
    %v834 = vsel %vm73, 0.0, %v832
    %v835 = vsel %vm52, %v834, %v824
    %836 = vrot.lane.b32.xlu0 %v808, 63
    %v837 = vpop.permute.xlu0 %836
    %v839 = vsel %vm78, %v837, 0.0
    %841 = vrot.lane.b32.xlu0 %v839, 32
    %v842 = vpop.permute.xlu0 %841
    %v844 = vsel %vm52, %v816, %v842
    %845 = vrot.lane.b32.xlu0 %v808, 64
    %v846 = vpop.permute.xlu0 %845
    %849 = vrot.lane.b32.xlu0 %v835, 64
    %v850 = vpop.permute.xlu0 %849
    %851 = vrot.lane.b32.xlu0 %v846, 64
    %v852 = vpop.permute.xlu0 %851
    %853 = vrot.lane.b32.xlu0 %v844, 64
    %v854 = vpop.permute.xlu0 %853
    %v858 = vsel %vm430, %v818, %v850
    %v859 = vsel %vm430, %v808, %v852
    %v860 = vsel %vm430, %v830, %v854
    %v861 = vpack.c.bf16 %v859, %v858
    %v862 = vpack.c.bf16 %v860, %v860
    %863 = vset.pattern.permute.xlu0 5
    %864 = vperm.xlu0 %863, %v249
    %v865 = vpop.permute.xlu0 %864
    %v868 = vunpack.c.l.b16 %v809
    %v869 = vpack.c.b16 %v868, %v868
    %870 = vrot.lane.b32.xlu0 %v869, 112
    %v871 = vpop.permute.xlu0 %870
    %v873 = vsel %vm644, %v871, 0
    %v876 = vsel %vm173, %v862, 0
    %878 = vmatprep.subr.bf16.mxu0 0
    %879 = vmatpush1.bf16.msra.mxu0 0
    %880 = vmatprep.subr.bf16.mxu0 0
    %881 = vmatpush1.bf16.msra.mxu0 0
    %882 = vmatprep.subr.bf16.mxu0 0
    %883 = vmatpush1.bf16.msra.mxu0 0
    %884 = vmatprep.subr.bf16.mxu0 0
    %885 = vmatpush1.bf16.msra.mxu0 0
    %886 = vmatprep.subr.bf16.mxu0 0
    %887 = vmatpush1.bf16.msra.mxu0 0
    %888 = vmatprep.subr.bf16.mxu0 0
    %889 = vmatpush1.bf16.msra.mxu0 0
    %890 = vmatprep.subr.bf16.mxu0 0
    %891 = vmatpush1.bf16.msra.mxu0 %v876
    %892 = vmatprep.subr.bf16.mxu0 0
    %893 = vmatpush1.bf16.msra.mxu0 %v861
    %894 = vmatprep.subr.bf16.mxu0 0
    %895 = vmatpush2.bf16.msra.mxu0 0
    %896 = vmatprep.subr.bf16.mxu0 0
    %897 = vmatpush2.bf16.msra.mxu0 0
    %898 = vmatprep.subr.bf16.mxu0 0
    %899 = vmatpush2.bf16.msra.mxu0 0
    %900 = vmatprep.subr.bf16.mxu0 0
    %901 = vmatpush2.bf16.msra.mxu0 0
    %902 = vmatprep.subr.bf16.mxu0 0
    %903 = vmatpush2.bf16.msra.mxu0 0
    %904 = vmatprep.subr.bf16.mxu0 0
    %905 = vmatpush2.bf16.msra.mxu0 0
    %906 = vmatprep.subr.bf16.mxu0 0
    %907 = vmatpush2.bf16.msra.mxu0 0
    %908 = vmatprep.subr.bf16.mxu0 0
    %909 = vmatpush2.bf16.msra.mxu0 0
    %910 = vmatprep.mubr.bf16.mxu0 0
    %911 = vmatmul.mubr.bf16.gmra.mxu0 %v873
    %v912 = vpop.f32.mrf.mxu0
    %v913 = vadd.f32 %v865, %v912
    %v914 = vpop.f32.mrf.mxu0
    %v915 = vpop.f32.mrf.mxu0
    %v916 = vpop.f32.mrf.mxu0
    %917 = vdwg.mxu0
    %v918 = vmul.f32 %v913, %v573
    %v919 = vadd.f32 %v918, %v433
    %920 = vset.pattern.permute.xlu0 9
    %921 = vperm.xlu0 %920, %v249
    %v922 = vpop.permute.xlu0 %921
    %v924 = vmul.f32 %v922, %v919
    %v925 = vand.u32 2147483647, %v924
    %vm926 = vcmp.le.f32.partialorder %v925, 0.7853982
    %vm927 = vcmp.lt.s32.totalorder %v924, 0
    %v928 = vand.u32 %v924, 2139095040
    %v929 = vshrl.u32 %v928, 23
    %v930 = vsub.s32 %v929, 127
    %v931 = vand.u32 2147483647, %v924
    %v932 = vand.u32 %v931, 8388607
    %v933 = vor.u32 %v932, 8388608
    %v934 = vsub.s32 0, %v933
    %v935 = vadd.s32 %v930, 1
    %vm936 = vcmp.gt.s32.totalorder %v935, 0
    %v937 = vsel %vm936, %v935, 0
    %v938 = vshrl.u32 %v937, 5
    %v939 = vand.u32 %v937, 31
    %v940 = vsub.s32 32, %v939
    %v941 = vshrl.u32 683565275, %v940
    %v942 = vshll.u32 683565275, %v939
    %v943 = vshrl.u32 2475754826, %v940
    %v944 = vor.u32 %v942, %v943
    %v945 = vshll.u32 2475754826, %v939
    %v946 = vshrl.u32 2131351028, %v940
    %v947 = vor.u32 %v945, %v946
    %v948 = vshll.u32 2131351028, %v939
    %v949 = vshrl.u32 2102212464, %v940
    %v950 = vor.u32 %v948, %v949
    %v951 = vshll.u32 2102212464, %v939
    %v952 = vshrl.u32 920167782, %v940
    %v953 = vor.u32 %v951, %v952
    %v954 = vshll.u32 920167782, %v939
    %v955 = vshrl.u32 1326507024, %v940
    %v956 = vor.u32 %v954, %v955
    %vm957 = vcmp.lt.s32.totalorder %v938, 1
    %vm958 = vcmp.lt.s32.totalorder %v938, 2
    %vm959 = vcmp.lt.s32.totalorder %v938, 3
    %vm960 = vcmp.lt.s32.totalorder %v938, 4
    %v961 = vsel %vm957, %v941, %v944
    %v962 = vsel %vm960, %v950, 2102212464
    %v963 = vsel %vm959, %v947, %v962
    %v964 = vsel %vm958, %v961, %v963
    %v965 = vsel %vm957, %v944, %v947
    %v966 = vsel %vm960, %v953, 920167782
    %v967 = vsel %vm959, %v950, %v966
    %v968 = vsel %vm958, %v965, %v967
    %v969 = vsel %vm957, %v947, %v950
    %v970 = vsel %vm960, %v956, 1326507024
    %v971 = vsel %vm959, %v953, %v970
    %v972 = vsel %vm958, %v969, %v971
    %v973 = vshll.u32 %v933, 8
    %v974 = vmul.u32.u64.compose %v973, %v972
    %v975 = vextract.low.u32 %v974
    %v976 = vextract.high.u32 %v974
    %v977 = vmul.u32.u64.compose %v973, %v968
    %v978 = vextract.low.u32 %v977
    %v979 = vextract.high.u32 %v977
    %v980 = vmul.u32 %v973, %v964
    %v981 = vadd.s32 %v976, %v978
    %vm982 = vc.u32 %v976, %v978
    %v983 = vadd.s32 %v979, 1
    %v984 = vsel %vm982, %v983, %v979
    %v985 = vadd.s32 %v980, %v984
    %v986 = vadd.s32 %v985, 536870912
    %v987 = vshrl.u32 %v986, 30
    %v988 = vshll.u32 %v987, 30
    %v989 = vsub.s32 %v985, %v988
    %vm990 = vcmp.lt.s32.totalorder %v989, 0
    %v991 = vsub.s32 0, %v989
    %v992 = vsel %vm990, %v991, %v989
    %v993 = vclz %v992
    %v994 = vsub.s32 %v993, 2
    %vm995 = vcmp.gt.s32.totalorder 0, %v994
    %v996 = vsel %vm995, 0, %v994
    %v997 = vsub.s32 32, %v996
    %v998 = vshll.u32 %v989, %v996
    %v999 = vshrl.u32 %v981, %v997
    %v1000 = vor.u32 %v998, %v999
    %v1001 = vsub.s32 4294967266, %v996
    %v1002 = vadd.s32 %v1001, 127
    %v1003 = vshll.u32 %v1002, 23
    %v1004 = vor.u32 4788187, %v1003
    %v1005 = vand.u32 2147483647, %v1004
    %v1007 = vcvt.s32.f32 %v1000
    %v1008 = vmul.f32 %v1007, %v1005
    %v1009 = vxor.u32 %v1008, 2147483648
    %v1010 = vsel %vm927, %v1009, %v1008
    %v1011 = vsub.s32 4, %v987
    %v1012 = vsel %vm927, %v1011, %v987
    %v1013 = vsel %vm926, %v924, %v1010
    %v1014 = vsel %vm926, 0, %v1012
    %v1015 = vcosq.f32.pop %v1013
    %v1016 = vsinq.f32.pop %v1013
    %vm1017 = vweird.f32 %v924
    %v1018 = vadd.s32 %v1014, 3
    %v1019 = vand.u32 %v1018, 3
    %vm1020 = vcmp.lt.s32.totalorder %v1019, 2
    %vm1021 = vcmp.eq.s32.totalorder %v1019, 0
    %v1022 = vxor.u32 %v1016, 2147483648
    %v1023 = vsel %vm1021, %v1015, %v1022
    %vm1024 = vcmp.eq.s32.totalorder %v1019, 2
    %v1025 = vxor.u32 %v1015, 2147483648
    %v1026 = vsel %vm1024, %v1025, %v1016
    %v1027 = vsel %vm1020, %v1023, %v1026
    %v1028 = vsel %vm1017, nan, %v1027
    %v1029 = vmul.f32 %v1028, %v1028
    %1030 = vset.pattern.permute.xlu0 10
    %1031 = vperm.xlu0 %1030, %v249
    %v1032 = vpop.permute.xlu0 %1031
    %v1034 = vmul.f32 %v1032, %v1029
    %v1035 = vadd.f32 %v919, %v1034
    %v1036 = vmul.f32 %v1035, %v573
    %1038 = vrot.lane.b32.xlu0 %v1036, 98
    %v1039 = vpop.permute.xlu0 %1038
    %v1041 = vsel %vm68, 0.0, %v1039
    %1042 = vrot.lane.b32.xlu0 %v1036, 1
    %v1043 = vpop.permute.xlu0 %1042
    %v1045 = vsel %vm73, 0.0, %v1043
    %1047 = vrot.lane.b32.xlu0 %v1045, 32
    %v1048 = vpop.permute.xlu0 %1047
    %v1050 = vsel %vm52, %v1041, %v1048
    %1051 = vrot.lane.b32.xlu0 %v1036, 95
    %v1052 = vpop.permute.xlu0 %1051
    %v1054 = vsel %vm78, %v1052, 0.0
    %1055 = vrot.lane.b32.xlu0 %v1036, 126
    %v1056 = vpop.permute.xlu0 %1055
    %v1058 = vsel %vm83, %v1056, 0.0
    %1060 = vrot.lane.b32.xlu0 %v1058, 32
    %v1061 = vpop.permute.xlu0 %1060
    %v1063 = vsel %vm52, %v1054, %v1061
    %1064 = vrot.lane.b32.xlu0 %v1036, 34
    %v1065 = vpop.permute.xlu0 %1064
    %v1067 = vsel %vm68, 0.0, %v1065
    %1068 = vrot.lane.b32.xlu0 %v1036, 65
    %v1069 = vpop.permute.xlu0 %1068
    %v1071 = vsel %vm73, 0.0, %v1069
    %1073 = vrot.lane.b32.xlu0 %v1071, 32
    %v1074 = vpop.permute.xlu0 %1073
    %v1076 = vsel %vm52, %v1067, %v1074
    %1077 = vrot.lane.b32.xlu0 %v1036, 31
    %v1078 = vpop.permute.xlu0 %1077
    %v1080 = vsel %vm78, %v1078, 0.0
    %1081 = vrot.lane.b32.xlu0 %v1036, 62
    %v1082 = vpop.permute.xlu0 %1081
    %v1084 = vsel %vm83, %v1082, 0.0
    %1086 = vrot.lane.b32.xlu0 %v1084, 32
    %v1087 = vpop.permute.xlu0 %1086
    %v1089 = vsel %vm52, %v1080, %v1087
    %1090 = vrot.lane.b32.xlu0 %v1036, 64
    %v1091 = vpop.permute.xlu0 %1090
    %1094 = vrot.lane.b32.xlu0 %v1076, 64
    %v1095 = vpop.permute.xlu0 %1094
    %1096 = vrot.lane.b32.xlu0 %v1091, 64
    %v1097 = vpop.permute.xlu0 %1096
    %1098 = vrot.lane.b32.xlu0 %v1089, 64
    %v1099 = vpop.permute.xlu0 %1098
    %v1103 = vsel %vm430, %v1050, %v1095
    %v1104 = vsel %vm430, %v1036, %v1097
    %v1105 = vsel %vm430, %v1063, %v1099
    %v1106 = vpack.c.bf16 %v1104, %v1103
    %v1107 = vpack.c.bf16 %v1105, %v1105
    %1108 = vset.pattern.permute.xlu0 8
    %1109 = vperm.xlu0 %1108, %v249
    %v1110 = vpop.permute.xlu0 %1109
    %1112 = vrot.lane.b32.xlu0 %v869, 88
    %v1113 = vpop.permute.xlu0 %1112
    %v1115 = vsel %vm644, %v1113, 0
    %v1118 = vsel %vm173, %v1107, 0
    %1120 = vmatprep.subr.bf16.mxu0 0
    %1121 = vmatpush1.bf16.msra.mxu0 0
    %1122 = vmatprep.subr.bf16.mxu0 0
    %1123 = vmatpush1.bf16.msra.mxu0 0
    %1124 = vmatprep.subr.bf16.mxu0 0
    %1125 = vmatpush1.bf16.msra.mxu0 0
    %1126 = vmatprep.subr.bf16.mxu0 0
    %1127 = vmatpush1.bf16.msra.mxu0 0
    %1128 = vmatprep.subr.bf16.mxu0 0
    %1129 = vmatpush1.bf16.msra.mxu0 0
    %1130 = vmatprep.subr.bf16.mxu0 0
    %1131 = vmatpush1.bf16.msra.mxu0 0
    %1132 = vmatprep.subr.bf16.mxu0 0
    %1133 = vmatpush1.bf16.msra.mxu0 %v1118
    %1134 = vmatprep.subr.bf16.mxu0 0
    %1135 = vmatpush1.bf16.msra.mxu0 %v1106
    %1136 = vmatprep.subr.bf16.mxu0 0
    %1137 = vmatpush2.bf16.msra.mxu0 0
    %1138 = vmatprep.subr.bf16.mxu0 0
    %1139 = vmatpush2.bf16.msra.mxu0 0
    %1140 = vmatprep.subr.bf16.mxu0 0
    %1141 = vmatpush2.bf16.msra.mxu0 0
    %1142 = vmatprep.subr.bf16.mxu0 0
    %1143 = vmatpush2.bf16.msra.mxu0 0
    %1144 = vmatprep.subr.bf16.mxu0 0
    %1145 = vmatpush2.bf16.msra.mxu0 0
    %1146 = vmatprep.subr.bf16.mxu0 0
    %1147 = vmatpush2.bf16.msra.mxu0 0
    %1148 = vmatprep.subr.bf16.mxu0 0
    %1149 = vmatpush2.bf16.msra.mxu0 0
    %1150 = vmatprep.subr.bf16.mxu0 0
    %1151 = vmatpush2.bf16.msra.mxu0 0
    %1152 = vmatprep.mubr.bf16.mxu0 0
    %1153 = vmatmul.mubr.bf16.gmra.mxu0 %v1115
    %v1154 = vpop.f32.mrf.mxu0
    %v1155 = vadd.f32 %v1110, %v1154
    %v1156 = vpop.f32.mrf.mxu0
    %v1157 = vpop.f32.mrf.mxu0
    %v1158 = vpop.f32.mrf.mxu0
    %1159 = vdwg.mxu0
    %v1160 = vmul.f32 %v1155, %v573
    %1161 = vset.pattern.permute.xlu0 12
    %1162 = vperm.xlu0 %1161, %v249
    %v1163 = vpop.permute.xlu0 %1162
    %v1165 = vmul.f32 %v1163, %v1160
    %v1166 = vand.u32 2147483647, %v1165
    %vm1167 = vcmp.le.f32.partialorder %v1166, 0.7853982
    %vm1168 = vcmp.lt.s32.totalorder %v1165, 0
    %v1169 = vand.u32 %v1165, 2139095040
    %v1170 = vshrl.u32 %v1169, 23
    %v1171 = vsub.s32 %v1170, 127
    %v1172 = vand.u32 2147483647, %v1165
    %v1173 = vand.u32 %v1172, 8388607
    %v1174 = vor.u32 %v1173, 8388608
    %v1175 = vsub.s32 0, %v1174
    %v1176 = vadd.s32 %v1171, 1
    %vm1177 = vcmp.gt.s32.totalorder %v1176, 0
    %v1178 = vsel %vm1177, %v1176, 0
    %v1179 = vshrl.u32 %v1178, 5
    %v1180 = vand.u32 %v1178, 31
    %v1181 = vsub.s32 32, %v1180
    %v1182 = vshrl.u32 683565275, %v1181
    %v1183 = vshll.u32 683565275, %v1180
    %v1184 = vshrl.u32 2475754826, %v1181
    %v1185 = vor.u32 %v1183, %v1184
    %v1186 = vshll.u32 2475754826, %v1180
    %v1187 = vshrl.u32 2131351028, %v1181
    %v1188 = vor.u32 %v1186, %v1187
    %v1189 = vshll.u32 2131351028, %v1180
    %v1190 = vshrl.u32 2102212464, %v1181
    %v1191 = vor.u32 %v1189, %v1190
    %v1192 = vshll.u32 2102212464, %v1180
    %v1193 = vshrl.u32 920167782, %v1181
    %v1194 = vor.u32 %v1192, %v1193
    %v1195 = vshll.u32 920167782, %v1180
    %v1196 = vshrl.u32 1326507024, %v1181
    %v1197 = vor.u32 %v1195, %v1196
    %vm1198 = vcmp.lt.s32.totalorder %v1179, 1
    %vm1199 = vcmp.lt.s32.totalorder %v1179, 2
    %vm1200 = vcmp.lt.s32.totalorder %v1179, 3
    %vm1201 = vcmp.lt.s32.totalorder %v1179, 4
    %v1202 = vsel %vm1198, %v1182, %v1185
    %v1203 = vsel %vm1201, %v1191, 2102212464
    %v1204 = vsel %vm1200, %v1188, %v1203
    %v1205 = vsel %vm1199, %v1202, %v1204
    %v1206 = vsel %vm1198, %v1185, %v1188
    %v1207 = vsel %vm1201, %v1194, 920167782
    %v1208 = vsel %vm1200, %v1191, %v1207
    %v1209 = vsel %vm1199, %v1206, %v1208
    %v1210 = vsel %vm1198, %v1188, %v1191
    %v1211 = vsel %vm1201, %v1197, 1326507024
    %v1212 = vsel %vm1200, %v1194, %v1211
    %v1213 = vsel %vm1199, %v1210, %v1212
    %v1214 = vshll.u32 %v1174, 8
    %v1215 = vmul.u32.u64.compose %v1214, %v1213
    %v1216 = vextract.low.u32 %v1215
    %v1217 = vextract.high.u32 %v1215
    %v1218 = vmul.u32.u64.compose %v1214, %v1209
    %v1219 = vextract.low.u32 %v1218
    %v1220 = vextract.high.u32 %v1218
    %v1221 = vmul.u32 %v1214, %v1205
    %v1222 = vadd.s32 %v1217, %v1219
    %vm1223 = vc.u32 %v1217, %v1219
    %v1224 = vadd.s32 %v1220, 1
    %v1225 = vsel %vm1223, %v1224, %v1220
    %v1226 = vadd.s32 %v1221, %v1225
    %v1227 = vadd.s32 %v1226, 536870912
    %v1228 = vshrl.u32 %v1227, 30
    %v1229 = vshll.u32 %v1228, 30
    %v1230 = vsub.s32 %v1226, %v1229
    %vm1231 = vcmp.lt.s32.totalorder %v1230, 0
    %v1232 = vsub.s32 0, %v1230
    %v1233 = vsel %vm1231, %v1232, %v1230
    %v1234 = vclz %v1233
    %v1235 = vsub.s32 %v1234, 2
    %vm1236 = vcmp.gt.s32.totalorder 0, %v1235
    %v1237 = vsel %vm1236, 0, %v1235
    %v1238 = vsub.s32 32, %v1237
    %v1239 = vshll.u32 %v1230, %v1237
    %v1240 = vshrl.u32 %v1222, %v1238
    %v1241 = vor.u32 %v1239, %v1240
    %v1242 = vsub.s32 4294967266, %v1237
    %v1243 = vadd.s32 %v1242, 127
    %v1244 = vshll.u32 %v1243, 23
    %v1245 = vor.u32 4788187, %v1244
    %v1246 = vand.u32 2147483647, %v1245
    %v1248 = vcvt.s32.f32 %v1241
    %v1249 = vmul.f32 %v1248, %v1246
    %v1250 = vxor.u32 %v1249, 2147483648
    %v1251 = vsel %vm1168, %v1250, %v1249
    %v1252 = vsub.s32 4, %v1228
    %v1253 = vsel %vm1168, %v1252, %v1228
    %v1254 = vsel %vm1167, %v1165, %v1251
    %v1255 = vsel %vm1167, 0, %v1253
    %v1256 = vcosq.f32.pop %v1254
    %v1257 = vsinq.f32.pop %v1254
    %vm1258 = vweird.f32 %v1165
    %v1259 = vadd.s32 %v1255, 3
    %v1260 = vand.u32 %v1259, 3
    %vm1261 = vcmp.lt.s32.totalorder %v1260, 2
    %vm1262 = vcmp.eq.s32.totalorder %v1260, 0
    %v1263 = vxor.u32 %v1257, 2147483648
    %v1264 = vsel %vm1262, %v1256, %v1263
    %vm1265 = vcmp.eq.s32.totalorder %v1260, 2
    %v1266 = vxor.u32 %v1256, 2147483648
    %v1267 = vsel %vm1265, %v1266, %v1257
    %v1268 = vsel %vm1261, %v1264, %v1267
    %v1269 = vsel %vm1258, nan, %v1268
    %v1270 = vmul.f32 %v1269, %v1269
    %1271 = vset.pattern.permute.xlu0 13
    %1272 = vperm.xlu0 %1271, %v249
    %v1273 = vpop.permute.xlu0 %1272
    %v1275 = vmul.f32 %v1273, %v1270
    %v1276 = vadd.f32 %v1160, %v1275
    %v1277 = vmul.f32 %v1276, %v573
    %1279 = vrot.lane.b32.xlu0 %v1277, 97
    %v1280 = vpop.permute.xlu0 %1279
    %v1282 = vsel %vm73, 0.0, %v1280
    %1283 = vrot.lane.b32.xlu0 %v1277, 32
    %v1284 = vpop.permute.xlu0 %1283
    %v1286 = vsel %vm52, %v1282, %v1284
    %1287 = vrot.lane.b32.xlu0 %v1277, 127
    %v1288 = vpop.permute.xlu0 %1287
    %v1290 = vsel %vm78, %v1288, 0.0
    %1291 = vrot.lane.b32.xlu0 %v1277, 96
    %v1292 = vpop.permute.xlu0 %1291
    %1295 = vrot.lane.b32.xlu0 %v1290, 32
    %v1296 = vpop.permute.xlu0 %1295
    %v1298 = vsel %vm52, %v1292, %v1296
    %1299 = vrot.lane.b32.xlu0 %v1277, 33
    %v1300 = vpop.permute.xlu0 %1299
    %v1302 = vsel %vm73, 0.0, %v1300
    %v1303 = vsel %vm52, %v1302, %v1292
    %1304 = vrot.lane.b32.xlu0 %v1277, 63
    %v1305 = vpop.permute.xlu0 %1304
    %v1307 = vsel %vm78, %v1305, 0.0
    %1309 = vrot.lane.b32.xlu0 %v1307, 32
    %v1310 = vpop.permute.xlu0 %1309
    %v1312 = vsel %vm52, %v1284, %v1310
    %1313 = vrot.lane.b32.xlu0 %v1277, 64
    %v1314 = vpop.permute.xlu0 %1313
    %1317 = vrot.lane.b32.xlu0 %v1303, 64
    %v1318 = vpop.permute.xlu0 %1317
    %1319 = vrot.lane.b32.xlu0 %v1314, 64
    %v1320 = vpop.permute.xlu0 %1319
    %1321 = vrot.lane.b32.xlu0 %v1312, 64
    %v1322 = vpop.permute.xlu0 %1321
    %v1326 = vsel %vm430, %v1286, %v1318
    %v1327 = vsel %vm430, %v1277, %v1320
    %v1328 = vsel %vm430, %v1298, %v1322
    %v1329 = vpack.c.bf16 %v1327, %v1326
    %v1330 = vpack.c.bf16 %v1328, %v1328
    %1331 = vset.pattern.permute.xlu0 11
    %1332 = vperm.xlu0 %1331, %v249
    %v1333 = vpop.permute.xlu0 %1332
    %1335 = vrot.lane.b32.xlu0 %v869, 64
    %v1336 = vpop.permute.xlu0 %1335
    %v1338 = vsel %vm644, %v1336, 0
    %v1341 = vsel %vm173, %v1330, 0
    %1343 = vmatprep.subr.bf16.mxu0 0
    %1344 = vmatpush1.bf16.msra.mxu0 0
    %1345 = vmatprep.subr.bf16.mxu0 0
    %1346 = vmatpush1.bf16.msra.mxu0 0
    %1347 = vmatprep.subr.bf16.mxu0 0
    %1348 = vmatpush1.bf16.msra.mxu0 0
    %1349 = vmatprep.subr.bf16.mxu0 0
    %1350 = vmatpush1.bf16.msra.mxu0 0
    %1351 = vmatprep.subr.bf16.mxu0 0
    %1352 = vmatpush1.bf16.msra.mxu0 0
    %1353 = vmatprep.subr.bf16.mxu0 0
    %1354 = vmatpush1.bf16.msra.mxu0 0
    %1355 = vmatprep.subr.bf16.mxu0 0
    %1356 = vmatpush1.bf16.msra.mxu0 %v1341
    %1357 = vmatprep.subr.bf16.mxu0 0
    %1358 = vmatpush1.bf16.msra.mxu0 %v1329
    %1359 = vmatprep.subr.bf16.mxu0 0
    %1360 = vmatpush2.bf16.msra.mxu0 0
    %1361 = vmatprep.subr.bf16.mxu0 0
    %1362 = vmatpush2.bf16.msra.mxu0 0
    %1363 = vmatprep.subr.bf16.mxu0 0
    %1364 = vmatpush2.bf16.msra.mxu0 0
    %1365 = vmatprep.subr.bf16.mxu0 0
    %1366 = vmatpush2.bf16.msra.mxu0 0
    %1367 = vmatprep.subr.bf16.mxu0 0
    %1368 = vmatpush2.bf16.msra.mxu0 0
    %1369 = vmatprep.subr.bf16.mxu0 0
    %1370 = vmatpush2.bf16.msra.mxu0 0
    %1371 = vmatprep.subr.bf16.mxu0 0
    %1372 = vmatpush2.bf16.msra.mxu0 0
    %1373 = vmatprep.subr.bf16.mxu0 0
    %1374 = vmatpush2.bf16.msra.mxu0 0
    %1375 = vmatprep.mubr.bf16.mxu0 0
    %1376 = vmatmul.mubr.bf16.gmra.mxu0 %v1338
    %v1377 = vpop.f32.mrf.mxu0
    %v1378 = vadd.f32 %v1333, %v1377
    %v1379 = vpop.f32.mrf.mxu0
    %v1380 = vpop.f32.mrf.mxu0
    %v1381 = vpop.f32.mrf.mxu0
    %1382 = vdwg.mxu0
    %v1383 = vmul.f32 %v1378, %v573
    %v1384 = vadd.f32 %v1383, %v919
    %v1385 = vmul.f32 %v1384, %v573
    %1386 = vset.pattern.permute.xlu0 15
    %1387 = vperm.xlu0 %1386, %v249
    %v1388 = vpop.permute.xlu0 %1387
    %v1390 = vmul.f32 %v1388, %v433
    %v1391 = vand.u32 2147483647, %v1390
    %vm1392 = vcmp.le.f32.partialorder %v1391, 0.7853982
    %vm1393 = vcmp.lt.s32.totalorder %v1390, 0
    %v1394 = vand.u32 %v1390, 2139095040
    %v1395 = vshrl.u32 %v1394, 23
    %v1396 = vsub.s32 %v1395, 127
    %v1397 = vand.u32 2147483647, %v1390
    %v1398 = vand.u32 %v1397, 8388607
    %v1399 = vor.u32 %v1398, 8388608
    %v1400 = vsub.s32 0, %v1399
    %v1401 = vadd.s32 %v1396, 1
    %vm1402 = vcmp.gt.s32.totalorder %v1401, 0
    %v1403 = vsel %vm1402, %v1401, 0
    %v1404 = vshrl.u32 %v1403, 5
    %v1405 = vand.u32 %v1403, 31
    %v1406 = vsub.s32 32, %v1405
    %v1407 = vshrl.u32 683565275, %v1406
    %v1408 = vshll.u32 683565275, %v1405
    %v1409 = vshrl.u32 2475754826, %v1406
    %v1410 = vor.u32 %v1408, %v1409
    %v1411 = vshll.u32 2475754826, %v1405
    %v1412 = vshrl.u32 2131351028, %v1406
    %v1413 = vor.u32 %v1411, %v1412
    %v1414 = vshll.u32 2131351028, %v1405
    %v1415 = vshrl.u32 2102212464, %v1406
    %v1416 = vor.u32 %v1414, %v1415
    %v1417 = vshll.u32 2102212464, %v1405
    %v1418 = vshrl.u32 920167782, %v1406
    %v1419 = vor.u32 %v1417, %v1418
    %v1420 = vshll.u32 920167782, %v1405
    %v1421 = vshrl.u32 1326507024, %v1406
    %v1422 = vor.u32 %v1420, %v1421
    %vm1423 = vcmp.lt.s32.totalorder %v1404, 1
    %vm1424 = vcmp.lt.s32.totalorder %v1404, 2
    %vm1425 = vcmp.lt.s32.totalorder %v1404, 3
    %vm1426 = vcmp.lt.s32.totalorder %v1404, 4
    %v1427 = vsel %vm1423, %v1407, %v1410
    %v1428 = vsel %vm1426, %v1416, 2102212464
    %v1429 = vsel %vm1425, %v1413, %v1428
    %v1430 = vsel %vm1424, %v1427, %v1429
    %v1431 = vsel %vm1423, %v1410, %v1413
    %v1432 = vsel %vm1426, %v1419, 920167782
    %v1433 = vsel %vm1425, %v1416, %v1432
    %v1434 = vsel %vm1424, %v1431, %v1433
    %v1435 = vsel %vm1423, %v1413, %v1416
    %v1436 = vsel %vm1426, %v1422, 1326507024
    %v1437 = vsel %vm1425, %v1419, %v1436
    %v1438 = vsel %vm1424, %v1435, %v1437
    %v1439 = vshll.u32 %v1399, 8
    %v1440 = vmul.u32.u64.compose %v1439, %v1438
    %v1441 = vextract.low.u32 %v1440
    %v1442 = vextract.high.u32 %v1440
    %v1443 = vmul.u32.u64.compose %v1439, %v1434
    %v1444 = vextract.low.u32 %v1443
    %v1445 = vextract.high.u32 %v1443
    %v1446 = vmul.u32 %v1439, %v1430
    %v1447 = vadd.s32 %v1442, %v1444
    %vm1448 = vc.u32 %v1442, %v1444
    %v1449 = vadd.s32 %v1445, 1
    %v1450 = vsel %vm1448, %v1449, %v1445
    %v1451 = vadd.s32 %v1446, %v1450
    %v1452 = vadd.s32 %v1451, 536870912
    %v1453 = vshrl.u32 %v1452, 30
    %v1454 = vshll.u32 %v1453, 30
    %v1455 = vsub.s32 %v1451, %v1454
    %vm1456 = vcmp.lt.s32.totalorder %v1455, 0
    %v1457 = vsub.s32 0, %v1455
    %v1458 = vsel %vm1456, %v1457, %v1455
    %v1459 = vclz %v1458
    %v1460 = vsub.s32 %v1459, 2
    %vm1461 = vcmp.gt.s32.totalorder 0, %v1460
    %v1462 = vsel %vm1461, 0, %v1460
    %v1463 = vsub.s32 32, %v1462
    %v1464 = vshll.u32 %v1455, %v1462
    %v1465 = vshrl.u32 %v1447, %v1463
    %v1466 = vor.u32 %v1464, %v1465
    %v1467 = vsub.s32 4294967266, %v1462
    %v1468 = vadd.s32 %v1467, 127
    %v1469 = vshll.u32 %v1468, 23
    %v1470 = vor.u32 4788187, %v1469
    %v1471 = vand.u32 2147483647, %v1470
    %v1473 = vcvt.s32.f32 %v1466
    %v1474 = vmul.f32 %v1473, %v1471
    %v1475 = vxor.u32 %v1474, 2147483648
    %v1476 = vsel %vm1393, %v1475, %v1474
    %v1477 = vsub.s32 4, %v1453
    %v1478 = vsel %vm1393, %v1477, %v1453
    %v1479 = vsel %vm1392, %v1390, %v1476
    %v1480 = vsel %vm1392, 0, %v1478
    %v1481 = vcosq.f32.pop %v1479
    %v1482 = vsinq.f32.pop %v1479
    %vm1483 = vweird.f32 %v1390
    %v1484 = vadd.s32 %v1480, 3
    %v1485 = vand.u32 %v1484, 3
    %vm1486 = vcmp.lt.s32.totalorder %v1485, 2
    %vm1487 = vcmp.eq.s32.totalorder %v1485, 0
    %v1488 = vxor.u32 %v1482, 2147483648
    %v1489 = vsel %vm1487, %v1481, %v1488
    %vm1490 = vcmp.eq.s32.totalorder %v1485, 2
    %v1491 = vxor.u32 %v1481, 2147483648
    %v1492 = vsel %vm1490, %v1491, %v1482
    %v1493 = vsel %vm1486, %v1489, %v1492
    %v1494 = vsel %vm1483, nan, %v1493
    %v1495 = vmul.f32 %v1494, %v1494
    %1496 = vset.pattern.permute.xlu0 16
    %1497 = vperm.xlu0 %1496, %v249
    %v1498 = vpop.permute.xlu0 %1497
    %v1500 = vmul.f32 %v1498, %v1495
    %v1501 = vadd.f32 %v433, %v1500
    %v1502 = vmul.f32 %v1501, %v573
    %1504 = vrot.lane.b32.xlu0 %v1502, 1
    %v1505 = vpop.permute.xlu0 %1504
    %v1507 = vsel %vm73, 0.0, %v1505
    %1508 = vrot.lane.b32.xlu0 %v1502, 97
    %v1509 = vpop.permute.xlu0 %1508
    %v1511 = vsel %vm73, 0.0, %v1509
    %1513 = vrot.lane.b32.xlu0 %v1511, 32
    %v1514 = vpop.permute.xlu0 %1513
    %v1516 = vsel %vm52, %v1507, %v1514
    %1517 = vrot.lane.b32.xlu0 %v1502, 32
    %v1518 = vpop.permute.xlu0 %1517
    %v1520 = vsel %vm52, %v1511, %v1518
    %1521 = vrot.lane.b32.xlu0 %v1502, 127
    %v1522 = vpop.permute.xlu0 %1521
    %v1524 = vsel %vm78, %v1522, 0.0
    %1525 = vrot.lane.b32.xlu0 %v1502, 96
    %v1526 = vpop.permute.xlu0 %1525
    %1529 = vrot.lane.b32.xlu0 %v1524, 32
    %v1530 = vpop.permute.xlu0 %1529
    %v1532 = vsel %vm52, %v1526, %v1530
    %1533 = vrot.lane.b32.xlu0 %v1502, 95
    %v1534 = vpop.permute.xlu0 %1533
    %v1536 = vsel %vm78, %v1534, 0.0
    %1538 = vrot.lane.b32.xlu0 %v1536, 32
    %v1539 = vpop.permute.xlu0 %1538
    %v1541 = vsel %vm52, %v1524, %v1539
    %1542 = vrot.lane.b32.xlu0 %v1502, 65
    %v1543 = vpop.permute.xlu0 %1542
    %v1545 = vsel %vm73, 0.0, %v1543
    %1546 = vrot.lane.b32.xlu0 %v1502, 33
    %v1547 = vpop.permute.xlu0 %1546
    %v1549 = vsel %vm73, 0.0, %v1547
    %1551 = vrot.lane.b32.xlu0 %v1549, 32
    %v1552 = vpop.permute.xlu0 %1551
    %v1554 = vsel %vm52, %v1545, %v1552
    %v1555 = vsel %vm52, %v1549, %v1526
    %1556 = vrot.lane.b32.xlu0 %v1502, 63
    %v1557 = vpop.permute.xlu0 %1556
    %v1559 = vsel %vm78, %v1557, 0.0
    %1561 = vrot.lane.b32.xlu0 %v1559, 32
    %v1562 = vpop.permute.xlu0 %1561
    %v1564 = vsel %vm52, %v1518, %v1562
    %1565 = vrot.lane.b32.xlu0 %v1502, 31
    %v1566 = vpop.permute.xlu0 %1565
    %v1568 = vsel %vm78, %v1566, 0.0
    %1570 = vrot.lane.b32.xlu0 %v1568, 32
    %v1571 = vpop.permute.xlu0 %1570
    %v1573 = vsel %vm52, %v1559, %v1571
    %1574 = vrot.lane.b32.xlu0 %v1502, 64
    %v1575 = vpop.permute.xlu0 %1574
    %1580 = vrot.lane.b32.xlu0 %v1554, 64
    %v1581 = vpop.permute.xlu0 %1580
    %1582 = vrot.lane.b32.xlu0 %v1555, 64
    %v1583 = vpop.permute.xlu0 %1582
    %1584 = vrot.lane.b32.xlu0 %v1575, 64
    %v1585 = vpop.permute.xlu0 %1584
    %1586 = vrot.lane.b32.xlu0 %v1564, 64
    %v1587 = vpop.permute.xlu0 %1586
    %1588 = vrot.lane.b32.xlu0 %v1573, 64
    %v1589 = vpop.permute.xlu0 %1588
    %v1595 = vsel %vm430, %v1516, %v1581
    %v1596 = vsel %vm430, %v1520, %v1583
    %v1597 = vsel %vm430, %v1502, %v1585
    %v1598 = vsel %vm430, %v1532, %v1587
    %v1599 = vsel %vm430, %v1541, %v1589
    %v1600 = vpack.c.bf16 %v1596, %v1595
    %v1601 = vpack.c.bf16 %v1598, %v1597
    %v1602 = vpack.c.bf16 %v1599, %v1599
    %1603 = vset.pattern.permute.xlu0 14
    %1604 = vperm.xlu0 %1603, %v249
    %v1605 = vpop.permute.xlu0 %1604
    %1607 = vrot.lane.b32.xlu0 %v869, 40
    %v1608 = vpop.permute.xlu0 %1607
    %vm1609 = vcmask 326656
    %v1611 = vsel %vm1609, %v1608, 0
    %v1614 = vsel %vm173, %v1602, 0
    %1616 = vmatprep.subr.bf16.mxu0 0
    %1617 = vmatpush1.bf16.msra.mxu0 0
    %1618 = vmatprep.subr.bf16.mxu0 0
    %1619 = vmatpush1.bf16.msra.mxu0 0
    %1620 = vmatprep.subr.bf16.mxu0 0
    %1621 = vmatpush1.bf16.msra.mxu0 0
    %1622 = vmatprep.subr.bf16.mxu0 0
    %1623 = vmatpush1.bf16.msra.mxu0 0
    %1624 = vmatprep.subr.bf16.mxu0 0
    %1625 = vmatpush1.bf16.msra.mxu0 0
    %1626 = vmatprep.subr.bf16.mxu0 0
    %1627 = vmatpush1.bf16.msra.mxu0 %v1614
    %1628 = vmatprep.subr.bf16.mxu0 0
    %1629 = vmatpush1.bf16.msra.mxu0 %v1601
    %1630 = vmatprep.subr.bf16.mxu0 0
    %1631 = vmatpush1.bf16.msra.mxu0 %v1600
    %1632 = vmatprep.subr.bf16.mxu0 0
    %1633 = vmatpush2.bf16.msra.mxu0 0
    %1634 = vmatprep.subr.bf16.mxu0 0
    %1635 = vmatpush2.bf16.msra.mxu0 0
    %1636 = vmatprep.subr.bf16.mxu0 0
    %1637 = vmatpush2.bf16.msra.mxu0 0
    %1638 = vmatprep.subr.bf16.mxu0 0
    %1639 = vmatpush2.bf16.msra.mxu0 0
    %1640 = vmatprep.subr.bf16.mxu0 0
    %1641 = vmatpush2.bf16.msra.mxu0 0
    %1642 = vmatprep.subr.bf16.mxu0 0
    %1643 = vmatpush2.bf16.msra.mxu0 0
    %1644 = vmatprep.subr.bf16.mxu0 0
    %1645 = vmatpush2.bf16.msra.mxu0 0
    %1646 = vmatprep.subr.bf16.mxu0 0
    %1647 = vmatpush2.bf16.msra.mxu0 0
    %1648 = vmatprep.mubr.bf16.mxu0 0
    %1649 = vmatmul.mubr.bf16.gmra.mxu0 %v1611
    %v1650 = vpop.f32.mrf.mxu0
    %v1651 = vadd.f32 %v1605, %v1650
    %v1652 = vpop.f32.mrf.mxu0
    %v1653 = vpop.f32.mrf.mxu0
    %v1654 = vpop.f32.mrf.mxu0
    %1655 = vdwg.mxu0
    %v1656 = vmul.f32 %v1651, %v573
    %1657 = vset.pattern.permute.xlu0 18
    %1658 = vperm.xlu0 %1657, %v249
    %v1659 = vpop.permute.xlu0 %1658
    %v1661 = vmul.f32 %v1659, %v1656
    %v1662 = vand.u32 2147483647, %v1661
    %vm1663 = vcmp.le.f32.partialorder %v1662, 0.7853982
    %vm1664 = vcmp.lt.s32.totalorder %v1661, 0
    %v1665 = vand.u32 %v1661, 2139095040
    %v1666 = vshrl.u32 %v1665, 23
    %v1667 = vsub.s32 %v1666, 127
    %v1668 = vand.u32 2147483647, %v1661
    %v1669 = vand.u32 %v1668, 8388607
    %v1670 = vor.u32 %v1669, 8388608
    %v1671 = vsub.s32 0, %v1670
    %v1672 = vadd.s32 %v1667, 1
    %vm1673 = vcmp.gt.s32.totalorder %v1672, 0
    %v1674 = vsel %vm1673, %v1672, 0
    %v1675 = vshrl.u32 %v1674, 5
    %v1676 = vand.u32 %v1674, 31
    %v1677 = vsub.s32 32, %v1676
    %v1678 = vshrl.u32 683565275, %v1677
    %v1679 = vshll.u32 683565275, %v1676
    %v1680 = vshrl.u32 2475754826, %v1677
    %v1681 = vor.u32 %v1679, %v1680
    %v1682 = vshll.u32 2475754826, %v1676
    %v1683 = vshrl.u32 2131351028, %v1677
    %v1684 = vor.u32 %v1682, %v1683
    %v1685 = vshll.u32 2131351028, %v1676
    %v1686 = vshrl.u32 2102212464, %v1677
    %v1687 = vor.u32 %v1685, %v1686
    %v1688 = vshll.u32 2102212464, %v1676
    %v1689 = vshrl.u32 920167782, %v1677
    %v1690 = vor.u32 %v1688, %v1689
    %v1691 = vshll.u32 920167782, %v1676
    %v1692 = vshrl.u32 1326507024, %v1677
    %v1693 = vor.u32 %v1691, %v1692
    %vm1694 = vcmp.lt.s32.totalorder %v1675, 1
    %vm1695 = vcmp.lt.s32.totalorder %v1675, 2
    %vm1696 = vcmp.lt.s32.totalorder %v1675, 3
    %vm1697 = vcmp.lt.s32.totalorder %v1675, 4
    %v1698 = vsel %vm1694, %v1678, %v1681
    %v1699 = vsel %vm1697, %v1687, 2102212464
    %v1700 = vsel %vm1696, %v1684, %v1699
    %v1701 = vsel %vm1695, %v1698, %v1700
    %v1702 = vsel %vm1694, %v1681, %v1684
    %v1703 = vsel %vm1697, %v1690, 920167782
    %v1704 = vsel %vm1696, %v1687, %v1703
    %v1705 = vsel %vm1695, %v1702, %v1704
    %v1706 = vsel %vm1694, %v1684, %v1687
    %v1707 = vsel %vm1697, %v1693, 1326507024
    %v1708 = vsel %vm1696, %v1690, %v1707
    %v1709 = vsel %vm1695, %v1706, %v1708
    %v1710 = vshll.u32 %v1670, 8
    %v1711 = vmul.u32.u64.compose %v1710, %v1709
    %v1712 = vextract.low.u32 %v1711
    %v1713 = vextract.high.u32 %v1711
    %v1714 = vmul.u32.u64.compose %v1710, %v1705
    %v1715 = vextract.low.u32 %v1714
    %v1716 = vextract.high.u32 %v1714
    %v1717 = vmul.u32 %v1710, %v1701
    %v1718 = vadd.s32 %v1713, %v1715
    %vm1719 = vc.u32 %v1713, %v1715
    %v1720 = vadd.s32 %v1716, 1
    %v1721 = vsel %vm1719, %v1720, %v1716
    %v1722 = vadd.s32 %v1717, %v1721
    %v1723 = vadd.s32 %v1722, 536870912
    %v1724 = vshrl.u32 %v1723, 30
    %v1725 = vshll.u32 %v1724, 30
    %v1726 = vsub.s32 %v1722, %v1725
    %vm1727 = vcmp.lt.s32.totalorder %v1726, 0
    %v1728 = vsub.s32 0, %v1726
    %v1729 = vsel %vm1727, %v1728, %v1726
    %v1730 = vclz %v1729
    %v1731 = vsub.s32 %v1730, 2
    %vm1732 = vcmp.gt.s32.totalorder 0, %v1731
    %v1733 = vsel %vm1732, 0, %v1731
    %v1734 = vsub.s32 32, %v1733
    %v1735 = vshll.u32 %v1726, %v1733
    %v1736 = vshrl.u32 %v1718, %v1734
    %v1737 = vor.u32 %v1735, %v1736
    %v1738 = vsub.s32 4294967266, %v1733
    %v1739 = vadd.s32 %v1738, 127
    %v1740 = vshll.u32 %v1739, 23
    %v1741 = vor.u32 4788187, %v1740
    %v1742 = vand.u32 2147483647, %v1741
    %v1744 = vcvt.s32.f32 %v1737
    %v1745 = vmul.f32 %v1744, %v1742
    %v1746 = vxor.u32 %v1745, 2147483648
    %v1747 = vsel %vm1664, %v1746, %v1745
    %v1748 = vsub.s32 4, %v1724
    %v1749 = vsel %vm1664, %v1748, %v1724
    %v1750 = vsel %vm1663, %v1661, %v1747
    %v1751 = vsel %vm1663, 0, %v1749
    %v1752 = vcosq.f32.pop %v1750
    %v1753 = vsinq.f32.pop %v1750
    %vm1754 = vweird.f32 %v1661
    %v1755 = vadd.s32 %v1751, 3
    %v1756 = vand.u32 %v1755, 3
    %vm1757 = vcmp.lt.s32.totalorder %v1756, 2
    %vm1758 = vcmp.eq.s32.totalorder %v1756, 0
    %v1759 = vxor.u32 %v1753, 2147483648
    %v1760 = vsel %vm1758, %v1752, %v1759
    %vm1761 = vcmp.eq.s32.totalorder %v1756, 2
    %v1762 = vxor.u32 %v1752, 2147483648
    %v1763 = vsel %vm1761, %v1762, %v1753
    %v1764 = vsel %vm1757, %v1760, %v1763
    %v1765 = vsel %vm1754, nan, %v1764
    %v1766 = vmul.f32 %v1765, %v1765
    %1767 = vset.pattern.permute.xlu0 19
    %1768 = vperm.xlu0 %1767, %v249
    %v1769 = vpop.permute.xlu0 %1768
    %v1771 = vmul.f32 %v1769, %v1766
    %v1772 = vadd.f32 %v1656, %v1771
    %v1773 = vmul.f32 %v1772, %v573
    %v1774 = vld [vmem:[%s3 + $0x8] sm:$0xf]
    %1776 = vrot.lane.b32.xlu0 %v1773, 1
    %v1777 = vpop.permute.xlu0 %1776
    %v1779 = vsel %vm73, 0.0, %v1777
    %1780 = vrot.lane.b32.xlu0 %v1773, 97
    %v1781 = vpop.permute.xlu0 %1780
    %v1783 = vsel %vm73, 0.0, %v1781
    %1785 = vrot.lane.b32.xlu0 %v1783, 32
    %v1786 = vpop.permute.xlu0 %1785
    %v1788 = vsel %vm52, %v1779, %v1786
    %1789 = vrot.lane.b32.xlu0 %v1773, 32
    %v1790 = vpop.permute.xlu0 %1789
    %v1792 = vsel %vm52, %v1783, %v1790
    %1793 = vrot.lane.b32.xlu0 %v1773, 127
    %v1794 = vpop.permute.xlu0 %1793
    %v1796 = vsel %vm78, %v1794, 0.0
    %1797 = vrot.lane.b32.xlu0 %v1773, 96
    %v1798 = vpop.permute.xlu0 %1797
    %1801 = vrot.lane.b32.xlu0 %v1796, 32
    %v1802 = vpop.permute.xlu0 %1801
    %v1804 = vsel %vm52, %v1798, %v1802
    %1805 = vrot.lane.b32.xlu0 %v1773, 95
    %v1806 = vpop.permute.xlu0 %1805
    %v1808 = vsel %vm78, %v1806, 0.0
    %1810 = vrot.lane.b32.xlu0 %v1808, 32
    %v1811 = vpop.permute.xlu0 %1810
    %v1813 = vsel %vm52, %v1796, %v1811
    %1814 = vrot.lane.b32.xlu0 %v1773, 65
    %v1815 = vpop.permute.xlu0 %1814
    %v1817 = vsel %vm73, 0.0, %v1815
    %1818 = vrot.lane.b32.xlu0 %v1773, 33
    %v1819 = vpop.permute.xlu0 %1818
    %v1821 = vsel %vm73, 0.0, %v1819
    %1823 = vrot.lane.b32.xlu0 %v1821, 32
    %v1824 = vpop.permute.xlu0 %1823
    %v1826 = vsel %vm52, %v1817, %v1824
    %v1827 = vsel %vm52, %v1821, %v1798
    %1828 = vrot.lane.b32.xlu0 %v1773, 63
    %v1829 = vpop.permute.xlu0 %1828
    %v1831 = vsel %vm78, %v1829, 0.0
    %1833 = vrot.lane.b32.xlu0 %v1831, 32
    %v1834 = vpop.permute.xlu0 %1833
    %v1836 = vsel %vm52, %v1790, %v1834
    %1837 = vrot.lane.b32.xlu0 %v1773, 31
    %v1838 = vpop.permute.xlu0 %1837
    %v1840 = vsel %vm78, %v1838, 0.0
    %1842 = vrot.lane.b32.xlu0 %v1840, 32
    %v1843 = vpop.permute.xlu0 %1842
    %v1845 = vsel %vm52, %v1831, %v1843
    %1846 = vrot.lane.b32.xlu0 %v1773, 64
    %v1847 = vpop.permute.xlu0 %1846
    %1852 = vrot.lane.b32.xlu0 %v1826, 64
    %v1853 = vpop.permute.xlu0 %1852
    %1854 = vrot.lane.b32.xlu0 %v1827, 64
    %v1855 = vpop.permute.xlu0 %1854
    %1856 = vrot.lane.b32.xlu0 %v1847, 64
    %v1857 = vpop.permute.xlu0 %1856
    %1858 = vrot.lane.b32.xlu0 %v1836, 64
    %v1859 = vpop.permute.xlu0 %1858
    %1860 = vrot.lane.b32.xlu0 %v1845, 64
    %v1861 = vpop.permute.xlu0 %1860
    %v1867 = vsel %vm430, %v1788, %v1853
    %v1868 = vsel %vm430, %v1792, %v1855
    %v1869 = vsel %vm430, %v1773, %v1857
    %v1870 = vsel %vm430, %v1804, %v1859
    %v1871 = vsel %vm430, %v1813, %v1861
    %v1872 = vpack.c.bf16 %v1868, %v1867
    %v1873 = vpack.c.bf16 %v1870, %v1869
    %v1874 = vpack.c.bf16 %v1871, %v1871
    %1875 = vset.pattern.permute.xlu0 17
    %1876 = vperm.xlu0 %1875, %v249
    %v1877 = vpop.permute.xlu0 %1876
    %v1880 = vsel %vm1609, %v1774, 0
    %v1883 = vsel %vm173, %v1874, 0
    %1885 = vmatprep.subr.bf16.mxu0 0
    %1886 = vmatpush1.bf16.msra.mxu0 0
    %1887 = vmatprep.subr.bf16.mxu0 0
    %1888 = vmatpush1.bf16.msra.mxu0 0
    %1889 = vmatprep.subr.bf16.mxu0 0
    %1890 = vmatpush1.bf16.msra.mxu0 0
    %1891 = vmatprep.subr.bf16.mxu0 0
    %1892 = vmatpush1.bf16.msra.mxu0 0
    %1893 = vmatprep.subr.bf16.mxu0 0
    %1894 = vmatpush1.bf16.msra.mxu0 0
    %1895 = vmatprep.subr.bf16.mxu0 0
    %1896 = vmatpush1.bf16.msra.mxu0 %v1883
    %1897 = vmatprep.subr.bf16.mxu0 0
    %1898 = vmatpush1.bf16.msra.mxu0 %v1873
    %1899 = vmatprep.subr.bf16.mxu0 0
    %1900 = vmatpush1.bf16.msra.mxu0 %v1872
    %1901 = vmatprep.subr.bf16.mxu0 0
    %1902 = vmatpush2.bf16.msra.mxu0 0
    %1903 = vmatprep.subr.bf16.mxu0 0
    %1904 = vmatpush2.bf16.msra.mxu0 0
    %1905 = vmatprep.subr.bf16.mxu0 0
    %1906 = vmatpush2.bf16.msra.mxu0 0
    %1907 = vmatprep.subr.bf16.mxu0 0
    %1908 = vmatpush2.bf16.msra.mxu0 0
    %1909 = vmatprep.subr.bf16.mxu0 0
    %1910 = vmatpush2.bf16.msra.mxu0 0
    %1911 = vmatprep.subr.bf16.mxu0 0
    %1912 = vmatpush2.bf16.msra.mxu0 0
    %1913 = vmatprep.subr.bf16.mxu0 0
    %1914 = vmatpush2.bf16.msra.mxu0 0
    %1915 = vmatprep.subr.bf16.mxu0 0
    %1916 = vmatpush2.bf16.msra.mxu0 0
    %1917 = vmatprep.mubr.bf16.mxu0 0
    %1918 = vmatmul.mubr.bf16.gmra.mxu0 %v1880
    %v1919 = vpop.f32.mrf.mxu0
    %v1920 = vadd.f32 %v1877, %v1919
    %v1921 = vpop.f32.mrf.mxu0
    %v1922 = vpop.f32.mrf.mxu0
    %v1923 = vpop.f32.mrf.mxu0
    %1924 = vdwg.mxu0
    %v1925 = vmul.f32 %v1920, %v573
    %v1926 = vadd.f32 %v1925, %v433
    %1927 = vset.pattern.permute.xlu0 21
    %1928 = vperm.xlu0 %1927, %v249
    %v1929 = vpop.permute.xlu0 %1928
    %v1931 = vmul.f32 %v1929, %v1926
    %v1932 = vand.u32 2147483647, %v1931
    %vm1933 = vcmp.le.f32.partialorder %v1932, 0.7853982
    %vm1934 = vcmp.lt.s32.totalorder %v1931, 0
    %v1935 = vand.u32 %v1931, 2139095040
    %v1936 = vshrl.u32 %v1935, 23
    %v1937 = vsub.s32 %v1936, 127
    %v1938 = vand.u32 2147483647, %v1931
    %v1939 = vand.u32 %v1938, 8388607
    %v1940 = vor.u32 %v1939, 8388608
    %v1941 = vsub.s32 0, %v1940
    %v1942 = vadd.s32 %v1937, 1
    %vm1943 = vcmp.gt.s32.totalorder %v1942, 0
    %v1944 = vsel %vm1943, %v1942, 0
    %v1945 = vshrl.u32 %v1944, 5
    %v1946 = vand.u32 %v1944, 31
    %v1947 = vsub.s32 32, %v1946
    %v1948 = vshrl.u32 683565275, %v1947
    %v1949 = vshll.u32 683565275, %v1946
    %v1950 = vshrl.u32 2475754826, %v1947
    %v1951 = vor.u32 %v1949, %v1950
    %v1952 = vshll.u32 2475754826, %v1946
    %v1953 = vshrl.u32 2131351028, %v1947
    %v1954 = vor.u32 %v1952, %v1953
    %v1955 = vshll.u32 2131351028, %v1946
    %v1956 = vshrl.u32 2102212464, %v1947
    %v1957 = vor.u32 %v1955, %v1956
    %v1958 = vshll.u32 2102212464, %v1946
    %v1959 = vshrl.u32 920167782, %v1947
    %v1960 = vor.u32 %v1958, %v1959
    %v1961 = vshll.u32 920167782, %v1946
    %v1962 = vshrl.u32 1326507024, %v1947
    %v1963 = vor.u32 %v1961, %v1962
    %vm1964 = vcmp.lt.s32.totalorder %v1945, 1
    %vm1965 = vcmp.lt.s32.totalorder %v1945, 2
    %vm1966 = vcmp.lt.s32.totalorder %v1945, 3
    %vm1967 = vcmp.lt.s32.totalorder %v1945, 4
    %v1968 = vsel %vm1964, %v1948, %v1951
    %v1969 = vsel %vm1967, %v1957, 2102212464
    %v1970 = vsel %vm1966, %v1954, %v1969
    %v1971 = vsel %vm1965, %v1968, %v1970
    %v1972 = vsel %vm1964, %v1951, %v1954
    %v1973 = vsel %vm1967, %v1960, 920167782
    %v1974 = vsel %vm1966, %v1957, %v1973
    %v1975 = vsel %vm1965, %v1972, %v1974
    %v1976 = vsel %vm1964, %v1954, %v1957
    %v1977 = vsel %vm1967, %v1963, 1326507024
    %v1978 = vsel %vm1966, %v1960, %v1977
    %v1979 = vsel %vm1965, %v1976, %v1978
    %v1980 = vshll.u32 %v1940, 8
    %v1981 = vmul.u32.u64.compose %v1980, %v1979
    %v1982 = vextract.low.u32 %v1981
    %v1983 = vextract.high.u32 %v1981
    %v1984 = vmul.u32.u64.compose %v1980, %v1975
    %v1985 = vextract.low.u32 %v1984
    %v1986 = vextract.high.u32 %v1984
    %v1987 = vmul.u32 %v1980, %v1971
    %v1988 = vadd.s32 %v1983, %v1985
    %vm1989 = vc.u32 %v1983, %v1985
    %v1990 = vadd.s32 %v1986, 1
    %v1991 = vsel %vm1989, %v1990, %v1986
    %v1992 = vadd.s32 %v1987, %v1991
    %v1993 = vadd.s32 %v1992, 536870912
    %v1994 = vshrl.u32 %v1993, 30
    %v1995 = vshll.u32 %v1994, 30
    %v1996 = vsub.s32 %v1992, %v1995
    %vm1997 = vcmp.lt.s32.totalorder %v1996, 0
    %v1998 = vsub.s32 0, %v1996
    %v1999 = vsel %vm1997, %v1998, %v1996
    %v2000 = vclz %v1999
    %v2001 = vsub.s32 %v2000, 2
    %vm2002 = vcmp.gt.s32.totalorder 0, %v2001
    %v2003 = vsel %vm2002, 0, %v2001
    %v2004 = vsub.s32 32, %v2003
    %v2005 = vshll.u32 %v1996, %v2003
    %v2006 = vshrl.u32 %v1988, %v2004
    %v2007 = vor.u32 %v2005, %v2006
    %v2008 = vsub.s32 4294967266, %v2003
    %v2009 = vadd.s32 %v2008, 127
    %v2010 = vshll.u32 %v2009, 23
    %v2011 = vor.u32 4788187, %v2010
    %v2012 = vand.u32 2147483647, %v2011
    %v2014 = vcvt.s32.f32 %v2007
    %v2015 = vmul.f32 %v2014, %v2012
    %v2016 = vxor.u32 %v2015, 2147483648
    %v2017 = vsel %vm1934, %v2016, %v2015
    %v2018 = vsub.s32 4, %v1994
    %v2019 = vsel %vm1934, %v2018, %v1994
    %v2020 = vsel %vm1933, %v1931, %v2017
    %v2021 = vsel %vm1933, 0, %v2019
    %v2022 = vcosq.f32.pop %v2020
    %v2023 = vsinq.f32.pop %v2020
    %vm2024 = vweird.f32 %v1931
    %v2025 = vadd.s32 %v2021, 3
    %v2026 = vand.u32 %v2025, 3
    %vm2027 = vcmp.lt.s32.totalorder %v2026, 2
    %vm2028 = vcmp.eq.s32.totalorder %v2026, 0
    %v2029 = vxor.u32 %v2023, 2147483648
    %v2030 = vsel %vm2028, %v2022, %v2029
    %vm2031 = vcmp.eq.s32.totalorder %v2026, 2
    %v2032 = vxor.u32 %v2022, 2147483648
    %v2033 = vsel %vm2031, %v2032, %v2023
    %v2034 = vsel %vm2027, %v2030, %v2033
    %v2035 = vsel %vm2024, nan, %v2034
    %v2036 = vmul.f32 %v2035, %v2035
    %2037 = vset.pattern.permute.xlu0 22
    %2038 = vperm.xlu0 %2037, %v249
    %v2039 = vpop.permute.xlu0 %2038
    %v2041 = vmul.f32 %v2039, %v2036
    %v2042 = vadd.f32 %v1926, %v2041
    %v2043 = vmul.f32 %v2042, %v573
    %2045 = vrot.lane.b32.xlu0 %v2043, 3
    %v2046 = vpop.permute.xlu0 %2045
    %v2048 = vsel %vm63, 0.0, %v2046
    %2049 = vrot.lane.b32.xlu0 %v2043, 99
    %v2050 = vpop.permute.xlu0 %2049
    %v2052 = vsel %vm63, 0.0, %v2050
    %2054 = vrot.lane.b32.xlu0 %v2052, 32
    %v2055 = vpop.permute.xlu0 %2054
    %v2057 = vsel %vm52, %v2048, %v2055
    %2058 = vrot.lane.b32.xlu0 %v2043, 98
    %v2059 = vpop.permute.xlu0 %2058
    %v2061 = vsel %vm68, 0.0, %v2059
    %2062 = vrot.lane.b32.xlu0 %v2043, 1
    %v2063 = vpop.permute.xlu0 %2062
    %v2065 = vsel %vm73, 0.0, %v2063
    %2067 = vrot.lane.b32.xlu0 %v2065, 32
    %v2068 = vpop.permute.xlu0 %2067
    %v2070 = vsel %vm52, %v2061, %v2068
    %2071 = vrot.lane.b32.xlu0 %v2043, 95
    %v2072 = vpop.permute.xlu0 %2071
    %v2074 = vsel %vm78, %v2072, 0.0
    %2075 = vrot.lane.b32.xlu0 %v2043, 126
    %v2076 = vpop.permute.xlu0 %2075
    %v2078 = vsel %vm83, %v2076, 0.0
    %2080 = vrot.lane.b32.xlu0 %v2078, 32
    %v2081 = vpop.permute.xlu0 %2080
    %v2083 = vsel %vm52, %v2074, %v2081
    %2084 = vrot.lane.b32.xlu0 %v2043, 125
    %v2085 = vpop.permute.xlu0 %2084
    %v2087 = vsel %vm88, %v2085, 0.0
    %2088 = vrot.lane.b32.xlu0 %v2043, 93
    %v2089 = vpop.permute.xlu0 %2088
    %v2091 = vsel %vm88, %v2089, 0.0
    %2093 = vrot.lane.b32.xlu0 %v2091, 32
    %v2094 = vpop.permute.xlu0 %2093
    %v2096 = vsel %vm52, %v2087, %v2094
    %2097 = vrot.lane.b32.xlu0 %v2043, 67
    %v2098 = vpop.permute.xlu0 %2097
    %v2100 = vsel %vm63, 0.0, %v2098
    %2101 = vrot.lane.b32.xlu0 %v2043, 35
    %v2102 = vpop.permute.xlu0 %2101
    %v2104 = vsel %vm63, 0.0, %v2102
    %2106 = vrot.lane.b32.xlu0 %v2104, 32
    %v2107 = vpop.permute.xlu0 %2106
    %v2109 = vsel %vm52, %v2100, %v2107
    %2110 = vrot.lane.b32.xlu0 %v2043, 34
    %v2111 = vpop.permute.xlu0 %2110
    %v2113 = vsel %vm68, 0.0, %v2111
    %2114 = vrot.lane.b32.xlu0 %v2043, 65
    %v2115 = vpop.permute.xlu0 %2114
    %v2117 = vsel %vm73, 0.0, %v2115
    %2119 = vrot.lane.b32.xlu0 %v2117, 32
    %v2120 = vpop.permute.xlu0 %2119
    %v2122 = vsel %vm52, %v2113, %v2120
    %2123 = vrot.lane.b32.xlu0 %v2043, 31
    %v2124 = vpop.permute.xlu0 %2123
    %v2126 = vsel %vm78, %v2124, 0.0
    %2127 = vrot.lane.b32.xlu0 %v2043, 62
    %v2128 = vpop.permute.xlu0 %2127
    %v2130 = vsel %vm83, %v2128, 0.0
    %2132 = vrot.lane.b32.xlu0 %v2130, 32
    %v2133 = vpop.permute.xlu0 %2132
    %v2135 = vsel %vm52, %v2126, %v2133
    %2136 = vrot.lane.b32.xlu0 %v2043, 61
    %v2137 = vpop.permute.xlu0 %2136
    %v2139 = vsel %vm88, %v2137, 0.0
    %2140 = vrot.lane.b32.xlu0 %v2043, 29
    %v2141 = vpop.permute.xlu0 %2140
    %v2143 = vsel %vm88, %v2141, 0.0
    %2145 = vrot.lane.b32.xlu0 %v2143, 32
    %v2146 = vpop.permute.xlu0 %2145
    %v2148 = vsel %vm52, %v2139, %v2146
    %2149 = vrot.lane.b32.xlu0 %v2043, 64
    %v2150 = vpop.permute.xlu0 %2149
    %2155 = vrot.lane.b32.xlu0 %v2109, 64
    %v2156 = vpop.permute.xlu0 %2155
    %2157 = vrot.lane.b32.xlu0 %v2122, 64
    %v2158 = vpop.permute.xlu0 %2157
    %2159 = vrot.lane.b32.xlu0 %v2150, 64
    %v2160 = vpop.permute.xlu0 %2159
    %2161 = vrot.lane.b32.xlu0 %v2135, 64
    %v2162 = vpop.permute.xlu0 %2161
    %2163 = vrot.lane.b32.xlu0 %v2148, 64
    %v2164 = vpop.permute.xlu0 %2163
    %v2170 = vsel %vm430, %v2057, %v2156
    %v2171 = vsel %vm430, %v2070, %v2158
    %v2172 = vsel %vm430, %v2043, %v2160
    %v2173 = vsel %vm430, %v2083, %v2162
    %v2174 = vsel %vm430, %v2096, %v2164
    %v2175 = vpack.c.bf16 %v2171, %v2170
    %v2176 = vpack.c.bf16 %v2173, %v2172
    %v2177 = vpack.c.bf16 %v2174, %v2174
    %2178 = vset.pattern.permute.xlu0 20
    %2179 = vperm.xlu0 %2178, %v249
    %v2180 = vpop.permute.xlu0 %2179
    %v2183 = vunpack.c.l.b16 %v1774
    %v2184 = vpack.c.b16 %v2183, %v2183
    %2185 = vrot.lane.b32.xlu0 %v2184, 88
    %v2186 = vpop.permute.xlu0 %2185
    %v2188 = vsel %vm1609, %v2186, 0
    %v2191 = vsel %vm173, %v2177, 0
    %2193 = vmatprep.subr.bf16.mxu0 0
    %2194 = vmatpush1.bf16.msra.mxu0 0
    %2195 = vmatprep.subr.bf16.mxu0 0
    %2196 = vmatpush1.bf16.msra.mxu0 0
    %2197 = vmatprep.subr.bf16.mxu0 0
    %2198 = vmatpush1.bf16.msra.mxu0 0
    %2199 = vmatprep.subr.bf16.mxu0 0
    %2200 = vmatpush1.bf16.msra.mxu0 0
    %2201 = vmatprep.subr.bf16.mxu0 0
    %2202 = vmatpush1.bf16.msra.mxu0 0
    %2203 = vmatprep.subr.bf16.mxu0 0
    %2204 = vmatpush1.bf16.msra.mxu0 %v2191
    %2205 = vmatprep.subr.bf16.mxu0 0
    %2206 = vmatpush1.bf16.msra.mxu0 %v2176
    %2207 = vmatprep.subr.bf16.mxu0 0
    %2208 = vmatpush1.bf16.msra.mxu0 %v2175
    %2209 = vmatprep.subr.bf16.mxu0 0
    %2210 = vmatpush2.bf16.msra.mxu0 0
    %2211 = vmatprep.subr.bf16.mxu0 0
    %2212 = vmatpush2.bf16.msra.mxu0 0
    %2213 = vmatprep.subr.bf16.mxu0 0
    %2214 = vmatpush2.bf16.msra.mxu0 0
    %2215 = vmatprep.subr.bf16.mxu0 0
    %2216 = vmatpush2.bf16.msra.mxu0 0
    %2217 = vmatprep.subr.bf16.mxu0 0
    %2218 = vmatpush2.bf16.msra.mxu0 0
    %2219 = vmatprep.subr.bf16.mxu0 0
    %2220 = vmatpush2.bf16.msra.mxu0 0
    %2221 = vmatprep.subr.bf16.mxu0 0
    %2222 = vmatpush2.bf16.msra.mxu0 0
    %2223 = vmatprep.subr.bf16.mxu0 0
    %2224 = vmatpush2.bf16.msra.mxu0 0
    %2225 = vmatprep.mubr.bf16.mxu0 0
    %2226 = vmatmul.mubr.bf16.gmra.mxu0 %v2188
    %v2227 = vpop.f32.mrf.mxu0
    %v2228 = vadd.f32 %v2180, %v2227
    %v2229 = vpop.f32.mrf.mxu0
    %v2230 = vpop.f32.mrf.mxu0
    %v2231 = vpop.f32.mrf.mxu0
    %2232 = vdwg.mxu0
    %v2233 = vmul.f32 %v2228, %v573
    %2234 = vset.pattern.permute.xlu0 24
    %2235 = vperm.xlu0 %2234, %v249
    %v2236 = vpop.permute.xlu0 %2235
    %v2238 = vmul.f32 %v2236, %v2233
    %v2239 = vand.u32 2147483647, %v2238
    %vm2240 = vcmp.le.f32.partialorder %v2239, 0.7853982
    %vm2241 = vcmp.lt.s32.totalorder %v2238, 0
    %v2242 = vand.u32 %v2238, 2139095040
    %v2243 = vshrl.u32 %v2242, 23
    %v2244 = vsub.s32 %v2243, 127
    %v2245 = vand.u32 2147483647, %v2238
    %v2246 = vand.u32 %v2245, 8388607
    %v2247 = vor.u32 %v2246, 8388608
    %v2248 = vsub.s32 0, %v2247
    %v2249 = vadd.s32 %v2244, 1
    %vm2250 = vcmp.gt.s32.totalorder %v2249, 0
    %v2251 = vsel %vm2250, %v2249, 0
    %v2252 = vshrl.u32 %v2251, 5
    %v2253 = vand.u32 %v2251, 31
    %v2254 = vsub.s32 32, %v2253
    %v2255 = vshrl.u32 683565275, %v2254
    %v2256 = vshll.u32 683565275, %v2253
    %v2257 = vshrl.u32 2475754826, %v2254
    %v2258 = vor.u32 %v2256, %v2257
    %v2259 = vshll.u32 2475754826, %v2253
    %v2260 = vshrl.u32 2131351028, %v2254
    %v2261 = vor.u32 %v2259, %v2260
    %v2262 = vshll.u32 2131351028, %v2253
    %v2263 = vshrl.u32 2102212464, %v2254
    %v2264 = vor.u32 %v2262, %v2263
    %v2265 = vshll.u32 2102212464, %v2253
    %v2266 = vshrl.u32 920167782, %v2254
    %v2267 = vor.u32 %v2265, %v2266
    %v2268 = vshll.u32 920167782, %v2253
    %v2269 = vshrl.u32 1326507024, %v2254
    %v2270 = vor.u32 %v2268, %v2269
    %vm2271 = vcmp.lt.s32.totalorder %v2252, 1
    %vm2272 = vcmp.lt.s32.totalorder %v2252, 2
    %vm2273 = vcmp.lt.s32.totalorder %v2252, 3
    %vm2274 = vcmp.lt.s32.totalorder %v2252, 4
    %v2275 = vsel %vm2271, %v2255, %v2258
    %v2276 = vsel %vm2274, %v2264, 2102212464
    %v2277 = vsel %vm2273, %v2261, %v2276
    %v2278 = vsel %vm2272, %v2275, %v2277
    %v2279 = vsel %vm2271, %v2258, %v2261
    %v2280 = vsel %vm2274, %v2267, 920167782
    %v2281 = vsel %vm2273, %v2264, %v2280
    %v2282 = vsel %vm2272, %v2279, %v2281
    %v2283 = vsel %vm2271, %v2261, %v2264
    %v2284 = vsel %vm2274, %v2270, 1326507024
    %v2285 = vsel %vm2273, %v2267, %v2284
    %v2286 = vsel %vm2272, %v2283, %v2285
    %v2287 = vshll.u32 %v2247, 8
    %v2288 = vmul.u32.u64.compose %v2287, %v2286
    %v2289 = vextract.low.u32 %v2288
    %v2290 = vextract.high.u32 %v2288
    %v2291 = vmul.u32.u64.compose %v2287, %v2282
    %v2292 = vextract.low.u32 %v2291
    %v2293 = vextract.high.u32 %v2291
    %v2294 = vmul.u32 %v2287, %v2278
    %v2295 = vadd.s32 %v2290, %v2292
    %vm2296 = vc.u32 %v2290, %v2292
    %v2297 = vadd.s32 %v2293, 1
    %v2298 = vsel %vm2296, %v2297, %v2293
    %v2299 = vadd.s32 %v2294, %v2298
    %v2300 = vadd.s32 %v2299, 536870912
    %v2301 = vshrl.u32 %v2300, 30
    %v2302 = vshll.u32 %v2301, 30
    %v2303 = vsub.s32 %v2299, %v2302
    %vm2304 = vcmp.lt.s32.totalorder %v2303, 0
    %v2305 = vsub.s32 0, %v2303
    %v2306 = vsel %vm2304, %v2305, %v2303
    %v2307 = vclz %v2306
    %v2308 = vsub.s32 %v2307, 2
    %vm2309 = vcmp.gt.s32.totalorder 0, %v2308
    %v2310 = vsel %vm2309, 0, %v2308
    %v2311 = vsub.s32 32, %v2310
    %v2312 = vshll.u32 %v2303, %v2310
    %v2313 = vshrl.u32 %v2295, %v2311
    %v2314 = vor.u32 %v2312, %v2313
    %v2315 = vsub.s32 4294967266, %v2310
    %v2316 = vadd.s32 %v2315, 127
    %v2317 = vshll.u32 %v2316, 23
    %v2318 = vor.u32 4788187, %v2317
    %v2319 = vand.u32 2147483647, %v2318
    %v2321 = vcvt.s32.f32 %v2314
    %v2322 = vmul.f32 %v2321, %v2319
    %v2323 = vxor.u32 %v2322, 2147483648
    %v2324 = vsel %vm2241, %v2323, %v2322
    %v2325 = vsub.s32 4, %v2301
    %v2326 = vsel %vm2241, %v2325, %v2301
    %v2327 = vsel %vm2240, %v2238, %v2324
    %v2328 = vsel %vm2240, 0, %v2326
    %v2329 = vcosq.f32.pop %v2327
    %v2330 = vsinq.f32.pop %v2327
    %vm2331 = vweird.f32 %v2238
    %v2332 = vadd.s32 %v2328, 3
    %v2333 = vand.u32 %v2332, 3
    %vm2334 = vcmp.lt.s32.totalorder %v2333, 2
    %vm2335 = vcmp.eq.s32.totalorder %v2333, 0
    %v2336 = vxor.u32 %v2330, 2147483648
    %v2337 = vsel %vm2335, %v2329, %v2336
    %vm2338 = vcmp.eq.s32.totalorder %v2333, 2
    %v2339 = vxor.u32 %v2329, 2147483648
    %v2340 = vsel %vm2338, %v2339, %v2330
    %v2341 = vsel %vm2334, %v2337, %v2340
    %v2342 = vsel %vm2331, nan, %v2341
    %v2343 = vmul.f32 %v2342, %v2342
    %2344 = vset.pattern.permute.xlu0 25
    %2345 = vperm.xlu0 %2344, %v249
    %v2346 = vpop.permute.xlu0 %2345
    %v2348 = vmul.f32 %v2346, %v2343
    %v2349 = vadd.f32 %v2233, %v2348
    %v2350 = vmul.f32 %v2349, %v573
    %2352 = vrot.lane.b32.xlu0 %v2350, 1
    %v2353 = vpop.permute.xlu0 %2352
    %v2355 = vsel %vm73, 0.0, %v2353
    %2356 = vrot.lane.b32.xlu0 %v2350, 97
    %v2357 = vpop.permute.xlu0 %2356
    %v2359 = vsel %vm73, 0.0, %v2357
    %2361 = vrot.lane.b32.xlu0 %v2359, 32
    %v2362 = vpop.permute.xlu0 %2361
    %v2364 = vsel %vm52, %v2355, %v2362
    %2365 = vrot.lane.b32.xlu0 %v2350, 32
    %v2366 = vpop.permute.xlu0 %2365
    %v2368 = vsel %vm52, %v2359, %v2366
    %2369 = vrot.lane.b32.xlu0 %v2350, 127
    %v2370 = vpop.permute.xlu0 %2369
    %v2372 = vsel %vm78, %v2370, 0.0
    %2373 = vrot.lane.b32.xlu0 %v2350, 96
    %v2374 = vpop.permute.xlu0 %2373
    %2377 = vrot.lane.b32.xlu0 %v2372, 32
    %v2378 = vpop.permute.xlu0 %2377
    %v2380 = vsel %vm52, %v2374, %v2378
    %2381 = vrot.lane.b32.xlu0 %v2350, 95
    %v2382 = vpop.permute.xlu0 %2381
    %v2384 = vsel %vm78, %v2382, 0.0
    %2386 = vrot.lane.b32.xlu0 %v2384, 32
    %v2387 = vpop.permute.xlu0 %2386
    %v2389 = vsel %vm52, %v2372, %v2387
    %2390 = vrot.lane.b32.xlu0 %v2350, 65
    %v2391 = vpop.permute.xlu0 %2390
    %v2393 = vsel %vm73, 0.0, %v2391
    %2394 = vrot.lane.b32.xlu0 %v2350, 33
    %v2395 = vpop.permute.xlu0 %2394
    %v2397 = vsel %vm73, 0.0, %v2395
    %2399 = vrot.lane.b32.xlu0 %v2397, 32
    %v2400 = vpop.permute.xlu0 %2399
    %v2402 = vsel %vm52, %v2393, %v2400
    %v2403 = vsel %vm52, %v2397, %v2374
    %2404 = vrot.lane.b32.xlu0 %v2350, 63
    %v2405 = vpop.permute.xlu0 %2404
    %v2407 = vsel %vm78, %v2405, 0.0
    %2409 = vrot.lane.b32.xlu0 %v2407, 32
    %v2410 = vpop.permute.xlu0 %2409
    %v2412 = vsel %vm52, %v2366, %v2410
    %2413 = vrot.lane.b32.xlu0 %v2350, 31
    %v2414 = vpop.permute.xlu0 %2413
    %v2416 = vsel %vm78, %v2414, 0.0
    %2418 = vrot.lane.b32.xlu0 %v2416, 32
    %v2419 = vpop.permute.xlu0 %2418
    %v2421 = vsel %vm52, %v2407, %v2419
    %2422 = vrot.lane.b32.xlu0 %v2350, 64
    %v2423 = vpop.permute.xlu0 %2422
    %2428 = vrot.lane.b32.xlu0 %v2402, 64
    %v2429 = vpop.permute.xlu0 %2428
    %2430 = vrot.lane.b32.xlu0 %v2403, 64
    %v2431 = vpop.permute.xlu0 %2430
    %2432 = vrot.lane.b32.xlu0 %v2423, 64
    %v2433 = vpop.permute.xlu0 %2432
    %2434 = vrot.lane.b32.xlu0 %v2412, 64
    %v2435 = vpop.permute.xlu0 %2434
    %2436 = vrot.lane.b32.xlu0 %v2421, 64
    %v2437 = vpop.permute.xlu0 %2436
    %v2443 = vsel %vm430, %v2364, %v2429
    %v2444 = vsel %vm430, %v2368, %v2431
    %v2445 = vsel %vm430, %v2350, %v2433
    %v2446 = vsel %vm430, %v2380, %v2435
    %v2447 = vsel %vm430, %v2389, %v2437
    %v2448 = vpack.c.bf16 %v2444, %v2443
    %v2449 = vpack.c.bf16 %v2446, %v2445
    %v2450 = vpack.c.bf16 %v2447, %v2447
    %2451 = vset.pattern.permute.xlu0 23
    %2452 = vperm.xlu0 %2451, %v249
    %v2453 = vpop.permute.xlu0 %2452
    %2455 = vrot.lane.b32.xlu0 %v2184, 48
    %v2456 = vpop.permute.xlu0 %2455
    %v2458 = vsel %vm1609, %v2456, 0
    %v2461 = vsel %vm173, %v2450, 0
    %2463 = vmatprep.subr.bf16.mxu0 0
    %2464 = vmatpush1.bf16.msra.mxu0 0
    %2465 = vmatprep.subr.bf16.mxu0 0
    %2466 = vmatpush1.bf16.msra.mxu0 0
    %2467 = vmatprep.subr.bf16.mxu0 0
    %2468 = vmatpush1.bf16.msra.mxu0 0
    %2469 = vmatprep.subr.bf16.mxu0 0
    %2470 = vmatpush1.bf16.msra.mxu0 0
    %2471 = vmatprep.subr.bf16.mxu0 0
    %2472 = vmatpush1.bf16.msra.mxu0 0
    %2473 = vmatprep.subr.bf16.mxu0 0
    %2474 = vmatpush1.bf16.msra.mxu0 %v2461
    %2475 = vmatprep.subr.bf16.mxu0 0
    %2476 = vmatpush1.bf16.msra.mxu0 %v2449
    %2477 = vmatprep.subr.bf16.mxu0 0
    %2478 = vmatpush1.bf16.msra.mxu0 %v2448
    %2479 = vmatprep.subr.bf16.mxu0 0
    %2480 = vmatpush2.bf16.msra.mxu0 0
    %2481 = vmatprep.subr.bf16.mxu0 0
    %2482 = vmatpush2.bf16.msra.mxu0 0
    %2483 = vmatprep.subr.bf16.mxu0 0
    %2484 = vmatpush2.bf16.msra.mxu0 0
    %2485 = vmatprep.subr.bf16.mxu0 0
    %2486 = vmatpush2.bf16.msra.mxu0 0
    %2487 = vmatprep.subr.bf16.mxu0 0
    %2488 = vmatpush2.bf16.msra.mxu0 0
    %2489 = vmatprep.subr.bf16.mxu0 0
    %2490 = vmatpush2.bf16.msra.mxu0 0
    %2491 = vmatprep.subr.bf16.mxu0 0
    %2492 = vmatpush2.bf16.msra.mxu0 0
    %2493 = vmatprep.subr.bf16.mxu0 0
    %2494 = vmatpush2.bf16.msra.mxu0 0
    %2495 = vmatprep.mubr.bf16.mxu0 0
    %2496 = vmatmul.mubr.bf16.gmra.mxu0 %v2458
    %v2497 = vpop.f32.mrf.mxu0
    %v2498 = vadd.f32 %v2453, %v2497
    %v2499 = vpop.f32.mrf.mxu0
    %v2500 = vpop.f32.mrf.mxu0
    %v2501 = vpop.f32.mrf.mxu0
    %2502 = vdwg.mxu0
    %v2503 = vmul.f32 %v2498, %v573
    %v2504 = vadd.f32 %v2503, %v1926
    %v2505 = vmul.f32 %v2504, %v573
    %v2506 = vadd.f32 %v1385, %v2505
    %v2507 = vmul.f32 %v2506, 0.5
    %v2508 = vld [vmem:[%s3 + $0x8] sm:$0xff]
    %v2509 = vld [vmem:[%s3 + $0xc] sm:$0xf]
    %2511 = vrot.lane.b32.xlu0 %v2507, 97
    %v2512 = vpop.permute.xlu0 %2511
    %v2514 = vsel %vm73, 0.0, %v2512
    %2515 = vrot.lane.b32.xlu0 %v2507, 32
    %v2516 = vpop.permute.xlu0 %2515
    %v2518 = vsel %vm52, %v2514, %v2516
    %2519 = vrot.lane.b32.xlu0 %v2507, 33
    %v2520 = vpop.permute.xlu0 %2519
    %v2522 = vsel %vm73, 0.0, %v2520
    %2523 = vrot.lane.b32.xlu0 %v2507, 96
    %v2524 = vpop.permute.xlu0 %2523
    %v2526 = vsel %vm52, %v2522, %v2524
    %2528 = vrot.lane.b32.xlu0 %v2526, 64
    %v2529 = vpop.permute.xlu0 %2528
    %v2531 = vsel %vm430, %v2518, %v2529
    %v2532 = vpack.c.bf16 %v2531, %v2507
    %2533 = vset.pattern.permute.xlu0 26
    %2534 = vperm.xlu0 %2533, %v249
    %v2535 = vpop.permute.xlu0 %2534
    %v2538 = vunpack.c.l.b16 %v2508
    %v2539 = vunpack.c.h.b16 %v2508
    %v2540 = vpack.c.b16 %v2538, %v2538
    %v2541 = vpack.c.b16 %v2539, %v2539
    %2542 = vrot.lane.b32.xlu0 %v2540, 8
    %v2543 = vpop.permute.xlu0 %2542
    %2544 = vrot.lane.b32.xlu0 %v2541, 8
    %v2545 = vpop.permute.xlu0 %2544
    %v2546 = vsel %vm642, %v2543, %v2545
    %vm2547 = vcmask 130048
    %v2549 = vsel %vm2547, %v2546, 0
    %2551 = vmatprep.subr.bf16.mxu0 0
    %2552 = vmatpush1.bf16.msra.mxu0 0
    %2553 = vmatprep.subr.bf16.mxu0 0
    %2554 = vmatpush1.bf16.msra.mxu0 0
    %2555 = vmatprep.subr.bf16.mxu0 0
    %2556 = vmatpush1.bf16.msra.mxu0 0
    %2557 = vmatprep.subr.bf16.mxu0 0
    %2558 = vmatpush1.bf16.msra.mxu0 0
    %2559 = vmatprep.subr.bf16.mxu0 0
    %2560 = vmatpush1.bf16.msra.mxu0 0
    %2561 = vmatprep.subr.bf16.mxu0 0
    %2562 = vmatpush1.bf16.msra.mxu0 0
    %2563 = vmatprep.subr.bf16.mxu0 0
    %2564 = vmatpush1.bf16.msra.mxu0 0
    %2565 = vmatprep.subr.bf16.mxu0 0
    %2566 = vmatpush1.bf16.msra.mxu0 %v2532
    %2567 = vmatprep.subr.bf16.mxu0 0
    %2568 = vmatpush2.bf16.msra.mxu0 0
    %2569 = vmatprep.subr.bf16.mxu0 0
    %2570 = vmatpush2.bf16.msra.mxu0 0
    %2571 = vmatprep.subr.bf16.mxu0 0
    %2572 = vmatpush2.bf16.msra.mxu0 0
    %2573 = vmatprep.subr.bf16.mxu0 0
    %2574 = vmatpush2.bf16.msra.mxu0 0
    %2575 = vmatprep.subr.bf16.mxu0 0
    %2576 = vmatpush2.bf16.msra.mxu0 0
    %2577 = vmatprep.subr.bf16.mxu0 0
    %2578 = vmatpush2.bf16.msra.mxu0 0
    %2579 = vmatprep.subr.bf16.mxu0 0
    %2580 = vmatpush2.bf16.msra.mxu0 0
    %2581 = vmatprep.subr.bf16.mxu0 0
    %2582 = vmatpush2.bf16.msra.mxu0 0
    %2583 = vmatprep.mubr.bf16.mxu0 0
    %2584 = vmatmul.mubr.bf16.gmra.mxu0 %v2549
    %v2585 = vpop.f32.mrf.mxu0
    %v2586 = vadd.f32 %v2535, %v2585
    %v2587 = vpop.f32.mrf.mxu0
    %v2588 = vpop.f32.mrf.mxu0
    %v2589 = vpop.f32.mrf.mxu0
    %2590 = vdwg.mxu0
    %2591 = vrot.lane.b32.xlu0 %v2507, 127
    %v2592 = vpop.permute.xlu0 %2591
    %v2594 = vsel %vm78, %v2592, 0.0
    %2596 = vrot.lane.b32.xlu0 %v2594, 32
    %v2597 = vpop.permute.xlu0 %2596
    %v2599 = vsel %vm52, %v2524, %v2597
    %2600 = vrot.lane.b32.xlu0 %v2507, 63
    %v2601 = vpop.permute.xlu0 %2600
    %v2603 = vsel %vm78, %v2601, 0.0
    %2605 = vrot.lane.b32.xlu0 %v2603, 32
    %v2606 = vpop.permute.xlu0 %2605
    %v2608 = vsel %vm52, %v2516, %v2606
    %2609 = vrot.lane.b32.xlu0 %v2507, 64
    %v2610 = vpop.permute.xlu0 %2609
    %2612 = vrot.lane.b32.xlu0 %v2608, 64
    %v2613 = vpop.permute.xlu0 %2612
    %2614 = vrot.lane.b32.xlu0 %v2610, 64
    %v2615 = vpop.permute.xlu0 %2614
    %v2618 = vsel %vm430, %v2599, %v2613
    %v2619 = vsel %vm430, %v2507, %v2615
    %v2620 = vpack.c.bf16 %v2619, %v2618
    %v2622 = vunpack.c.l.b16 %v2509
    %v2623 = vpack.c.b16 %v2622, %v2622
    %2624 = vrot.lane.b32.xlu0 %v2623, 120
    %v2625 = vpop.permute.xlu0 %2624
    %v2627 = vsel %vm2547, %v2625, 0
    %2629 = vmatprep.subr.bf16.mxu0 0
    %2630 = vmatpush1.bf16.msra.mxu0 0
    %2631 = vmatprep.subr.bf16.mxu0 0
    %2632 = vmatpush1.bf16.msra.mxu0 0
    %2633 = vmatprep.subr.bf16.mxu0 0
    %2634 = vmatpush1.bf16.msra.mxu0 0
    %2635 = vmatprep.subr.bf16.mxu0 0
    %2636 = vmatpush1.bf16.msra.mxu0 0
    %2637 = vmatprep.subr.bf16.mxu0 0
    %2638 = vmatpush1.bf16.msra.mxu0 0
    %2639 = vmatprep.subr.bf16.mxu0 0
    %2640 = vmatpush1.bf16.msra.mxu0 0
    %2641 = vmatprep.subr.bf16.mxu0 0
    %2642 = vmatpush1.bf16.msra.mxu0 0
    %2643 = vmatprep.subr.bf16.mxu0 0
    %2644 = vmatpush1.bf16.msra.mxu0 %v2620
    %2645 = vmatprep.subr.bf16.mxu0 0
    %2646 = vmatpush2.bf16.msra.mxu0 0
    %2647 = vmatprep.subr.bf16.mxu0 0
    %2648 = vmatpush2.bf16.msra.mxu0 0
    %2649 = vmatprep.subr.bf16.mxu0 0
    %2650 = vmatpush2.bf16.msra.mxu0 0
    %2651 = vmatprep.subr.bf16.mxu0 0
    %2652 = vmatpush2.bf16.msra.mxu0 0
    %2653 = vmatprep.subr.bf16.mxu0 0
    %2654 = vmatpush2.bf16.msra.mxu0 0
    %2655 = vmatprep.subr.bf16.mxu0 0
    %2656 = vmatpush2.bf16.msra.mxu0 0
    %2657 = vmatprep.subr.bf16.mxu0 0
    %2658 = vmatpush2.bf16.msra.mxu0 0
    %2659 = vmatprep.subr.bf16.mxu0 0
    %2660 = vmatpush2.bf16.msra.mxu0 0
    %2661 = vmatprep.mubr.bf16.mxu0 0
    %2662 = vmatmul.mubr.bf16.gmra.mxu0 %v2627
    %v2663 = vpop.f32.mrf.mxu0
    %v2664 = vadd.f32 %v2535, %v2663
    %v2665 = vpop.f32.mrf.mxu0
    %v2666 = vpop.f32.mrf.mxu0
    %v2667 = vpop.f32.mrf.mxu0
    %2668 = vdwg.mxu0
    %2670 = vrot.lane.b32.xlu0 %v2664, 64
    %v2671 = vpop.permute.xlu0 %2670
    %2674 = vrot.lane.b32.xlu0 %v2586, 64
    %v2675 = vpop.permute.xlu0 %2674
    %v2677 = vsel %vm430, %v2586, %v2671
    %v2678 = vsel %vm430, %v2675, %v2664
    %v2679 = vmul.u32 %v438, 2
    %v2680 = vadd.s32 %v2679, 1
    %2681 = vrot.lane.b32.xlu0 %v2680, 64
    %v2682 = vpop.permute.xlu0 %2681
    %v2683 = vsel %vm430, %v2679, %v2682
    %s2684 = smul.u32 %s36, 4
    %v2685 = vstv %s2684
    %vm2686 = vcmp.lt.s32.totalorder %v2683, %v2685
    %v2687 = vsel %vm2686, 1, 0
    %v2688 = vcvt.s32.f32 %v2687
    %s2689 = smul.u32 %s37, 4
    %v2690 = vstv %s2689
    %vm2691 = vcmp.lt.s32.totalorder %v2683, %v2690
    %v2692 = vsel %vm2691, 1, 0
    %v2693 = vcvt.s32.f32 %v2692
    %2694 = vset.pattern.permute.xlu0 28
    %2695 = vperm.xlu0 %2694, %v249
    %v2696 = vpop.permute.xlu0 %2695
    %v2698 = vmul.f32 %v2696, %v2677
    %v2699 = vmul.f32 %v2696, %v2678
    %v2700 = vand.u32 2147483647, %v2698
    %vm2701 = vcmp.le.f32.partialorder %v2700, 0.7853982
    %vm2702 = vcmp.lt.s32.totalorder %v2698, 0
    %v2703 = vand.u32 %v2698, 2139095040
    %v2704 = vshrl.u32 %v2703, 23
    %v2705 = vsub.s32 %v2704, 127
    %v2706 = vand.u32 2147483647, %v2698
    %v2707 = vand.u32 %v2706, 8388607
    %v2708 = vor.u32 %v2707, 8388608
    %v2709 = vsub.s32 0, %v2708
    %v2710 = vadd.s32 %v2705, 1
    %vm2711 = vcmp.gt.s32.totalorder %v2710, 0
    %v2712 = vsel %vm2711, %v2710, 0
    %v2713 = vshrl.u32 %v2712, 5
    %v2714 = vand.u32 %v2712, 31
    %v2715 = vsub.s32 32, %v2714
    %v2716 = vshrl.u32 683565275, %v2715
    %v2717 = vshll.u32 683565275, %v2714
    %v2718 = vshrl.u32 2475754826, %v2715
    %v2719 = vor.u32 %v2717, %v2718
    %v2720 = vshll.u32 2475754826, %v2714
    %v2721 = vshrl.u32 2131351028, %v2715
    %v2722 = vor.u32 %v2720, %v2721
    %v2723 = vshll.u32 2131351028, %v2714
    %v2724 = vshrl.u32 2102212464, %v2715
    %v2725 = vor.u32 %v2723, %v2724
    %v2726 = vshll.u32 2102212464, %v2714
    %v2727 = vshrl.u32 920167782, %v2715
    %v2728 = vor.u32 %v2726, %v2727
    %v2729 = vshll.u32 920167782, %v2714
    %v2730 = vshrl.u32 1326507024, %v2715
    %v2731 = vor.u32 %v2729, %v2730
    %vm2732 = vcmp.lt.s32.totalorder %v2713, 1
    %vm2733 = vcmp.lt.s32.totalorder %v2713, 2
    %vm2734 = vcmp.lt.s32.totalorder %v2713, 3
    %vm2735 = vcmp.lt.s32.totalorder %v2713, 4
    %v2736 = vsel %vm2732, %v2716, %v2719
    %v2737 = vsel %vm2735, %v2725, 2102212464
    %v2738 = vsel %vm2734, %v2722, %v2737
    %v2739 = vsel %vm2733, %v2736, %v2738
    %v2740 = vsel %vm2732, %v2719, %v2722
    %v2741 = vsel %vm2735, %v2728, 920167782
    %v2742 = vsel %vm2734, %v2725, %v2741
    %v2743 = vsel %vm2733, %v2740, %v2742
    %v2744 = vsel %vm2732, %v2722, %v2725
    %v2745 = vsel %vm2735, %v2731, 1326507024
    %v2746 = vsel %vm2734, %v2728, %v2745
    %v2747 = vsel %vm2733, %v2744, %v2746
    %v2748 = vshll.u32 %v2708, 8
    %v2749 = vmul.u32.u64.compose %v2748, %v2747
    %v2750 = vextract.low.u32 %v2749
    %v2751 = vextract.high.u32 %v2749
    %v2752 = vmul.u32.u64.compose %v2748, %v2743
    %v2753 = vextract.low.u32 %v2752
    %v2754 = vextract.high.u32 %v2752
    %v2755 = vmul.u32 %v2748, %v2739
    %v2756 = vadd.s32 %v2751, %v2753
    %vm2757 = vc.u32 %v2751, %v2753
    %v2758 = vadd.s32 %v2754, 1
    %v2759 = vsel %vm2757, %v2758, %v2754
    %v2760 = vadd.s32 %v2755, %v2759
    %v2761 = vadd.s32 %v2760, 536870912
    %v2762 = vshrl.u32 %v2761, 30
    %v2763 = vshll.u32 %v2762, 30
    %v2764 = vsub.s32 %v2760, %v2763
    %vm2765 = vcmp.lt.s32.totalorder %v2764, 0
    %v2766 = vsub.s32 0, %v2764
    %v2767 = vsel %vm2765, %v2766, %v2764
    %v2768 = vclz %v2767
    %v2769 = vsub.s32 %v2768, 2
    %vm2770 = vcmp.gt.s32.totalorder 0, %v2769
    %v2771 = vsel %vm2770, 0, %v2769
    %v2772 = vsub.s32 32, %v2771
    %v2773 = vshll.u32 %v2764, %v2771
    %v2774 = vshrl.u32 %v2756, %v2772
    %v2775 = vor.u32 %v2773, %v2774
    %v2776 = vsub.s32 4294967266, %v2771
    %v2777 = vadd.s32 %v2776, 127
    %v2778 = vshll.u32 %v2777, 23
    %v2779 = vor.u32 4788187, %v2778
    %v2780 = vand.u32 2147483647, %v2779
    %v2782 = vcvt.s32.f32 %v2775
    %v2783 = vmul.f32 %v2782, %v2780
    %v2784 = vxor.u32 %v2783, 2147483648
    %v2785 = vsel %vm2702, %v2784, %v2783
    %v2786 = vsub.s32 4, %v2762
    %v2787 = vsel %vm2702, %v2786, %v2762
    %v2788 = vsel %vm2701, %v2698, %v2785
    %v2789 = vsel %vm2701, 0, %v2787
    %v2790 = vcosq.f32.pop %v2788
    %v2791 = vsinq.f32.pop %v2788
    %vm2792 = vweird.f32 %v2698
    %v2793 = vadd.s32 %v2789, 3
    %v2794 = vand.u32 %v2793, 3
    %vm2795 = vcmp.lt.s32.totalorder %v2794, 2
    %vm2796 = vcmp.eq.s32.totalorder %v2794, 0
    %v2797 = vxor.u32 %v2791, 2147483648
    %v2798 = vsel %vm2796, %v2790, %v2797
    %vm2799 = vcmp.eq.s32.totalorder %v2794, 2
    %v2800 = vxor.u32 %v2790, 2147483648
    %v2801 = vsel %vm2799, %v2800, %v2791
    %v2802 = vsel %vm2795, %v2798, %v2801
    %v2803 = vsel %vm2792, nan, %v2802
    %v2804 = vand.u32 2147483647, %v2699
    %vm2805 = vcmp.le.f32.partialorder %v2804, 0.7853982
    %vm2806 = vcmp.lt.s32.totalorder %v2699, 0
    %v2807 = vand.u32 %v2699, 2139095040
    %v2808 = vshrl.u32 %v2807, 23
    %v2809 = vsub.s32 %v2808, 127
    %v2810 = vand.u32 2147483647, %v2699
    %v2811 = vand.u32 %v2810, 8388607
    %v2812 = vor.u32 %v2811, 8388608
    %v2813 = vsub.s32 0, %v2812
    %v2814 = vadd.s32 %v2809, 1
    %vm2815 = vcmp.gt.s32.totalorder %v2814, 0
    %v2816 = vsel %vm2815, %v2814, 0
    %v2817 = vshrl.u32 %v2816, 5
    %v2818 = vand.u32 %v2816, 31
    %v2819 = vsub.s32 32, %v2818
    %v2820 = vshrl.u32 683565275, %v2819
    %v2821 = vshll.u32 683565275, %v2818
    %v2822 = vshrl.u32 2475754826, %v2819
    %v2823 = vor.u32 %v2821, %v2822
    %v2824 = vshll.u32 2475754826, %v2818
    %v2825 = vshrl.u32 2131351028, %v2819
    %v2826 = vor.u32 %v2824, %v2825
    %v2827 = vshll.u32 2131351028, %v2818
    %v2828 = vshrl.u32 2102212464, %v2819
    %v2829 = vor.u32 %v2827, %v2828
    %v2830 = vshll.u32 2102212464, %v2818
    %v2831 = vshrl.u32 920167782, %v2819
    %v2832 = vor.u32 %v2830, %v2831
    %v2833 = vshll.u32 920167782, %v2818
    %v2834 = vshrl.u32 1326507024, %v2819
    %v2835 = vor.u32 %v2833, %v2834
    %vm2836 = vcmp.lt.s32.totalorder %v2817, 1
    %vm2837 = vcmp.lt.s32.totalorder %v2817, 2
    %vm2838 = vcmp.lt.s32.totalorder %v2817, 3
    %vm2839 = vcmp.lt.s32.totalorder %v2817, 4
    %v2840 = vsel %vm2836, %v2820, %v2823
    %v2841 = vsel %vm2839, %v2829, 2102212464
    %v2842 = vsel %vm2838, %v2826, %v2841
    %v2843 = vsel %vm2837, %v2840, %v2842
    %v2844 = vsel %vm2836, %v2823, %v2826
    %v2845 = vsel %vm2839, %v2832, 920167782
    %v2846 = vsel %vm2838, %v2829, %v2845
    %v2847 = vsel %vm2837, %v2844, %v2846
    %v2848 = vsel %vm2836, %v2826, %v2829
    %v2849 = vsel %vm2839, %v2835, 1326507024
    %v2850 = vsel %vm2838, %v2832, %v2849
    %v2851 = vsel %vm2837, %v2848, %v2850
    %v2852 = vshll.u32 %v2812, 8
    %v2853 = vmul.u32.u64.compose %v2852, %v2851
    %v2854 = vextract.low.u32 %v2853
    %v2855 = vextract.high.u32 %v2853
    %v2856 = vmul.u32.u64.compose %v2852, %v2847
    %v2857 = vextract.low.u32 %v2856
    %v2858 = vextract.high.u32 %v2856
    %v2859 = vmul.u32 %v2852, %v2843
    %v2860 = vadd.s32 %v2855, %v2857
    %vm2861 = vc.u32 %v2855, %v2857
    %v2862 = vadd.s32 %v2858, 1
    %v2863 = vsel %vm2861, %v2862, %v2858
    %v2864 = vadd.s32 %v2859, %v2863
    %v2865 = vadd.s32 %v2864, 536870912
    %v2866 = vshrl.u32 %v2865, 30
    %v2867 = vshll.u32 %v2866, 30
    %v2868 = vsub.s32 %v2864, %v2867
    %vm2869 = vcmp.lt.s32.totalorder %v2868, 0
    %v2870 = vsub.s32 0, %v2868
    %v2871 = vsel %vm2869, %v2870, %v2868
    %v2872 = vclz %v2871
    %v2873 = vsub.s32 %v2872, 2
    %vm2874 = vcmp.gt.s32.totalorder 0, %v2873
    %v2875 = vsel %vm2874, 0, %v2873
    %v2876 = vsub.s32 32, %v2875
    %v2877 = vshll.u32 %v2868, %v2875
    %v2878 = vshrl.u32 %v2860, %v2876
    %v2879 = vor.u32 %v2877, %v2878
    %v2880 = vsub.s32 4294967266, %v2875
    %v2881 = vadd.s32 %v2880, 127
    %v2882 = vshll.u32 %v2881, 23
    %v2883 = vor.u32 4788187, %v2882
    %v2884 = vand.u32 2147483647, %v2883
    %v2886 = vcvt.s32.f32 %v2879
    %v2887 = vmul.f32 %v2886, %v2884
    %v2888 = vxor.u32 %v2887, 2147483648
    %v2889 = vsel %vm2806, %v2888, %v2887
    %v2890 = vsub.s32 4, %v2866
    %v2891 = vsel %vm2806, %v2890, %v2866
    %v2892 = vsel %vm2805, %v2699, %v2889
    %v2893 = vsel %vm2805, 0, %v2891
    %v2894 = vcosq.f32.pop %v2892
    %v2895 = vsinq.f32.pop %v2892
    %vm2896 = vweird.f32 %v2699
    %v2897 = vadd.s32 %v2893, 3
    %v2898 = vand.u32 %v2897, 3
    %vm2899 = vcmp.lt.s32.totalorder %v2898, 2
    %vm2900 = vcmp.eq.s32.totalorder %v2898, 0
    %v2901 = vxor.u32 %v2895, 2147483648
    %v2902 = vsel %vm2900, %v2894, %v2901
    %vm2903 = vcmp.eq.s32.totalorder %v2898, 2
    %v2904 = vxor.u32 %v2894, 2147483648
    %v2905 = vsel %vm2903, %v2904, %v2895
    %v2906 = vsel %vm2899, %v2902, %v2905
    %v2907 = vsel %vm2896, nan, %v2906
    %v2908 = vmul.f32 %v2803, %v2803
    %v2909 = vmul.f32 %v2907, %v2907
    %2910 = vset.pattern.permute.xlu0 29
    %2911 = vperm.xlu0 %2910, %v249
    %v2912 = vpop.permute.xlu0 %2911
    %v2914 = vmul.f32 %v2912, %v2908
    %v2915 = vmul.f32 %v2912, %v2909
    %v2916 = vadd.f32 %v2677, %v2914
    %v2917 = vadd.f32 %v2678, %v2915
    %v2918 = vlaneseq
    %v2919 = vshrl.u32 %v2918, 7
    %v2920 = vsub.s32 0, %v2919
    %v2921 = vrot.slane %v2688, %v2920
    %v2922 = vlaneseq
    %v2923 = vshrl.u32 %v2922, 7
    %v2924 = vsub.s32 0, %v2923
    %v2925 = vrot.slane %v2693, %v2924
    %v2926 = vmul.f32 %v2916, %v2921
    %v2927 = vmul.f32 %v2917, %v2925
    %2929 = vrot.lane.b32.xlu0 %v2926, 33
    %v2930 = vpop.permute.xlu0 %2929
    %v2932 = vsel %vm73, 0.0, %v2930
    %2933 = vrot.lane.b32.xlu0 %v2926, 96
    %v2934 = vpop.permute.xlu0 %2933
    %v2936 = vsel %vm52, %v2932, %v2934
    %2937 = vrot.lane.b32.xlu0 %v2926, 64
    %v2938 = vpop.permute.xlu0 %2937
    %v2940 = vsel %vm430, %v2936, %v2938
    %2941 = vrot.lane.b32.xlu0 %v2926, 127
    %v2942 = vpop.permute.xlu0 %2941
    %v2944 = vsel %vm78, %v2942, 0.0
    %2946 = vrot.lane.b32.xlu0 %v2944, 32
    %v2947 = vpop.permute.xlu0 %2946
    %v2949 = vsel %vm52, %v2934, %v2947
    %2951 = vrot.lane.b32.xlu0 %v2949, 64
    %v2952 = vpop.permute.xlu0 %2951
    %v2954 = vsel %vm430, %v2938, %v2952
    %2956 = vrot.lane.b32.xlu0 %v2927, 33
    %v2957 = vpop.permute.xlu0 %2956
    %v2959 = vsel %vm73, 0.0, %v2957
    %2960 = vrot.lane.b32.xlu0 %v2927, 96
    %v2961 = vpop.permute.xlu0 %2960
    %v2963 = vsel %vm52, %v2959, %v2961
    %2964 = vrot.lane.b32.xlu0 %v2927, 64
    %v2965 = vpop.permute.xlu0 %2964
    %v2967 = vsel %vm430, %v2963, %v2965
    %2968 = vrot.lane.b32.xlu0 %v2927, 127
    %v2969 = vpop.permute.xlu0 %2968
    %v2971 = vsel %vm78, %v2969, 0.0
    %2973 = vrot.lane.b32.xlu0 %v2971, 32
    %v2974 = vpop.permute.xlu0 %2973
    %v2976 = vsel %vm52, %v2961, %v2974
    %2978 = vrot.lane.b32.xlu0 %v2976, 64
    %v2979 = vpop.permute.xlu0 %2978
    %v2981 = vsel %vm430, %v2965, %v2979
    %v2982 = vpack.c.bf16 %v2926, %v2940
    %v2983 = vpack.c.bf16 %v2927, %v2967
    %v2984 = vpack.c.bf16 %v2954, %v2954
    %v2985 = vpack.c.bf16 %v2981, %v2981
    %2986 = vset.pattern.permute.xlu0 27
    %2987 = vperm.xlu0 %2986, %v249
    %v2988 = vpop.permute.xlu0 %2987
    %2990 = vrot.lane.b32.xlu0 %v2623, 104
    %v2991 = vpop.permute.xlu0 %2990
    %v2993 = vsel %vm644, %v2991, 0
    %v2996 = vsel %vm173, %v2984, 0
    %v2999 = vsel %vm173, %v2985, 0
    %3001 = vmatprep.subr.bf16.mxu0 0
    %3002 = vmatpush1.bf16.msra.mxu0 0
    %3003 = vmatprep.subr.bf16.mxu0 0
    %3004 = vmatpush1.bf16.msra.mxu0 0
    %3005 = vmatprep.subr.bf16.mxu0 0
    %3006 = vmatpush1.bf16.msra.mxu0 0
    %3007 = vmatprep.subr.bf16.mxu0 0
    %3008 = vmatpush1.bf16.msra.mxu0 0
    %3009 = vmatprep.subr.bf16.mxu0 0
    %3010 = vmatpush1.bf16.msra.mxu0 0
    %3011 = vmatprep.subr.bf16.mxu0 0
    %3012 = vmatpush1.bf16.msra.mxu0 0
    %3013 = vmatprep.subr.bf16.mxu0 %v2999
    %3014 = vmatpush1.bf16.msra.mxu0 %v2996
    %3015 = vmatprep.subr.bf16.mxu0 %v2983
    %3016 = vmatpush1.bf16.msra.mxu0 %v2982
    %3017 = vmatprep.subr.bf16.mxu0 0
    %3018 = vmatpush2.bf16.msra.mxu0 0
    %3019 = vmatprep.subr.bf16.mxu0 0
    %3020 = vmatpush2.bf16.msra.mxu0 0
    %3021 = vmatprep.subr.bf16.mxu0 0
    %3022 = vmatpush2.bf16.msra.mxu0 0
    %3023 = vmatprep.subr.bf16.mxu0 0
    %3024 = vmatpush2.bf16.msra.mxu0 0
    %3025 = vmatprep.subr.bf16.mxu0 0
    %3026 = vmatpush2.bf16.msra.mxu0 0
    %3027 = vmatprep.subr.bf16.mxu0 0
    %3028 = vmatpush2.bf16.msra.mxu0 0
    %3029 = vmatprep.subr.bf16.mxu0 0
    %3030 = vmatpush2.bf16.msra.mxu0 0
    %3031 = vmatprep.subr.bf16.mxu0 0
    %3032 = vmatpush2.bf16.msra.mxu0 0
    %3033 = vmatprep.mubr.bf16.mxu0 0
    %3034 = vmatmul.mubr.bf16.gmra.mxu0 %v2993
    %v3035 = vpop.f32.mrf.mxu0
    %v3036 = vadd.f32 %v2988, %v3035
    %v3037 = vpop.f32.mrf.mxu0
    %v3038 = vadd.f32 %v2988, %v3037
    %v3039 = vpop.f32.mrf.mxu0
    %v3040 = vpop.f32.mrf.mxu0
    %3041 = vdwg.mxu0
    %v3042 = vmul.f32 %v3036, %v2921
    %v3043 = vmul.f32 %v3038, %v2925
    %3044 = vset.pattern.permute.xlu0 31
    %3045 = vperm.xlu0 %3044, %v249
    %v3046 = vpop.permute.xlu0 %3045
    %v3048 = vmul.f32 %v3046, %v3042
    %v3049 = vmul.f32 %v3046, %v3043
    %v3050 = vand.u32 2147483647, %v3048
    %vm3051 = vcmp.le.f32.partialorder %v3050, 0.7853982
    %vm3052 = vcmp.lt.s32.totalorder %v3048, 0
    %v3053 = vand.u32 %v3048, 2139095040
    %v3054 = vshrl.u32 %v3053, 23
    %v3055 = vsub.s32 %v3054, 127
    %v3056 = vand.u32 2147483647, %v3048
    %v3057 = vand.u32 %v3056, 8388607
    %v3058 = vor.u32 %v3057, 8388608
    %v3059 = vsub.s32 0, %v3058
    %v3060 = vadd.s32 %v3055, 1
    %vm3061 = vcmp.gt.s32.totalorder %v3060, 0
    %v3062 = vsel %vm3061, %v3060, 0
    %v3063 = vshrl.u32 %v3062, 5
    %v3064 = vand.u32 %v3062, 31
    %v3065 = vsub.s32 32, %v3064
    %v3066 = vshrl.u32 683565275, %v3065
    %v3067 = vshll.u32 683565275, %v3064
    %v3068 = vshrl.u32 2475754826, %v3065
    %v3069 = vor.u32 %v3067, %v3068
    %v3070 = vshll.u32 2475754826, %v3064
    %v3071 = vshrl.u32 2131351028, %v3065
    %v3072 = vor.u32 %v3070, %v3071
    %v3073 = vshll.u32 2131351028, %v3064
    %v3074 = vshrl.u32 2102212464, %v3065
    %v3075 = vor.u32 %v3073, %v3074
    %v3076 = vshll.u32 2102212464, %v3064
    %v3077 = vshrl.u32 920167782, %v3065
    %v3078 = vor.u32 %v3076, %v3077
    %v3079 = vshll.u32 920167782, %v3064
    %v3080 = vshrl.u32 1326507024, %v3065
    %v3081 = vor.u32 %v3079, %v3080
    %vm3082 = vcmp.lt.s32.totalorder %v3063, 1
    %vm3083 = vcmp.lt.s32.totalorder %v3063, 2
    %vm3084 = vcmp.lt.s32.totalorder %v3063, 3
    %vm3085 = vcmp.lt.s32.totalorder %v3063, 4
    %v3086 = vsel %vm3082, %v3066, %v3069
    %v3087 = vsel %vm3085, %v3075, 2102212464
    %v3088 = vsel %vm3084, %v3072, %v3087
    %v3089 = vsel %vm3083, %v3086, %v3088
    %v3090 = vsel %vm3082, %v3069, %v3072
    %v3091 = vsel %vm3085, %v3078, 920167782
    %v3092 = vsel %vm3084, %v3075, %v3091
    %v3093 = vsel %vm3083, %v3090, %v3092
    %v3094 = vsel %vm3082, %v3072, %v3075
    %v3095 = vsel %vm3085, %v3081, 1326507024
    %v3096 = vsel %vm3084, %v3078, %v3095
    %v3097 = vsel %vm3083, %v3094, %v3096
    %v3098 = vshll.u32 %v3058, 8
    %v3099 = vmul.u32.u64.compose %v3098, %v3097
    %v3100 = vextract.low.u32 %v3099
    %v3101 = vextract.high.u32 %v3099
    %v3102 = vmul.u32.u64.compose %v3098, %v3093
    %v3103 = vextract.low.u32 %v3102
    %v3104 = vextract.high.u32 %v3102
    %v3105 = vmul.u32 %v3098, %v3089
    %v3106 = vadd.s32 %v3101, %v3103
    %vm3107 = vc.u32 %v3101, %v3103
    %v3108 = vadd.s32 %v3104, 1
    %v3109 = vsel %vm3107, %v3108, %v3104
    %v3110 = vadd.s32 %v3105, %v3109
    %v3111 = vadd.s32 %v3110, 536870912
    %v3112 = vshrl.u32 %v3111, 30
    %v3113 = vshll.u32 %v3112, 30
    %v3114 = vsub.s32 %v3110, %v3113
    %vm3115 = vcmp.lt.s32.totalorder %v3114, 0
    %v3116 = vsub.s32 0, %v3114
    %v3117 = vsel %vm3115, %v3116, %v3114
    %v3118 = vclz %v3117
    %v3119 = vsub.s32 %v3118, 2
    %vm3120 = vcmp.gt.s32.totalorder 0, %v3119
    %v3121 = vsel %vm3120, 0, %v3119
    %v3122 = vsub.s32 32, %v3121
    %v3123 = vshll.u32 %v3114, %v3121
    %v3124 = vshrl.u32 %v3106, %v3122
    %v3125 = vor.u32 %v3123, %v3124
    %v3126 = vsub.s32 4294967266, %v3121
    %v3127 = vadd.s32 %v3126, 127
    %v3128 = vshll.u32 %v3127, 23
    %v3129 = vor.u32 4788187, %v3128
    %v3130 = vand.u32 2147483647, %v3129
    %v3132 = vcvt.s32.f32 %v3125
    %v3133 = vmul.f32 %v3132, %v3130
    %v3134 = vxor.u32 %v3133, 2147483648
    %v3135 = vsel %vm3052, %v3134, %v3133
    %v3136 = vsub.s32 4, %v3112
    %v3137 = vsel %vm3052, %v3136, %v3112
    %v3138 = vsel %vm3051, %v3048, %v3135
    %v3139 = vsel %vm3051, 0, %v3137
    %v3140 = vcosq.f32.pop %v3138
    %v3141 = vsinq.f32.pop %v3138
    %vm3142 = vweird.f32 %v3048
    %v3143 = vadd.s32 %v3139, 3
    %v3144 = vand.u32 %v3143, 3
    %vm3145 = vcmp.lt.s32.totalorder %v3144, 2
    %vm3146 = vcmp.eq.s32.totalorder %v3144, 0
    %v3147 = vxor.u32 %v3141, 2147483648
    %v3148 = vsel %vm3146, %v3140, %v3147
    %vm3149 = vcmp.eq.s32.totalorder %v3144, 2
    %v3150 = vxor.u32 %v3140, 2147483648
    %v3151 = vsel %vm3149, %v3150, %v3141
    %v3152 = vsel %vm3145, %v3148, %v3151
    %v3153 = vsel %vm3142, nan, %v3152
    %v3154 = vand.u32 2147483647, %v3049
    %vm3155 = vcmp.le.f32.partialorder %v3154, 0.7853982
    %vm3156 = vcmp.lt.s32.totalorder %v3049, 0
    %v3157 = vand.u32 %v3049, 2139095040
    %v3158 = vshrl.u32 %v3157, 23
    %v3159 = vsub.s32 %v3158, 127
    %v3160 = vand.u32 2147483647, %v3049
    %v3161 = vand.u32 %v3160, 8388607
    %v3162 = vor.u32 %v3161, 8388608
    %v3163 = vsub.s32 0, %v3162
    %v3164 = vadd.s32 %v3159, 1
    %vm3165 = vcmp.gt.s32.totalorder %v3164, 0
    %v3166 = vsel %vm3165, %v3164, 0
    %v3167 = vshrl.u32 %v3166, 5
    %v3168 = vand.u32 %v3166, 31
    %v3169 = vsub.s32 32, %v3168
    %v3170 = vshrl.u32 683565275, %v3169
    %v3171 = vshll.u32 683565275, %v3168
    %v3172 = vshrl.u32 2475754826, %v3169
    %v3173 = vor.u32 %v3171, %v3172
    %v3174 = vshll.u32 2475754826, %v3168
    %v3175 = vshrl.u32 2131351028, %v3169
    %v3176 = vor.u32 %v3174, %v3175
    %v3177 = vshll.u32 2131351028, %v3168
    %v3178 = vshrl.u32 2102212464, %v3169
    %v3179 = vor.u32 %v3177, %v3178
    %v3180 = vshll.u32 2102212464, %v3168
    %v3181 = vshrl.u32 920167782, %v3169
    %v3182 = vor.u32 %v3180, %v3181
    %v3183 = vshll.u32 920167782, %v3168
    %v3184 = vshrl.u32 1326507024, %v3169
    %v3185 = vor.u32 %v3183, %v3184
    %vm3186 = vcmp.lt.s32.totalorder %v3167, 1
    %vm3187 = vcmp.lt.s32.totalorder %v3167, 2
    %vm3188 = vcmp.lt.s32.totalorder %v3167, 3
    %vm3189 = vcmp.lt.s32.totalorder %v3167, 4
    %v3190 = vsel %vm3186, %v3170, %v3173
    %v3191 = vsel %vm3189, %v3179, 2102212464
    %v3192 = vsel %vm3188, %v3176, %v3191
    %v3193 = vsel %vm3187, %v3190, %v3192
    %v3194 = vsel %vm3186, %v3173, %v3176
    %v3195 = vsel %vm3189, %v3182, 920167782
    %v3196 = vsel %vm3188, %v3179, %v3195
    %v3197 = vsel %vm3187, %v3194, %v3196
    %v3198 = vsel %vm3186, %v3176, %v3179
    %v3199 = vsel %vm3189, %v3185, 1326507024
    %v3200 = vsel %vm3188, %v3182, %v3199
    %v3201 = vsel %vm3187, %v3198, %v3200
    %v3202 = vshll.u32 %v3162, 8
    %v3203 = vmul.u32.u64.compose %v3202, %v3201
    %v3204 = vextract.low.u32 %v3203
    %v3205 = vextract.high.u32 %v3203
    %v3206 = vmul.u32.u64.compose %v3202, %v3197
    %v3207 = vextract.low.u32 %v3206
    %v3208 = vextract.high.u32 %v3206
    %v3209 = vmul.u32 %v3202, %v3193
    %v3210 = vadd.s32 %v3205, %v3207
    %vm3211 = vc.u32 %v3205, %v3207
    %v3212 = vadd.s32 %v3208, 1
    %v3213 = vsel %vm3211, %v3212, %v3208
    %v3214 = vadd.s32 %v3209, %v3213
    %v3215 = vadd.s32 %v3214, 536870912
    %v3216 = vshrl.u32 %v3215, 30
    %v3217 = vshll.u32 %v3216, 30
    %v3218 = vsub.s32 %v3214, %v3217
    %vm3219 = vcmp.lt.s32.totalorder %v3218, 0
    %v3220 = vsub.s32 0, %v3218
    %v3221 = vsel %vm3219, %v3220, %v3218
    %v3222 = vclz %v3221
    %v3223 = vsub.s32 %v3222, 2
    %vm3224 = vcmp.gt.s32.totalorder 0, %v3223
    %v3225 = vsel %vm3224, 0, %v3223
    %v3226 = vsub.s32 32, %v3225
    %v3227 = vshll.u32 %v3218, %v3225
    %v3228 = vshrl.u32 %v3210, %v3226
    %v3229 = vor.u32 %v3227, %v3228
    %v3230 = vsub.s32 4294967266, %v3225
    %v3231 = vadd.s32 %v3230, 127
    %v3232 = vshll.u32 %v3231, 23
    %v3233 = vor.u32 4788187, %v3232
    %v3234 = vand.u32 2147483647, %v3233
    %v3236 = vcvt.s32.f32 %v3229
    %v3237 = vmul.f32 %v3236, %v3234
    %v3238 = vxor.u32 %v3237, 2147483648
    %v3239 = vsel %vm3156, %v3238, %v3237
    %v3240 = vsub.s32 4, %v3216
    %v3241 = vsel %vm3156, %v3240, %v3216
    %v3242 = vsel %vm3155, %v3049, %v3239
    %v3243 = vsel %vm3155, 0, %v3241
    %v3244 = vcosq.f32.pop %v3242
    %v3245 = vsinq.f32.pop %v3242
    %vm3246 = vweird.f32 %v3049
    %v3247 = vadd.s32 %v3243, 3
    %v3248 = vand.u32 %v3247, 3
    %vm3249 = vcmp.lt.s32.totalorder %v3248, 2
    %vm3250 = vcmp.eq.s32.totalorder %v3248, 0
    %v3251 = vxor.u32 %v3245, 2147483648
    %v3252 = vsel %vm3250, %v3244, %v3251
    %vm3253 = vcmp.eq.s32.totalorder %v3248, 2
    %v3254 = vxor.u32 %v3244, 2147483648
    %v3255 = vsel %vm3253, %v3254, %v3245
    %v3256 = vsel %vm3249, %v3252, %v3255
    %v3257 = vsel %vm3246, nan, %v3256
    %v3258 = vmul.f32 %v3153, %v3153
    %v3259 = vmul.f32 %v3257, %v3257
    %3260 = vset.pattern.permute.xlu0 32
    %3261 = vperm.xlu0 %3260, %v249
    %v3262 = vpop.permute.xlu0 %3261
    %v3264 = vmul.f32 %v3262, %v3258
    %v3265 = vmul.f32 %v3262, %v3259
    %v3266 = vadd.f32 %v3042, %v3264
    %v3267 = vadd.f32 %v3043, %v3265
    %v3268 = vmul.f32 %v3266, %v2921
    %v3269 = vmul.f32 %v3267, %v2925
    %3271 = vrot.lane.b32.xlu0 %v3268, 33
    %v3272 = vpop.permute.xlu0 %3271
    %v3274 = vsel %vm73, 0.0, %v3272
    %3275 = vrot.lane.b32.xlu0 %v3268, 96
    %v3276 = vpop.permute.xlu0 %3275
    %v3278 = vsel %vm52, %v3274, %v3276
    %3279 = vrot.lane.b32.xlu0 %v3268, 64
    %v3280 = vpop.permute.xlu0 %3279
    %v3282 = vsel %vm430, %v3278, %v3280
    %3283 = vrot.lane.b32.xlu0 %v3268, 127
    %v3284 = vpop.permute.xlu0 %3283
    %v3286 = vsel %vm78, %v3284, 0.0
    %3288 = vrot.lane.b32.xlu0 %v3286, 32
    %v3289 = vpop.permute.xlu0 %3288
    %v3291 = vsel %vm52, %v3276, %v3289
    %3293 = vrot.lane.b32.xlu0 %v3291, 64
    %v3294 = vpop.permute.xlu0 %3293
    %v3296 = vsel %vm430, %v3280, %v3294
    %3298 = vrot.lane.b32.xlu0 %v3269, 33
    %v3299 = vpop.permute.xlu0 %3298
    %v3301 = vsel %vm73, 0.0, %v3299
    %3302 = vrot.lane.b32.xlu0 %v3269, 96
    %v3303 = vpop.permute.xlu0 %3302
    %v3305 = vsel %vm52, %v3301, %v3303
    %3306 = vrot.lane.b32.xlu0 %v3269, 64
    %v3307 = vpop.permute.xlu0 %3306
    %v3309 = vsel %vm430, %v3305, %v3307
    %3310 = vrot.lane.b32.xlu0 %v3269, 127
    %v3311 = vpop.permute.xlu0 %3310
    %v3313 = vsel %vm78, %v3311, 0.0
    %3315 = vrot.lane.b32.xlu0 %v3313, 32
    %v3316 = vpop.permute.xlu0 %3315
    %v3318 = vsel %vm52, %v3303, %v3316
    %3320 = vrot.lane.b32.xlu0 %v3318, 64
    %v3321 = vpop.permute.xlu0 %3320
    %v3323 = vsel %vm430, %v3307, %v3321
    %v3324 = vpack.c.bf16 %v3268, %v3282
    %v3325 = vpack.c.bf16 %v3269, %v3309
    %v3326 = vpack.c.bf16 %v3296, %v3296
    %v3327 = vpack.c.bf16 %v3323, %v3323
    %3328 = vset.pattern.permute.xlu0 30
    %3329 = vperm.xlu0 %3328, %v249
    %v3330 = vpop.permute.xlu0 %3329
    %3332 = vrot.lane.b32.xlu0 %v2623, 80
    %v3333 = vpop.permute.xlu0 %3332
    %v3335 = vsel %vm644, %v3333, 0
    %v3338 = vsel %vm173, %v3326, 0
    %v3341 = vsel %vm173, %v3327, 0
    %3343 = vmatprep.subr.bf16.mxu0 0
    %3344 = vmatpush1.bf16.msra.mxu0 0
    %3345 = vmatprep.subr.bf16.mxu0 0
    %3346 = vmatpush1.bf16.msra.mxu0 0
    %3347 = vmatprep.subr.bf16.mxu0 0
    %3348 = vmatpush1.bf16.msra.mxu0 0
    %3349 = vmatprep.subr.bf16.mxu0 0
    %3350 = vmatpush1.bf16.msra.mxu0 0
    %3351 = vmatprep.subr.bf16.mxu0 0
    %3352 = vmatpush1.bf16.msra.mxu0 0
    %3353 = vmatprep.subr.bf16.mxu0 0
    %3354 = vmatpush1.bf16.msra.mxu0 0
    %3355 = vmatprep.subr.bf16.mxu0 %v3341
    %3356 = vmatpush1.bf16.msra.mxu0 %v3338
    %3357 = vmatprep.subr.bf16.mxu0 %v3325
    %3358 = vmatpush1.bf16.msra.mxu0 %v3324
    %3359 = vmatprep.subr.bf16.mxu0 0
    %3360 = vmatpush2.bf16.msra.mxu0 0
    %3361 = vmatprep.subr.bf16.mxu0 0
    %3362 = vmatpush2.bf16.msra.mxu0 0
    %3363 = vmatprep.subr.bf16.mxu0 0
    %3364 = vmatpush2.bf16.msra.mxu0 0
    %3365 = vmatprep.subr.bf16.mxu0 0
    %3366 = vmatpush2.bf16.msra.mxu0 0
    %3367 = vmatprep.subr.bf16.mxu0 0
    %3368 = vmatpush2.bf16.msra.mxu0 0
    %3369 = vmatprep.subr.bf16.mxu0 0
    %3370 = vmatpush2.bf16.msra.mxu0 0
    %3371 = vmatprep.subr.bf16.mxu0 0
    %3372 = vmatpush2.bf16.msra.mxu0 0
    %3373 = vmatprep.subr.bf16.mxu0 0
    %3374 = vmatpush2.bf16.msra.mxu0 0
    %3375 = vmatprep.mubr.bf16.mxu0 0
    %3376 = vmatmul.mubr.bf16.gmra.mxu0 %v3335
    %v3377 = vpop.f32.mrf.mxu0
    %v3378 = vadd.f32 %v3330, %v3377
    %v3379 = vpop.f32.mrf.mxu0
    %v3380 = vadd.f32 %v3330, %v3379
    %v3381 = vpop.f32.mrf.mxu0
    %v3382 = vpop.f32.mrf.mxu0
    %3383 = vdwg.mxu0
    %v3384 = vmul.f32 %v3378, %v2921
    %v3385 = vmul.f32 %v3380, %v2925
    %v3386 = vadd.f32 %v3384, %v2677
    %v3387 = vadd.f32 %v3385, %v2678
    %3388 = vset.pattern.permute.xlu0 34
    %3389 = vperm.xlu0 %3388, %v249
    %v3390 = vpop.permute.xlu0 %3389
    %v3392 = vmul.f32 %v3390, %v3386
    %v3393 = vmul.f32 %v3390, %v3387
    %v3394 = vand.u32 2147483647, %v3392
    %vm3395 = vcmp.le.f32.partialorder %v3394, 0.7853982
    %vm3396 = vcmp.lt.s32.totalorder %v3392, 0
    %v3397 = vand.u32 %v3392, 2139095040
    %v3398 = vshrl.u32 %v3397, 23
    %v3399 = vsub.s32 %v3398, 127
    %v3400 = vand.u32 2147483647, %v3392
    %v3401 = vand.u32 %v3400, 8388607
    %v3402 = vor.u32 %v3401, 8388608
    %v3403 = vsub.s32 0, %v3402
    %v3404 = vadd.s32 %v3399, 1
    %vm3405 = vcmp.gt.s32.totalorder %v3404, 0
    %v3406 = vsel %vm3405, %v3404, 0
    %v3407 = vshrl.u32 %v3406, 5
    %v3408 = vand.u32 %v3406, 31
    %v3409 = vsub.s32 32, %v3408
    %v3410 = vshrl.u32 683565275, %v3409
    %v3411 = vshll.u32 683565275, %v3408
    %v3412 = vshrl.u32 2475754826, %v3409
    %v3413 = vor.u32 %v3411, %v3412
    %v3414 = vshll.u32 2475754826, %v3408
    %v3415 = vshrl.u32 2131351028, %v3409
    %v3416 = vor.u32 %v3414, %v3415
    %v3417 = vshll.u32 2131351028, %v3408
    %v3418 = vshrl.u32 2102212464, %v3409
    %v3419 = vor.u32 %v3417, %v3418
    %v3420 = vshll.u32 2102212464, %v3408
    %v3421 = vshrl.u32 920167782, %v3409
    %v3422 = vor.u32 %v3420, %v3421
    %v3423 = vshll.u32 920167782, %v3408
    %v3424 = vshrl.u32 1326507024, %v3409
    %v3425 = vor.u32 %v3423, %v3424
    %vm3426 = vcmp.lt.s32.totalorder %v3407, 1
    %vm3427 = vcmp.lt.s32.totalorder %v3407, 2
    %vm3428 = vcmp.lt.s32.totalorder %v3407, 3
    %vm3429 = vcmp.lt.s32.totalorder %v3407, 4
    %v3430 = vsel %vm3426, %v3410, %v3413
    %v3431 = vsel %vm3429, %v3419, 2102212464
    %v3432 = vsel %vm3428, %v3416, %v3431
    %v3433 = vsel %vm3427, %v3430, %v3432
    %v3434 = vsel %vm3426, %v3413, %v3416
    %v3435 = vsel %vm3429, %v3422, 920167782
    %v3436 = vsel %vm3428, %v3419, %v3435
    %v3437 = vsel %vm3427, %v3434, %v3436
    %v3438 = vsel %vm3426, %v3416, %v3419
    %v3439 = vsel %vm3429, %v3425, 1326507024
    %v3440 = vsel %vm3428, %v3422, %v3439
    %v3441 = vsel %vm3427, %v3438, %v3440
    %v3442 = vshll.u32 %v3402, 8
    %v3443 = vmul.u32.u64.compose %v3442, %v3441
    %v3444 = vextract.low.u32 %v3443
    %v3445 = vextract.high.u32 %v3443
    %v3446 = vmul.u32.u64.compose %v3442, %v3437
    %v3447 = vextract.low.u32 %v3446
    %v3448 = vextract.high.u32 %v3446
    %v3449 = vmul.u32 %v3442, %v3433
    %v3450 = vadd.s32 %v3445, %v3447
    %vm3451 = vc.u32 %v3445, %v3447
    %v3452 = vadd.s32 %v3448, 1
    %v3453 = vsel %vm3451, %v3452, %v3448
    %v3454 = vadd.s32 %v3449, %v3453
    %v3455 = vadd.s32 %v3454, 536870912
    %v3456 = vshrl.u32 %v3455, 30
    %v3457 = vshll.u32 %v3456, 30
    %v3458 = vsub.s32 %v3454, %v3457
    %vm3459 = vcmp.lt.s32.totalorder %v3458, 0
    %v3460 = vsub.s32 0, %v3458
    %v3461 = vsel %vm3459, %v3460, %v3458
    %v3462 = vclz %v3461
    %v3463 = vsub.s32 %v3462, 2
    %vm3464 = vcmp.gt.s32.totalorder 0, %v3463
    %v3465 = vsel %vm3464, 0, %v3463
    %v3466 = vsub.s32 32, %v3465
    %v3467 = vshll.u32 %v3458, %v3465
    %v3468 = vshrl.u32 %v3450, %v3466
    %v3469 = vor.u32 %v3467, %v3468
    %v3470 = vsub.s32 4294967266, %v3465
    %v3471 = vadd.s32 %v3470, 127
    %v3472 = vshll.u32 %v3471, 23
    %v3473 = vor.u32 4788187, %v3472
    %v3474 = vand.u32 2147483647, %v3473
    %v3476 = vcvt.s32.f32 %v3469
    %v3477 = vmul.f32 %v3476, %v3474
    %v3478 = vxor.u32 %v3477, 2147483648
    %v3479 = vsel %vm3396, %v3478, %v3477
    %v3480 = vsub.s32 4, %v3456
    %v3481 = vsel %vm3396, %v3480, %v3456
    %v3482 = vsel %vm3395, %v3392, %v3479
    %v3483 = vsel %vm3395, 0, %v3481
    %v3484 = vcosq.f32.pop %v3482
    %v3485 = vsinq.f32.pop %v3482
    %vm3486 = vweird.f32 %v3392
    %v3487 = vadd.s32 %v3483, 3
    %v3488 = vand.u32 %v3487, 3
    %vm3489 = vcmp.lt.s32.totalorder %v3488, 2
    %vm3490 = vcmp.eq.s32.totalorder %v3488, 0
    %v3491 = vxor.u32 %v3485, 2147483648
    %v3492 = vsel %vm3490, %v3484, %v3491
    %vm3493 = vcmp.eq.s32.totalorder %v3488, 2
    %v3494 = vxor.u32 %v3484, 2147483648
    %v3495 = vsel %vm3493, %v3494, %v3485
    %v3496 = vsel %vm3489, %v3492, %v3495
    %v3497 = vsel %vm3486, nan, %v3496
    %v3498 = vand.u32 2147483647, %v3393
    %vm3499 = vcmp.le.f32.partialorder %v3498, 0.7853982
    %vm3500 = vcmp.lt.s32.totalorder %v3393, 0
    %v3501 = vand.u32 %v3393, 2139095040
    %v3502 = vshrl.u32 %v3501, 23
    %v3503 = vsub.s32 %v3502, 127
    %v3504 = vand.u32 2147483647, %v3393
    %v3505 = vand.u32 %v3504, 8388607
    %v3506 = vor.u32 %v3505, 8388608
    %v3507 = vsub.s32 0, %v3506
    %v3508 = vadd.s32 %v3503, 1
    %vm3509 = vcmp.gt.s32.totalorder %v3508, 0
    %v3510 = vsel %vm3509, %v3508, 0
    %v3511 = vshrl.u32 %v3510, 5
    %v3512 = vand.u32 %v3510, 31
    %v3513 = vsub.s32 32, %v3512
    %v3514 = vshrl.u32 683565275, %v3513
    %v3515 = vshll.u32 683565275, %v3512
    %v3516 = vshrl.u32 2475754826, %v3513
    %v3517 = vor.u32 %v3515, %v3516
    %v3518 = vshll.u32 2475754826, %v3512
    %v3519 = vshrl.u32 2131351028, %v3513
    %v3520 = vor.u32 %v3518, %v3519
    %v3521 = vshll.u32 2131351028, %v3512
    %v3522 = vshrl.u32 2102212464, %v3513
    %v3523 = vor.u32 %v3521, %v3522
    %v3524 = vshll.u32 2102212464, %v3512
    %v3525 = vshrl.u32 920167782, %v3513
    %v3526 = vor.u32 %v3524, %v3525
    %v3527 = vshll.u32 920167782, %v3512
    %v3528 = vshrl.u32 1326507024, %v3513
    %v3529 = vor.u32 %v3527, %v3528
    %vm3530 = vcmp.lt.s32.totalorder %v3511, 1
    %vm3531 = vcmp.lt.s32.totalorder %v3511, 2
    %vm3532 = vcmp.lt.s32.totalorder %v3511, 3
    %vm3533 = vcmp.lt.s32.totalorder %v3511, 4
    %v3534 = vsel %vm3530, %v3514, %v3517
    %v3535 = vsel %vm3533, %v3523, 2102212464
    %v3536 = vsel %vm3532, %v3520, %v3535
    %v3537 = vsel %vm3531, %v3534, %v3536
    %v3538 = vsel %vm3530, %v3517, %v3520
    %v3539 = vsel %vm3533, %v3526, 920167782
    %v3540 = vsel %vm3532, %v3523, %v3539
    %v3541 = vsel %vm3531, %v3538, %v3540
    %v3542 = vsel %vm3530, %v3520, %v3523
    %v3543 = vsel %vm3533, %v3529, 1326507024
    %v3544 = vsel %vm3532, %v3526, %v3543
    %v3545 = vsel %vm3531, %v3542, %v3544
    %v3546 = vshll.u32 %v3506, 8
    %v3547 = vmul.u32.u64.compose %v3546, %v3545
    %v3548 = vextract.low.u32 %v3547
    %v3549 = vextract.high.u32 %v3547
    %v3550 = vmul.u32.u64.compose %v3546, %v3541
    %v3551 = vextract.low.u32 %v3550
    %v3552 = vextract.high.u32 %v3550
    %v3553 = vmul.u32 %v3546, %v3537
    %v3554 = vadd.s32 %v3549, %v3551
    %vm3555 = vc.u32 %v3549, %v3551
    %v3556 = vadd.s32 %v3552, 1
    %v3557 = vsel %vm3555, %v3556, %v3552
    %v3558 = vadd.s32 %v3553, %v3557
    %v3559 = vadd.s32 %v3558, 536870912
    %v3560 = vshrl.u32 %v3559, 30
    %v3561 = vshll.u32 %v3560, 30
    %v3562 = vsub.s32 %v3558, %v3561
    %vm3563 = vcmp.lt.s32.totalorder %v3562, 0
    %v3564 = vsub.s32 0, %v3562
    %v3565 = vsel %vm3563, %v3564, %v3562
    %v3566 = vclz %v3565
    %v3567 = vsub.s32 %v3566, 2
    %vm3568 = vcmp.gt.s32.totalorder 0, %v3567
    %v3569 = vsel %vm3568, 0, %v3567
    %v3570 = vsub.s32 32, %v3569
    %v3571 = vshll.u32 %v3562, %v3569
    %v3572 = vshrl.u32 %v3554, %v3570
    %v3573 = vor.u32 %v3571, %v3572
    %v3574 = vsub.s32 4294967266, %v3569
    %v3575 = vadd.s32 %v3574, 127
    %v3576 = vshll.u32 %v3575, 23
    %v3577 = vor.u32 4788187, %v3576
    %v3578 = vand.u32 2147483647, %v3577
    %v3580 = vcvt.s32.f32 %v3573
    %v3581 = vmul.f32 %v3580, %v3578
    %v3582 = vxor.u32 %v3581, 2147483648
    %v3583 = vsel %vm3500, %v3582, %v3581
    %v3584 = vsub.s32 4, %v3560
    %v3585 = vsel %vm3500, %v3584, %v3560
    %v3586 = vsel %vm3499, %v3393, %v3583
    %v3587 = vsel %vm3499, 0, %v3585
    %v3588 = vcosq.f32.pop %v3586
    %v3589 = vsinq.f32.pop %v3586
    %vm3590 = vweird.f32 %v3393
    %v3591 = vadd.s32 %v3587, 3
    %v3592 = vand.u32 %v3591, 3
    %vm3593 = vcmp.lt.s32.totalorder %v3592, 2
    %vm3594 = vcmp.eq.s32.totalorder %v3592, 0
    %v3595 = vxor.u32 %v3589, 2147483648
    %v3596 = vsel %vm3594, %v3588, %v3595
    %vm3597 = vcmp.eq.s32.totalorder %v3592, 2
    %v3598 = vxor.u32 %v3588, 2147483648
    %v3599 = vsel %vm3597, %v3598, %v3589
    %v3600 = vsel %vm3593, %v3596, %v3599
    %v3601 = vsel %vm3590, nan, %v3600
    %v3602 = vmul.f32 %v3497, %v3497
    %v3603 = vmul.f32 %v3601, %v3601
    %3604 = vset.pattern.permute.xlu0 35
    %3605 = vperm.xlu0 %3604, %v249
    %v3606 = vpop.permute.xlu0 %3605
    %v3608 = vmul.f32 %v3606, %v3602
    %v3609 = vmul.f32 %v3606, %v3603
    %v3610 = vadd.f32 %v3386, %v3608
    %v3611 = vadd.f32 %v3387, %v3609
    %v3612 = vmul.f32 %v3610, %v2921
    %v3613 = vmul.f32 %v3611, %v2925
    %3615 = vrot.lane.b32.xlu0 %v3612, 65
    %v3616 = vpop.permute.xlu0 %3615
    %v3618 = vsel %vm73, 0.0, %v3616
    %3619 = vrot.lane.b32.xlu0 %v3612, 33
    %v3620 = vpop.permute.xlu0 %3619
    %v3622 = vsel %vm73, 0.0, %v3620
    %3624 = vrot.lane.b32.xlu0 %v3622, 32
    %v3625 = vpop.permute.xlu0 %3624
    %v3627 = vsel %vm52, %v3618, %v3625
    %3628 = vrot.lane.b32.xlu0 %v3612, 97
    %v3629 = vpop.permute.xlu0 %3628
    %v3631 = vsel %vm73, 0.0, %v3629
    %3632 = vrot.lane.b32.xlu0 %v3612, 32
    %v3633 = vpop.permute.xlu0 %3632
    %v3635 = vsel %vm52, %v3631, %v3633
    %3637 = vrot.lane.b32.xlu0 %v3635, 64
    %v3638 = vpop.permute.xlu0 %3637
    %v3640 = vsel %vm430, %v3627, %v3638
    %3641 = vrot.lane.b32.xlu0 %v3612, 63
    %v3642 = vpop.permute.xlu0 %3641
    %v3644 = vsel %vm78, %v3642, 0.0
    %3646 = vrot.lane.b32.xlu0 %v3644, 32
    %v3647 = vpop.permute.xlu0 %3646
    %v3649 = vsel %vm52, %v3633, %v3647
    %3650 = vrot.lane.b32.xlu0 %v3612, 127
    %v3651 = vpop.permute.xlu0 %3650
    %v3653 = vsel %vm78, %v3651, 0.0
    %3654 = vrot.lane.b32.xlu0 %v3612, 95
    %v3655 = vpop.permute.xlu0 %3654
    %v3657 = vsel %vm78, %v3655, 0.0
    %3659 = vrot.lane.b32.xlu0 %v3657, 32
    %v3660 = vpop.permute.xlu0 %3659
    %v3662 = vsel %vm52, %v3653, %v3660
    %3664 = vrot.lane.b32.xlu0 %v3662, 64
    %v3665 = vpop.permute.xlu0 %3664
    %v3667 = vsel %vm430, %v3649, %v3665
    %3669 = vrot.lane.b32.xlu0 %v3613, 65
    %v3670 = vpop.permute.xlu0 %3669
    %v3672 = vsel %vm73, 0.0, %v3670
    %3673 = vrot.lane.b32.xlu0 %v3613, 33
    %v3674 = vpop.permute.xlu0 %3673
    %v3676 = vsel %vm73, 0.0, %v3674
    %3678 = vrot.lane.b32.xlu0 %v3676, 32
    %v3679 = vpop.permute.xlu0 %3678
    %v3681 = vsel %vm52, %v3672, %v3679
    %3682 = vrot.lane.b32.xlu0 %v3613, 97
    %v3683 = vpop.permute.xlu0 %3682
    %v3685 = vsel %vm73, 0.0, %v3683
    %3686 = vrot.lane.b32.xlu0 %v3613, 32
    %v3687 = vpop.permute.xlu0 %3686
    %v3689 = vsel %vm52, %v3685, %v3687
    %3691 = vrot.lane.b32.xlu0 %v3689, 64
    %v3692 = vpop.permute.xlu0 %3691
    %v3694 = vsel %vm430, %v3681, %v3692
    %3695 = vrot.lane.b32.xlu0 %v3613, 63
    %v3696 = vpop.permute.xlu0 %3695
    %v3698 = vsel %vm78, %v3696, 0.0
    %3700 = vrot.lane.b32.xlu0 %v3698, 32
    %v3701 = vpop.permute.xlu0 %3700
    %v3703 = vsel %vm52, %v3687, %v3701
    %3704 = vrot.lane.b32.xlu0 %v3613, 127
    %v3705 = vpop.permute.xlu0 %3704
    %v3707 = vsel %vm78, %v3705, 0.0
    %3708 = vrot.lane.b32.xlu0 %v3613, 95
    %v3709 = vpop.permute.xlu0 %3708
    %v3711 = vsel %vm78, %v3709, 0.0
    %3713 = vrot.lane.b32.xlu0 %v3711, 32
    %v3714 = vpop.permute.xlu0 %3713
    %v3716 = vsel %vm52, %v3707, %v3714
    %3718 = vrot.lane.b32.xlu0 %v3716, 64
    %v3719 = vpop.permute.xlu0 %3718
    %v3721 = vsel %vm430, %v3703, %v3719
    %v3722 = vpack.c.bf16 %v3612, %v3640
    %v3723 = vpack.c.bf16 %v3613, %v3694
    %v3724 = vpack.c.bf16 %v3667, %v3667
    %v3725 = vpack.c.bf16 %v3721, %v3721
    %3726 = vset.pattern.permute.xlu0 33
    %3727 = vperm.xlu0 %3726, %v249
    %v3728 = vpop.permute.xlu0 %3727
    %3730 = vrot.lane.b32.xlu0 %v2623, 56
    %v3731 = vpop.permute.xlu0 %3730
    %v3733 = vsel %vm644, %v3731, 0
    %v3736 = vsel %vm173, %v3724, 0
    %v3739 = vsel %vm173, %v3725, 0
    %3741 = vmatprep.subr.bf16.mxu0 0
    %3742 = vmatpush1.bf16.msra.mxu0 0
    %3743 = vmatprep.subr.bf16.mxu0 0
    %3744 = vmatpush1.bf16.msra.mxu0 0
    %3745 = vmatprep.subr.bf16.mxu0 0
    %3746 = vmatpush1.bf16.msra.mxu0 0
    %3747 = vmatprep.subr.bf16.mxu0 0
    %3748 = vmatpush1.bf16.msra.mxu0 0
    %3749 = vmatprep.subr.bf16.mxu0 0
    %3750 = vmatpush1.bf16.msra.mxu0 0
    %3751 = vmatprep.subr.bf16.mxu0 0
    %3752 = vmatpush1.bf16.msra.mxu0 0
    %3753 = vmatprep.subr.bf16.mxu0 %v3739
    %3754 = vmatpush1.bf16.msra.mxu0 %v3736
    %3755 = vmatprep.subr.bf16.mxu0 %v3723
    %3756 = vmatpush1.bf16.msra.mxu0 %v3722
    %3757 = vmatprep.subr.bf16.mxu0 0
    %3758 = vmatpush2.bf16.msra.mxu0 0
    %3759 = vmatprep.subr.bf16.mxu0 0
    %3760 = vmatpush2.bf16.msra.mxu0 0
    %3761 = vmatprep.subr.bf16.mxu0 0
    %3762 = vmatpush2.bf16.msra.mxu0 0
    %3763 = vmatprep.subr.bf16.mxu0 0
    %3764 = vmatpush2.bf16.msra.mxu0 0
    %3765 = vmatprep.subr.bf16.mxu0 0
    %3766 = vmatpush2.bf16.msra.mxu0 0
    %3767 = vmatprep.subr.bf16.mxu0 0
    %3768 = vmatpush2.bf16.msra.mxu0 0
    %3769 = vmatprep.subr.bf16.mxu0 0
    %3770 = vmatpush2.bf16.msra.mxu0 0
    %3771 = vmatprep.subr.bf16.mxu0 0
    %3772 = vmatpush2.bf16.msra.mxu0 0
    %3773 = vmatprep.mubr.bf16.mxu0 0
    %3774 = vmatmul.mubr.bf16.gmra.mxu0 %v3733
    %v3775 = vpop.f32.mrf.mxu0
    %v3776 = vadd.f32 %v3728, %v3775
    %v3777 = vpop.f32.mrf.mxu0
    %v3778 = vadd.f32 %v3728, %v3777
    %v3779 = vpop.f32.mrf.mxu0
    %v3780 = vpop.f32.mrf.mxu0
    %3781 = vdwg.mxu0
    %v3782 = vmul.f32 %v3776, %v2921
    %v3783 = vmul.f32 %v3778, %v2925
    %3784 = vset.pattern.permute.xlu0 37
    %3785 = vperm.xlu0 %3784, %v249
    %v3786 = vpop.permute.xlu0 %3785
    %v3788 = vmul.f32 %v3786, %v3782
    %v3789 = vmul.f32 %v3786, %v3783
    %v3790 = vand.u32 2147483647, %v3788
    %vm3791 = vcmp.le.f32.partialorder %v3790, 0.7853982
    %vm3792 = vcmp.lt.s32.totalorder %v3788, 0
    %v3793 = vand.u32 %v3788, 2139095040
    %v3794 = vshrl.u32 %v3793, 23
    %v3795 = vsub.s32 %v3794, 127
    %v3796 = vand.u32 2147483647, %v3788
    %v3797 = vand.u32 %v3796, 8388607
    %v3798 = vor.u32 %v3797, 8388608
    %v3799 = vsub.s32 0, %v3798
    %v3800 = vadd.s32 %v3795, 1
    %vm3801 = vcmp.gt.s32.totalorder %v3800, 0
    %v3802 = vsel %vm3801, %v3800, 0
    %v3803 = vshrl.u32 %v3802, 5
    %v3804 = vand.u32 %v3802, 31
    %v3805 = vsub.s32 32, %v3804
    %v3806 = vshrl.u32 683565275, %v3805
    %v3807 = vshll.u32 683565275, %v3804
    %v3808 = vshrl.u32 2475754826, %v3805
    %v3809 = vor.u32 %v3807, %v3808
    %v3810 = vshll.u32 2475754826, %v3804
    %v3811 = vshrl.u32 2131351028, %v3805
    %v3812 = vor.u32 %v3810, %v3811
    %v3813 = vshll.u32 2131351028, %v3804
    %v3814 = vshrl.u32 2102212464, %v3805
    %v3815 = vor.u32 %v3813, %v3814
    %v3816 = vshll.u32 2102212464, %v3804
    %v3817 = vshrl.u32 920167782, %v3805
    %v3818 = vor.u32 %v3816, %v3817
    %v3819 = vshll.u32 920167782, %v3804
    %v3820 = vshrl.u32 1326507024, %v3805
    %v3821 = vor.u32 %v3819, %v3820
    %vm3822 = vcmp.lt.s32.totalorder %v3803, 1
    %vm3823 = vcmp.lt.s32.totalorder %v3803, 2
    %vm3824 = vcmp.lt.s32.totalorder %v3803, 3
    %vm3825 = vcmp.lt.s32.totalorder %v3803, 4
    %v3826 = vsel %vm3822, %v3806, %v3809
    %v3827 = vsel %vm3825, %v3815, 2102212464
    %v3828 = vsel %vm3824, %v3812, %v3827
    %v3829 = vsel %vm3823, %v3826, %v3828
    %v3830 = vsel %vm3822, %v3809, %v3812
    %v3831 = vsel %vm3825, %v3818, 920167782
    %v3832 = vsel %vm3824, %v3815, %v3831
    %v3833 = vsel %vm3823, %v3830, %v3832
    %v3834 = vsel %vm3822, %v3812, %v3815
    %v3835 = vsel %vm3825, %v3821, 1326507024
    %v3836 = vsel %vm3824, %v3818, %v3835
    %v3837 = vsel %vm3823, %v3834, %v3836
    %v3838 = vshll.u32 %v3798, 8
    %v3839 = vmul.u32.u64.compose %v3838, %v3837
    %v3840 = vextract.low.u32 %v3839
    %v3841 = vextract.high.u32 %v3839
    %v3842 = vmul.u32.u64.compose %v3838, %v3833
    %v3843 = vextract.low.u32 %v3842
    %v3844 = vextract.high.u32 %v3842
    %v3845 = vmul.u32 %v3838, %v3829
    %v3846 = vadd.s32 %v3841, %v3843
    %vm3847 = vc.u32 %v3841, %v3843
    %v3848 = vadd.s32 %v3844, 1
    %v3849 = vsel %vm3847, %v3848, %v3844
    %v3850 = vadd.s32 %v3845, %v3849
    %v3851 = vadd.s32 %v3850, 536870912
    %v3852 = vshrl.u32 %v3851, 30
    %v3853 = vshll.u32 %v3852, 30
    %v3854 = vsub.s32 %v3850, %v3853
    %vm3855 = vcmp.lt.s32.totalorder %v3854, 0
    %v3856 = vsub.s32 0, %v3854
    %v3857 = vsel %vm3855, %v3856, %v3854
    %v3858 = vclz %v3857
    %v3859 = vsub.s32 %v3858, 2
    %vm3860 = vcmp.gt.s32.totalorder 0, %v3859
    %v3861 = vsel %vm3860, 0, %v3859
    %v3862 = vsub.s32 32, %v3861
    %v3863 = vshll.u32 %v3854, %v3861
    %v3864 = vshrl.u32 %v3846, %v3862
    %v3865 = vor.u32 %v3863, %v3864
    %v3866 = vsub.s32 4294967266, %v3861
    %v3867 = vadd.s32 %v3866, 127
    %v3868 = vshll.u32 %v3867, 23
    %v3869 = vor.u32 4788187, %v3868
    %v3870 = vand.u32 2147483647, %v3869
    %v3872 = vcvt.s32.f32 %v3865
    %v3873 = vmul.f32 %v3872, %v3870
    %v3874 = vxor.u32 %v3873, 2147483648
    %v3875 = vsel %vm3792, %v3874, %v3873
    %v3876 = vsub.s32 4, %v3852
    %v3877 = vsel %vm3792, %v3876, %v3852
    %v3878 = vsel %vm3791, %v3788, %v3875
    %v3879 = vsel %vm3791, 0, %v3877
    %v3880 = vcosq.f32.pop %v3878
    %v3881 = vsinq.f32.pop %v3878
    %vm3882 = vweird.f32 %v3788
    %v3883 = vadd.s32 %v3879, 3
    %v3884 = vand.u32 %v3883, 3
    %vm3885 = vcmp.lt.s32.totalorder %v3884, 2
    %vm3886 = vcmp.eq.s32.totalorder %v3884, 0
    %v3887 = vxor.u32 %v3881, 2147483648
    %v3888 = vsel %vm3886, %v3880, %v3887
    %vm3889 = vcmp.eq.s32.totalorder %v3884, 2
    %v3890 = vxor.u32 %v3880, 2147483648
    %v3891 = vsel %vm3889, %v3890, %v3881
    %v3892 = vsel %vm3885, %v3888, %v3891
    %v3893 = vsel %vm3882, nan, %v3892
    %v3894 = vand.u32 2147483647, %v3789
    %vm3895 = vcmp.le.f32.partialorder %v3894, 0.7853982
    %vm3896 = vcmp.lt.s32.totalorder %v3789, 0
    %v3897 = vand.u32 %v3789, 2139095040
    %v3898 = vshrl.u32 %v3897, 23
    %v3899 = vsub.s32 %v3898, 127
    %v3900 = vand.u32 2147483647, %v3789
    %v3901 = vand.u32 %v3900, 8388607
    %v3902 = vor.u32 %v3901, 8388608
    %v3903 = vsub.s32 0, %v3902
    %v3904 = vadd.s32 %v3899, 1
    %vm3905 = vcmp.gt.s32.totalorder %v3904, 0
    %v3906 = vsel %vm3905, %v3904, 0
    %v3907 = vshrl.u32 %v3906, 5
    %v3908 = vand.u32 %v3906, 31
    %v3909 = vsub.s32 32, %v3908
    %v3910 = vshrl.u32 683565275, %v3909
    %v3911 = vshll.u32 683565275, %v3908
    %v3912 = vshrl.u32 2475754826, %v3909
    %v3913 = vor.u32 %v3911, %v3912
    %v3914 = vshll.u32 2475754826, %v3908
    %v3915 = vshrl.u32 2131351028, %v3909
    %v3916 = vor.u32 %v3914, %v3915
    %v3917 = vshll.u32 2131351028, %v3908
    %v3918 = vshrl.u32 2102212464, %v3909
    %v3919 = vor.u32 %v3917, %v3918
    %v3920 = vshll.u32 2102212464, %v3908
    %v3921 = vshrl.u32 920167782, %v3909
    %v3922 = vor.u32 %v3920, %v3921
    %v3923 = vshll.u32 920167782, %v3908
    %v3924 = vshrl.u32 1326507024, %v3909
    %v3925 = vor.u32 %v3923, %v3924
    %vm3926 = vcmp.lt.s32.totalorder %v3907, 1
    %vm3927 = vcmp.lt.s32.totalorder %v3907, 2
    %vm3928 = vcmp.lt.s32.totalorder %v3907, 3
    %vm3929 = vcmp.lt.s32.totalorder %v3907, 4
    %v3930 = vsel %vm3926, %v3910, %v3913
    %v3931 = vsel %vm3929, %v3919, 2102212464
    %v3932 = vsel %vm3928, %v3916, %v3931
    %v3933 = vsel %vm3927, %v3930, %v3932
    %v3934 = vsel %vm3926, %v3913, %v3916
    %v3935 = vsel %vm3929, %v3922, 920167782
    %v3936 = vsel %vm3928, %v3919, %v3935
    %v3937 = vsel %vm3927, %v3934, %v3936
    %v3938 = vsel %vm3926, %v3916, %v3919
    %v3939 = vsel %vm3929, %v3925, 1326507024
    %v3940 = vsel %vm3928, %v3922, %v3939
    %v3941 = vsel %vm3927, %v3938, %v3940
    %v3942 = vshll.u32 %v3902, 8
    %v3943 = vmul.u32.u64.compose %v3942, %v3941
    %v3944 = vextract.low.u32 %v3943
    %v3945 = vextract.high.u32 %v3943
    %v3946 = vmul.u32.u64.compose %v3942, %v3937
    %v3947 = vextract.low.u32 %v3946
    %v3948 = vextract.high.u32 %v3946
    %v3949 = vmul.u32 %v3942, %v3933
    %v3950 = vadd.s32 %v3945, %v3947
    %vm3951 = vc.u32 %v3945, %v3947
    %v3952 = vadd.s32 %v3948, 1
    %v3953 = vsel %vm3951, %v3952, %v3948
    %v3954 = vadd.s32 %v3949, %v3953
    %v3955 = vadd.s32 %v3954, 536870912
    %v3956 = vshrl.u32 %v3955, 30
    %v3957 = vshll.u32 %v3956, 30
    %v3958 = vsub.s32 %v3954, %v3957
    %vm3959 = vcmp.lt.s32.totalorder %v3958, 0
    %v3960 = vsub.s32 0, %v3958
    %v3961 = vsel %vm3959, %v3960, %v3958
    %v3962 = vclz %v3961
    %v3963 = vsub.s32 %v3962, 2
    %vm3964 = vcmp.gt.s32.totalorder 0, %v3963
    %v3965 = vsel %vm3964, 0, %v3963
    %v3966 = vsub.s32 32, %v3965
    %v3967 = vshll.u32 %v3958, %v3965
    %v3968 = vshrl.u32 %v3950, %v3966
    %v3969 = vor.u32 %v3967, %v3968
    %v3970 = vsub.s32 4294967266, %v3965
    %v3971 = vadd.s32 %v3970, 127
    %v3972 = vshll.u32 %v3971, 23
    %v3973 = vor.u32 4788187, %v3972
    %v3974 = vand.u32 2147483647, %v3973
    %v3976 = vcvt.s32.f32 %v3969
    %v3977 = vmul.f32 %v3976, %v3974
    %v3978 = vxor.u32 %v3977, 2147483648
    %v3979 = vsel %vm3896, %v3978, %v3977
    %v3980 = vsub.s32 4, %v3956
    %v3981 = vsel %vm3896, %v3980, %v3956
    %v3982 = vsel %vm3895, %v3789, %v3979
    %v3983 = vsel %vm3895, 0, %v3981
    %v3984 = vcosq.f32.pop %v3982
    %v3985 = vsinq.f32.pop %v3982
    %vm3986 = vweird.f32 %v3789
    %v3987 = vadd.s32 %v3983, 3
    %v3988 = vand.u32 %v3987, 3
    %vm3989 = vcmp.lt.s32.totalorder %v3988, 2
    %vm3990 = vcmp.eq.s32.totalorder %v3988, 0
    %v3991 = vxor.u32 %v3985, 2147483648
    %v3992 = vsel %vm3990, %v3984, %v3991
    %vm3993 = vcmp.eq.s32.totalorder %v3988, 2
    %v3994 = vxor.u32 %v3984, 2147483648
    %v3995 = vsel %vm3993, %v3994, %v3985
    %v3996 = vsel %vm3989, %v3992, %v3995
    %v3997 = vsel %vm3986, nan, %v3996
    %v3998 = vmul.f32 %v3893, %v3893
    %v3999 = vmul.f32 %v3997, %v3997
    %4000 = vset.pattern.permute.xlu0 38
    %4001 = vperm.xlu0 %4000, %v249
    %v4002 = vpop.permute.xlu0 %4001
    %v4004 = vmul.f32 %v4002, %v3998
    %v4005 = vmul.f32 %v4002, %v3999
    %v4006 = vadd.f32 %v3782, %v4004
    %v4007 = vadd.f32 %v3783, %v4005
    %v4008 = vmul.f32 %v4006, %v2921
    %v4009 = vmul.f32 %v4007, %v2925
    %4011 = vrot.lane.b32.xlu0 %v4008, 33
    %v4012 = vpop.permute.xlu0 %4011
    %v4014 = vsel %vm73, 0.0, %v4012
    %4015 = vrot.lane.b32.xlu0 %v4008, 96
    %v4016 = vpop.permute.xlu0 %4015
    %v4018 = vsel %vm52, %v4014, %v4016
    %4019 = vrot.lane.b32.xlu0 %v4008, 64
    %v4020 = vpop.permute.xlu0 %4019
    %v4022 = vsel %vm430, %v4018, %v4020
    %4023 = vrot.lane.b32.xlu0 %v4008, 127
    %v4024 = vpop.permute.xlu0 %4023
    %v4026 = vsel %vm78, %v4024, 0.0
    %4028 = vrot.lane.b32.xlu0 %v4026, 32
    %v4029 = vpop.permute.xlu0 %4028
    %v4031 = vsel %vm52, %v4016, %v4029
    %4033 = vrot.lane.b32.xlu0 %v4031, 64
    %v4034 = vpop.permute.xlu0 %4033
    %v4036 = vsel %vm430, %v4020, %v4034
    %4038 = vrot.lane.b32.xlu0 %v4009, 33
    %v4039 = vpop.permute.xlu0 %4038
    %v4041 = vsel %vm73, 0.0, %v4039
    %4042 = vrot.lane.b32.xlu0 %v4009, 96
    %v4043 = vpop.permute.xlu0 %4042
    %v4045 = vsel %vm52, %v4041, %v4043
    %4046 = vrot.lane.b32.xlu0 %v4009, 64
    %v4047 = vpop.permute.xlu0 %4046
    %v4049 = vsel %vm430, %v4045, %v4047
    %4050 = vrot.lane.b32.xlu0 %v4009, 127
    %v4051 = vpop.permute.xlu0 %4050
    %v4053 = vsel %vm78, %v4051, 0.0
    %4055 = vrot.lane.b32.xlu0 %v4053, 32
    %v4056 = vpop.permute.xlu0 %4055
    %v4058 = vsel %vm52, %v4043, %v4056
    %4060 = vrot.lane.b32.xlu0 %v4058, 64
    %v4061 = vpop.permute.xlu0 %4060
    %v4063 = vsel %vm430, %v4047, %v4061
    %v4064 = vpack.c.bf16 %v4008, %v4022
    %v4065 = vpack.c.bf16 %v4009, %v4049
    %v4066 = vpack.c.bf16 %v4036, %v4036
    %v4067 = vpack.c.bf16 %v4063, %v4063
    %4068 = vset.pattern.permute.xlu0 36
    %4069 = vperm.xlu0 %4068, %v249
    %v4070 = vpop.permute.xlu0 %4069
    %4072 = vrot.lane.b32.xlu0 %v2623, 32
    %v4073 = vpop.permute.xlu0 %4072
    %v4075 = vsel %vm644, %v4073, 0
    %v4078 = vsel %vm173, %v4066, 0
    %v4081 = vsel %vm173, %v4067, 0
    %4083 = vmatprep.subr.bf16.mxu0 0
    %4084 = vmatpush1.bf16.msra.mxu0 0
    %4085 = vmatprep.subr.bf16.mxu0 0
    %4086 = vmatpush1.bf16.msra.mxu0 0
    %4087 = vmatprep.subr.bf16.mxu0 0
    %4088 = vmatpush1.bf16.msra.mxu0 0
    %4089 = vmatprep.subr.bf16.mxu0 0
    %4090 = vmatpush1.bf16.msra.mxu0 0
    %4091 = vmatprep.subr.bf16.mxu0 0
    %4092 = vmatpush1.bf16.msra.mxu0 0
    %4093 = vmatprep.subr.bf16.mxu0 0
    %4094 = vmatpush1.bf16.msra.mxu0 0
    %4095 = vmatprep.subr.bf16.mxu0 %v4081
    %4096 = vmatpush1.bf16.msra.mxu0 %v4078
    %4097 = vmatprep.subr.bf16.mxu0 %v4065
    %4098 = vmatpush1.bf16.msra.mxu0 %v4064
    %4099 = vmatprep.subr.bf16.mxu0 0
    %4100 = vmatpush2.bf16.msra.mxu0 0
    %4101 = vmatprep.subr.bf16.mxu0 0
    %4102 = vmatpush2.bf16.msra.mxu0 0
    %4103 = vmatprep.subr.bf16.mxu0 0
    %4104 = vmatpush2.bf16.msra.mxu0 0
    %4105 = vmatprep.subr.bf16.mxu0 0
    %4106 = vmatpush2.bf16.msra.mxu0 0
    %4107 = vmatprep.subr.bf16.mxu0 0
    %4108 = vmatpush2.bf16.msra.mxu0 0
    %4109 = vmatprep.subr.bf16.mxu0 0
    %4110 = vmatpush2.bf16.msra.mxu0 0
    %4111 = vmatprep.subr.bf16.mxu0 0
    %4112 = vmatpush2.bf16.msra.mxu0 0
    %4113 = vmatprep.subr.bf16.mxu0 0
    %4114 = vmatpush2.bf16.msra.mxu0 0
    %4115 = vmatprep.mubr.bf16.mxu0 0
    %4116 = vmatmul.mubr.bf16.gmra.mxu0 %v4075
    %v4117 = vpop.f32.mrf.mxu0
    %v4118 = vadd.f32 %v4070, %v4117
    %v4119 = vpop.f32.mrf.mxu0
    %v4120 = vadd.f32 %v4070, %v4119
    %v4121 = vpop.f32.mrf.mxu0
    %v4122 = vpop.f32.mrf.mxu0
    %4123 = vdwg.mxu0
    %v4124 = vmul.f32 %v4118, %v2921
    %v4125 = vmul.f32 %v4120, %v2925
    %v4126 = vadd.f32 %v4124, %v3386
    %v4127 = vadd.f32 %v4125, %v3387
    %v4128 = vmul.f32 %v4126, %v2921
    %v4129 = vmul.f32 %v4127, %v2925
    %4130 = vset.pattern.permute.xlu0 40
    %4131 = vperm.xlu0 %4130, %v249
    %v4132 = vpop.permute.xlu0 %4131
    %v4134 = vmul.f32 %v4132, %v2677
    %v4135 = vmul.f32 %v4132, %v2678
    %v4136 = vand.u32 2147483647, %v4134
    %vm4137 = vcmp.le.f32.partialorder %v4136, 0.7853982
    %vm4138 = vcmp.lt.s32.totalorder %v4134, 0
    %v4139 = vand.u32 %v4134, 2139095040
    %v4140 = vshrl.u32 %v4139, 23
    %v4141 = vsub.s32 %v4140, 127
    %v4142 = vand.u32 2147483647, %v4134
    %v4143 = vand.u32 %v4142, 8388607
    %v4144 = vor.u32 %v4143, 8388608
    %v4145 = vsub.s32 0, %v4144
    %v4146 = vadd.s32 %v4141, 1
    %vm4147 = vcmp.gt.s32.totalorder %v4146, 0
    %v4148 = vsel %vm4147, %v4146, 0
    %v4149 = vshrl.u32 %v4148, 5
    %v4150 = vand.u32 %v4148, 31
    %v4151 = vsub.s32 32, %v4150
    %v4152 = vshrl.u32 683565275, %v4151
    %v4153 = vshll.u32 683565275, %v4150
    %v4154 = vshrl.u32 2475754826, %v4151
    %v4155 = vor.u32 %v4153, %v4154
    %v4156 = vshll.u32 2475754826, %v4150
    %v4157 = vshrl.u32 2131351028, %v4151
    %v4158 = vor.u32 %v4156, %v4157
    %v4159 = vshll.u32 2131351028, %v4150
    %v4160 = vshrl.u32 2102212464, %v4151
    %v4161 = vor.u32 %v4159, %v4160
    %v4162 = vshll.u32 2102212464, %v4150
    %v4163 = vshrl.u32 920167782, %v4151
    %v4164 = vor.u32 %v4162, %v4163
    %v4165 = vshll.u32 920167782, %v4150
    %v4166 = vshrl.u32 1326507024, %v4151
    %v4167 = vor.u32 %v4165, %v4166
    %vm4168 = vcmp.lt.s32.totalorder %v4149, 1
    %vm4169 = vcmp.lt.s32.totalorder %v4149, 2
    %vm4170 = vcmp.lt.s32.totalorder %v4149, 3
    %vm4171 = vcmp.lt.s32.totalorder %v4149, 4
    %v4172 = vsel %vm4168, %v4152, %v4155
    %v4173 = vsel %vm4171, %v4161, 2102212464
    %v4174 = vsel %vm4170, %v4158, %v4173
    %v4175 = vsel %vm4169, %v4172, %v4174
    %v4176 = vsel %vm4168, %v4155, %v4158
    %v4177 = vsel %vm4171, %v4164, 920167782
    %v4178 = vsel %vm4170, %v4161, %v4177
    %v4179 = vsel %vm4169, %v4176, %v4178
    %v4180 = vsel %vm4168, %v4158, %v4161
    %v4181 = vsel %vm4171, %v4167, 1326507024
    %v4182 = vsel %vm4170, %v4164, %v4181
    %v4183 = vsel %vm4169, %v4180, %v4182
    %v4184 = vshll.u32 %v4144, 8
    %v4185 = vmul.u32.u64.compose %v4184, %v4183
    %v4186 = vextract.low.u32 %v4185
    %v4187 = vextract.high.u32 %v4185
    %v4188 = vmul.u32.u64.compose %v4184, %v4179
    %v4189 = vextract.low.u32 %v4188
    %v4190 = vextract.high.u32 %v4188
    %v4191 = vmul.u32 %v4184, %v4175
    %v4192 = vadd.s32 %v4187, %v4189
    %vm4193 = vc.u32 %v4187, %v4189
    %v4194 = vadd.s32 %v4190, 1
    %v4195 = vsel %vm4193, %v4194, %v4190
    %v4196 = vadd.s32 %v4191, %v4195
    %v4197 = vadd.s32 %v4196, 536870912
    %v4198 = vshrl.u32 %v4197, 30
    %v4199 = vshll.u32 %v4198, 30
    %v4200 = vsub.s32 %v4196, %v4199
    %vm4201 = vcmp.lt.s32.totalorder %v4200, 0
    %v4202 = vsub.s32 0, %v4200
    %v4203 = vsel %vm4201, %v4202, %v4200
    %v4204 = vclz %v4203
    %v4205 = vsub.s32 %v4204, 2
    %vm4206 = vcmp.gt.s32.totalorder 0, %v4205
    %v4207 = vsel %vm4206, 0, %v4205
    %v4208 = vsub.s32 32, %v4207
    %v4209 = vshll.u32 %v4200, %v4207
    %v4210 = vshrl.u32 %v4192, %v4208
    %v4211 = vor.u32 %v4209, %v4210
    %v4212 = vsub.s32 4294967266, %v4207
    %v4213 = vadd.s32 %v4212, 127
    %v4214 = vshll.u32 %v4213, 23
    %v4215 = vor.u32 4788187, %v4214
    %v4216 = vand.u32 2147483647, %v4215
    %v4218 = vcvt.s32.f32 %v4211
    %v4219 = vmul.f32 %v4218, %v4216
    %v4220 = vxor.u32 %v4219, 2147483648
    %v4221 = vsel %vm4138, %v4220, %v4219
    %v4222 = vsub.s32 4, %v4198
    %v4223 = vsel %vm4138, %v4222, %v4198
    %v4224 = vsel %vm4137, %v4134, %v4221
    %v4225 = vsel %vm4137, 0, %v4223
    %v4226 = vcosq.f32.pop %v4224
    %v4227 = vsinq.f32.pop %v4224
    %vm4228 = vweird.f32 %v4134
    %v4229 = vadd.s32 %v4225, 3
    %v4230 = vand.u32 %v4229, 3
    %vm4231 = vcmp.lt.s32.totalorder %v4230, 2
    %vm4232 = vcmp.eq.s32.totalorder %v4230, 0
    %v4233 = vxor.u32 %v4227, 2147483648
    %v4234 = vsel %vm4232, %v4226, %v4233
    %vm4235 = vcmp.eq.s32.totalorder %v4230, 2
    %v4236 = vxor.u32 %v4226, 2147483648
    %v4237 = vsel %vm4235, %v4236, %v4227
    %v4238 = vsel %vm4231, %v4234, %v4237
    %v4239 = vsel %vm4228, nan, %v4238
    %v4240 = vand.u32 2147483647, %v4135
    %vm4241 = vcmp.le.f32.partialorder %v4240, 0.7853982
    %vm4242 = vcmp.lt.s32.totalorder %v4135, 0
    %v4243 = vand.u32 %v4135, 2139095040
    %v4244 = vshrl.u32 %v4243, 23
    %v4245 = vsub.s32 %v4244, 127
    %v4246 = vand.u32 2147483647, %v4135
    %v4247 = vand.u32 %v4246, 8388607
    %v4248 = vor.u32 %v4247, 8388608
    %v4249 = vsub.s32 0, %v4248
    %v4250 = vadd.s32 %v4245, 1
    %vm4251 = vcmp.gt.s32.totalorder %v4250, 0
    %v4252 = vsel %vm4251, %v4250, 0
    %v4253 = vshrl.u32 %v4252, 5
    %v4254 = vand.u32 %v4252, 31
    %v4255 = vsub.s32 32, %v4254
    %v4256 = vshrl.u32 683565275, %v4255
    %v4257 = vshll.u32 683565275, %v4254
    %v4258 = vshrl.u32 2475754826, %v4255
    %v4259 = vor.u32 %v4257, %v4258
    %v4260 = vshll.u32 2475754826, %v4254
    %v4261 = vshrl.u32 2131351028, %v4255
    %v4262 = vor.u32 %v4260, %v4261
    %v4263 = vshll.u32 2131351028, %v4254
    %v4264 = vshrl.u32 2102212464, %v4255
    %v4265 = vor.u32 %v4263, %v4264
    %v4266 = vshll.u32 2102212464, %v4254
    %v4267 = vshrl.u32 920167782, %v4255
    %v4268 = vor.u32 %v4266, %v4267
    %v4269 = vshll.u32 920167782, %v4254
    %v4270 = vshrl.u32 1326507024, %v4255
    %v4271 = vor.u32 %v4269, %v4270
    %vm4272 = vcmp.lt.s32.totalorder %v4253, 1
    %vm4273 = vcmp.lt.s32.totalorder %v4253, 2
    %vm4274 = vcmp.lt.s32.totalorder %v4253, 3
    %vm4275 = vcmp.lt.s32.totalorder %v4253, 4
    %v4276 = vsel %vm4272, %v4256, %v4259
    %v4277 = vsel %vm4275, %v4265, 2102212464
    %v4278 = vsel %vm4274, %v4262, %v4277
    %v4279 = vsel %vm4273, %v4276, %v4278
    %v4280 = vsel %vm4272, %v4259, %v4262
    %v4281 = vsel %vm4275, %v4268, 920167782
    %v4282 = vsel %vm4274, %v4265, %v4281
    %v4283 = vsel %vm4273, %v4280, %v4282
    %v4284 = vsel %vm4272, %v4262, %v4265
    %v4285 = vsel %vm4275, %v4271, 1326507024
    %v4286 = vsel %vm4274, %v4268, %v4285
    %v4287 = vsel %vm4273, %v4284, %v4286
    %v4288 = vshll.u32 %v4248, 8
    %v4289 = vmul.u32.u64.compose %v4288, %v4287
    %v4290 = vextract.low.u32 %v4289
    %v4291 = vextract.high.u32 %v4289
    %v4292 = vmul.u32.u64.compose %v4288, %v4283
    %v4293 = vextract.low.u32 %v4292
    %v4294 = vextract.high.u32 %v4292
    %v4295 = vmul.u32 %v4288, %v4279
    %v4296 = vadd.s32 %v4291, %v4293
    %vm4297 = vc.u32 %v4291, %v4293
    %v4298 = vadd.s32 %v4294, 1
    %v4299 = vsel %vm4297, %v4298, %v4294
    %v4300 = vadd.s32 %v4295, %v4299
    %v4301 = vadd.s32 %v4300, 536870912
    %v4302 = vshrl.u32 %v4301, 30
    %v4303 = vshll.u32 %v4302, 30
    %v4304 = vsub.s32 %v4300, %v4303
    %vm4305 = vcmp.lt.s32.totalorder %v4304, 0
    %v4306 = vsub.s32 0, %v4304
    %v4307 = vsel %vm4305, %v4306, %v4304
    %v4308 = vclz %v4307
    %v4309 = vsub.s32 %v4308, 2
    %vm4310 = vcmp.gt.s32.totalorder 0, %v4309
    %v4311 = vsel %vm4310, 0, %v4309
    %v4312 = vsub.s32 32, %v4311
    %v4313 = vshll.u32 %v4304, %v4311
    %v4314 = vshrl.u32 %v4296, %v4312
    %v4315 = vor.u32 %v4313, %v4314
    %v4316 = vsub.s32 4294967266, %v4311
    %v4317 = vadd.s32 %v4316, 127
    %v4318 = vshll.u32 %v4317, 23
    %v4319 = vor.u32 4788187, %v4318
    %v4320 = vand.u32 2147483647, %v4319
    %v4322 = vcvt.s32.f32 %v4315
    %v4323 = vmul.f32 %v4322, %v4320
    %v4324 = vxor.u32 %v4323, 2147483648
    %v4325 = vsel %vm4242, %v4324, %v4323
    %v4326 = vsub.s32 4, %v4302
    %v4327 = vsel %vm4242, %v4326, %v4302
    %v4328 = vsel %vm4241, %v4135, %v4325
    %v4329 = vsel %vm4241, 0, %v4327
    %v4330 = vcosq.f32.pop %v4328
    %v4331 = vsinq.f32.pop %v4328
    %vm4332 = vweird.f32 %v4135
    %v4333 = vadd.s32 %v4329, 3
    %v4334 = vand.u32 %v4333, 3
    %vm4335 = vcmp.lt.s32.totalorder %v4334, 2
    %vm4336 = vcmp.eq.s32.totalorder %v4334, 0
    %v4337 = vxor.u32 %v4331, 2147483648
    %v4338 = vsel %vm4336, %v4330, %v4337
    %vm4339 = vcmp.eq.s32.totalorder %v4334, 2
    %v4340 = vxor.u32 %v4330, 2147483648
    %v4341 = vsel %vm4339, %v4340, %v4331
    %v4342 = vsel %vm4335, %v4338, %v4341
    %v4343 = vsel %vm4332, nan, %v4342
    %v4344 = vmul.f32 %v4239, %v4239
    %v4345 = vmul.f32 %v4343, %v4343
    %4346 = vset.pattern.permute.xlu0 41
    %4347 = vperm.xlu0 %4346, %v249
    %v4348 = vpop.permute.xlu0 %4347
    %v4350 = vmul.f32 %v4348, %v4344
    %v4351 = vmul.f32 %v4348, %v4345
    %v4352 = vadd.f32 %v2677, %v4350
    %v4353 = vadd.f32 %v2678, %v4351
    %v4354 = vmul.f32 %v4352, %v2921
    %v4355 = vmul.f32 %v4353, %v2925
    %v4356 = vld [vmem:[%s3 + $0xc] sm:$0xff]
    %4358 = vrot.lane.b32.xlu0 %v4354, 97
    %v4359 = vpop.permute.xlu0 %4358
    %v4361 = vsel %vm73, 0.0, %v4359
    %4362 = vrot.lane.b32.xlu0 %v4354, 32
    %v4363 = vpop.permute.xlu0 %4362
    %v4365 = vsel %vm52, %v4361, %v4363
    %4366 = vrot.lane.b32.xlu0 %v4354, 33
    %v4367 = vpop.permute.xlu0 %4366
    %v4369 = vsel %vm73, 0.0, %v4367
    %4370 = vrot.lane.b32.xlu0 %v4354, 96
    %v4371 = vpop.permute.xlu0 %4370
    %v4373 = vsel %vm52, %v4369, %v4371
    %4375 = vrot.lane.b32.xlu0 %v4373, 64
    %v4376 = vpop.permute.xlu0 %4375
    %v4378 = vsel %vm430, %v4365, %v4376
    %4379 = vrot.lane.b32.xlu0 %v4354, 64
    %v4380 = vpop.permute.xlu0 %4379
    %v4382 = vsel %vm430, %v4373, %v4380
    %4383 = vrot.lane.b32.xlu0 %v4354, 127
    %v4384 = vpop.permute.xlu0 %4383
    %v4386 = vsel %vm78, %v4384, 0.0
    %4388 = vrot.lane.b32.xlu0 %v4386, 32
    %v4389 = vpop.permute.xlu0 %4388
    %v4391 = vsel %vm52, %v4371, %v4389
    %4393 = vrot.lane.b32.xlu0 %v4391, 64
    %v4394 = vpop.permute.xlu0 %4393
    %v4396 = vsel %vm430, %v4380, %v4394
    %4397 = vrot.lane.b32.xlu0 %v4354, 63
    %v4398 = vpop.permute.xlu0 %4397
    %v4400 = vsel %vm78, %v4398, 0.0
    %4402 = vrot.lane.b32.xlu0 %v4400, 32
    %v4403 = vpop.permute.xlu0 %4402
    %v4405 = vsel %vm52, %v4363, %v4403
    %4407 = vrot.lane.b32.xlu0 %v4405, 64
    %v4408 = vpop.permute.xlu0 %4407
    %v4410 = vsel %vm430, %v4391, %v4408
    %4412 = vrot.lane.b32.xlu0 %v4355, 97
    %v4413 = vpop.permute.xlu0 %4412
    %v4415 = vsel %vm73, 0.0, %v4413
    %4416 = vrot.lane.b32.xlu0 %v4355, 32
    %v4417 = vpop.permute.xlu0 %4416
    %v4419 = vsel %vm52, %v4415, %v4417
    %4420 = vrot.lane.b32.xlu0 %v4355, 33
    %v4421 = vpop.permute.xlu0 %4420
    %v4423 = vsel %vm73, 0.0, %v4421
    %4424 = vrot.lane.b32.xlu0 %v4355, 96
    %v4425 = vpop.permute.xlu0 %4424
    %v4427 = vsel %vm52, %v4423, %v4425
    %4429 = vrot.lane.b32.xlu0 %v4427, 64
    %v4430 = vpop.permute.xlu0 %4429
    %v4432 = vsel %vm430, %v4419, %v4430
    %4433 = vrot.lane.b32.xlu0 %v4355, 64
    %v4434 = vpop.permute.xlu0 %4433
    %v4436 = vsel %vm430, %v4427, %v4434
    %4437 = vrot.lane.b32.xlu0 %v4355, 127
    %v4438 = vpop.permute.xlu0 %4437
    %v4440 = vsel %vm78, %v4438, 0.0
    %4442 = vrot.lane.b32.xlu0 %v4440, 32
    %v4443 = vpop.permute.xlu0 %4442
    %v4445 = vsel %vm52, %v4425, %v4443
    %4447 = vrot.lane.b32.xlu0 %v4445, 64
    %v4448 = vpop.permute.xlu0 %4447
    %v4450 = vsel %vm430, %v4434, %v4448
    %4451 = vrot.lane.b32.xlu0 %v4355, 63
    %v4452 = vpop.permute.xlu0 %4451
    %v4454 = vsel %vm78, %v4452, 0.0
    %4456 = vrot.lane.b32.xlu0 %v4454, 32
    %v4457 = vpop.permute.xlu0 %4456
    %v4459 = vsel %vm52, %v4417, %v4457
    %4461 = vrot.lane.b32.xlu0 %v4459, 64
    %v4462 = vpop.permute.xlu0 %4461
    %v4464 = vsel %vm430, %v4445, %v4462
    %v4465 = vpack.c.bf16 %v4382, %v4378
    %v4466 = vpack.c.bf16 %v4436, %v4432
    %v4467 = vpack.c.bf16 %v4396, %v4354
    %v4468 = vpack.c.bf16 %v4450, %v4355
    %v4469 = vpack.c.bf16 %v4410, %v4410
    %v4470 = vpack.c.bf16 %v4464, %v4464
    %4471 = vset.pattern.permute.xlu0 39
    %4472 = vperm.xlu0 %4471, %v249
    %v4473 = vpop.permute.xlu0 %4472
    %v4476 = vunpack.c.l.b16 %v4356
    %v4477 = vunpack.c.h.b16 %v4356
    %v4478 = vpack.c.b16 %v4476, %v4476
    %v4479 = vpack.c.b16 %v4477, %v4477
    %4480 = vrot.lane.b32.xlu0 %v4478, 8
    %v4481 = vpop.permute.xlu0 %4480
    %4482 = vrot.lane.b32.xlu0 %v4479, 8
    %v4483 = vpop.permute.xlu0 %4482
    %v4484 = vsel %vm642, %v4481, %v4483
    %v4486 = vsel %vm1609, %v4484, 0
    %v4489 = vsel %vm173, %v4469, 0
    %v4492 = vsel %vm173, %v4470, 0
    %4494 = vmatprep.subr.bf16.mxu0 0
    %4495 = vmatpush1.bf16.msra.mxu0 0
    %4496 = vmatprep.subr.bf16.mxu0 0
    %4497 = vmatpush1.bf16.msra.mxu0 0
    %4498 = vmatprep.subr.bf16.mxu0 0
    %4499 = vmatpush1.bf16.msra.mxu0 0
    %4500 = vmatprep.subr.bf16.mxu0 0
    %4501 = vmatpush1.bf16.msra.mxu0 0
    %4502 = vmatprep.subr.bf16.mxu0 0
    %4503 = vmatpush1.bf16.msra.mxu0 0
    %4504 = vmatprep.subr.bf16.mxu0 %v4492
    %4505 = vmatpush1.bf16.msra.mxu0 %v4489
    %4506 = vmatprep.subr.bf16.mxu0 %v4468
    %4507 = vmatpush1.bf16.msra.mxu0 %v4467
    %4508 = vmatprep.subr.bf16.mxu0 %v4466
    %4509 = vmatpush1.bf16.msra.mxu0 %v4465
    %4510 = vmatprep.subr.bf16.mxu0 0
    %4511 = vmatpush2.bf16.msra.mxu0 0
    %4512 = vmatprep.subr.bf16.mxu0 0
    %4513 = vmatpush2.bf16.msra.mxu0 0
    %4514 = vmatprep.subr.bf16.mxu0 0
    %4515 = vmatpush2.bf16.msra.mxu0 0
    %4516 = vmatprep.subr.bf16.mxu0 0
    %4517 = vmatpush2.bf16.msra.mxu0 0
    %4518 = vmatprep.subr.bf16.mxu0 0
    %4519 = vmatpush2.bf16.msra.mxu0 0
    %4520 = vmatprep.subr.bf16.mxu0 0
    %4521 = vmatpush2.bf16.msra.mxu0 0
    %4522 = vmatprep.subr.bf16.mxu0 0
    %4523 = vmatpush2.bf16.msra.mxu0 0
    %4524 = vmatprep.subr.bf16.mxu0 0
    %4525 = vmatpush2.bf16.msra.mxu0 0
    %4526 = vmatprep.mubr.bf16.mxu0 0
    %4527 = vmatmul.mubr.bf16.gmra.mxu0 %v4486
    %v4528 = vpop.f32.mrf.mxu0
    %v4529 = vadd.f32 %v4473, %v4528
    %v4530 = vpop.f32.mrf.mxu0
    %v4531 = vadd.f32 %v4473, %v4530
    %v4532 = vpop.f32.mrf.mxu0
    %v4533 = vpop.f32.mrf.mxu0
    %4534 = vdwg.mxu0
    %v4535 = vmul.f32 %v4529, %v2921
    %v4536 = vmul.f32 %v4531, %v2925
    %4537 = vset.pattern.permute.xlu0 43
    %4538 = vperm.xlu0 %4537, %v249
    %v4539 = vpop.permute.xlu0 %4538
    %v4541 = vmul.f32 %v4539, %v4535
    %v4542 = vmul.f32 %v4539, %v4536
    %v4543 = vand.u32 2147483647, %v4541
    %vm4544 = vcmp.le.f32.partialorder %v4543, 0.7853982
    %vm4545 = vcmp.lt.s32.totalorder %v4541, 0
    %v4546 = vand.u32 %v4541, 2139095040
    %v4547 = vshrl.u32 %v4546, 23
    %v4548 = vsub.s32 %v4547, 127
    %v4549 = vand.u32 2147483647, %v4541
    %v4550 = vand.u32 %v4549, 8388607
    %v4551 = vor.u32 %v4550, 8388608
    %v4552 = vsub.s32 0, %v4551
    %v4553 = vadd.s32 %v4548, 1
    %vm4554 = vcmp.gt.s32.totalorder %v4553, 0
    %v4555 = vsel %vm4554, %v4553, 0
    %v4556 = vshrl.u32 %v4555, 5
    %v4557 = vand.u32 %v4555, 31
    %v4558 = vsub.s32 32, %v4557
    %v4559 = vshrl.u32 683565275, %v4558
    %v4560 = vshll.u32 683565275, %v4557
    %v4561 = vshrl.u32 2475754826, %v4558
    %v4562 = vor.u32 %v4560, %v4561
    %v4563 = vshll.u32 2475754826, %v4557
    %v4564 = vshrl.u32 2131351028, %v4558
    %v4565 = vor.u32 %v4563, %v4564
    %v4566 = vshll.u32 2131351028, %v4557
    %v4567 = vshrl.u32 2102212464, %v4558
    %v4568 = vor.u32 %v4566, %v4567
    %v4569 = vshll.u32 2102212464, %v4557
    %v4570 = vshrl.u32 920167782, %v4558
    %v4571 = vor.u32 %v4569, %v4570
    %v4572 = vshll.u32 920167782, %v4557
    %v4573 = vshrl.u32 1326507024, %v4558
    %v4574 = vor.u32 %v4572, %v4573
    %vm4575 = vcmp.lt.s32.totalorder %v4556, 1
    %vm4576 = vcmp.lt.s32.totalorder %v4556, 2
    %vm4577 = vcmp.lt.s32.totalorder %v4556, 3
    %vm4578 = vcmp.lt.s32.totalorder %v4556, 4
    %v4579 = vsel %vm4575, %v4559, %v4562
    %v4580 = vsel %vm4578, %v4568, 2102212464
    %v4581 = vsel %vm4577, %v4565, %v4580
    %v4582 = vsel %vm4576, %v4579, %v4581
    %v4583 = vsel %vm4575, %v4562, %v4565
    %v4584 = vsel %vm4578, %v4571, 920167782
    %v4585 = vsel %vm4577, %v4568, %v4584
    %v4586 = vsel %vm4576, %v4583, %v4585
    %v4587 = vsel %vm4575, %v4565, %v4568
    %v4588 = vsel %vm4578, %v4574, 1326507024
    %v4589 = vsel %vm4577, %v4571, %v4588
    %v4590 = vsel %vm4576, %v4587, %v4589
    %v4591 = vshll.u32 %v4551, 8
    %v4592 = vmul.u32.u64.compose %v4591, %v4590
    %v4593 = vextract.low.u32 %v4592
    %v4594 = vextract.high.u32 %v4592
    %v4595 = vmul.u32.u64.compose %v4591, %v4586
    %v4596 = vextract.low.u32 %v4595
    %v4597 = vextract.high.u32 %v4595
    %v4598 = vmul.u32 %v4591, %v4582
    %v4599 = vadd.s32 %v4594, %v4596
    %vm4600 = vc.u32 %v4594, %v4596
    %v4601 = vadd.s32 %v4597, 1
    %v4602 = vsel %vm4600, %v4601, %v4597
    %v4603 = vadd.s32 %v4598, %v4602
    %v4604 = vadd.s32 %v4603, 536870912
    %v4605 = vshrl.u32 %v4604, 30
    %v4606 = vshll.u32 %v4605, 30
    %v4607 = vsub.s32 %v4603, %v4606
    %vm4608 = vcmp.lt.s32.totalorder %v4607, 0
    %v4609 = vsub.s32 0, %v4607
    %v4610 = vsel %vm4608, %v4609, %v4607
    %v4611 = vclz %v4610
    %v4612 = vsub.s32 %v4611, 2
    %vm4613 = vcmp.gt.s32.totalorder 0, %v4612
    %v4614 = vsel %vm4613, 0, %v4612
    %v4615 = vsub.s32 32, %v4614
    %v4616 = vshll.u32 %v4607, %v4614
    %v4617 = vshrl.u32 %v4599, %v4615
    %v4618 = vor.u32 %v4616, %v4617
    %v4619 = vsub.s32 4294967266, %v4614
    %v4620 = vadd.s32 %v4619, 127
    %v4621 = vshll.u32 %v4620, 23
    %v4622 = vor.u32 4788187, %v4621
    %v4623 = vand.u32 2147483647, %v4622
    %v4625 = vcvt.s32.f32 %v4618
    %v4626 = vmul.f32 %v4625, %v4623
    %v4627 = vxor.u32 %v4626, 2147483648
    %v4628 = vsel %vm4545, %v4627, %v4626
    %v4629 = vsub.s32 4, %v4605
    %v4630 = vsel %vm4545, %v4629, %v4605
    %v4631 = vsel %vm4544, %v4541, %v4628
    %v4632 = vsel %vm4544, 0, %v4630
    %v4633 = vcosq.f32.pop %v4631
    %v4634 = vsinq.f32.pop %v4631
    %vm4635 = vweird.f32 %v4541
    %v4636 = vadd.s32 %v4632, 3
    %v4637 = vand.u32 %v4636, 3
    %vm4638 = vcmp.lt.s32.totalorder %v4637, 2
    %vm4639 = vcmp.eq.s32.totalorder %v4637, 0
    %v4640 = vxor.u32 %v4634, 2147483648
    %v4641 = vsel %vm4639, %v4633, %v4640
    %vm4642 = vcmp.eq.s32.totalorder %v4637, 2
    %v4643 = vxor.u32 %v4633, 2147483648
    %v4644 = vsel %vm4642, %v4643, %v4634
    %v4645 = vsel %vm4638, %v4641, %v4644
    %v4646 = vsel %vm4635, nan, %v4645
    %v4647 = vand.u32 2147483647, %v4542
    %vm4648 = vcmp.le.f32.partialorder %v4647, 0.7853982
    %vm4649 = vcmp.lt.s32.totalorder %v4542, 0
    %v4650 = vand.u32 %v4542, 2139095040
    %v4651 = vshrl.u32 %v4650, 23
    %v4652 = vsub.s32 %v4651, 127
    %v4653 = vand.u32 2147483647, %v4542
    %v4654 = vand.u32 %v4653, 8388607
    %v4655 = vor.u32 %v4654, 8388608
    %v4656 = vsub.s32 0, %v4655
    %v4657 = vadd.s32 %v4652, 1
    %vm4658 = vcmp.gt.s32.totalorder %v4657, 0
    %v4659 = vsel %vm4658, %v4657, 0
    %v4660 = vshrl.u32 %v4659, 5
    %v4661 = vand.u32 %v4659, 31
    %v4662 = vsub.s32 32, %v4661
    %v4663 = vshrl.u32 683565275, %v4662
    %v4664 = vshll.u32 683565275, %v4661
    %v4665 = vshrl.u32 2475754826, %v4662
    %v4666 = vor.u32 %v4664, %v4665
    %v4667 = vshll.u32 2475754826, %v4661
    %v4668 = vshrl.u32 2131351028, %v4662
    %v4669 = vor.u32 %v4667, %v4668
    %v4670 = vshll.u32 2131351028, %v4661
    %v4671 = vshrl.u32 2102212464, %v4662
    %v4672 = vor.u32 %v4670, %v4671
    %v4673 = vshll.u32 2102212464, %v4661
    %v4674 = vshrl.u32 920167782, %v4662
    %v4675 = vor.u32 %v4673, %v4674
    %v4676 = vshll.u32 920167782, %v4661
    %v4677 = vshrl.u32 1326507024, %v4662
    %v4678 = vor.u32 %v4676, %v4677
    %vm4679 = vcmp.lt.s32.totalorder %v4660, 1
    %vm4680 = vcmp.lt.s32.totalorder %v4660, 2
    %vm4681 = vcmp.lt.s32.totalorder %v4660, 3
    %vm4682 = vcmp.lt.s32.totalorder %v4660, 4
    %v4683 = vsel %vm4679, %v4663, %v4666
    %v4684 = vsel %vm4682, %v4672, 2102212464
    %v4685 = vsel %vm4681, %v4669, %v4684
    %v4686 = vsel %vm4680, %v4683, %v4685
    %v4687 = vsel %vm4679, %v4666, %v4669
    %v4688 = vsel %vm4682, %v4675, 920167782
    %v4689 = vsel %vm4681, %v4672, %v4688
    %v4690 = vsel %vm4680, %v4687, %v4689
    %v4691 = vsel %vm4679, %v4669, %v4672
    %v4692 = vsel %vm4682, %v4678, 1326507024
    %v4693 = vsel %vm4681, %v4675, %v4692
    %v4694 = vsel %vm4680, %v4691, %v4693
    %v4695 = vshll.u32 %v4655, 8
    %v4696 = vmul.u32.u64.compose %v4695, %v4694
    %v4697 = vextract.low.u32 %v4696
    %v4698 = vextract.high.u32 %v4696
    %v4699 = vmul.u32.u64.compose %v4695, %v4690
    %v4700 = vextract.low.u32 %v4699
    %v4701 = vextract.high.u32 %v4699
    %v4702 = vmul.u32 %v4695, %v4686
    %v4703 = vadd.s32 %v4698, %v4700
    %vm4704 = vc.u32 %v4698, %v4700
    %v4705 = vadd.s32 %v4701, 1
    %v4706 = vsel %vm4704, %v4705, %v4701
    %v4707 = vadd.s32 %v4702, %v4706
    %v4708 = vadd.s32 %v4707, 536870912
    %v4709 = vshrl.u32 %v4708, 30
    %v4710 = vshll.u32 %v4709, 30
    %v4711 = vsub.s32 %v4707, %v4710
    %vm4712 = vcmp.lt.s32.totalorder %v4711, 0
    %v4713 = vsub.s32 0, %v4711
    %v4714 = vsel %vm4712, %v4713, %v4711
    %v4715 = vclz %v4714
    %v4716 = vsub.s32 %v4715, 2
    %vm4717 = vcmp.gt.s32.totalorder 0, %v4716
    %v4718 = vsel %vm4717, 0, %v4716
    %v4719 = vsub.s32 32, %v4718
    %v4720 = vshll.u32 %v4711, %v4718
    %v4721 = vshrl.u32 %v4703, %v4719
    %v4722 = vor.u32 %v4720, %v4721
    %v4723 = vsub.s32 4294967266, %v4718
    %v4724 = vadd.s32 %v4723, 127
    %v4725 = vshll.u32 %v4724, 23
    %v4726 = vor.u32 4788187, %v4725
    %v4727 = vand.u32 2147483647, %v4726
    %v4729 = vcvt.s32.f32 %v4722
    %v4730 = vmul.f32 %v4729, %v4727
    %v4731 = vxor.u32 %v4730, 2147483648
    %v4732 = vsel %vm4649, %v4731, %v4730
    %v4733 = vsub.s32 4, %v4709
    %v4734 = vsel %vm4649, %v4733, %v4709
    %v4735 = vsel %vm4648, %v4542, %v4732
    %v4736 = vsel %vm4648, 0, %v4734
    %v4737 = vcosq.f32.pop %v4735
    %v4738 = vsinq.f32.pop %v4735
    %vm4739 = vweird.f32 %v4542
    %v4740 = vadd.s32 %v4736, 3
    %v4741 = vand.u32 %v4740, 3
    %vm4742 = vcmp.lt.s32.totalorder %v4741, 2
    %vm4743 = vcmp.eq.s32.totalorder %v4741, 0
    %v4744 = vxor.u32 %v4738, 2147483648
    %v4745 = vsel %vm4743, %v4737, %v4744
    %vm4746 = vcmp.eq.s32.totalorder %v4741, 2
    %v4747 = vxor.u32 %v4737, 2147483648
    %v4748 = vsel %vm4746, %v4747, %v4738
    %v4749 = vsel %vm4742, %v4745, %v4748
    %v4750 = vsel %vm4739, nan, %v4749
    %v4751 = vmul.f32 %v4646, %v4646
    %v4752 = vmul.f32 %v4750, %v4750
    %4753 = vset.pattern.permute.xlu0 44
    %4754 = vperm.xlu0 %4753, %v249
    %v4755 = vpop.permute.xlu0 %4754
    %v4757 = vmul.f32 %v4755, %v4751
    %v4758 = vmul.f32 %v4755, %v4752
    %v4759 = vadd.f32 %v4535, %v4757
    %v4760 = vadd.f32 %v4536, %v4758
    %v4761 = vmul.f32 %v4759, %v2921
    %v4762 = vmul.f32 %v4760, %v2925
    %v4763 = vld [vmem:[%s3 + $0x10] sm:$0xf]
    %4765 = vrot.lane.b32.xlu0 %v4761, 97
    %v4766 = vpop.permute.xlu0 %4765
    %v4768 = vsel %vm73, 0.0, %v4766
    %4769 = vrot.lane.b32.xlu0 %v4761, 32
    %v4770 = vpop.permute.xlu0 %4769
    %v4772 = vsel %vm52, %v4768, %v4770
    %4773 = vrot.lane.b32.xlu0 %v4761, 33
    %v4774 = vpop.permute.xlu0 %4773
    %v4776 = vsel %vm73, 0.0, %v4774
    %4777 = vrot.lane.b32.xlu0 %v4761, 96
    %v4778 = vpop.permute.xlu0 %4777
    %v4780 = vsel %vm52, %v4776, %v4778
    %4782 = vrot.lane.b32.xlu0 %v4780, 64
    %v4783 = vpop.permute.xlu0 %4782
    %v4785 = vsel %vm430, %v4772, %v4783
    %4786 = vrot.lane.b32.xlu0 %v4761, 64
    %v4787 = vpop.permute.xlu0 %4786
    %v4789 = vsel %vm430, %v4780, %v4787
    %4790 = vrot.lane.b32.xlu0 %v4761, 127
    %v4791 = vpop.permute.xlu0 %4790
    %v4793 = vsel %vm78, %v4791, 0.0
    %4795 = vrot.lane.b32.xlu0 %v4793, 32
    %v4796 = vpop.permute.xlu0 %4795
    %v4798 = vsel %vm52, %v4778, %v4796
    %4800 = vrot.lane.b32.xlu0 %v4798, 64
    %v4801 = vpop.permute.xlu0 %4800
    %v4803 = vsel %vm430, %v4787, %v4801
    %4804 = vrot.lane.b32.xlu0 %v4761, 63
    %v4805 = vpop.permute.xlu0 %4804
    %v4807 = vsel %vm78, %v4805, 0.0
    %4809 = vrot.lane.b32.xlu0 %v4807, 32
    %v4810 = vpop.permute.xlu0 %4809
    %v4812 = vsel %vm52, %v4770, %v4810
    %4814 = vrot.lane.b32.xlu0 %v4812, 64
    %v4815 = vpop.permute.xlu0 %4814
    %v4817 = vsel %vm430, %v4798, %v4815
    %4819 = vrot.lane.b32.xlu0 %v4762, 97
    %v4820 = vpop.permute.xlu0 %4819
    %v4822 = vsel %vm73, 0.0, %v4820
    %4823 = vrot.lane.b32.xlu0 %v4762, 32
    %v4824 = vpop.permute.xlu0 %4823
    %v4826 = vsel %vm52, %v4822, %v4824
    %4827 = vrot.lane.b32.xlu0 %v4762, 33
    %v4828 = vpop.permute.xlu0 %4827
    %v4830 = vsel %vm73, 0.0, %v4828
    %4831 = vrot.lane.b32.xlu0 %v4762, 96
    %v4832 = vpop.permute.xlu0 %4831
    %v4834 = vsel %vm52, %v4830, %v4832
    %4836 = vrot.lane.b32.xlu0 %v4834, 64
    %v4837 = vpop.permute.xlu0 %4836
    %v4839 = vsel %vm430, %v4826, %v4837
    %4840 = vrot.lane.b32.xlu0 %v4762, 64
    %v4841 = vpop.permute.xlu0 %4840
    %v4843 = vsel %vm430, %v4834, %v4841
    %4844 = vrot.lane.b32.xlu0 %v4762, 127
    %v4845 = vpop.permute.xlu0 %4844
    %v4847 = vsel %vm78, %v4845, 0.0
    %4849 = vrot.lane.b32.xlu0 %v4847, 32
    %v4850 = vpop.permute.xlu0 %4849
    %v4852 = vsel %vm52, %v4832, %v4850
    %4854 = vrot.lane.b32.xlu0 %v4852, 64
    %v4855 = vpop.permute.xlu0 %4854
    %v4857 = vsel %vm430, %v4841, %v4855
    %4858 = vrot.lane.b32.xlu0 %v4762, 63
    %v4859 = vpop.permute.xlu0 %4858
    %v4861 = vsel %vm78, %v4859, 0.0
    %4863 = vrot.lane.b32.xlu0 %v4861, 32
    %v4864 = vpop.permute.xlu0 %4863
    %v4866 = vsel %vm52, %v4824, %v4864
    %4868 = vrot.lane.b32.xlu0 %v4866, 64
    %v4869 = vpop.permute.xlu0 %4868
    %v4871 = vsel %vm430, %v4852, %v4869
    %v4872 = vpack.c.bf16 %v4789, %v4785
    %v4873 = vpack.c.bf16 %v4843, %v4839
    %v4874 = vpack.c.bf16 %v4803, %v4761
    %v4875 = vpack.c.bf16 %v4857, %v4762
    %v4876 = vpack.c.bf16 %v4817, %v4817
    %v4877 = vpack.c.bf16 %v4871, %v4871
    %4878 = vset.pattern.permute.xlu0 42
    %4879 = vperm.xlu0 %4878, %v249
    %v4880 = vpop.permute.xlu0 %4879
    %v4883 = vunpack.c.l.b16 %v4763
    %v4884 = vpack.c.b16 %v4883, %v4883
    %4885 = vrot.lane.b32.xlu0 %v4884, 96
    %v4886 = vpop.permute.xlu0 %4885
    %v4888 = vsel %vm1609, %v4886, 0
    %v4891 = vsel %vm173, %v4876, 0
    %v4894 = vsel %vm173, %v4877, 0
    %4896 = vmatprep.subr.bf16.mxu0 0
    %4897 = vmatpush1.bf16.msra.mxu0 0
    %4898 = vmatprep.subr.bf16.mxu0 0
    %4899 = vmatpush1.bf16.msra.mxu0 0
    %4900 = vmatprep.subr.bf16.mxu0 0
    %4901 = vmatpush1.bf16.msra.mxu0 0
    %4902 = vmatprep.subr.bf16.mxu0 0
    %4903 = vmatpush1.bf16.msra.mxu0 0
    %4904 = vmatprep.subr.bf16.mxu0 0
    %4905 = vmatpush1.bf16.msra.mxu0 0
    %4906 = vmatprep.subr.bf16.mxu0 %v4894
    %4907 = vmatpush1.bf16.msra.mxu0 %v4891
    %4908 = vmatprep.subr.bf16.mxu0 %v4875
    %4909 = vmatpush1.bf16.msra.mxu0 %v4874
    %4910 = vmatprep.subr.bf16.mxu0 %v4873
    %4911 = vmatpush1.bf16.msra.mxu0 %v4872
    %4912 = vmatprep.subr.bf16.mxu0 0
    %4913 = vmatpush2.bf16.msra.mxu0 0
    %4914 = vmatprep.subr.bf16.mxu0 0
    %4915 = vmatpush2.bf16.msra.mxu0 0
    %4916 = vmatprep.subr.bf16.mxu0 0
    %4917 = vmatpush2.bf16.msra.mxu0 0
    %4918 = vmatprep.subr.bf16.mxu0 0
    %4919 = vmatpush2.bf16.msra.mxu0 0
    %4920 = vmatprep.subr.bf16.mxu0 0
    %4921 = vmatpush2.bf16.msra.mxu0 0
    %4922 = vmatprep.subr.bf16.mxu0 0
    %4923 = vmatpush2.bf16.msra.mxu0 0
    %4924 = vmatprep.subr.bf16.mxu0 0
    %4925 = vmatpush2.bf16.msra.mxu0 0
    %4926 = vmatprep.subr.bf16.mxu0 0
    %4927 = vmatpush2.bf16.msra.mxu0 0
    %4928 = vmatprep.mubr.bf16.mxu0 0
    %4929 = vmatmul.mubr.bf16.gmra.mxu0 %v4888
    %v4930 = vpop.f32.mrf.mxu0
    %v4931 = vadd.f32 %v4880, %v4930
    %v4932 = vpop.f32.mrf.mxu0
    %v4933 = vadd.f32 %v4880, %v4932
    %v4934 = vpop.f32.mrf.mxu0
    %v4935 = vpop.f32.mrf.mxu0
    %4936 = vdwg.mxu0
    %v4937 = vmul.f32 %v4931, %v2921
    %v4938 = vmul.f32 %v4933, %v2925
    %v4939 = vadd.f32 %v4937, %v2677
    %v4940 = vadd.f32 %v4938, %v2678
    %4941 = vset.pattern.permute.xlu0 46
    %4942 = vperm.xlu0 %4941, %v249
    %v4943 = vpop.permute.xlu0 %4942
    %v4945 = vmul.f32 %v4943, %v4939
    %v4946 = vmul.f32 %v4943, %v4940
    %v4947 = vand.u32 2147483647, %v4945
    %vm4948 = vcmp.le.f32.partialorder %v4947, 0.7853982
    %vm4949 = vcmp.lt.s32.totalorder %v4945, 0
    %v4950 = vand.u32 %v4945, 2139095040
    %v4951 = vshrl.u32 %v4950, 23
    %v4952 = vsub.s32 %v4951, 127
    %v4953 = vand.u32 2147483647, %v4945
    %v4954 = vand.u32 %v4953, 8388607
    %v4955 = vor.u32 %v4954, 8388608
    %v4956 = vsub.s32 0, %v4955
    %v4957 = vadd.s32 %v4952, 1
    %vm4958 = vcmp.gt.s32.totalorder %v4957, 0
    %v4959 = vsel %vm4958, %v4957, 0
    %v4960 = vshrl.u32 %v4959, 5
    %v4961 = vand.u32 %v4959, 31
    %v4962 = vsub.s32 32, %v4961
    %v4963 = vshrl.u32 683565275, %v4962
    %v4964 = vshll.u32 683565275, %v4961
    %v4965 = vshrl.u32 2475754826, %v4962
    %v4966 = vor.u32 %v4964, %v4965
    %v4967 = vshll.u32 2475754826, %v4961
    %v4968 = vshrl.u32 2131351028, %v4962
    %v4969 = vor.u32 %v4967, %v4968
    %v4970 = vshll.u32 2131351028, %v4961
    %v4971 = vshrl.u32 2102212464, %v4962
    %v4972 = vor.u32 %v4970, %v4971
    %v4973 = vshll.u32 2102212464, %v4961
    %v4974 = vshrl.u32 920167782, %v4962
    %v4975 = vor.u32 %v4973, %v4974
    %v4976 = vshll.u32 920167782, %v4961
    %v4977 = vshrl.u32 1326507024, %v4962
    %v4978 = vor.u32 %v4976, %v4977
    %vm4979 = vcmp.lt.s32.totalorder %v4960, 1
    %vm4980 = vcmp.lt.s32.totalorder %v4960, 2
    %vm4981 = vcmp.lt.s32.totalorder %v4960, 3
    %vm4982 = vcmp.lt.s32.totalorder %v4960, 4
    %v4983 = vsel %vm4979, %v4963, %v4966
    %v4984 = vsel %vm4982, %v4972, 2102212464
    %v4985 = vsel %vm4981, %v4969, %v4984
    %v4986 = vsel %vm4980, %v4983, %v4985
    %v4987 = vsel %vm4979, %v4966, %v4969
    %v4988 = vsel %vm4982, %v4975, 920167782
    %v4989 = vsel %vm4981, %v4972, %v4988
    %v4990 = vsel %vm4980, %v4987, %v4989
    %v4991 = vsel %vm4979, %v4969, %v4972
    %v4992 = vsel %vm4982, %v4978, 1326507024
    %v4993 = vsel %vm4981, %v4975, %v4992
    %v4994 = vsel %vm4980, %v4991, %v4993
    %v4995 = vshll.u32 %v4955, 8
    %v4996 = vmul.u32.u64.compose %v4995, %v4994
    %v4997 = vextract.low.u32 %v4996
    %v4998 = vextract.high.u32 %v4996
    %v4999 = vmul.u32.u64.compose %v4995, %v4990
    %v5000 = vextract.low.u32 %v4999
    %v5001 = vextract.high.u32 %v4999
    %v5002 = vmul.u32 %v4995, %v4986
    %v5003 = vadd.s32 %v4998, %v5000
    %vm5004 = vc.u32 %v4998, %v5000
    %v5005 = vadd.s32 %v5001, 1
    %v5006 = vsel %vm5004, %v5005, %v5001
    %v5007 = vadd.s32 %v5002, %v5006
    %v5008 = vadd.s32 %v5007, 536870912
    %v5009 = vshrl.u32 %v5008, 30
    %v5010 = vshll.u32 %v5009, 30
    %v5011 = vsub.s32 %v5007, %v5010
    %vm5012 = vcmp.lt.s32.totalorder %v5011, 0
    %v5013 = vsub.s32 0, %v5011
    %v5014 = vsel %vm5012, %v5013, %v5011
    %v5015 = vclz %v5014
    %v5016 = vsub.s32 %v5015, 2
    %vm5017 = vcmp.gt.s32.totalorder 0, %v5016
    %v5018 = vsel %vm5017, 0, %v5016
    %v5019 = vsub.s32 32, %v5018
    %v5020 = vshll.u32 %v5011, %v5018
    %v5021 = vshrl.u32 %v5003, %v5019
    %v5022 = vor.u32 %v5020, %v5021
    %v5023 = vsub.s32 4294967266, %v5018
    %v5024 = vadd.s32 %v5023, 127
    %v5025 = vshll.u32 %v5024, 23
    %v5026 = vor.u32 4788187, %v5025
    %v5027 = vand.u32 2147483647, %v5026
    %v5029 = vcvt.s32.f32 %v5022
    %v5030 = vmul.f32 %v5029, %v5027
    %v5031 = vxor.u32 %v5030, 2147483648
    %v5032 = vsel %vm4949, %v5031, %v5030
    %v5033 = vsub.s32 4, %v5009
    %v5034 = vsel %vm4949, %v5033, %v5009
    %v5035 = vsel %vm4948, %v4945, %v5032
    %v5036 = vsel %vm4948, 0, %v5034
    %v5037 = vcosq.f32.pop %v5035
    %v5038 = vsinq.f32.pop %v5035
    %vm5039 = vweird.f32 %v4945
    %v5040 = vadd.s32 %v5036, 3
    %v5041 = vand.u32 %v5040, 3
    %vm5042 = vcmp.lt.s32.totalorder %v5041, 2
    %vm5043 = vcmp.eq.s32.totalorder %v5041, 0
    %v5044 = vxor.u32 %v5038, 2147483648
    %v5045 = vsel %vm5043, %v5037, %v5044
    %vm5046 = vcmp.eq.s32.totalorder %v5041, 2
    %v5047 = vxor.u32 %v5037, 2147483648
    %v5048 = vsel %vm5046, %v5047, %v5038
    %v5049 = vsel %vm5042, %v5045, %v5048
    %v5050 = vsel %vm5039, nan, %v5049
    %v5051 = vand.u32 2147483647, %v4946
    %vm5052 = vcmp.le.f32.partialorder %v5051, 0.7853982
    %vm5053 = vcmp.lt.s32.totalorder %v4946, 0
    %v5054 = vand.u32 %v4946, 2139095040
    %v5055 = vshrl.u32 %v5054, 23
    %v5056 = vsub.s32 %v5055, 127
    %v5057 = vand.u32 2147483647, %v4946
    %v5058 = vand.u32 %v5057, 8388607
    %v5059 = vor.u32 %v5058, 8388608
    %v5060 = vsub.s32 0, %v5059
    %v5061 = vadd.s32 %v5056, 1
    %vm5062 = vcmp.gt.s32.totalorder %v5061, 0
    %v5063 = vsel %vm5062, %v5061, 0
    %v5064 = vshrl.u32 %v5063, 5
    %v5065 = vand.u32 %v5063, 31
    %v5066 = vsub.s32 32, %v5065
    %v5067 = vshrl.u32 683565275, %v5066
    %v5068 = vshll.u32 683565275, %v5065
    %v5069 = vshrl.u32 2475754826, %v5066
    %v5070 = vor.u32 %v5068, %v5069
    %v5071 = vshll.u32 2475754826, %v5065
    %v5072 = vshrl.u32 2131351028, %v5066
    %v5073 = vor.u32 %v5071, %v5072
    %v5074 = vshll.u32 2131351028, %v5065
    %v5075 = vshrl.u32 2102212464, %v5066
    %v5076 = vor.u32 %v5074, %v5075
    %v5077 = vshll.u32 2102212464, %v5065
    %v5078 = vshrl.u32 920167782, %v5066
    %v5079 = vor.u32 %v5077, %v5078
    %v5080 = vshll.u32 920167782, %v5065
    %v5081 = vshrl.u32 1326507024, %v5066
    %v5082 = vor.u32 %v5080, %v5081
    %vm5083 = vcmp.lt.s32.totalorder %v5064, 1
    %vm5084 = vcmp.lt.s32.totalorder %v5064, 2
    %vm5085 = vcmp.lt.s32.totalorder %v5064, 3
    %vm5086 = vcmp.lt.s32.totalorder %v5064, 4
    %v5087 = vsel %vm5083, %v5067, %v5070
    %v5088 = vsel %vm5086, %v5076, 2102212464
    %v5089 = vsel %vm5085, %v5073, %v5088
    %v5090 = vsel %vm5084, %v5087, %v5089
    %v5091 = vsel %vm5083, %v5070, %v5073
    %v5092 = vsel %vm5086, %v5079, 920167782
    %v5093 = vsel %vm5085, %v5076, %v5092
    %v5094 = vsel %vm5084, %v5091, %v5093
    %v5095 = vsel %vm5083, %v5073, %v5076
    %v5096 = vsel %vm5086, %v5082, 1326507024
    %v5097 = vsel %vm5085, %v5079, %v5096
    %v5098 = vsel %vm5084, %v5095, %v5097
    %v5099 = vshll.u32 %v5059, 8
    %v5100 = vmul.u32.u64.compose %v5099, %v5098
    %v5101 = vextract.low.u32 %v5100
    %v5102 = vextract.high.u32 %v5100
    %v5103 = vmul.u32.u64.compose %v5099, %v5094
    %v5104 = vextract.low.u32 %v5103
    %v5105 = vextract.high.u32 %v5103
    %v5106 = vmul.u32 %v5099, %v5090
    %v5107 = vadd.s32 %v5102, %v5104
    %vm5108 = vc.u32 %v5102, %v5104
    %v5109 = vadd.s32 %v5105, 1
    %v5110 = vsel %vm5108, %v5109, %v5105
    %v5111 = vadd.s32 %v5106, %v5110
    %v5112 = vadd.s32 %v5111, 536870912
    %v5113 = vshrl.u32 %v5112, 30
    %v5114 = vshll.u32 %v5113, 30
    %v5115 = vsub.s32 %v5111, %v5114
    %vm5116 = vcmp.lt.s32.totalorder %v5115, 0
    %v5117 = vsub.s32 0, %v5115
    %v5118 = vsel %vm5116, %v5117, %v5115
    %v5119 = vclz %v5118
    %v5120 = vsub.s32 %v5119, 2
    %vm5121 = vcmp.gt.s32.totalorder 0, %v5120
    %v5122 = vsel %vm5121, 0, %v5120
    %v5123 = vsub.s32 32, %v5122
    %v5124 = vshll.u32 %v5115, %v5122
    %v5125 = vshrl.u32 %v5107, %v5123
    %v5126 = vor.u32 %v5124, %v5125
    %v5127 = vsub.s32 4294967266, %v5122
    %v5128 = vadd.s32 %v5127, 127
    %v5129 = vshll.u32 %v5128, 23
    %v5130 = vor.u32 4788187, %v5129
    %v5131 = vand.u32 2147483647, %v5130
    %v5133 = vcvt.s32.f32 %v5126
    %v5134 = vmul.f32 %v5133, %v5131
    %v5135 = vxor.u32 %v5134, 2147483648
    %v5136 = vsel %vm5053, %v5135, %v5134
    %v5137 = vsub.s32 4, %v5113
    %v5138 = vsel %vm5053, %v5137, %v5113
    %v5139 = vsel %vm5052, %v4946, %v5136
    %v5140 = vsel %vm5052, 0, %v5138
    %v5141 = vcosq.f32.pop %v5139
    %v5142 = vsinq.f32.pop %v5139
    %vm5143 = vweird.f32 %v4946
    %v5144 = vadd.s32 %v5140, 3
    %v5145 = vand.u32 %v5144, 3
    %vm5146 = vcmp.lt.s32.totalorder %v5145, 2
    %vm5147 = vcmp.eq.s32.totalorder %v5145, 0
    %v5148 = vxor.u32 %v5142, 2147483648
    %v5149 = vsel %vm5147, %v5141, %v5148
    %vm5150 = vcmp.eq.s32.totalorder %v5145, 2
    %v5151 = vxor.u32 %v5141, 2147483648
    %v5152 = vsel %vm5150, %v5151, %v5142
    %v5153 = vsel %vm5146, %v5149, %v5152
    %v5154 = vsel %vm5143, nan, %v5153
    %v5155 = vmul.f32 %v5050, %v5050
    %v5156 = vmul.f32 %v5154, %v5154
    %5157 = vset.pattern.permute.xlu0 47
    %5158 = vperm.xlu0 %5157, %v249
    %v5159 = vpop.permute.xlu0 %5158
    %v5161 = vmul.f32 %v5159, %v5155
    %v5162 = vmul.f32 %v5159, %v5156
    %v5163 = vadd.f32 %v4939, %v5161
    %v5164 = vadd.f32 %v4940, %v5162
    %v5165 = vmul.f32 %v5163, %v2921
    %v5166 = vmul.f32 %v5164, %v2925
    %5168 = vrot.lane.b32.xlu0 %v5165, 98
    %v5169 = vpop.permute.xlu0 %5168
    %v5171 = vsel %vm68, 0.0, %v5169
    %5172 = vrot.lane.b32.xlu0 %v5165, 1
    %v5173 = vpop.permute.xlu0 %5172
    %v5175 = vsel %vm73, 0.0, %v5173
    %5177 = vrot.lane.b32.xlu0 %v5175, 32
    %v5178 = vpop.permute.xlu0 %5177
    %v5180 = vsel %vm52, %v5171, %v5178
    %5181 = vrot.lane.b32.xlu0 %v5165, 34
    %v5182 = vpop.permute.xlu0 %5181
    %v5184 = vsel %vm68, 0.0, %v5182
    %5185 = vrot.lane.b32.xlu0 %v5165, 65
    %v5186 = vpop.permute.xlu0 %5185
    %v5188 = vsel %vm73, 0.0, %v5186
    %5190 = vrot.lane.b32.xlu0 %v5188, 32
    %v5191 = vpop.permute.xlu0 %5190
    %v5193 = vsel %vm52, %v5184, %v5191
    %5195 = vrot.lane.b32.xlu0 %v5193, 64
    %v5196 = vpop.permute.xlu0 %5195
    %v5198 = vsel %vm430, %v5180, %v5196
    %5199 = vrot.lane.b32.xlu0 %v5165, 33
    %v5200 = vpop.permute.xlu0 %5199
    %v5202 = vsel %vm73, 0.0, %v5200
    %5204 = vrot.lane.b32.xlu0 %v5202, 32
    %v5205 = vpop.permute.xlu0 %5204
    %v5207 = vsel %vm52, %v5188, %v5205
    %5208 = vrot.lane.b32.xlu0 %v5165, 97
    %v5209 = vpop.permute.xlu0 %5208
    %v5211 = vsel %vm73, 0.0, %v5209
    %5212 = vrot.lane.b32.xlu0 %v5165, 32
    %v5213 = vpop.permute.xlu0 %5212
    %v5215 = vsel %vm52, %v5211, %v5213
    %5217 = vrot.lane.b32.xlu0 %v5215, 64
    %v5218 = vpop.permute.xlu0 %5217
    %v5220 = vsel %vm430, %v5207, %v5218
    %5221 = vrot.lane.b32.xlu0 %v5165, 63
    %v5222 = vpop.permute.xlu0 %5221
    %v5224 = vsel %vm78, %v5222, 0.0
    %5226 = vrot.lane.b32.xlu0 %v5224, 32
    %v5227 = vpop.permute.xlu0 %5226
    %v5229 = vsel %vm52, %v5213, %v5227
    %5230 = vrot.lane.b32.xlu0 %v5165, 127
    %v5231 = vpop.permute.xlu0 %5230
    %v5233 = vsel %vm78, %v5231, 0.0
    %5234 = vrot.lane.b32.xlu0 %v5165, 95
    %v5235 = vpop.permute.xlu0 %5234
    %v5237 = vsel %vm78, %v5235, 0.0
    %5239 = vrot.lane.b32.xlu0 %v5237, 32
    %v5240 = vpop.permute.xlu0 %5239
    %v5242 = vsel %vm52, %v5233, %v5240
    %5244 = vrot.lane.b32.xlu0 %v5242, 64
    %v5245 = vpop.permute.xlu0 %5244
    %v5247 = vsel %vm430, %v5229, %v5245
    %5248 = vrot.lane.b32.xlu0 %v5165, 126
    %v5249 = vpop.permute.xlu0 %5248
    %v5251 = vsel %vm83, %v5249, 0.0
    %5253 = vrot.lane.b32.xlu0 %v5251, 32
    %v5254 = vpop.permute.xlu0 %5253
    %v5256 = vsel %vm52, %v5237, %v5254
    %5257 = vrot.lane.b32.xlu0 %v5165, 31
    %v5258 = vpop.permute.xlu0 %5257
    %v5260 = vsel %vm78, %v5258, 0.0
    %5261 = vrot.lane.b32.xlu0 %v5165, 62
    %v5262 = vpop.permute.xlu0 %5261
    %v5264 = vsel %vm83, %v5262, 0.0
    %5266 = vrot.lane.b32.xlu0 %v5264, 32
    %v5267 = vpop.permute.xlu0 %5266
    %v5269 = vsel %vm52, %v5260, %v5267
    %5271 = vrot.lane.b32.xlu0 %v5269, 64
    %v5272 = vpop.permute.xlu0 %5271
    %v5274 = vsel %vm430, %v5256, %v5272
    %5276 = vrot.lane.b32.xlu0 %v5166, 98
    %v5277 = vpop.permute.xlu0 %5276
    %v5279 = vsel %vm68, 0.0, %v5277
    %5280 = vrot.lane.b32.xlu0 %v5166, 1
    %v5281 = vpop.permute.xlu0 %5280
    %v5283 = vsel %vm73, 0.0, %v5281
    %5285 = vrot.lane.b32.xlu0 %v5283, 32
    %v5286 = vpop.permute.xlu0 %5285
    %v5288 = vsel %vm52, %v5279, %v5286
    %5289 = vrot.lane.b32.xlu0 %v5166, 34
    %v5290 = vpop.permute.xlu0 %5289
    %v5292 = vsel %vm68, 0.0, %v5290
    %5293 = vrot.lane.b32.xlu0 %v5166, 65
    %v5294 = vpop.permute.xlu0 %5293
    %v5296 = vsel %vm73, 0.0, %v5294
    %5298 = vrot.lane.b32.xlu0 %v5296, 32
    %v5299 = vpop.permute.xlu0 %5298
    %v5301 = vsel %vm52, %v5292, %v5299
    %5303 = vrot.lane.b32.xlu0 %v5301, 64
    %v5304 = vpop.permute.xlu0 %5303
    %v5306 = vsel %vm430, %v5288, %v5304
    %5307 = vrot.lane.b32.xlu0 %v5166, 33
    %v5308 = vpop.permute.xlu0 %5307
    %v5310 = vsel %vm73, 0.0, %v5308
    %5312 = vrot.lane.b32.xlu0 %v5310, 32
    %v5313 = vpop.permute.xlu0 %5312
    %v5315 = vsel %vm52, %v5296, %v5313
    %5316 = vrot.lane.b32.xlu0 %v5166, 97
    %v5317 = vpop.permute.xlu0 %5316
    %v5319 = vsel %vm73, 0.0, %v5317
    %5320 = vrot.lane.b32.xlu0 %v5166, 32
    %v5321 = vpop.permute.xlu0 %5320
    %v5323 = vsel %vm52, %v5319, %v5321
    %5325 = vrot.lane.b32.xlu0 %v5323, 64
    %v5326 = vpop.permute.xlu0 %5325
    %v5328 = vsel %vm430, %v5315, %v5326
    %5329 = vrot.lane.b32.xlu0 %v5166, 63
    %v5330 = vpop.permute.xlu0 %5329
    %v5332 = vsel %vm78, %v5330, 0.0
    %5334 = vrot.lane.b32.xlu0 %v5332, 32
    %v5335 = vpop.permute.xlu0 %5334
    %v5337 = vsel %vm52, %v5321, %v5335
    %5338 = vrot.lane.b32.xlu0 %v5166, 127
    %v5339 = vpop.permute.xlu0 %5338
    %v5341 = vsel %vm78, %v5339, 0.0
    %5342 = vrot.lane.b32.xlu0 %v5166, 95
    %v5343 = vpop.permute.xlu0 %5342
    %v5345 = vsel %vm78, %v5343, 0.0
    %5347 = vrot.lane.b32.xlu0 %v5345, 32
    %v5348 = vpop.permute.xlu0 %5347
    %v5350 = vsel %vm52, %v5341, %v5348
    %5352 = vrot.lane.b32.xlu0 %v5350, 64
    %v5353 = vpop.permute.xlu0 %5352
    %v5355 = vsel %vm430, %v5337, %v5353
    %5356 = vrot.lane.b32.xlu0 %v5166, 126
    %v5357 = vpop.permute.xlu0 %5356
    %v5359 = vsel %vm83, %v5357, 0.0
    %5361 = vrot.lane.b32.xlu0 %v5359, 32
    %v5362 = vpop.permute.xlu0 %5361
    %v5364 = vsel %vm52, %v5345, %v5362
    %5365 = vrot.lane.b32.xlu0 %v5166, 31
    %v5366 = vpop.permute.xlu0 %5365
    %v5368 = vsel %vm78, %v5366, 0.0
    %5369 = vrot.lane.b32.xlu0 %v5166, 62
    %v5370 = vpop.permute.xlu0 %5369
    %v5372 = vsel %vm83, %v5370, 0.0
    %5374 = vrot.lane.b32.xlu0 %v5372, 32
    %v5375 = vpop.permute.xlu0 %5374
    %v5377 = vsel %vm52, %v5368, %v5375
    %5379 = vrot.lane.b32.xlu0 %v5377, 64
    %v5380 = vpop.permute.xlu0 %5379
    %v5382 = vsel %vm430, %v5364, %v5380
    %v5383 = vpack.c.bf16 %v5220, %v5198
    %v5384 = vpack.c.bf16 %v5328, %v5306
    %v5385 = vpack.c.bf16 %v5247, %v5165
    %v5386 = vpack.c.bf16 %v5355, %v5166
    %v5387 = vpack.c.bf16 %v5274, %v5274
    %v5388 = vpack.c.bf16 %v5382, %v5382
    %5389 = vset.pattern.permute.xlu0 45
    %5390 = vperm.xlu0 %5389, %v249
    %v5391 = vpop.permute.xlu0 %5390
    %5393 = vrot.lane.b32.xlu0 %v4884, 56
    %v5394 = vpop.permute.xlu0 %5393
    %v5396 = vsel %vm1609, %v5394, 0
    %v5399 = vsel %vm173, %v5387, 0
    %v5402 = vsel %vm173, %v5388, 0
    %5404 = vmatprep.subr.bf16.mxu0 0
    %5405 = vmatpush1.bf16.msra.mxu0 0
    %5406 = vmatprep.subr.bf16.mxu0 0
    %5407 = vmatpush1.bf16.msra.mxu0 0
    %5408 = vmatprep.subr.bf16.mxu0 0
    %5409 = vmatpush1.bf16.msra.mxu0 0
    %5410 = vmatprep.subr.bf16.mxu0 0
    %5411 = vmatpush1.bf16.msra.mxu0 0
    %5412 = vmatprep.subr.bf16.mxu0 0
    %5413 = vmatpush1.bf16.msra.mxu0 0
    %5414 = vmatprep.subr.bf16.mxu0 %v5402
    %5415 = vmatpush1.bf16.msra.mxu0 %v5399
    %5416 = vmatprep.subr.bf16.mxu0 %v5386
    %5417 = vmatpush1.bf16.msra.mxu0 %v5385
    %5418 = vmatprep.subr.bf16.mxu0 %v5384
    %5419 = vmatpush1.bf16.msra.mxu0 %v5383
    %5420 = vmatprep.subr.bf16.mxu0 0
    %5421 = vmatpush2.bf16.msra.mxu0 0
    %5422 = vmatprep.subr.bf16.mxu0 0
    %5423 = vmatpush2.bf16.msra.mxu0 0
    %5424 = vmatprep.subr.bf16.mxu0 0
    %5425 = vmatpush2.bf16.msra.mxu0 0
    %5426 = vmatprep.subr.bf16.mxu0 0
    %5427 = vmatpush2.bf16.msra.mxu0 0
    %5428 = vmatprep.subr.bf16.mxu0 0
    %5429 = vmatpush2.bf16.msra.mxu0 0
    %5430 = vmatprep.subr.bf16.mxu0 0
    %5431 = vmatpush2.bf16.msra.mxu0 0
    %5432 = vmatprep.subr.bf16.mxu0 0
    %5433 = vmatpush2.bf16.msra.mxu0 0
    %5434 = vmatprep.subr.bf16.mxu0 0
    %5435 = vmatpush2.bf16.msra.mxu0 0
    %5436 = vmatprep.mubr.bf16.mxu0 0
    %5437 = vmatmul.mubr.bf16.gmra.mxu0 %v5396
    %v5438 = vpop.f32.mrf.mxu0
    %v5439 = vadd.f32 %v5391, %v5438
    %v5440 = vpop.f32.mrf.mxu0
    %v5441 = vadd.f32 %v5391, %v5440
    %v5442 = vpop.f32.mrf.mxu0
    %v5443 = vpop.f32.mrf.mxu0
    %5444 = vdwg.mxu0
    %v5445 = vmul.f32 %v5439, %v2921
    %v5446 = vmul.f32 %v5441, %v2925
    %5447 = vset.pattern.permute.xlu0 49
    %5448 = vperm.xlu0 %5447, %v249
    %v5449 = vpop.permute.xlu0 %5448
    %v5451 = vmul.f32 %v5449, %v5445
    %v5452 = vmul.f32 %v5449, %v5446
    %v5453 = vand.u32 2147483647, %v5451
    %vm5454 = vcmp.le.f32.partialorder %v5453, 0.7853982
    %vm5455 = vcmp.lt.s32.totalorder %v5451, 0
    %v5456 = vand.u32 %v5451, 2139095040
    %v5457 = vshrl.u32 %v5456, 23
    %v5458 = vsub.s32 %v5457, 127
    %v5459 = vand.u32 2147483647, %v5451
    %v5460 = vand.u32 %v5459, 8388607
    %v5461 = vor.u32 %v5460, 8388608
    %v5462 = vsub.s32 0, %v5461
    %v5463 = vadd.s32 %v5458, 1
    %vm5464 = vcmp.gt.s32.totalorder %v5463, 0
    %v5465 = vsel %vm5464, %v5463, 0
    %v5466 = vshrl.u32 %v5465, 5
    %v5467 = vand.u32 %v5465, 31
    %v5468 = vsub.s32 32, %v5467
    %v5469 = vshrl.u32 683565275, %v5468
    %v5470 = vshll.u32 683565275, %v5467
    %v5471 = vshrl.u32 2475754826, %v5468
    %v5472 = vor.u32 %v5470, %v5471
    %v5473 = vshll.u32 2475754826, %v5467
    %v5474 = vshrl.u32 2131351028, %v5468
    %v5475 = vor.u32 %v5473, %v5474
    %v5476 = vshll.u32 2131351028, %v5467
    %v5477 = vshrl.u32 2102212464, %v5468
    %v5478 = vor.u32 %v5476, %v5477
    %v5479 = vshll.u32 2102212464, %v5467
    %v5480 = vshrl.u32 920167782, %v5468
    %v5481 = vor.u32 %v5479, %v5480
    %v5482 = vshll.u32 920167782, %v5467
    %v5483 = vshrl.u32 1326507024, %v5468
    %v5484 = vor.u32 %v5482, %v5483
    %vm5485 = vcmp.lt.s32.totalorder %v5466, 1
    %vm5486 = vcmp.lt.s32.totalorder %v5466, 2
    %vm5487 = vcmp.lt.s32.totalorder %v5466, 3
    %vm5488 = vcmp.lt.s32.totalorder %v5466, 4
    %v5489 = vsel %vm5485, %v5469, %v5472
    %v5490 = vsel %vm5488, %v5478, 2102212464
    %v5491 = vsel %vm5487, %v5475, %v5490
    %v5492 = vsel %vm5486, %v5489, %v5491
    %v5493 = vsel %vm5485, %v5472, %v5475
    %v5494 = vsel %vm5488, %v5481, 920167782
    %v5495 = vsel %vm5487, %v5478, %v5494
    %v5496 = vsel %vm5486, %v5493, %v5495
    %v5497 = vsel %vm5485, %v5475, %v5478
    %v5498 = vsel %vm5488, %v5484, 1326507024
    %v5499 = vsel %vm5487, %v5481, %v5498
    %v5500 = vsel %vm5486, %v5497, %v5499
    %v5501 = vshll.u32 %v5461, 8
    %v5502 = vmul.u32.u64.compose %v5501, %v5500
    %v5503 = vextract.low.u32 %v5502
    %v5504 = vextract.high.u32 %v5502
    %v5505 = vmul.u32.u64.compose %v5501, %v5496
    %v5506 = vextract.low.u32 %v5505
    %v5507 = vextract.high.u32 %v5505
    %v5508 = vmul.u32 %v5501, %v5492
    %v5509 = vadd.s32 %v5504, %v5506
    %vm5510 = vc.u32 %v5504, %v5506
    %v5511 = vadd.s32 %v5507, 1
    %v5512 = vsel %vm5510, %v5511, %v5507
    %v5513 = vadd.s32 %v5508, %v5512
    %v5514 = vadd.s32 %v5513, 536870912
    %v5515 = vshrl.u32 %v5514, 30
    %v5516 = vshll.u32 %v5515, 30
    %v5517 = vsub.s32 %v5513, %v5516
    %vm5518 = vcmp.lt.s32.totalorder %v5517, 0
    %v5519 = vsub.s32 0, %v5517
    %v5520 = vsel %vm5518, %v5519, %v5517
    %v5521 = vclz %v5520
    %v5522 = vsub.s32 %v5521, 2
    %vm5523 = vcmp.gt.s32.totalorder 0, %v5522
    %v5524 = vsel %vm5523, 0, %v5522
    %v5525 = vsub.s32 32, %v5524
    %v5526 = vshll.u32 %v5517, %v5524
    %v5527 = vshrl.u32 %v5509, %v5525
    %v5528 = vor.u32 %v5526, %v5527
    %v5529 = vsub.s32 4294967266, %v5524
    %v5530 = vadd.s32 %v5529, 127
    %v5531 = vshll.u32 %v5530, 23
    %v5532 = vor.u32 4788187, %v5531
    %v5533 = vand.u32 2147483647, %v5532
    %v5535 = vcvt.s32.f32 %v5528
    %v5536 = vmul.f32 %v5535, %v5533
    %v5537 = vxor.u32 %v5536, 2147483648
    %v5538 = vsel %vm5455, %v5537, %v5536
    %v5539 = vsub.s32 4, %v5515
    %v5540 = vsel %vm5455, %v5539, %v5515
    %v5541 = vsel %vm5454, %v5451, %v5538
    %v5542 = vsel %vm5454, 0, %v5540
    %v5543 = vcosq.f32.pop %v5541
    %v5544 = vsinq.f32.pop %v5541
    %vm5545 = vweird.f32 %v5451
    %v5546 = vadd.s32 %v5542, 3
    %v5547 = vand.u32 %v5546, 3
    %vm5548 = vcmp.lt.s32.totalorder %v5547, 2
    %vm5549 = vcmp.eq.s32.totalorder %v5547, 0
    %v5550 = vxor.u32 %v5544, 2147483648
    %v5551 = vsel %vm5549, %v5543, %v5550
    %vm5552 = vcmp.eq.s32.totalorder %v5547, 2
    %v5553 = vxor.u32 %v5543, 2147483648
    %v5554 = vsel %vm5552, %v5553, %v5544
    %v5555 = vsel %vm5548, %v5551, %v5554
    %v5556 = vsel %vm5545, nan, %v5555
    %v5557 = vand.u32 2147483647, %v5452
    %vm5558 = vcmp.le.f32.partialorder %v5557, 0.7853982
    %vm5559 = vcmp.lt.s32.totalorder %v5452, 0
    %v5560 = vand.u32 %v5452, 2139095040
    %v5561 = vshrl.u32 %v5560, 23
    %v5562 = vsub.s32 %v5561, 127
    %v5563 = vand.u32 2147483647, %v5452
    %v5564 = vand.u32 %v5563, 8388607
    %v5565 = vor.u32 %v5564, 8388608
    %v5566 = vsub.s32 0, %v5565
    %v5567 = vadd.s32 %v5562, 1
    %vm5568 = vcmp.gt.s32.totalorder %v5567, 0
    %v5569 = vsel %vm5568, %v5567, 0
    %v5570 = vshrl.u32 %v5569, 5
    %v5571 = vand.u32 %v5569, 31
    %v5572 = vsub.s32 32, %v5571
    %v5573 = vshrl.u32 683565275, %v5572
    %v5574 = vshll.u32 683565275, %v5571
    %v5575 = vshrl.u32 2475754826, %v5572
    %v5576 = vor.u32 %v5574, %v5575
    %v5577 = vshll.u32 2475754826, %v5571
    %v5578 = vshrl.u32 2131351028, %v5572
    %v5579 = vor.u32 %v5577, %v5578
    %v5580 = vshll.u32 2131351028, %v5571
    %v5581 = vshrl.u32 2102212464, %v5572
    %v5582 = vor.u32 %v5580, %v5581
    %v5583 = vshll.u32 2102212464, %v5571
    %v5584 = vshrl.u32 920167782, %v5572
    %v5585 = vor.u32 %v5583, %v5584
    %v5586 = vshll.u32 920167782, %v5571
    %v5587 = vshrl.u32 1326507024, %v5572
    %v5588 = vor.u32 %v5586, %v5587
    %vm5589 = vcmp.lt.s32.totalorder %v5570, 1
    %vm5590 = vcmp.lt.s32.totalorder %v5570, 2
    %vm5591 = vcmp.lt.s32.totalorder %v5570, 3
    %vm5592 = vcmp.lt.s32.totalorder %v5570, 4
    %v5593 = vsel %vm5589, %v5573, %v5576
    %v5594 = vsel %vm5592, %v5582, 2102212464
    %v5595 = vsel %vm5591, %v5579, %v5594
    %v5596 = vsel %vm5590, %v5593, %v5595
    %v5597 = vsel %vm5589, %v5576, %v5579
    %v5598 = vsel %vm5592, %v5585, 920167782
    %v5599 = vsel %vm5591, %v5582, %v5598
    %v5600 = vsel %vm5590, %v5597, %v5599
    %v5601 = vsel %vm5589, %v5579, %v5582
    %v5602 = vsel %vm5592, %v5588, 1326507024
    %v5603 = vsel %vm5591, %v5585, %v5602
    %v5604 = vsel %vm5590, %v5601, %v5603
    %v5605 = vshll.u32 %v5565, 8
    %v5606 = vmul.u32.u64.compose %v5605, %v5604
    %v5607 = vextract.low.u32 %v5606
    %v5608 = vextract.high.u32 %v5606
    %v5609 = vmul.u32.u64.compose %v5605, %v5600
    %v5610 = vextract.low.u32 %v5609
    %v5611 = vextract.high.u32 %v5609
    %v5612 = vmul.u32 %v5605, %v5596
    %v5613 = vadd.s32 %v5608, %v5610
    %vm5614 = vc.u32 %v5608, %v5610
    %v5615 = vadd.s32 %v5611, 1
    %v5616 = vsel %vm5614, %v5615, %v5611
    %v5617 = vadd.s32 %v5612, %v5616
    %v5618 = vadd.s32 %v5617, 536870912
    %v5619 = vshrl.u32 %v5618, 30
    %v5620 = vshll.u32 %v5619, 30
    %v5621 = vsub.s32 %v5617, %v5620
    %vm5622 = vcmp.lt.s32.totalorder %v5621, 0
    %v5623 = vsub.s32 0, %v5621
    %v5624 = vsel %vm5622, %v5623, %v5621
    %v5625 = vclz %v5624
    %v5626 = vsub.s32 %v5625, 2
    %vm5627 = vcmp.gt.s32.totalorder 0, %v5626
    %v5628 = vsel %vm5627, 0, %v5626
    %v5629 = vsub.s32 32, %v5628
    %v5630 = vshll.u32 %v5621, %v5628
    %v5631 = vshrl.u32 %v5613, %v5629
    %v5632 = vor.u32 %v5630, %v5631
    %v5633 = vsub.s32 4294967266, %v5628
    %v5634 = vadd.s32 %v5633, 127
    %v5635 = vshll.u32 %v5634, 23
    %v5636 = vor.u32 4788187, %v5635
    %v5637 = vand.u32 2147483647, %v5636
    %v5639 = vcvt.s32.f32 %v5632
    %v5640 = vmul.f32 %v5639, %v5637
    %v5641 = vxor.u32 %v5640, 2147483648
    %v5642 = vsel %vm5559, %v5641, %v5640
    %v5643 = vsub.s32 4, %v5619
    %v5644 = vsel %vm5559, %v5643, %v5619
    %v5645 = vsel %vm5558, %v5452, %v5642
    %v5646 = vsel %vm5558, 0, %v5644
    %v5647 = vcosq.f32.pop %v5645
    %v5648 = vsinq.f32.pop %v5645
    %vm5649 = vweird.f32 %v5452
    %v5650 = vadd.s32 %v5646, 3
    %v5651 = vand.u32 %v5650, 3
    %vm5652 = vcmp.lt.s32.totalorder %v5651, 2
    %vm5653 = vcmp.eq.s32.totalorder %v5651, 0
    %v5654 = vxor.u32 %v5648, 2147483648
    %v5655 = vsel %vm5653, %v5647, %v5654
    %vm5656 = vcmp.eq.s32.totalorder %v5651, 2
    %v5657 = vxor.u32 %v5647, 2147483648
    %v5658 = vsel %vm5656, %v5657, %v5648
    %v5659 = vsel %vm5652, %v5655, %v5658
    %v5660 = vsel %vm5649, nan, %v5659
    %v5661 = vmul.f32 %v5556, %v5556
    %v5662 = vmul.f32 %v5660, %v5660
    %5663 = vset.pattern.permute.xlu0 50
    %5664 = vperm.xlu0 %5663, %v249
    %v5665 = vpop.permute.xlu0 %5664
    %v5667 = vmul.f32 %v5665, %v5661
    %v5668 = vmul.f32 %v5665, %v5662
    %v5669 = vadd.f32 %v5445, %v5667
    %v5670 = vadd.f32 %v5446, %v5668
    %v5671 = vmul.f32 %v5669, %v2921
    %v5672 = vmul.f32 %v5670, %v2925
    %v5673 = vld [vmem:[%s3 + $0x10] sm:$0xff]
    %5675 = vrot.lane.b32.xlu0 %v5671, 97
    %v5676 = vpop.permute.xlu0 %5675
    %v5678 = vsel %vm73, 0.0, %v5676
    %5679 = vrot.lane.b32.xlu0 %v5671, 32
    %v5680 = vpop.permute.xlu0 %5679
    %v5682 = vsel %vm52, %v5678, %v5680
    %5683 = vrot.lane.b32.xlu0 %v5671, 33
    %v5684 = vpop.permute.xlu0 %5683
    %v5686 = vsel %vm73, 0.0, %v5684
    %5687 = vrot.lane.b32.xlu0 %v5671, 96
    %v5688 = vpop.permute.xlu0 %5687
    %v5690 = vsel %vm52, %v5686, %v5688
    %5692 = vrot.lane.b32.xlu0 %v5690, 64
    %v5693 = vpop.permute.xlu0 %5692
    %v5695 = vsel %vm430, %v5682, %v5693
    %5696 = vrot.lane.b32.xlu0 %v5671, 64
    %v5697 = vpop.permute.xlu0 %5696
    %v5699 = vsel %vm430, %v5690, %v5697
    %5700 = vrot.lane.b32.xlu0 %v5671, 127
    %v5701 = vpop.permute.xlu0 %5700
    %v5703 = vsel %vm78, %v5701, 0.0
    %5705 = vrot.lane.b32.xlu0 %v5703, 32
    %v5706 = vpop.permute.xlu0 %5705
    %v5708 = vsel %vm52, %v5688, %v5706
    %5710 = vrot.lane.b32.xlu0 %v5708, 64
    %v5711 = vpop.permute.xlu0 %5710
    %v5713 = vsel %vm430, %v5697, %v5711
    %5714 = vrot.lane.b32.xlu0 %v5671, 63
    %v5715 = vpop.permute.xlu0 %5714
    %v5717 = vsel %vm78, %v5715, 0.0
    %5719 = vrot.lane.b32.xlu0 %v5717, 32
    %v5720 = vpop.permute.xlu0 %5719
    %v5722 = vsel %vm52, %v5680, %v5720
    %5724 = vrot.lane.b32.xlu0 %v5722, 64
    %v5725 = vpop.permute.xlu0 %5724
    %v5727 = vsel %vm430, %v5708, %v5725
    %5729 = vrot.lane.b32.xlu0 %v5672, 97
    %v5730 = vpop.permute.xlu0 %5729
    %v5732 = vsel %vm73, 0.0, %v5730
    %5733 = vrot.lane.b32.xlu0 %v5672, 32
    %v5734 = vpop.permute.xlu0 %5733
    %v5736 = vsel %vm52, %v5732, %v5734
    %5737 = vrot.lane.b32.xlu0 %v5672, 33
    %v5738 = vpop.permute.xlu0 %5737
    %v5740 = vsel %vm73, 0.0, %v5738
    %5741 = vrot.lane.b32.xlu0 %v5672, 96
    %v5742 = vpop.permute.xlu0 %5741
    %v5744 = vsel %vm52, %v5740, %v5742
    %5746 = vrot.lane.b32.xlu0 %v5744, 64
    %v5747 = vpop.permute.xlu0 %5746
    %v5749 = vsel %vm430, %v5736, %v5747
    %5750 = vrot.lane.b32.xlu0 %v5672, 64
    %v5751 = vpop.permute.xlu0 %5750
    %v5753 = vsel %vm430, %v5744, %v5751
    %5754 = vrot.lane.b32.xlu0 %v5672, 127
    %v5755 = vpop.permute.xlu0 %5754
    %v5757 = vsel %vm78, %v5755, 0.0
    %5759 = vrot.lane.b32.xlu0 %v5757, 32
    %v5760 = vpop.permute.xlu0 %5759
    %v5762 = vsel %vm52, %v5742, %v5760
    %5764 = vrot.lane.b32.xlu0 %v5762, 64
    %v5765 = vpop.permute.xlu0 %5764
    %v5767 = vsel %vm430, %v5751, %v5765
    %5768 = vrot.lane.b32.xlu0 %v5672, 63
    %v5769 = vpop.permute.xlu0 %5768
    %v5771 = vsel %vm78, %v5769, 0.0
    %5773 = vrot.lane.b32.xlu0 %v5771, 32
    %v5774 = vpop.permute.xlu0 %5773
    %v5776 = vsel %vm52, %v5734, %v5774
    %5778 = vrot.lane.b32.xlu0 %v5776, 64
    %v5779 = vpop.permute.xlu0 %5778
    %v5781 = vsel %vm430, %v5762, %v5779
    %v5782 = vpack.c.bf16 %v5699, %v5695
    %v5783 = vpack.c.bf16 %v5753, %v5749
    %v5784 = vpack.c.bf16 %v5713, %v5671
    %v5785 = vpack.c.bf16 %v5767, %v5672
    %v5786 = vpack.c.bf16 %v5727, %v5727
    %v5787 = vpack.c.bf16 %v5781, %v5781
    %5788 = vset.pattern.permute.xlu0 48
    %5789 = vperm.xlu0 %5788, %v249
    %v5790 = vpop.permute.xlu0 %5789
    %v5793 = vunpack.c.l.b16 %v5673
    %v5794 = vunpack.c.h.b16 %v5673
    %v5795 = vpack.c.b16 %v5793, %v5793
    %v5796 = vpack.c.b16 %v5794, %v5794
    %5797 = vrot.lane.b32.xlu0 %v5795, 16
    %v5798 = vpop.permute.xlu0 %5797
    %5799 = vrot.lane.b32.xlu0 %v5796, 16
    %v5800 = vpop.permute.xlu0 %5799
    %vm5801 = vcmask 130048
    %v5802 = vsel %vm5801, %v5798, %v5800
    %v5804 = vsel %vm1609, %v5802, 0
    %v5807 = vsel %vm173, %v5786, 0
    %v5810 = vsel %vm173, %v5787, 0
    %5812 = vmatprep.subr.bf16.mxu0 0
    %5813 = vmatpush1.bf16.msra.mxu0 0
    %5814 = vmatprep.subr.bf16.mxu0 0
    %5815 = vmatpush1.bf16.msra.mxu0 0
    %5816 = vmatprep.subr.bf16.mxu0 0
    %5817 = vmatpush1.bf16.msra.mxu0 0
    %5818 = vmatprep.subr.bf16.mxu0 0
    %5819 = vmatpush1.bf16.msra.mxu0 0
    %5820 = vmatprep.subr.bf16.mxu0 0
    %5821 = vmatpush1.bf16.msra.mxu0 0
    %5822 = vmatprep.subr.bf16.mxu0 %v5810
    %5823 = vmatpush1.bf16.msra.mxu0 %v5807
    %5824 = vmatprep.subr.bf16.mxu0 %v5785
    %5825 = vmatpush1.bf16.msra.mxu0 %v5784
    %5826 = vmatprep.subr.bf16.mxu0 %v5783
    %5827 = vmatpush1.bf16.msra.mxu0 %v5782
    %5828 = vmatprep.subr.bf16.mxu0 0
    %5829 = vmatpush2.bf16.msra.mxu0 0
    %5830 = vmatprep.subr.bf16.mxu0 0
    %5831 = vmatpush2.bf16.msra.mxu0 0
    %5832 = vmatprep.subr.bf16.mxu0 0
    %5833 = vmatpush2.bf16.msra.mxu0 0
    %5834 = vmatprep.subr.bf16.mxu0 0
    %5835 = vmatpush2.bf16.msra.mxu0 0
    %5836 = vmatprep.subr.bf16.mxu0 0
    %5837 = vmatpush2.bf16.msra.mxu0 0
    %5838 = vmatprep.subr.bf16.mxu0 0
    %5839 = vmatpush2.bf16.msra.mxu0 0
    %5840 = vmatprep.subr.bf16.mxu0 0
    %5841 = vmatpush2.bf16.msra.mxu0 0
    %5842 = vmatprep.subr.bf16.mxu0 0
    %5843 = vmatpush2.bf16.msra.mxu0 0
    %5844 = vmatprep.mubr.bf16.mxu0 0
    %5845 = vmatmul.mubr.bf16.gmra.mxu0 %v5804
    %v5846 = vpop.f32.mrf.mxu0
    %v5847 = vadd.f32 %v5790, %v5846
    %v5848 = vpop.f32.mrf.mxu0
    %v5849 = vadd.f32 %v5790, %v5848
    %v5850 = vpop.f32.mrf.mxu0
    %v5851 = vpop.f32.mrf.mxu0
    %5852 = vdwg.mxu0
    %v5853 = vmul.f32 %v5847, %v2921
    %v5854 = vmul.f32 %v5849, %v2925
    %v5855 = vadd.f32 %v5853, %v4939
    %v5856 = vadd.f32 %v5854, %v4940
    %v5857 = vmul.f32 %v5855, %v2921
    %v5858 = vmul.f32 %v5856, %v2925
    %v5859 = vadd.f32 %v4128, %v5857
    %v5860 = vadd.f32 %v4129, %v5858
    %v5861 = vmul.f32 %v5859, 0.5
    %v5862 = vmul.f32 %v5860, 0.5
    %5863 = vset.pattern.permute.xlu0 51
    %5864 = vperm.xlu0 %5863, %v249
    %v5865 = vpop.permute.xlu0 %5864
    %v5867 = vmul.f32 %v5865, %v5861
    %v5868 = vmul.f32 %v5865, %v5862
    %v5869 = vand.u32 2147483647, %v5867
    %vm5870 = vcmp.le.f32.partialorder %v5869, 0.7853982
    %vm5871 = vcmp.lt.s32.totalorder %v5867, 0
    %v5872 = vand.u32 %v5867, 2139095040
    %v5873 = vshrl.u32 %v5872, 23
    %v5874 = vsub.s32 %v5873, 127
    %v5875 = vand.u32 2147483647, %v5867
    %v5876 = vand.u32 %v5875, 8388607
    %v5877 = vor.u32 %v5876, 8388608
    %v5878 = vsub.s32 0, %v5877
    %v5879 = vadd.s32 %v5874, 1
    %vm5880 = vcmp.gt.s32.totalorder %v5879, 0
    %v5881 = vsel %vm5880, %v5879, 0
    %v5882 = vshrl.u32 %v5881, 5
    %v5883 = vand.u32 %v5881, 31
    %v5884 = vsub.s32 32, %v5883
    %v5885 = vshrl.u32 683565275, %v5884
    %v5886 = vshll.u32 683565275, %v5883
    %v5887 = vshrl.u32 2475754826, %v5884
    %v5888 = vor.u32 %v5886, %v5887
    %v5889 = vshll.u32 2475754826, %v5883
    %v5890 = vshrl.u32 2131351028, %v5884
    %v5891 = vor.u32 %v5889, %v5890
    %v5892 = vshll.u32 2131351028, %v5883
    %v5893 = vshrl.u32 2102212464, %v5884
    %v5894 = vor.u32 %v5892, %v5893
    %v5895 = vshll.u32 2102212464, %v5883
    %v5896 = vshrl.u32 920167782, %v5884
    %v5897 = vor.u32 %v5895, %v5896
    %v5898 = vshll.u32 920167782, %v5883
    %v5899 = vshrl.u32 1326507024, %v5884
    %v5900 = vor.u32 %v5898, %v5899
    %vm5901 = vcmp.lt.s32.totalorder %v5882, 1
    %vm5902 = vcmp.lt.s32.totalorder %v5882, 2
    %vm5903 = vcmp.lt.s32.totalorder %v5882, 3
    %vm5904 = vcmp.lt.s32.totalorder %v5882, 4
    %v5905 = vsel %vm5901, %v5885, %v5888
    %v5906 = vsel %vm5904, %v5894, 2102212464
    %v5907 = vsel %vm5903, %v5891, %v5906
    %v5908 = vsel %vm5902, %v5905, %v5907
    %v5909 = vsel %vm5901, %v5888, %v5891
    %v5910 = vsel %vm5904, %v5897, 920167782
    %v5911 = vsel %vm5903, %v5894, %v5910
    %v5912 = vsel %vm5902, %v5909, %v5911
    %v5913 = vsel %vm5901, %v5891, %v5894
    %v5914 = vsel %vm5904, %v5900, 1326507024
    %v5915 = vsel %vm5903, %v5897, %v5914
    %v5916 = vsel %vm5902, %v5913, %v5915
    %v5917 = vshll.u32 %v5877, 8
    %v5918 = vmul.u32.u64.compose %v5917, %v5916
    %v5919 = vextract.low.u32 %v5918
    %v5920 = vextract.high.u32 %v5918
    %v5921 = vmul.u32.u64.compose %v5917, %v5912
    %v5922 = vextract.low.u32 %v5921
    %v5923 = vextract.high.u32 %v5921
    %v5924 = vmul.u32 %v5917, %v5908
    %v5925 = vadd.s32 %v5920, %v5922
    %vm5926 = vc.u32 %v5920, %v5922
    %v5927 = vadd.s32 %v5923, 1
    %v5928 = vsel %vm5926, %v5927, %v5923
    %v5929 = vadd.s32 %v5924, %v5928
    %v5930 = vadd.s32 %v5929, 536870912
    %v5931 = vshrl.u32 %v5930, 30
    %v5932 = vshll.u32 %v5931, 30
    %v5933 = vsub.s32 %v5929, %v5932
    %vm5934 = vcmp.lt.s32.totalorder %v5933, 0
    %v5935 = vsub.s32 0, %v5933
    %v5936 = vsel %vm5934, %v5935, %v5933
    %v5937 = vclz %v5936
    %v5938 = vsub.s32 %v5937, 2
    %vm5939 = vcmp.gt.s32.totalorder 0, %v5938
    %v5940 = vsel %vm5939, 0, %v5938
    %v5941 = vsub.s32 32, %v5940
    %v5942 = vshll.u32 %v5933, %v5940
    %v5943 = vshrl.u32 %v5925, %v5941
    %v5944 = vor.u32 %v5942, %v5943
    %v5945 = vsub.s32 4294967266, %v5940
    %v5946 = vadd.s32 %v5945, 127
    %v5947 = vshll.u32 %v5946, 23
    %v5948 = vor.u32 4788187, %v5947
    %v5949 = vand.u32 2147483647, %v5948
    %v5951 = vcvt.s32.f32 %v5944
    %v5952 = vmul.f32 %v5951, %v5949
    %v5953 = vxor.u32 %v5952, 2147483648
    %v5954 = vsel %vm5871, %v5953, %v5952
    %v5955 = vsub.s32 4, %v5931
    %v5956 = vsel %vm5871, %v5955, %v5931
    %v5957 = vsel %vm5870, %v5867, %v5954
    %v5958 = vsel %vm5870, 0, %v5956
    %v5959 = vcosq.f32.pop %v5957
    %v5960 = vsinq.f32.pop %v5957
    %vm5961 = vweird.f32 %v5867
    %v5962 = vadd.s32 %v5958, 3
    %v5963 = vand.u32 %v5962, 3
    %vm5964 = vcmp.lt.s32.totalorder %v5963, 2
    %vm5965 = vcmp.eq.s32.totalorder %v5963, 0
    %v5966 = vxor.u32 %v5960, 2147483648
    %v5967 = vsel %vm5965, %v5959, %v5966
    %vm5968 = vcmp.eq.s32.totalorder %v5963, 2
    %v5969 = vxor.u32 %v5959, 2147483648
    %v5970 = vsel %vm5968, %v5969, %v5960
    %v5971 = vsel %vm5964, %v5967, %v5970
    %v5972 = vsel %vm5961, nan, %v5971
    %v5973 = vand.u32 2147483647, %v5868
    %vm5974 = vcmp.le.f32.partialorder %v5973, 0.7853982
    %vm5975 = vcmp.lt.s32.totalorder %v5868, 0
    %v5976 = vand.u32 %v5868, 2139095040
    %v5977 = vshrl.u32 %v5976, 23
    %v5978 = vsub.s32 %v5977, 127
    %v5979 = vand.u32 2147483647, %v5868
    %v5980 = vand.u32 %v5979, 8388607
    %v5981 = vor.u32 %v5980, 8388608
    %v5982 = vsub.s32 0, %v5981
    %v5983 = vadd.s32 %v5978, 1
    %vm5984 = vcmp.gt.s32.totalorder %v5983, 0
    %v5985 = vsel %vm5984, %v5983, 0
    %v5986 = vshrl.u32 %v5985, 5
    %v5987 = vand.u32 %v5985, 31
    %v5988 = vsub.s32 32, %v5987
    %v5989 = vshrl.u32 683565275, %v5988
    %v5990 = vshll.u32 683565275, %v5987
    %v5991 = vshrl.u32 2475754826, %v5988
    %v5992 = vor.u32 %v5990, %v5991
    %v5993 = vshll.u32 2475754826, %v5987
    %v5994 = vshrl.u32 2131351028, %v5988
    %v5995 = vor.u32 %v5993, %v5994
    %v5996 = vshll.u32 2131351028, %v5987
    %v5997 = vshrl.u32 2102212464, %v5988
    %v5998 = vor.u32 %v5996, %v5997
    %v5999 = vshll.u32 2102212464, %v5987
    %v6000 = vshrl.u32 920167782, %v5988
    %v6001 = vor.u32 %v5999, %v6000
    %v6002 = vshll.u32 920167782, %v5987
    %v6003 = vshrl.u32 1326507024, %v5988
    %v6004 = vor.u32 %v6002, %v6003
    %vm6005 = vcmp.lt.s32.totalorder %v5986, 1
    %vm6006 = vcmp.lt.s32.totalorder %v5986, 2
    %vm6007 = vcmp.lt.s32.totalorder %v5986, 3
    %vm6008 = vcmp.lt.s32.totalorder %v5986, 4
    %v6009 = vsel %vm6005, %v5989, %v5992
    %v6010 = vsel %vm6008, %v5998, 2102212464
    %v6011 = vsel %vm6007, %v5995, %v6010
    %v6012 = vsel %vm6006, %v6009, %v6011
    %v6013 = vsel %vm6005, %v5992, %v5995
    %v6014 = vsel %vm6008, %v6001, 920167782
    %v6015 = vsel %vm6007, %v5998, %v6014
    %v6016 = vsel %vm6006, %v6013, %v6015
    %v6017 = vsel %vm6005, %v5995, %v5998
    %v6018 = vsel %vm6008, %v6004, 1326507024
    %v6019 = vsel %vm6007, %v6001, %v6018
    %v6020 = vsel %vm6006, %v6017, %v6019
    %v6021 = vshll.u32 %v5981, 8
    %v6022 = vmul.u32.u64.compose %v6021, %v6020
    %v6023 = vextract.low.u32 %v6022
    %v6024 = vextract.high.u32 %v6022
    %v6025 = vmul.u32.u64.compose %v6021, %v6016
    %v6026 = vextract.low.u32 %v6025
    %v6027 = vextract.high.u32 %v6025
    %v6028 = vmul.u32 %v6021, %v6012
    %v6029 = vadd.s32 %v6024, %v6026
    %vm6030 = vc.u32 %v6024, %v6026
    %v6031 = vadd.s32 %v6027, 1
    %v6032 = vsel %vm6030, %v6031, %v6027
    %v6033 = vadd.s32 %v6028, %v6032
    %v6034 = vadd.s32 %v6033, 536870912
    %v6035 = vshrl.u32 %v6034, 30
    %v6036 = vshll.u32 %v6035, 30
    %v6037 = vsub.s32 %v6033, %v6036
    %vm6038 = vcmp.lt.s32.totalorder %v6037, 0
    %v6039 = vsub.s32 0, %v6037
    %v6040 = vsel %vm6038, %v6039, %v6037
    %v6041 = vclz %v6040
    %v6042 = vsub.s32 %v6041, 2
    %vm6043 = vcmp.gt.s32.totalorder 0, %v6042
    %v6044 = vsel %vm6043, 0, %v6042
    %v6045 = vsub.s32 32, %v6044
    %v6046 = vshll.u32 %v6037, %v6044
    %v6047 = vshrl.u32 %v6029, %v6045
    %v6048 = vor.u32 %v6046, %v6047
    %v6049 = vsub.s32 4294967266, %v6044
    %v6050 = vadd.s32 %v6049, 127
    %v6051 = vshll.u32 %v6050, 23
    %v6052 = vor.u32 4788187, %v6051
    %v6053 = vand.u32 2147483647, %v6052
    %v6055 = vcvt.s32.f32 %v6048
    %v6056 = vmul.f32 %v6055, %v6053
    %v6057 = vxor.u32 %v6056, 2147483648
    %v6058 = vsel %vm5975, %v6057, %v6056
    %v6059 = vsub.s32 4, %v6035
    %v6060 = vsel %vm5975, %v6059, %v6035
    %v6061 = vsel %vm5974, %v5868, %v6058
    %v6062 = vsel %vm5974, 0, %v6060
    %v6063 = vcosq.f32.pop %v6061
    %v6064 = vsinq.f32.pop %v6061
    %vm6065 = vweird.f32 %v5868
    %v6066 = vadd.s32 %v6062, 3
    %v6067 = vand.u32 %v6066, 3
    %vm6068 = vcmp.lt.s32.totalorder %v6067, 2
    %vm6069 = vcmp.eq.s32.totalorder %v6067, 0
    %v6070 = vxor.u32 %v6064, 2147483648
    %v6071 = vsel %vm6069, %v6063, %v6070
    %vm6072 = vcmp.eq.s32.totalorder %v6067, 2
    %v6073 = vxor.u32 %v6063, 2147483648
    %v6074 = vsel %vm6072, %v6073, %v6064
    %v6075 = vsel %vm6068, %v6071, %v6074
    %v6076 = vsel %vm6065, nan, %v6075
    %v6077 = vmul.f32 %v5972, %v5972
    %v6078 = vmul.f32 %v6076, %v6076
    %6079 = vset.pattern.permute.xlu0 52
    %6080 = vperm.xlu0 %6079, %v249
    %v6081 = vpop.permute.xlu0 %6080
    %v6083 = vmul.f32 %v6081, %v6077
    %v6084 = vmul.f32 %v6081, %v6078
    %v6085 = vadd.f32 %v5861, %v6083
    %v6086 = vadd.f32 %v5862, %v6084
    %v6089 = vcombine.low %v6085, %v6086
    %6091 = vst [vmem:[%s5] sm:$0xff] %v6089
    %v6092 = vld [vmem:[%s3 + $0x14] sm:$0x1]
    %6093 = vrot.lane.b32.xlu0 %v6085, 65
    %v6094 = vpop.permute.xlu0 %6093
    %v6096 = vsel %vm73, 0.0, %v6094
    %6097 = vrot.lane.b32.xlu0 %v6085, 33
    %v6098 = vpop.permute.xlu0 %6097
    %v6100 = vsel %vm73, 0.0, %v6098
    %6102 = vrot.lane.b32.xlu0 %v6100, 32
    %v6103 = vpop.permute.xlu0 %6102
    %v6105 = vsel %vm52, %v6096, %v6103
    %6106 = vrot.lane.b32.xlu0 %v6085, 97
    %v6107 = vpop.permute.xlu0 %6106
    %v6109 = vsel %vm73, 0.0, %v6107
    %6110 = vrot.lane.b32.xlu0 %v6085, 32
    %v6111 = vpop.permute.xlu0 %6110
    %v6113 = vsel %vm52, %v6109, %v6111
    %6115 = vrot.lane.b32.xlu0 %v6113, 64
    %v6116 = vpop.permute.xlu0 %6115
    %v6118 = vsel %vm430, %v6105, %v6116
    %6119 = vrot.lane.b32.xlu0 %v6085, 96
    %v6120 = vpop.permute.xlu0 %6119
    %v6122 = vsel %vm52, %v6100, %v6120
    %6124 = vrot.lane.b32.xlu0 %v6122, 64
    %v6125 = vpop.permute.xlu0 %6124
    %v6127 = vsel %vm430, %v6113, %v6125
    %6128 = vrot.lane.b32.xlu0 %v6085, 64
    %v6129 = vpop.permute.xlu0 %6128
    %v6131 = vsel %vm430, %v6122, %v6129
    %6132 = vrot.lane.b32.xlu0 %v6085, 127
    %v6133 = vpop.permute.xlu0 %6132
    %v6135 = vsel %vm78, %v6133, 0.0
    %6137 = vrot.lane.b32.xlu0 %v6135, 32
    %v6138 = vpop.permute.xlu0 %6137
    %v6140 = vsel %vm52, %v6120, %v6138
    %6142 = vrot.lane.b32.xlu0 %v6140, 64
    %v6143 = vpop.permute.xlu0 %6142
    %v6145 = vsel %vm430, %v6129, %v6143
    %6146 = vrot.lane.b32.xlu0 %v6085, 63
    %v6147 = vpop.permute.xlu0 %6146
    %v6149 = vsel %vm78, %v6147, 0.0
    %6151 = vrot.lane.b32.xlu0 %v6149, 32
    %v6152 = vpop.permute.xlu0 %6151
    %v6154 = vsel %vm52, %v6111, %v6152
    %6156 = vrot.lane.b32.xlu0 %v6154, 64
    %v6157 = vpop.permute.xlu0 %6156
    %v6159 = vsel %vm430, %v6140, %v6157
    %6160 = vrot.lane.b32.xlu0 %v6085, 95
    %v6161 = vpop.permute.xlu0 %6160
    %v6163 = vsel %vm78, %v6161, 0.0
    %6165 = vrot.lane.b32.xlu0 %v6163, 32
    %v6166 = vpop.permute.xlu0 %6165
    %v6168 = vsel %vm52, %v6135, %v6166
    %6170 = vrot.lane.b32.xlu0 %v6168, 64
    %v6171 = vpop.permute.xlu0 %6170
    %v6173 = vsel %vm430, %v6154, %v6171
    %6174 = vrot.lane.b32.xlu0 %v6086, 65
    %v6175 = vpop.permute.xlu0 %6174
    %v6177 = vsel %vm73, 0.0, %v6175
    %6178 = vrot.lane.b32.xlu0 %v6086, 33
    %v6179 = vpop.permute.xlu0 %6178
    %v6181 = vsel %vm73, 0.0, %v6179
    %6183 = vrot.lane.b32.xlu0 %v6181, 32
    %v6184 = vpop.permute.xlu0 %6183
    %v6186 = vsel %vm52, %v6177, %v6184
    %6187 = vrot.lane.b32.xlu0 %v6086, 97
    %v6188 = vpop.permute.xlu0 %6187
    %v6190 = vsel %vm73, 0.0, %v6188
    %6191 = vrot.lane.b32.xlu0 %v6086, 32
    %v6192 = vpop.permute.xlu0 %6191
    %v6194 = vsel %vm52, %v6190, %v6192
    %6196 = vrot.lane.b32.xlu0 %v6194, 64
    %v6197 = vpop.permute.xlu0 %6196
    %v6199 = vsel %vm430, %v6186, %v6197
    %6200 = vrot.lane.b32.xlu0 %v6086, 96
    %v6201 = vpop.permute.xlu0 %6200
    %v6203 = vsel %vm52, %v6181, %v6201
    %6205 = vrot.lane.b32.xlu0 %v6203, 64
    %v6206 = vpop.permute.xlu0 %6205
    %v6208 = vsel %vm430, %v6194, %v6206
    %6209 = vrot.lane.b32.xlu0 %v6086, 64
    %v6210 = vpop.permute.xlu0 %6209
    %v6212 = vsel %vm430, %v6203, %v6210
    %6213 = vrot.lane.b32.xlu0 %v6086, 127
    %v6214 = vpop.permute.xlu0 %6213
    %v6216 = vsel %vm78, %v6214, 0.0
    %6218 = vrot.lane.b32.xlu0 %v6216, 32
    %v6219 = vpop.permute.xlu0 %6218
    %v6221 = vsel %vm52, %v6201, %v6219
    %6223 = vrot.lane.b32.xlu0 %v6221, 64
    %v6224 = vpop.permute.xlu0 %6223
    %v6226 = vsel %vm430, %v6210, %v6224
    %6227 = vrot.lane.b32.xlu0 %v6086, 63
    %v6228 = vpop.permute.xlu0 %6227
    %v6230 = vsel %vm78, %v6228, 0.0
    %6232 = vrot.lane.b32.xlu0 %v6230, 32
    %v6233 = vpop.permute.xlu0 %6232
    %v6235 = vsel %vm52, %v6192, %v6233
    %6237 = vrot.lane.b32.xlu0 %v6235, 64
    %v6238 = vpop.permute.xlu0 %6237
    %v6240 = vsel %vm430, %v6221, %v6238
    %6241 = vrot.lane.b32.xlu0 %v6086, 95
    %v6242 = vpop.permute.xlu0 %6241
    %v6244 = vsel %vm78, %v6242, 0.0
    %6246 = vrot.lane.b32.xlu0 %v6244, 32
    %v6247 = vpop.permute.xlu0 %6246
    %v6249 = vsel %vm52, %v6216, %v6247
    %6251 = vrot.lane.b32.xlu0 %v6249, 64
    %v6252 = vpop.permute.xlu0 %6251
    %v6254 = vsel %vm430, %v6235, %v6252
    %v6255 = vpack.c.bf16 %v6127, %v6118
    %v6256 = vpack.c.bf16 %v6208, %v6199
    %v6257 = vpack.c.bf16 %v6085, %v6131
    %v6258 = vpack.c.bf16 %v6086, %v6212
    %v6259 = vpack.c.bf16 %v6159, %v6145
    %v6260 = vpack.c.bf16 %v6240, %v6226
    %v6261 = vpack.c.bf16 %v6173, %v6173
    %v6262 = vpack.c.bf16 %v6254, %v6254
    %v6264 = vunpack.c.l.b16 %v6092
    %v6265 = vpack.c.b16 %v6264, %v6264
    %6266 = vrot.lane.b32.xlu0 %v6265, 104
    %v6267 = vpop.permute.xlu0 %6266
    %v6269 = vsel %vm169, %v6267, 0
    %v6272 = vsel %vm173, %v6261, 0
    %v6275 = vsel %vm173, %v6262, 0
    %6277 = vmatprep.subr.bf16.mxu0 0
    %6278 = vmatpush1.bf16.msra.mxu0 0
    %6279 = vmatprep.subr.bf16.mxu0 0
    %6280 = vmatpush1.bf16.msra.mxu0 0
    %6281 = vmatprep.subr.bf16.mxu0 0
    %6282 = vmatpush1.bf16.msra.mxu0 0
    %6283 = vmatprep.subr.bf16.mxu0 0
    %6284 = vmatpush1.bf16.msra.mxu0 0
    %6285 = vmatprep.subr.bf16.mxu0 %v6275
    %6286 = vmatpush1.bf16.msra.mxu0 %v6272
    %6287 = vmatprep.subr.bf16.mxu0 %v6260
    %6288 = vmatpush1.bf16.msra.mxu0 %v6259
    %6289 = vmatprep.subr.bf16.mxu0 %v6258
    %6290 = vmatpush1.bf16.msra.mxu0 %v6257
    %6291 = vmatprep.subr.bf16.mxu0 %v6256
    %6292 = vmatpush1.bf16.msra.mxu0 %v6255
    %6293 = vmatprep.subr.bf16.mxu0 0
    %6294 = vmatpush2.bf16.msra.mxu0 0
    %6295 = vmatprep.subr.bf16.mxu0 0
    %6296 = vmatpush2.bf16.msra.mxu0 0
    %6297 = vmatprep.subr.bf16.mxu0 0
    %6298 = vmatpush2.bf16.msra.mxu0 0
    %6299 = vmatprep.subr.bf16.mxu0 0
    %6300 = vmatpush2.bf16.msra.mxu0 0
    %6301 = vmatprep.subr.bf16.mxu0 0
    %6302 = vmatpush2.bf16.msra.mxu0 0
    %6303 = vmatprep.subr.bf16.mxu0 0
    %6304 = vmatpush2.bf16.msra.mxu0 0
    %6305 = vmatprep.subr.bf16.mxu0 0
    %6306 = vmatpush2.bf16.msra.mxu0 0
    %6307 = vmatprep.subr.bf16.mxu0 0
    %6308 = vmatpush2.bf16.msra.mxu0 0
    %6309 = vmatprep.mubr.bf16.mxu0 0
    %6310 = vmatmul.mubr.bf16.gmra.mxu0 %v6269
    %v6311 = vpop.f32.mrf.mxu0
    %v6312 = vadd.f32 0.0, %v6311
    %v6313 = vpop.f32.mrf.mxu0
    %v6314 = vadd.f32 0.0, %v6313
    %v6315 = vpop.f32.mrf.mxu0
    %v6316 = vpop.f32.mrf.mxu0
    %6317 = vdwg.mxu0
    %v6320 = vcombine.low %v6312, %v6314
    %v6322 = vunpack.c.l.s4 1966171168
    %v6323 = vunpack.c.0.s8 %v6322
    %v6324 = vlaneseq
    %v6325 = vshrl.u32 %v6324, 7
    %v6326 = vsub.s32 %v6323, %v6325
    %v6327 = vrot.slane %v6320, %v6326
    %v6329 = vunpack.c.l.s4 1966171168
    %v6330 = vunpack.c.0.s8 %v6329
    %v6331 = vlaneseq
    %v6332 = vshrl.u32 %v6331, 7
    %v6333 = vsub.s32 %v6330, %v6332
    %v6334 = vrot.slane %v6327, %v6333
    %v6336 = vlaneseq
    %vm6337 = vcmp.ge.s32.totalorder %v6336, 0
    %vm6338 = vcmp.lt.s32.totalorder %v6336, 256
    %vm6339 = vmand %vm6337, %vm6338
    %6340 = vst.msk [vmem:[%s6] sm:$0x3] %vm6339, %v6334
    // Predicated region
    $region26: #{semantic_f0_predictor_forward.1} parent=1 // pred_check
      _
    $region27: #{semantic_f0_predictor_forward.1} parent=1 // pred_check_branch
      %6342 = sbr.rel (0) target = $region29
    $region28: #{semantic_f0_predictor_forward.1} parent=1 // pred_region
      _
    $region29: #{semantic_f0_predictor_forward.1} parent=1 // pred_fallthru
      _
    // Predicated region
    $region30: #{semantic_f0_predictor_forward.1} parent=1 // pred_check
      _
    $region31: #{semantic_f0_predictor_forward.1} parent=1 // pred_check_branch
      %6344 = sbr.rel (0) target = $region33
    $region32: #{semantic_f0_predictor_forward.1} parent=1 // pred_region
      _
    $region33: #{semantic_f0_predictor_forward.1} parent=1 // pred_fallthru
      _
    // Predicated region
    $region34: #{semantic_f0_predictor_forward.1} parent=1 // pred_check
      _
    $region35: #{semantic_f0_predictor_forward.1} parent=1 // pred_check_branch
      %6346 = sbr.rel (0) target = $region37
    $region36: #{semantic_f0_predictor_forward.1} parent=1 // pred_region
      _
    $region37: #{semantic_f0_predictor_forward.1} parent=1 // pred_fallthru
      _
    // Predicated region
    $region38: #{semantic_f0_predictor_forward.1} parent=1 // pred_check
      _
    $region39: #{semantic_f0_predictor_forward.1} parent=1 // pred_check_branch
      %6348 = sbr.rel (0) target = $region41
    $region40: #{semantic_f0_predictor_forward.1} parent=1 // pred_region
      _
    $region41: #{semantic_f0_predictor_forward.1} parent=1 // pred_fallthru
      _
    %6349 = vsyncpa [#allocation3], 1

</llo_original>
